<compile_context>
chip_gen: v5e
topology: v5e:2x2
jax: 0.10.0
libtpu: 0.0.40
codegen_flags: <defaults>
</compile_context>

<pallas_src>
import jax
import jax.numpy as jnp
from jax.experimental import pallas as pl
from jax.experimental.pallas import tpu as pltpu

MAX_TM = 1024  # max packed-row tile (multiple of 8); big tiles amortize grid-step overhead


# ----------------------------------------------------------------------------
# hardware / tiling helpers
# ----------------------------------------------------------------------------
def _round_up(x, m):
    return ((x + m - 1) // m) * m


_NUM_TC_CACHE = None


def _num_tensorcores():
    """2 for megacore chips (v4 / v5p / v7x), else 1.  Perf heuristic only."""
    global _NUM_TC_CACHE
    if _NUM_TC_CACHE is None:
        cores = 1
        try:
            kind = jax.devices()[0].device_kind.lower()
            if any(t in kind for t in ("v4", "v5p", "v7")):
                cores = 2
        except Exception:
            cores = 1
        _NUM_TC_CACHE = cores
    return _NUM_TC_CACHE


def _choose_tile(M):
    """Row tile: maximal single tile on 1-TC chips; even, balanced grid on 2-TC."""
    tm = min(MAX_TM, _round_up(M, 8))
    if _num_tensorcores() >= 2 and M > 8:
        steps = pl.cdiv(M, tm)
        if steps % 2:                              # keep both TensorCores busy
            steps += 1
            tm = max(8, _round_up(pl.cdiv(M, steps), 8))
    return tm


def _row_spec(tm, c):
    return pl.BlockSpec((tm, c), lambda i: (i, 0))


def _full_spec(a):
    # NOTE: params are grid-invariant; default double buffering is kept for
    # lowering safety (pl.Buffered(1) would shave a little VMEM).
    return pl.BlockSpec(a.shape, lambda i: (0, 0))


def _run_rowwise(kernel, row_args, param_args, out_dim, Mp):
    """Launch `kernel` over a 1-D packed-row grid."""
    tm = _choose_tile(Mp)
    grid = (pl.cdiv(Mp, tm),)
    in_specs = ([_row_spec(tm, a.shape[-1]) for a in row_args]
                + [_full_spec(a) for a in param_args])
    flops = 0
    bytes_accessed = Mp * out_dim * 4
    for a in row_args:
        bytes_accessed += a.size * a.dtype.itemsize
    for a in param_args:
        bytes_accessed += a.size * a.dtype.itemsize
        if a.ndim == 2 and a.shape[0] > 1:
            flops += 2 * Mp * a.shape[0] * a.shape[1]
    return pl.pallas_call(
        kernel,
        out_shape=jax.ShapeDtypeStruct((Mp, out_dim), jnp.float32),
        grid=grid,
        in_specs=in_specs,
        out_specs=_row_spec(tm, out_dim),
        compiler_params=pltpu.CompilerParams(dimension_semantics=("parallel",)),
        cost_estimate=pl.CostEstimate(flops=int(flops),
                                      transcendentals=int(Mp * out_dim),
                                      bytes_accessed=int(bytes_accessed)),
    )(*row_args, *param_args)


# ----------------------------------------------------------------------------
# row packing (g rows per 128-lane vreg row) -- wrapper-side free reshapes
# ----------------------------------------------------------------------------
def _pack_rows(a, g):
    """(B, N, C) -> ((B*N)/g, g*C) row-major packed view."""
    B, N, C = a.shape
    M = B * N
    flat = a.reshape(M, C)
    rem = (-M) % g
    if rem:
        # TODO(synk): only hit when B*N is not a multiple of g -- costs one pad copy.
        flat = jnp.concatenate([flat, jnp.zeros((rem, C), flat.dtype)], axis=0)
    Mp = (M + rem) // g
    return flat.reshape(Mp, g * C), Mp


def _unpack_rows(out, B, N, C):
    return out.reshape(-1, C)[: B * N].reshape(B, N, C)


# ----------------------------------------------------------------------------
# host-side weight packing: block-diagonal expansion / lane tiling
# ----------------------------------------------------------------------------
def _block_diag(w, g):
    k, n = w.shape
    out = jnp.zeros((g * k, g * n), w.dtype)
    for i in range(g):
        out = out.at[i * k:(i + 1) * k, i * n:(i + 1) * n].set(w)
    return out


def _tile_cols(v, g):
    return jnp.tile(v, (1, g))


def _pack_mlp_tail(p, g):
    args = []
    for w, b in zip(p["ws"][1:], p["bs"][1:]):
        args += [_block_diag(w, g).astype(jnp.bfloat16), _tile_cols(b, g)]
    return args


def _ln_args(p, g):
    L = p["gamma"].shape[-1]
    red = _block_diag(jnp.full((L, L), 1.0 / L, jnp.float32), g)   # group-mean matrix
    return [_tile_cols(p["gamma"], g), _tile_cols(p["beta"], g), red]


def pack_encoder(p, in_mean, in_inv_std, C, P, g):
    """Fuses Normalizer + latent-input slicing into the packed first layer."""
    Din = C + P + 1
    w1 = p["ws"][0]                                   # (C+1, L)
    L = w1.shape[1]
    w1n = jnp.zeros((Din, L), jnp.float32)
    w1n = w1n.at[:C, :].set(w1[:C]).at[Din - 1, :].set(w1[C])      # pos rows stay 0
    mean = jnp.zeros((1, Din), jnp.float32)
    mean = mean.at[:, :C].set(in_mean[:, :C]).at[:, Din - 1].set(in_mean[:, C])
    inv = jnp.ones((1, Din), jnp.float32)
    inv = inv.at[:, :C].set(in_inv_std[:, :C]).at[:, Din - 1].set(in_inv_std[:, C])
    args = [_tile_cols(mean, g), _tile_cols(inv, g),
            _block_diag(w1n, g).astype(jnp.bfloat16), _tile_cols(p["bs"][0], g)]
    args += _pack_mlp_tail(p, g) + _ln_args(p, g)
    return args, len(p["ws"]) - 1


def pack_edge(p, L, P, g):
    w1 = p["ws"][0]                                   # (2L+P+1, L)
    args = [_block_diag(w1[:L], g).astype(jnp.bfloat16),
            _block_diag(w1[L:2 * L], g).astype(jnp.bfloat16),
            _block_diag(w1[2 * L:2 * L + P], g),                   # f32, tiny K -> VPU
            _block_diag(jnp.ones((P, L), jnp.float32), g),         # |d|^2 group-sum
            _tile_cols(w1[2 * L + P:2 * L + P + 1], g),
            _tile_cols(p["bs"][0], g)]
    args += _pack_mlp_tail(p, g) + _ln_args(p, g)
    return args, len(p["ws"]) - 1


def pack_node(p, L, g):
    w1 = p["ws"][0]                                   # (2L, L)
    args = [_block_diag(w1[:L], g).astype(jnp.bfloat16),
            _block_diag(w1[L:], g).astype(jnp.bfloat16),
            _tile_cols(p["bs"][0], g)]
    args += _pack_mlp_tail(p, g) + _ln_args(p, g)
    return args, len(p["ws"]) - 1


def pack_decoder(p, tar_std, tar_mean, C, g):
    """Decoder + inverse target-norm + mask + residual; residual/mask come from a
    packed [x(C), mask] stream via selection matrices (no separate mask DMA)."""
    Dm = C + 1
    sel = jnp.zeros((g * Dm, g * C), jnp.float32)
    msel = jnp.zeros((g * Dm, g * C), jnp.float32)
    for i in range(g):
        for c in range(C):
            sel = sel.at[i * Dm + c, i * C + c].set(1.0)
            msel = msel.at[i * Dm + C, i * C + c].set(1.0)
    args = [_tile_cols(tar_std, g), _tile_cols(tar_mean, g), sel, msel,
            _block_diag(p["ws"][0], g).astype(jnp.bfloat16), _tile_cols(p["bs"][0], g)]
    args += _pack_mlp_tail(p, g)
    return args, len(p["ws"]) - 1


# ----------------------------------------------------------------------------
# in-kernel helpers
# ----------------------------------------------------------------------------
def _dot_bf16(a_f32, w_ref):
    """MXU matmul: f32 activation cast to bf16, bf16 weight, f32 accumulate."""
    return jnp.dot(a_f32.astype(jnp.bfloat16), w_ref[...],
                   preferred_element_type=jnp.float32)


def _bcast_term(x_f32, w_ref):
    """Tiny-K contribution via VPU broadcast FMAs (no MXU push)."""
    w = w_ref[...].astype(jnp.float32)
    acc = x_f32[:, 0:1] * w[0:1, :]
    for k in range(1, x_f32.shape[-1]):
        acc = acc + x_f32[:, k:k + 1] * w[k:k + 1, :]
    return acc


def _mlp_tail_packed(h, refs, idx, n_rest, layer_norm):
    """[ReLU -> Linear(bf16 MXU)] * n_rest, then group LayerNorm (single pass)."""
    for _ in range(n_rest):
        h = jnp.maximum(h, 0.0)                       # ReLU in f32 (VPU)
        h = _dot_bf16(h, refs[idx]) + refs[idx + 1][...]
        idx += 2
    if layer_norm:
        gamma = refs[idx][...]
        beta = refs[idx + 1][...]
        red = refs[idx + 2][...]                      # block-diag group-mean matrix
        s1 = jnp.dot(h, red, preferred_element_type=jnp.float32)       # E[h]
        s2 = jnp.dot(h * h, red, preferred_element_type=jnp.float32)   # E[h^2]
        var = jnp.maximum(s2 - s1 * s1, 0.0)
        h = (h - s1) * jax.lax.rsqrt(var + 1e-5) * gamma + beta
    return h


# ----------------------------------------------------------------------------
# fused kernels (all operate on lane-packed rows: g graph rows per vreg row)
# ----------------------------------------------------------------------------
def _make_encoder_kernel(n_rest):
    # refs: node_p, mean_t, inv_t, w1_bd, b1_t, [w,b]*n_rest, gamma, beta, red, out
    def kernel(*refs):
        o_ref = refs[-1]
        nx = (refs[0][...] - refs[1][...]) * refs[2][...]
        h = _dot_bf16(nx, refs[3]) + refs[4][...]
        o_ref[...] = _mlp_tail_packed(h, refs, 5, n_rest, layer_norm=True)
    return kernel


def _make_edge_kernel(n_rest):
    # refs: xi_p, xj_p, pi_p, pj_p, Wxi, Wxj, Wd, Sd, wdist_t, b1_t,
    #       [w,b]*n_rest, gamma, beta, red, out
    def kernel(*refs):
        o_ref = refs[-1]
        xi = refs[0][...]
        xj = refs[1][...]
        d = refs[2][...] - refs[3][...]
        dist = jnp.sqrt(_bcast_term(d * d, refs[7]))          # per-edge |d| broadcast
        h = (_dot_bf16(xi, refs[4]) + _dot_bf16(xj, refs[5])
             + _bcast_term(d, refs[6]) + dist * refs[8][...] + refs[9][...])
        o_ref[...] = _mlp_tail_packed(h, refs, 10, n_rest, layer_norm=True)
    return kernel


def _make_node_kernel(n_rest):
    # refs: x_p, aggr_p, Wx, Wa, b1_t, [w,b]*n_rest, gamma, beta, red, out
    def kernel(*refs):
        o_ref = refs[-1]
        x = refs[0][...]
        h = _dot_bf16(x, refs[2]) + _dot_bf16(refs[1][...], refs[3]) + refs[4][...]
        h = _mlp_tail_packed(h, refs, 5, n_rest, layer_norm=True)
        o_ref[...] = x + h                            # residual fused in-kernel
    return kernel


def _make_decoder_kernel(n_rest):
    # refs: h_p, nm_p, tar_std_t, tar_mean_t, Sel, Msel, w1, b1, [w,b]*n_rest, out
    def kernel(*refs):
        o_ref = refs[-1]
        nm = refs[1][...]
        h = _dot_bf16(refs[0][...], refs[6]) + refs[7][...]
        h = _mlp_tail_packed(h, refs, 8, n_rest, layer_norm=False)
        delta = h * refs[2][...] + refs[3][...]       # inverse target-normalize
        base = _bcast_term(nm, refs[4])               # original features (exact f32)
        mask = _bcast_term(nm, refs[5])               # mask broadcast over channels
        o_ref[...] = base + delta * mask
    return kernel


# ----------------------------------------------------------------------------
# wrappers
# ----------------------------------------------------------------------------
def encoder_forward(packed, node_in, L, g):
    args, n_rest = packed
    B, N, _ = node_in.shape
    node_p, Mp = _pack_rows(node_in, g)
    out = _run_rowwise(_make_encoder_kernel(n_rest), [node_p], args, g * L, Mp)
    return _unpack_rows(out, B, N, L)


def edge_mlp_forward(packed, xi, xj, pi, pj, L, g):
    args, n_rest = packed
    B, E, _ = xi.shape
    xi_p, Mp = _pack_rows(xi, g)
    xj_p, _ = _pack_rows(xj, g)
    pi_p, _ = _pack_rows(pi, g)
    pj_p, _ = _pack_rows(pj, g)
    out = _run_rowwise(_make_edge_kernel(n_rest),
                       [xi_p, xj_p, pi_p, pj_p], args, g * L, Mp)
    return _unpack_rows(out, B, E, L)


def node_mlp_forward(packed, x, aggr, L, g):
    args, n_rest = packed
    B, N, _ = x.shape
    x_p, Mp = _pack_rows(x, g)
    a_p, _ = _pack_rows(aggr, g)
    out = _run_rowwise(_make_node_kernel(n_rest), [x_p, a_p], args, g * L, Mp)
    return _unpack_rows(out, B, N, L)


def decode_combine_forward(packed, h, node_in, node_mask, C, g):
    args, n_rest = packed
    B, N, _ = h.shape
    nm = jnp.concatenate([node_in[..., :C],
                          node_mask[..., :1].astype(node_in.dtype)], axis=-1)
    h_p, Mp = _pack_rows(h, g)
    nm_p, _ = _pack_rows(nm, g)
    out = _run_rowwise(_make_decoder_kernel(n_rest), [h_p, nm_p], args, g * C, Mp)
    return _unpack_rows(out, B, N, C)


# ----------------------------------------------------------------------------
# parameter initialization (deterministic, synthetic)
# ----------------------------------------------------------------------------
def init_mlp(key, in_dim, hid_dim, out_dim, hidden_layer, layer_norm):
    dims = [in_dim] + [hid_dim] * hidden_layer + [out_dim]
    ws, bs = [], []
    for i in range(len(dims) - 1):
        key, k = jax.random.split(key)
        scale = (2.0 / (dims[i] + dims[i + 1])) ** 0.5
        ws.append(jax.random.normal(k, (dims[i], dims[i + 1]), jnp.float32) * scale)
        bs.append(jnp.zeros((1, dims[i + 1]), jnp.float32))
    p = {"ws": ws, "bs": bs}
    if layer_norm:
        p["gamma"] = jnp.ones((1, out_dim), jnp.float32)
        p["beta"] = jnp.zeros((1, out_dim), jnp.float32)
    return p, key


def init_gmp(key, latent_dim, hidden_layer, pos_dim):
    edge_mlp, key = init_mlp(key, 2 * latent_dim + pos_dim + 1,
                             latent_dim, latent_dim, hidden_layer, True)
    node_mlp, key = init_mlp(key, 2 * latent_dim,
                             latent_dim, latent_dim, hidden_layer, True)
    return {"edge": edge_mlp, "node": node_mlp}, key


def init_bsgmp(key, unet_depth, latent_dim, hidden_layer, pos_dim):
    downs, ups = [], []
    for _ in range(unet_depth):
        gm, key = init_gmp(key, latent_dim, hidden_layer, pos_dim)
        downs.append(gm)
    bottom, key = init_gmp(key, latent_dim, hidden_layer, pos_dim)
    for _ in range(unet_depth):
        gm, key = init_gmp(key, latent_dim, hidden_layer, pos_dim)
        ups.append(gm)
    return {"down": downs, "bottom": bottom, "up": ups}, key


# ----------------------------------------------------------------------------
# graph message passing (BSGMP) -- MLPs in Pallas, gather/scatter stays in XLA
# ----------------------------------------------------------------------------
def gmp_forward(packed, x, edges, pos, L, g):
    B, N, _ = x.shape
    s, r = edges[0], edges[1]
    # TODO(synk): data-dependent gather + receiver scatter-add stay in XLA; fusing
    # them into the edge/node kernels needs receiver-sorted edges + scalar-prefetched
    # per-tile edge offsets (PrefetchScalarGridSpec) and an in-kernel gather.
    xi = jnp.take(x, r, axis=1)
    xj = jnp.take(x, s, axis=1)
    pi = jnp.take(pos, r, axis=1)
    pj = jnp.take(pos, s, axis=1)
    edge_emb = edge_mlp_forward(packed["edge"], xi, xj, pi, pj, L, g)   # Pallas
    aggr = jnp.zeros((B, N, L), jnp.float32).at[:, r].add(edge_emb)
    return node_mlp_forward(packed["node"], x, aggr, L, g)              # Pallas


def bsgmp_forward(packed, h, m_ids, m_gs, pos, L, g):
    depth = len(packed["down"])
    down_outs, down_pos = [], []
    for i in range(depth):
        h = gmp_forward(packed["down"][i], h, m_gs[i], pos, L, g)
        down_outs.append(h)
        down_pos.append(pos)
        h = jnp.take(h, m_ids[i], axis=1)             # bi-stride pooling (gather)
        pos = jnp.take(pos, m_ids[i], axis=1)
    h = gmp_forward(packed["bottom"], h, m_gs[depth], pos, L, g)
    for i in range(depth):
        idx = depth - 1 - i
        # unpool: relies on m_ids[idx] being duplicate-free (true for bi-stride ids)
        up = jnp.zeros_like(down_outs[idx]).at[:, m_ids[idx]].set(h)
        h = up + down_outs[idx]
        h = gmp_forward(packed["up"][i], h, m_gs[idx], down_pos[idx], L, g)
    return h


# ----------------------------------------------------------------------------
# BSMS_Simulator
# ----------------------------------------------------------------------------
class BSMSSimulatorPallas:
    def __init__(self, cfg, key):
        self.cfg = cfg
        C, P, L = cfg["out_dim"], cfg["pos_dim"], cfg["latent_dim"]
        self.out_dim, self.pos_dim, self.latent_dim = C, P, L
        self.g = max(1, 128 // L)                     # rows packed per 128-lane row

        enc, key = init_mlp(key, C + 1, L, L, cfg["hidden_layer"], True)
        proc, key = init_bsgmp(key, cfg["unet_depth"], L, cfg["hidden_layer"], P)
        dec, key = init_mlp(key, L, L, C, cfg["hidden_layer"], False)

        # synthetic (deterministic) Normalizer statistics: norm = (x - mean) / std
        key, k1, k2, k3, k4 = jax.random.split(key, 5)
        self.in_mean = jax.random.normal(k1, (1, C + 1), jnp.float32) * 0.1
        in_std = 1.0 + 0.05 * jnp.abs(jax.random.normal(k2, (1, C + 1), jnp.float32))
        self.in_inv_std = 1.0 / in_std
        self.tar_mean = jax.random.normal(k3, (1, C), jnp.float32) * 0.01
        self.tar_std = 1.0 + 0.05 * jnp.abs(jax.random.normal(k4, (1, C), jnp.float32))

        # pack all weights once (host side) into block-diagonal / lane-tiled form
        g = self.g
        self._enc = pack_encoder(enc, self.in_mean, self.in_inv_std, C, P, g)
        self._dec = pack_decoder(dec, self.tar_std, self.tar_mean, C, g)

        def _pack_gmp(gm):
            return {"edge": pack_edge(gm["edge"], L, P, g),
                    "node": pack_node(gm["node"], L, g)}

        self._proc = {"down": [_pack_gmp(gm) for gm in proc["down"]],
                      "bottom": _pack_gmp(proc["bottom"]),
                      "up": [_pack_gmp(gm) for gm in proc["up"]]}
        self._forward_jit = jax.jit(self._forward)

    def _forward(self, m_ids, m_gs, node_in, node_mask):
        C, P, L, g = self.out_dim, self.pos_dim, self.latent_dim, self.g
        node_pos = node_in[..., -(1 + P):-1]                      # (B, N, pos_dim)
        # encoder kernel fuses the input Normalizer + latent-input slicing
        h = encoder_forward(self._enc, node_in, L, g)
        h = bsgmp_forward(self._proc, h, m_ids, m_gs, node_pos, L, g)
        # decoder kernel fuses inverse target-normalize + mask + residual add
        return decode_combine_forward(self._dec, h, node_in, node_mask, C, g)

    def forward(self, data, consistent_mesh, warmup):
        if consistent_mesh:
            node_in, node_tar, node_mask, m_gs, m_ids = data
            m_gs = [gr[0] for gr in m_gs]
            m_ids = [ids[0] for ids in m_ids]
        else:
            # TODO(synk): PyG Data-batch path (data[i].x / .edge_index) not ported
            raise NotImplementedError
        if warmup:
            # TODO(synk): stateful Normalizer statistic accumulation not ported;
            # warmup just returns zeros like the reference.
            return jnp.zeros_like(node_tar)
        return self._forward_jit(m_ids, m_gs, node_in, node_mask)


# ----------------------------------------------------------------------------
if __name__ == "__main__":
    cfg = dict(out_dim=3, pos_dim=2, latent_dim=32, hidden_layer=2, unet_depth=2)
    key = jax.random.PRNGKey(0)
    model = BSMSSimulatorPallas(cfg, key)

    B, N = 2, 64
    C, P = cfg["out_dim"], cfg["pos_dim"]
    k1, k2, k3, k4 = jax.random.split(jax.random.PRNGKey(0), 4)
    node_in = jax.random.normal(k1, (B, N, C + P + 1), jnp.float32)
    node_tar = jax.random.normal(k2, (B, N, C), jnp.float32)
    node_mask = (jax.random.uniform(k3, (B, N, 1)) > 0.1).astype(jnp.float32)

    # multi-level graphs (shared across batch): level sizes 64 -> 32 -> 16
    sizes = [N, N // 2, N // 4]
    n_edges = [128, 64, 32]
    ek = jax.random.split(k4, 3)
    m_gs = []
    for lvl in range(3):
        e = jax.random.randint(ek[lvl], (2, n_edges[lvl]), 0, sizes[lvl],
                               dtype=jnp.int32)
        m_gs.append(e[None])                          # leading batch dim (shared mesh)
    m_ids = [jnp.arange(0, sizes[0], 2, dtype=jnp.int32)[None],
             jnp.arange(0, sizes[1], 2, dtype=jnp.int32)[None]]

    data = (node_in, node_tar, node_mask, m_gs, m_ids)
    out = model.forward(data, consistent_mesh=True, warmup=False)
    out = jax.block_until_ready(out)
    assert out.shape == (B, N, C)
    assert bool(jnp.all(jnp.isfinite(out)))
    print("KERNEL_OK")
</pallas_src>

<mosaic_0001>
module attributes {stable_mosaic.version = 11 : i64} {
  func.func @kernel(%arg0: i32, %arg1: memref<32x24xf32, #tpu.memory_space<vmem>>, %arg2: memref<1x24xf32, #tpu.memory_space<vmem>>, %arg3: memref<1x24xf32, #tpu.memory_space<vmem>>, %arg4: memref<24x128xbf16, #tpu.memory_space<vmem>>, %arg5: memref<1x128xf32, #tpu.memory_space<vmem>>, %arg6: memref<128x128xbf16, #tpu.memory_space<vmem>>, %arg7: memref<1x128xf32, #tpu.memory_space<vmem>>, %arg8: memref<128x128xbf16, #tpu.memory_space<vmem>>, %arg9: memref<1x128xf32, #tpu.memory_space<vmem>>, %arg10: memref<1x128xf32, #tpu.memory_space<vmem>>, %arg11: memref<1x128xf32, #tpu.memory_space<vmem>>, %arg12: memref<128x128xf32, #tpu.memory_space<vmem>>, %arg13: memref<32x128xf32, #tpu.memory_space<vmem>>) attributes {dimension_semantics = [#tpu.dimension_semantics<parallel>], iteration_bounds = array<i64: 1>, scalar_prefetch = 0 : i64, scratch_operands = 0 : i64, tpu.core_type = #tpu.core_type<tc>, window_params = [{transform_indices = @transform_0, window_bounds = array<i64: 32, 24>}, {pipeline_mode = #tpu.pipeline_mode<synchronous>, transform_indices = @transform_1, window_bounds = array<i64: 1, 24>}, {pipeline_mode = #tpu.pipeline_mode<synchronous>, transform_indices = @transform_2, window_bounds = array<i64: 1, 24>}, {pipeline_mode = #tpu.pipeline_mode<synchronous>, transform_indices = @transform_3, window_bounds = array<i64: 24, 128>}, {pipeline_mode = #tpu.pipeline_mode<synchronous>, transform_indices = @transform_4, window_bounds = array<i64: 1, 128>}, {pipeline_mode = #tpu.pipeline_mode<synchronous>, transform_indices = @transform_5, window_bounds = array<i64: 128, 128>}, {pipeline_mode = #tpu.pipeline_mode<synchronous>, transform_indices = @transform_6, window_bounds = array<i64: 1, 128>}, {pipeline_mode = #tpu.pipeline_mode<synchronous>, transform_indices = @transform_7, window_bounds = array<i64: 128, 128>}, {pipeline_mode = #tpu.pipeline_mode<synchronous>, transform_indices = @transform_8, window_bounds = array<i64: 1, 128>}, {pipeline_mode = #tpu.pipeline_mode<synchronous>, transform_indices = @transform_9, window_bounds = array<i64: 1, 128>}, {pipeline_mode = #tpu.pipeline_mode<synchronous>, transform_indices = @transform_10, window_bounds = array<i64: 1, 128>}, {pipeline_mode = #tpu.pipeline_mode<synchronous>, transform_indices = @transform_11, window_bounds = array<i64: 128, 128>}, {transform_indices = @transform_12, window_bounds = array<i64: 32, 128>}]} {
    %c0 = arith.constant 0 : index
    %c0_0 = arith.constant 0 : index
    %0 = vector.load %arg1[%c0, %c0_0] : memref<32x24xf32, #tpu.memory_space<vmem>>, vector<32x24xf32>
    %c0_1 = arith.constant 0 : index
    %c0_2 = arith.constant 0 : index
    %1 = vector.load %arg2[%c0_1, %c0_2] : memref<1x24xf32, #tpu.memory_space<vmem>>, vector<1x24xf32>
    %2 = vector.broadcast %1 : vector<1x24xf32> to vector<32x24xf32>
    %3 = arith.subf %0, %2 : vector<32x24xf32>
    %c0_3 = arith.constant 0 : index
    %c0_4 = arith.constant 0 : index
    %4 = vector.load %arg3[%c0_3, %c0_4] : memref<1x24xf32, #tpu.memory_space<vmem>>, vector<1x24xf32>
    %5 = vector.broadcast %4 : vector<1x24xf32> to vector<32x24xf32>
    %6 = arith.mulf %3, %5 : vector<32x24xf32>
    %7 = arith.truncf %6 : vector<32x24xf32> to vector<32x24xbf16>
    %c0_5 = arith.constant 0 : index
    %c0_6 = arith.constant 0 : index
    %8 = vector.load %arg4[%c0_5, %c0_6] : memref<24x128xbf16, #tpu.memory_space<vmem>>, vector<24x128xbf16>
    %cst = arith.constant dense<0.000000e+00> : vector<32x128xf32>
    %9 = tpu.matmul %7, %8, %cst {dimension_numbers = #tpu.dot_dimension_numbers<[1], [0], [0], [1], [0, 0, 1, 1], [], []>} : vector<32x24xbf16>, vector<24x128xbf16>, vector<32x128xf32> -> vector<32x128xf32>
    %c0_7 = arith.constant 0 : index
    %c0_8 = arith.constant 0 : index
    %10 = vector.load %arg5[%c0_7, %c0_8] : memref<1x128xf32, #tpu.memory_space<vmem>>, vector<1x128xf32>
    %11 = vector.broadcast %10 : vector<1x128xf32> to vector<32x128xf32>
    %12 = arith.addf %9, %11 : vector<32x128xf32>
    %cst_9 = arith.constant 0.000000e+00 : f32
    %13 = vector.broadcast %cst_9 : f32 to vector<32x128xf32>
    %14 = arith.maximumf %12, %13 : vector<32x128xf32>
    %15 = arith.truncf %14 : vector<32x128xf32> to vector<32x128xbf16>
    %c0_10 = arith.constant 0 : index
    %c0_11 = arith.constant 0 : index
    %16 = vector.load %arg6[%c0_10, %c0_11] : memref<128x128xbf16, #tpu.memory_space<vmem>>, vector<128x128xbf16>
    %cst_12 = arith.constant dense<0.000000e+00> : vector<32x128xf32>
    %17 = tpu.matmul %15, %16, %cst_12 {dimension_numbers = #tpu.dot_dimension_numbers<[1], [0], [0], [1], [0, 0, 1, 1], [], []>} : vector<32x128xbf16>, vector<128x128xbf16>, vector<32x128xf32> -> vector<32x128xf32>
    %c0_13 = arith.constant 0 : index
    %c0_14 = arith.constant 0 : index
    %18 = vector.load %arg7[%c0_13, %c0_14] : memref<1x128xf32, #tpu.memory_space<vmem>>, vector<1x128xf32>
    %19 = vector.broadcast %18 : vector<1x128xf32> to vector<32x128xf32>
    %20 = arith.addf %17, %19 : vector<32x128xf32>
    %cst_15 = arith.constant 0.000000e+00 : f32
    %21 = vector.broadcast %cst_15 : f32 to vector<32x128xf32>
    %22 = arith.maximumf %20, %21 : vector<32x128xf32>
    %23 = arith.truncf %22 : vector<32x128xf32> to vector<32x128xbf16>
    %c0_16 = arith.constant 0 : index
    %c0_17 = arith.constant 0 : index
    %24 = vector.load %arg8[%c0_16, %c0_17] : memref<128x128xbf16, #tpu.memory_space<vmem>>, vector<128x128xbf16>
    %cst_18 = arith.constant dense<0.000000e+00> : vector<32x128xf32>
    %25 = tpu.matmul %23, %24, %cst_18 {dimension_numbers = #tpu.dot_dimension_numbers<[1], [0], [0], [1], [0, 0, 1, 1], [], []>} : vector<32x128xbf16>, vector<128x128xbf16>, vector<32x128xf32> -> vector<32x128xf32>
    %c0_19 = arith.constant 0 : index
    %c0_20 = arith.constant 0 : index
    %26 = vector.load %arg9[%c0_19, %c0_20] : memref<1x128xf32, #tpu.memory_space<vmem>>, vector<1x128xf32>
    %27 = vector.broadcast %26 : vector<1x128xf32> to vector<32x128xf32>
    %28 = arith.addf %25, %27 : vector<32x128xf32>
    %c0_21 = arith.constant 0 : index
    %c0_22 = arith.constant 0 : index
    %29 = vector.load %arg10[%c0_21, %c0_22] : memref<1x128xf32, #tpu.memory_space<vmem>>, vector<1x128xf32>
    %c0_23 = arith.constant 0 : index
    %c0_24 = arith.constant 0 : index
    %30 = vector.load %arg11[%c0_23, %c0_24] : memref<1x128xf32, #tpu.memory_space<vmem>>, vector<1x128xf32>
    %c0_25 = arith.constant 0 : index
    %c0_26 = arith.constant 0 : index
    %31 = vector.load %arg12[%c0_25, %c0_26] : memref<128x128xf32, #tpu.memory_space<vmem>>, vector<128x128xf32>
    %cst_27 = arith.constant dense<0.000000e+00> : vector<32x128xf32>
    %32 = tpu.matmul %28, %31, %cst_27 {dimension_numbers = #tpu.dot_dimension_numbers<[1], [0], [0], [1], [0, 0, 1, 1], [], []>} : vector<32x128xf32>, vector<128x128xf32>, vector<32x128xf32> -> vector<32x128xf32>
    %33 = arith.mulf %28, %28 : vector<32x128xf32>
    %cst_28 = arith.constant dense<0.000000e+00> : vector<32x128xf32>
    %34 = tpu.matmul %33, %31, %cst_28 {dimension_numbers = #tpu.dot_dimension_numbers<[1], [0], [0], [1], [0, 0, 1, 1], [], []>} : vector<32x128xf32>, vector<128x128xf32>, vector<32x128xf32> -> vector<32x128xf32>
    %35 = arith.mulf %32, %32 : vector<32x128xf32>
    %36 = arith.subf %34, %35 : vector<32x128xf32>
    %cst_29 = arith.constant 0.000000e+00 : f32
    %37 = vector.broadcast %cst_29 : f32 to vector<32x128xf32>
    %38 = arith.maximumf %36, %37 : vector<32x128xf32>
    %39 = arith.subf %28, %32 : vector<32x128xf32>
    %cst_30 = arith.constant 9.99999974E-6 : f32
    %40 = vector.broadcast %cst_30 : f32 to vector<32x128xf32>
    %41 = arith.addf %38, %40 : vector<32x128xf32>
    %42 = math.rsqrt %41 : vector<32x128xf32>
    %43 = arith.mulf %39, %42 : vector<32x128xf32>
    %44 = vector.broadcast %29 : vector<1x128xf32> to vector<32x128xf32>
    %45 = arith.mulf %43, %44 : vector<32x128xf32>
    %46 = vector.broadcast %30 : vector<1x128xf32> to vector<32x128xf32>
    %47 = arith.addf %45, %46 : vector<32x128xf32>
    %c0_31 = arith.constant 0 : index
    %c0_32 = arith.constant 0 : index
    %48 = vector.load %arg13[%c0_31, %c0_32] : memref<32x128xf32, #tpu.memory_space<vmem>>, vector<32x128xf32>
    tpu.vector_store %arg13[%c0_31, %c0_32], %47 {strides = array<i32>} : memref<32x128xf32, #tpu.memory_space<vmem>>, vector<32x128xf32>,
    return
  }
  func.func @transform_0(%arg0: i32) -> (i32, i32) {
    %c0_i32 = arith.constant 0 : i32
    %c0_i32_0 = arith.constant 0 : i32
    return %arg0, %c0_i32 : i32, i32
  }
  func.func @transform_1(%arg0: i32) -> (i32, i32) {
    %c0_i32 = arith.constant 0 : i32
    %c0_i32_0 = arith.constant 0 : i32
    %c0_i32_1 = arith.constant 0 : i32
    return %c0_i32, %c0_i32_0 : i32, i32
  }
  func.func @transform_2(%arg0: i32) -> (i32, i32) {
    %c0_i32 = arith.constant 0 : i32
    %c0_i32_0 = arith.constant 0 : i32
    %c0_i32_1 = arith.constant 0 : i32
    return %c0_i32, %c0_i32_0 : i32, i32
  }
  func.func @transform_3(%arg0: i32) -> (i32, i32) {
    %c0_i32 = arith.constant 0 : i32
    %c0_i32_0 = arith.constant 0 : i32
    %c0_i32_1 = arith.constant 0 : i32
    return %c0_i32, %c0_i32_0 : i32, i32
  }
  func.func @transform_4(%arg0: i32) -> (i32, i32) {
    %c0_i32 = arith.constant 0 : i32
    %c0_i32_0 = arith.constant 0 : i32
    %c0_i32_1 = arith.constant 0 : i32
    return %c0_i32, %c0_i32_0 : i32, i32
  }
  func.func @transform_5(%arg0: i32) -> (i32, i32) {
    %c0_i32 = arith.constant 0 : i32
    %c0_i32_0 = arith.constant 0 : i32
    %c0_i32_1 = arith.constant 0 : i32
    return %c0_i32, %c0_i32_0 : i32, i32
  }
  func.func @transform_6(%arg0: i32) -> (i32, i32) {
    %c0_i32 = arith.constant 0 : i32
    %c0_i32_0 = arith.constant 0 : i32
    %c0_i32_1 = arith.constant 0 : i32
    return %c0_i32, %c0_i32_0 : i32, i32
  }
  func.func @transform_7(%arg0: i32) -> (i32, i32) {
    %c0_i32 = arith.constant 0 : i32
    %c0_i32_0 = arith.constant 0 : i32
    %c0_i32_1 = arith.constant 0 : i32
    return %c0_i32, %c0_i32_0 : i32, i32
  }
  func.func @transform_8(%arg0: i32) -> (i32, i32) {
    %c0_i32 = arith.constant 0 : i32
    %c0_i32_0 = arith.constant 0 : i32
    %c0_i32_1 = arith.constant 0 : i32
    return %c0_i32, %c0_i32_0 : i32, i32
  }
  func.func @transform_9(%arg0: i32) -> (i32, i32) {
    %c0_i32 = arith.constant 0 : i32
    %c0_i32_0 = arith.constant 0 : i32
    %c0_i32_1 = arith.constant 0 : i32
    return %c0_i32, %c0_i32_0 : i32, i32
  }
  func.func @transform_10(%arg0: i32) -> (i32, i32) {
    %c0_i32 = arith.constant 0 : i32
    %c0_i32_0 = arith.constant 0 : i32
    %c0_i32_1 = arith.constant 0 : i32
    return %c0_i32, %c0_i32_0 : i32, i32
  }
  func.func @transform_11(%arg0: i32) -> (i32, i32) {
    %c0_i32 = arith.constant 0 : i32
    %c0_i32_0 = arith.constant 0 : i32
    %c0_i32_1 = arith.constant 0 : i32
    return %c0_i32, %c0_i32_0 : i32, i32
  }
  func.func @transform_12(%arg0: i32) -> (i32, i32) {
    %c0_i32 = arith.constant 0 : i32
    %c0_i32_0 = arith.constant 0 : i32
    return %arg0, %c0_i32 : i32, i32
  }
}

module attributes {stable_mosaic.version = 11 : i64} {
  func.func @kernel(%arg0: i32, %arg1: memref<64x128xf32, #tpu.memory_space<vmem>>, %arg2: memref<64x128xf32, #tpu.memory_space<vmem>>, %arg3: memref<64x8xf32, #tpu.memory_space<vmem>>, %arg4: memref<64x8xf32, #tpu.memory_space<vmem>>, %arg5: memref<128x128xbf16, #tpu.memory_space<vmem>>, %arg6: memref<128x128xbf16, #tpu.memory_space<vmem>>, %arg7: memref<8x128xf32, #tpu.memory_space<vmem>>, %arg8: memref<8x128xf32, #tpu.memory_space<vmem>>, %arg9: memref<1x128xf32, #tpu.memory_space<vmem>>, %arg10: memref<1x128xf32, #tpu.memory_space<vmem>>, %arg11: memref<128x128xbf16, #tpu.memory_space<vmem>>, %arg12: memref<1x128xf32, #tpu.memory_space<vmem>>, %arg13: memref<128x128xbf16, #tpu.memory_space<vmem>>, %arg14: memref<1x128xf32, #tpu.memory_space<vmem>>, %arg15: memref<1x128xf32, #tpu.memory_space<vmem>>, %arg16: memref<1x128xf32, #tpu.memory_space<vmem>>, %arg17: memref<128x128xf32, #tpu.memory_space<vmem>>, %arg18: memref<64x128xf32, #tpu.memory_space<vmem>>) attributes {dimension_semantics = [#tpu.dimension_semantics<parallel>], iteration_bounds = array<i64: 1>, scalar_prefetch = 0 : i64, scratch_operands = 0 : i64, tpu.core_type = #tpu.core_type<tc>, window_params = [{transform_indices = @transform_0, window_bounds = array<i64: 64, 128>}, {transform_indices = @transform_1, window_bounds = array<i64: 64, 128>}, {transform_indices = @transform_2, window_bounds = array<i64: 64, 8>}, {transform_indices = @transform_3, window_bounds = array<i64: 64, 8>}, {pipeline_mode = #tpu.pipeline_mode<synchronous>, transform_indices = @transform_4, window_bounds = array<i64: 128, 128>}, {pipeline_mode = #tpu.pipeline_mode<synchronous>, transform_indices = @transform_5, window_bounds = array<i64: 128, 128>}, {pipeline_mode = #tpu.pipeline_mode<synchronous>, transform_indices = @transform_6, window_bounds = array<i64: 8, 128>}, {pipeline_mode = #tpu.pipeline_mode<synchronous>, transform_indices = @transform_7, window_bounds = array<i64: 8, 128>}, {pipeline_mode = #tpu.pipeline_mode<synchronous>, transform_indices = @transform_8, window_bounds = array<i64: 1, 128>}, {pipeline_mode = #tpu.pipeline_mode<synchronous>, transform_indices = @transform_9, window_bounds = array<i64: 1, 128>}, {pipeline_mode = #tpu.pipeline_mode<synchronous>, transform_indices = @transform_10, window_bounds = array<i64: 128, 128>}, {pipeline_mode = #tpu.pipeline_mode<synchronous>, transform_indices = @transform_11, window_bounds = array<i64: 1, 128>}, {pipeline_mode = #tpu.pipeline_mode<synchronous>, transform_indices = @transform_12, window_bounds = array<i64: 128, 128>}, {pipeline_mode = #tpu.pipeline_mode<synchronous>, transform_indices = @transform_13, window_bounds = array<i64: 1, 128>}, {pipeline_mode = #tpu.pipeline_mode<synchronous>, transform_indices = @transform_14, window_bounds = array<i64: 1, 128>}, {pipeline_mode = #tpu.pipeline_mode<synchronous>, transform_indices = @transform_15, window_bounds = array<i64: 1, 128>}, {pipeline_mode = #tpu.pipeline_mode<synchronous>, transform_indices = @transform_16, window_bounds = array<i64: 128, 128>}, {transform_indices = @transform_17, window_bounds = array<i64: 64, 128>}]} {
    %c0 = arith.constant 0 : index
    %c0_0 = arith.constant 0 : index
    %0 = vector.load %arg1[%c0, %c0_0] : memref<64x128xf32, #tpu.memory_space<vmem>>, vector<64x128xf32>
    %c0_1 = arith.constant 0 : index
    %c0_2 = arith.constant 0 : index
    %1 = vector.load %arg2[%c0_1, %c0_2] : memref<64x128xf32, #tpu.memory_space<vmem>>, vector<64x128xf32>
    %c0_3 = arith.constant 0 : index
    %c0_4 = arith.constant 0 : index
    %2 = vector.load %arg3[%c0_3, %c0_4] : memref<64x8xf32, #tpu.memory_space<vmem>>, vector<64x8xf32>
    %c0_5 = arith.constant 0 : index
    %c0_6 = arith.constant 0 : index
    %3 = vector.load %arg4[%c0_5, %c0_6] : memref<64x8xf32, #tpu.memory_space<vmem>>, vector<64x8xf32>
    %4 = arith.subf %2, %3 : vector<64x8xf32>
    %5 = arith.mulf %4, %4 : vector<64x8xf32>
    %c0_7 = arith.constant 0 : index
    %c0_8 = arith.constant 0 : index
    %6 = vector.load %arg8[%c0_7, %c0_8] : memref<8x128xf32, #tpu.memory_space<vmem>>, vector<8x128xf32>
    %7 = vector.extract_strided_slice %5 {offsets = [0, 0], sizes = [64, 1], strides = [1, 1]} : vector<64x8xf32> to vector<64x1xf32>
    %8 = vector.extract_strided_slice %6 {offsets = [0, 0], sizes = [1, 128], strides = [1, 1]} : vector<8x128xf32> to vector<1x128xf32>
    %9 = vector.broadcast %7 : vector<64x1xf32> to vector<64x128xf32>
    %10 = vector.broadcast %8 : vector<1x128xf32> to vector<64x128xf32>
    %11 = arith.mulf %9, %10 : vector<64x128xf32>
    %12 = vector.extract_strided_slice %5 {offsets = [0, 1], sizes = [64, 1], strides = [1, 1]} : vector<64x8xf32> to vector<64x1xf32>
    %13 = vector.extract_strided_slice %6 {offsets = [1, 0], sizes = [1, 128], strides = [1, 1]} : vector<8x128xf32> to vector<1x128xf32>
    %14 = vector.broadcast %12 : vector<64x1xf32> to vector<64x128xf32>
    %15 = vector.broadcast %13 : vector<1x128xf32> to vector<64x128xf32>
    %16 = arith.mulf %14, %15 : vector<64x128xf32>
    %17 = arith.addf %11, %16 : vector<64x128xf32>
    %18 = vector.extract_strided_slice %5 {offsets = [0, 2], sizes = [64, 1], strides = [1, 1]} : vector<64x8xf32> to vector<64x1xf32>
    %19 = vector.extract_strided_slice %6 {offsets = [2, 0], sizes = [1, 128], strides = [1, 1]} : vector<8x128xf32> to vector<1x128xf32>
    %20 = vector.broadcast %18 : vector<64x1xf32> to vector<64x128xf32>
    %21 = vector.broadcast %19 : vector<1x128xf32> to vector<64x128xf32>
    %22 = arith.mulf %20, %21 : vector<64x128xf32>
    %23 = arith.addf %17, %22 : vector<64x128xf32>
    %24 = vector.extract_strided_slice %5 {offsets = [0, 3], sizes = [64, 1], strides = [1, 1]} : vector<64x8xf32> to vector<64x1xf32>
    %25 = vector.extract_strided_slice %6 {offsets = [3, 0], sizes = [1, 128], strides = [1, 1]} : vector<8x128xf32> to vector<1x128xf32>
    %26 = vector.broadcast %24 : vector<64x1xf32> to vector<64x128xf32>
    %27 = vector.broadcast %25 : vector<1x128xf32> to vector<64x128xf32>
    %28 = arith.mulf %26, %27 : vector<64x128xf32>
    %29 = arith.addf %23, %28 : vector<64x128xf32>
    %30 = vector.extract_strided_slice %5 {offsets = [0, 4], sizes = [64, 1], strides = [1, 1]} : vector<64x8xf32> to vector<64x1xf32>
    %31 = vector.extract_strided_slice %6 {offsets = [4, 0], sizes = [1, 128], strides = [1, 1]} : vector<8x128xf32> to vector<1x128xf32>
    %32 = vector.broadcast %30 : vector<64x1xf32> to vector<64x128xf32>
    %33 = vector.broadcast %31 : vector<1x128xf32> to vector<64x128xf32>
    %34 = arith.mulf %32, %33 : vector<64x128xf32>
    %35 = arith.addf %29, %34 : vector<64x128xf32>
    %36 = vector.extract_strided_slice %5 {offsets = [0, 5], sizes = [64, 1], strides = [1, 1]} : vector<64x8xf32> to vector<64x1xf32>
    %37 = vector.extract_strided_slice %6 {offsets = [5, 0], sizes = [1, 128], strides = [1, 1]} : vector<8x128xf32> to vector<1x128xf32>
    %38 = vector.broadcast %36 : vector<64x1xf32> to vector<64x128xf32>
    %39 = vector.broadcast %37 : vector<1x128xf32> to vector<64x128xf32>
    %40 = arith.mulf %38, %39 : vector<64x128xf32>
    %41 = arith.addf %35, %40 : vector<64x128xf32>
    %42 = vector.extract_strided_slice %5 {offsets = [0, 6], sizes = [64, 1], strides = [1, 1]} : vector<64x8xf32> to vector<64x1xf32>
    %43 = vector.extract_strided_slice %6 {offsets = [6, 0], sizes = [1, 128], strides = [1, 1]} : vector<8x128xf32> to vector<1x128xf32>
    %44 = vector.broadcast %42 : vector<64x1xf32> to vector<64x128xf32>
    %45 = vector.broadcast %43 : vector<1x128xf32> to vector<64x128xf32>
    %46 = arith.mulf %44, %45 : vector<64x128xf32>
    %47 = arith.addf %41, %46 : vector<64x128xf32>
    %48 = vector.extract_strided_slice %5 {offsets = [0, 7], sizes = [64, 1], strides = [1, 1]} : vector<64x8xf32> to vector<64x1xf32>
    %49 = vector.extract_strided_slice %6 {offsets = [7, 0], sizes = [1, 128], strides = [1, 1]} : vector<8x128xf32> to vector<1x128xf32>
    %50 = vector.broadcast %48 : vector<64x1xf32> to vector<64x128xf32>
    %51 = vector.broadcast %49 : vector<1x128xf32> to vector<64x128xf32>
    %52 = arith.mulf %50, %51 : vector<64x128xf32>
    %53 = arith.addf %47, %52 : vector<64x128xf32>
    %54 = math.sqrt %53 : vector<64x128xf32>
    %55 = arith.truncf %0 : vector<64x128xf32> to vector<64x128xbf16>
    %c0_9 = arith.constant 0 : index
    %c0_10 = arith.constant 0 : index
    %56 = vector.load %arg5[%c0_9, %c0_10] : memref<128x128xbf16, #tpu.memory_space<vmem>>, vector<128x128xbf16>
    %cst = arith.constant dense<0.000000e+00> : vector<64x128xf32>
    %57 = tpu.matmul %55, %56, %cst {dimension_numbers = #tpu.dot_dimension_numbers<[1], [0], [0], [1], [0, 0, 1, 1], [], []>} : vector<64x128xbf16>, vector<128x128xbf16>, vector<64x128xf32> -> vector<64x128xf32>
    %58 = arith.truncf %1 : vector<64x128xf32> to vector<64x128xbf16>
    %c0_11 = arith.constant 0 : index
    %c0_12 = arith.constant 0 : index
    %59 = vector.load %arg6[%c0_11, %c0_12] : memref<128x128xbf16, #tpu.memory_space<vmem>>, vector<128x128xbf16>
    %cst_13 = arith.constant dense<0.000000e+00> : vector<64x128xf32>
    %60 = tpu.matmul %58, %59, %cst_13 {dimension_numbers = #tpu.dot_dimension_numbers<[1], [0], [0], [1], [0, 0, 1, 1], [], []>} : vector<64x128xbf16>, vector<128x128xbf16>, vector<64x128xf32> -> vector<64x128xf32>
    %61 = arith.addf %57, %60 : vector<64x128xf32>
    %c0_14 = arith.constant 0 : index
    %c0_15 = arith.constant 0 : index
    %62 = vector.load %arg7[%c0_14, %c0_15] : memref<8x128xf32, #tpu.memory_space<vmem>>, vector<8x128xf32>
    %63 = vector.extract_strided_slice %4 {offsets = [0, 0], sizes = [64, 1], strides = [1, 1]} : vector<64x8xf32> to vector<64x1xf32>
    %64 = vector.extract_strided_slice %62 {offsets = [0, 0], sizes = [1, 128], strides = [1, 1]} : vector<8x128xf32> to vector<1x128xf32>
    %65 = vector.broadcast %63 : vector<64x1xf32> to vector<64x128xf32>
    %66 = vector.broadcast %64 : vector<1x128xf32> to vector<64x128xf32>
    %67 = arith.mulf %65, %66 : vector<64x128xf32>
    %68 = vector.extract_strided_slice %4 {offsets = [0, 1], sizes = [64, 1], strides = [1, 1]} : vector<64x8xf32> to vector<64x1xf32>
    %69 = vector.extract_strided_slice %62 {offsets = [1, 0], sizes = [1, 128], strides = [1, 1]} : vector<8x128xf32> to vector<1x128xf32>
    %70 = vector.broadcast %68 : vector<64x1xf32> to vector<64x128xf32>
    %71 = vector.broadcast %69 : vector<1x128xf32> to vector<64x128xf32>
    %72 = arith.mulf %70, %71 : vector<64x128xf32>
    %73 = arith.addf %67, %72 : vector<64x128xf32>
    %74 = vector.extract_strided_slice %4 {offsets = [0, 2], sizes = [64, 1], strides = [1, 1]} : vector<64x8xf32> to vector<64x1xf32>
    %75 = vector.extract_strided_slice %62 {offsets = [2, 0], sizes = [1, 128], strides = [1, 1]} : vector<8x128xf32> to vector<1x128xf32>
    %76 = vector.broadcast %74 : vector<64x1xf32> to vector<64x128xf32>
    %77 = vector.broadcast %75 : vector<1x128xf32> to vector<64x128xf32>
    %78 = arith.mulf %76, %77 : vector<64x128xf32>
    %79 = arith.addf %73, %78 : vector<64x128xf32>
    %80 = vector.extract_strided_slice %4 {offsets = [0, 3], sizes = [64, 1], strides = [1, 1]} : vector<64x8xf32> to vector<64x1xf32>
    %81 = vector.extract_strided_slice %62 {offsets = [3, 0], sizes = [1, 128], strides = [1, 1]} : vector<8x128xf32> to vector<1x128xf32>
    %82 = vector.broadcast %80 : vector<64x1xf32> to vector<64x128xf32>
    %83 = vector.broadcast %81 : vector<1x128xf32> to vector<64x128xf32>
    %84 = arith.mulf %82, %83 : vector<64x128xf32>
    %85 = arith.addf %79, %84 : vector<64x128xf32>
    %86 = vector.extract_strided_slice %4 {offsets = [0, 4], sizes = [64, 1], strides = [1, 1]} : vector<64x8xf32> to vector<64x1xf32>
    %87 = vector.extract_strided_slice %62 {offsets = [4, 0], sizes = [1, 128], strides = [1, 1]} : vector<8x128xf32> to vector<1x128xf32>
    %88 = vector.broadcast %86 : vector<64x1xf32> to vector<64x128xf32>
    %89 = vector.broadcast %87 : vector<1x128xf32> to vector<64x128xf32>
    %90 = arith.mulf %88, %89 : vector<64x128xf32>
    %91 = arith.addf %85, %90 : vector<64x128xf32>
    %92 = vector.extract_strided_slice %4 {offsets = [0, 5], sizes = [64, 1], strides = [1, 1]} : vector<64x8xf32> to vector<64x1xf32>
    %93 = vector.extract_strided_slice %62 {offsets = [5, 0], sizes = [1, 128], strides = [1, 1]} : vector<8x128xf32> to vector<1x128xf32>
    %94 = vector.broadcast %92 : vector<64x1xf32> to vector<64x128xf32>
    %95 = vector.broadcast %93 : vector<1x128xf32> to vector<64x128xf32>
    %96 = arith.mulf %94, %95 : vector<64x128xf32>
    %97 = arith.addf %91, %96 : vector<64x128xf32>
    %98 = vector.extract_strided_slice %4 {offsets = [0, 6], sizes = [64, 1], strides = [1, 1]} : vector<64x8xf32> to vector<64x1xf32>
    %99 = vector.extract_strided_slice %62 {offsets = [6, 0], sizes = [1, 128], strides = [1, 1]} : vector<8x128xf32> to vector<1x128xf32>
    %100 = vector.broadcast %98 : vector<64x1xf32> to vector<64x128xf32>
    %101 = vector.broadcast %99 : vector<1x128xf32> to vector<64x128xf32>
    %102 = arith.mulf %100, %101 : vector<64x128xf32>
    %103 = arith.addf %97, %102 : vector<64x128xf32>
    %104 = vector.extract_strided_slice %4 {offsets = [0, 7], sizes = [64, 1], strides = [1, 1]} : vector<64x8xf32> to vector<64x1xf32>
    %105 = vector.extract_strided_slice %62 {offsets = [7, 0], sizes = [1, 128], strides = [1, 1]} : vector<8x128xf32> to vector<1x128xf32>
    %106 = vector.broadcast %104 : vector<64x1xf32> to vector<64x128xf32>
    %107 = vector.broadcast %105 : vector<1x128xf32> to vector<64x128xf32>
    %108 = arith.mulf %106, %107 : vector<64x128xf32>
    %109 = arith.addf %103, %108 : vector<64x128xf32>
    %110 = arith.addf %61, %109 : vector<64x128xf32>
    %c0_16 = arith.constant 0 : index
    %c0_17 = arith.constant 0 : index
    %111 = vector.load %arg9[%c0_16, %c0_17] : memref<1x128xf32, #tpu.memory_space<vmem>>, vector<1x128xf32>
    %112 = vector.broadcast %111 : vector<1x128xf32> to vector<64x128xf32>
    %113 = arith.mulf %54, %112 : vector<64x128xf32>
    %114 = arith.addf %110, %113 : vector<64x128xf32>
    %c0_18 = arith.constant 0 : index
    %c0_19 = arith.constant 0 : index
    %115 = vector.load %arg10[%c0_18, %c0_19] : memref<1x128xf32, #tpu.memory_space<vmem>>, vector<1x128xf32>
    %116 = vector.broadcast %115 : vector<1x128xf32> to vector<64x128xf32>
    %117 = arith.addf %114, %116 : vector<64x128xf32>
    %cst_20 = arith.constant 0.000000e+00 : f32
    %118 = vector.broadcast %cst_20 : f32 to vector<64x128xf32>
    %119 = arith.maximumf %117, %118 : vector<64x128xf32>
    %120 = arith.truncf %119 : vector<64x128xf32> to vector<64x128xbf16>
    %c0_21 = arith.constant 0 : index
    %c0_22 = arith.constant 0 : index
    %121 = vector.load %arg11[%c0_21, %c0_22] : memref<128x128xbf16, #tpu.memory_space<vmem>>, vector<128x128xbf16>
    %cst_23 = arith.constant dense<0.000000e+00> : vector<64x128xf32>
    %122 = tpu.matmul %120, %121, %cst_23 {dimension_numbers = #tpu.dot_dimension_numbers<[1], [0], [0], [1], [0, 0, 1, 1], [], []>} : vector<64x128xbf16>, vector<128x128xbf16>, vector<64x128xf32> -> vector<64x128xf32>
    %c0_24 = arith.constant 0 : index
    %c0_25 = arith.constant 0 : index
    %123 = vector.load %arg12[%c0_24, %c0_25] : memref<1x128xf32, #tpu.memory_space<vmem>>, vector<1x128xf32>
    %124 = vector.broadcast %123 : vector<1x128xf32> to vector<64x128xf32>
    %125 = arith.addf %122, %124 : vector<64x128xf32>
    %cst_26 = arith.constant 0.000000e+00 : f32
    %126 = vector.broadcast %cst_26 : f32 to vector<64x128xf32>
    %127 = arith.maximumf %125, %126 : vector<64x128xf32>
    %128 = arith.truncf %127 : vector<64x128xf32> to vector<64x128xbf16>
    %c0_27 = arith.constant 0 : index
    %c0_28 = arith.constant 0 : index
    %129 = vector.load %arg13[%c0_27, %c0_28] : memref<128x128xbf16, #tpu.memory_space<vmem>>, vector<128x128xbf16>
    %cst_29 = arith.constant dense<0.000000e+00> : vector<64x128xf32>
    %130 = tpu.matmul %128, %129, %cst_29 {dimension_numbers = #tpu.dot_dimension_numbers<[1], [0], [0], [1], [0, 0, 1, 1], [], []>} : vector<64x128xbf16>, vector<128x128xbf16>, vector<64x128xf32> -> vector<64x128xf32>
    %c0_30 = arith.constant 0 : index
    %c0_31 = arith.constant 0 : index
    %131 = vector.load %arg14[%c0_30, %c0_31] : memref<1x128xf32, #tpu.memory_space<vmem>>, vector<1x128xf32>
    %132 = vector.broadcast %131 : vector<1x128xf32> to vector<64x128xf32>
    %133 = arith.addf %130, %132 : vector<64x128xf32>
    %c0_32 = arith.constant 0 : index
    %c0_33 = arith.constant 0 : index
    %134 = vector.load %arg15[%c0_32, %c0_33] : memref<1x128xf32, #tpu.memory_space<vmem>>, vector<1x128xf32>
    %c0_34 = arith.constant 0 : index
    %c0_35 = arith.constant 0 : index
    %135 = vector.load %arg16[%c0_34, %c0_35] : memref<1x128xf32, #tpu.memory_space<vmem>>, vector<1x128xf32>
    %c0_36 = arith.constant 0 : index
    %c0_37 = arith.constant 0 : index
    %136 = vector.load %arg17[%c0_36, %c0_37] : memref<128x128xf32, #tpu.memory_space<vmem>>, vector<128x128xf32>
    %cst_38 = arith.constant dense<0.000000e+00> : vector<64x128xf32>
    %137 = tpu.matmul %133, %136, %cst_38 {dimension_numbers = #tpu.dot_dimension_numbers<[1], [0], [0], [1], [0, 0, 1, 1], [], []>} : vector<64x128xf32>, vector<128x128xf32>, vector<64x128xf32> -> vector<64x128xf32>
    %138 = arith.mulf %133, %133 : vector<64x128xf32>
    %cst_39 = arith.constant dense<0.000000e+00> : vector<64x128xf32>
    %139 = tpu.matmul %138, %136, %cst_39 {dimension_numbers = #tpu.dot_dimension_numbers<[1], [0], [0], [1], [0, 0, 1, 1], [], []>} : vector<64x128xf32>, vector<128x128xf32>, vector<64x128xf32> -> vector<64x128xf32>
    %140 = arith.mulf %137, %137 : vector<64x128xf32>
    %141 = arith.subf %139, %140 : vector<64x128xf32>
    %cst_40 = arith.constant 0.000000e+00 : f32
    %142 = vector.broadcast %cst_40 : f32 to vector<64x128xf32>
    %143 = arith.maximumf %141, %142 : vector<64x128xf32>
    %144 = arith.subf %133, %137 : vector<64x128xf32>
    %cst_41 = arith.constant 9.99999974E-6 : f32
    %145 = vector.broadcast %cst_41 : f32 to vector<64x128xf32>
    %146 = arith.addf %143, %145 : vector<64x128xf32>
    %147 = math.rsqrt %146 : vector<64x128xf32>
    %148 = arith.mulf %144, %147 : vector<64x128xf32>
    %149 = vector.broadcast %134 : vector<1x128xf32> to vector<64x128xf32>
    %150 = arith.mulf %148, %149 : vector<64x128xf32>
    %151 = vector.broadcast %135 : vector<1x128xf32> to vector<64x128xf32>
    %152 = arith.addf %150, %151 : vector<64x128xf32>
    %c0_42 = arith.constant 0 : index
    %c0_43 = arith.constant 0 : index
    %153 = vector.load %arg18[%c0_42, %c0_43] : memref<64x128xf32, #tpu.memory_space<vmem>>, vector<64x128xf32>
    tpu.vector_store %arg18[%c0_42, %c0_43], %152 {strides = array<i32>} : memref<64x128xf32, #tpu.memory_space<vmem>>, vector<64x128xf32>,
    return
  }
  func.func @transform_0(%arg0: i32) -> (i32, i32) {
    %c0_i32 = arith.constant 0 : i32
    %c0_i32_0 = arith.constant 0 : i32
    return %arg0, %c0_i32 : i32, i32
  }
  func.func @transform_1(%arg0: i32) -> (i32, i32) {
    %c0_i32 = arith.constant 0 : i32
    %c0_i32_0 = arith.constant 0 : i32
    return %arg0, %c0_i32 : i32, i32
  }
  func.func @transform_2(%arg0: i32) -> (i32, i32) {
    %c0_i32 = arith.constant 0 : i32
    %c0_i32_0 = arith.constant 0 : i32
    return %arg0, %c0_i32 : i32, i32
  }
  func.func @transform_3(%arg0: i32) -> (i32, i32) {
    %c0_i32 = arith.constant 0 : i32
    %c0_i32_0 = arith.constant 0 : i32
    return %arg0, %c0_i32 : i32, i32
  }
  func.func @transform_4(%arg0: i32) -> (i32, i32) {
    %c0_i32 = arith.constant 0 : i32
    %c0_i32_0 = arith.constant 0 : i32
    %c0_i32_1 = arith.constant 0 : i32
    return %c0_i32, %c0_i32_0 : i32, i32
  }
  func.func @transform_5(%arg0: i32) -> (i32, i32) {
    %c0_i32 = arith.constant 0 : i32
    %c0_i32_0 = arith.constant 0 : i32
    %c0_i32_1 = arith.constant 0 : i32
    return %c0_i32, %c0_i32_0 : i32, i32
  }
  func.func @transform_6(%arg0: i32) -> (i32, i32) {
    %c0_i32 = arith.constant 0 : i32
    %c0_i32_0 = arith.constant 0 : i32
    %c0_i32_1 = arith.constant 0 : i32
    return %c0_i32, %c0_i32_0 : i32, i32
  }
  func.func @transform_7(%arg0: i32) -> (i32, i32) {
    %c0_i32 = arith.constant 0 : i32
    %c0_i32_0 = arith.constant 0 : i32
    %c0_i32_1 = arith.constant 0 : i32
    return %c0_i32, %c0_i32_0 : i32, i32
  }
  func.func @transform_8(%arg0: i32) -> (i32, i32) {
    %c0_i32 = arith.constant 0 : i32
    %c0_i32_0 = arith.constant 0 : i32
    %c0_i32_1 = arith.constant 0 : i32
    return %c0_i32, %c0_i32_0 : i32, i32
  }
  func.func @transform_9(%arg0: i32) -> (i32, i32) {
    %c0_i32 = arith.constant 0 : i32
    %c0_i32_0 = arith.constant 0 : i32
    %c0_i32_1 = arith.constant 0 : i32
    return %c0_i32, %c0_i32_0 : i32, i32
  }
  func.func @transform_10(%arg0: i32) -> (i32, i32) {
    %c0_i32 = arith.constant 0 : i32
    %c0_i32_0 = arith.constant 0 : i32
    %c0_i32_1 = arith.constant 0 : i32
    return %c0_i32, %c0_i32_0 : i32, i32
  }
  func.func @transform_11(%arg0: i32) -> (i32, i32) {
    %c0_i32 = arith.constant 0 : i32
    %c0_i32_0 = arith.constant 0 : i32
    %c0_i32_1 = arith.constant 0 : i32
    return %c0_i32, %c0_i32_0 : i32, i32
  }
  func.func @transform_12(%arg0: i32) -> (i32, i32) {
    %c0_i32 = arith.constant 0 : i32
    %c0_i32_0 = arith.constant 0 : i32
    %c0_i32_1 = arith.constant 0 : i32
    return %c0_i32, %c0_i32_0 : i32, i32
  }
  func.func @transform_13(%arg0: i32) -> (i32, i32) {
    %c0_i32 = arith.constant 0 : i32
    %c0_i32_0 = arith.constant 0 : i32
    %c0_i32_1 = arith.constant 0 : i32
    return %c0_i32, %c0_i32_0 : i32, i32
  }
  func.func @transform_14(%arg0: i32) -> (i32, i32) {
    %c0_i32 = arith.constant 0 : i32
    %c0_i32_0 = arith.constant 0 : i32
    %c0_i32_1 = arith.constant 0 : i32
    return %c0_i32, %c0_i32_0 : i32, i32
  }
  func.func @transform_15(%arg0: i32) -> (i32, i32) {
    %c0_i32 = arith.constant 0 : i32
    %c0_i32_0 = arith.constant 0 : i32
    %c0_i32_1 = arith.constant 0 : i32
    return %c0_i32, %c0_i32_0 : i32, i32
  }
  func.func @transform_16(%arg0: i32) -> (i32, i32) {
    %c0_i32 = arith.constant 0 : i32
    %c0_i32_0 = arith.constant 0 : i32
    %c0_i32_1 = arith.constant 0 : i32
    return %c0_i32, %c0_i32_0 : i32, i32
  }
  func.func @transform_17(%arg0: i32) -> (i32, i32) {
    %c0_i32 = arith.constant 0 : i32
    %c0_i32_0 = arith.constant 0 : i32
    return %arg0, %c0_i32 : i32, i32
  }
}

module attributes {stable_mosaic.version = 11 : i64} {
  func.func @kernel(%arg0: i32, %arg1: memref<32x128xf32, #tpu.memory_space<vmem>>, %arg2: memref<32x128xf32, #tpu.memory_space<vmem>>, %arg3: memref<128x128xbf16, #tpu.memory_space<vmem>>, %arg4: memref<128x128xbf16, #tpu.memory_space<vmem>>, %arg5: memref<1x128xf32, #tpu.memory_space<vmem>>, %arg6: memref<128x128xbf16, #tpu.memory_space<vmem>>, %arg7: memref<1x128xf32, #tpu.memory_space<vmem>>, %arg8: memref<128x128xbf16, #tpu.memory_space<vmem>>, %arg9: memref<1x128xf32, #tpu.memory_space<vmem>>, %arg10: memref<1x128xf32, #tpu.memory_space<vmem>>, %arg11: memref<1x128xf32, #tpu.memory_space<vmem>>, %arg12: memref<128x128xf32, #tpu.memory_space<vmem>>, %arg13: memref<32x128xf32, #tpu.memory_space<vmem>>) attributes {dimension_semantics = [#tpu.dimension_semantics<parallel>], iteration_bounds = array<i64: 1>, scalar_prefetch = 0 : i64, scratch_operands = 0 : i64, tpu.core_type = #tpu.core_type<tc>, window_params = [{transform_indices = @transform_0, window_bounds = array<i64: 32, 128>}, {transform_indices = @transform_1, window_bounds = array<i64: 32, 128>}, {pipeline_mode = #tpu.pipeline_mode<synchronous>, transform_indices = @transform_2, window_bounds = array<i64: 128, 128>}, {pipeline_mode = #tpu.pipeline_mode<synchronous>, transform_indices = @transform_3, window_bounds = array<i64: 128, 128>}, {pipeline_mode = #tpu.pipeline_mode<synchronous>, transform_indices = @transform_4, window_bounds = array<i64: 1, 128>}, {pipeline_mode = #tpu.pipeline_mode<synchronous>, transform_indices = @transform_5, window_bounds = array<i64: 128, 128>}, {pipeline_mode = #tpu.pipeline_mode<synchronous>, transform_indices = @transform_6, window_bounds = array<i64: 1, 128>}, {pipeline_mode = #tpu.pipeline_mode<synchronous>, transform_indices = @transform_7, window_bounds = array<i64: 128, 128>}, {pipeline_mode = #tpu.pipeline_mode<synchronous>, transform_indices = @transform_8, window_bounds = array<i64: 1, 128>}, {pipeline_mode = #tpu.pipeline_mode<synchronous>, transform_indices = @transform_9, window_bounds = array<i64: 1, 128>}, {pipeline_mode = #tpu.pipeline_mode<synchronous>, transform_indices = @transform_10, window_bounds = array<i64: 1, 128>}, {pipeline_mode = #tpu.pipeline_mode<synchronous>, transform_indices = @transform_11, window_bounds = array<i64: 128, 128>}, {transform_indices = @transform_12, window_bounds = array<i64: 32, 128>}]} {
    %c0 = arith.constant 0 : index
    %c0_0 = arith.constant 0 : index
    %0 = vector.load %arg1[%c0, %c0_0] : memref<32x128xf32, #tpu.memory_space<vmem>>, vector<32x128xf32>
    %1 = arith.truncf %0 : vector<32x128xf32> to vector<32x128xbf16>
    %c0_1 = arith.constant 0 : index
    %c0_2 = arith.constant 0 : index
    %2 = vector.load %arg3[%c0_1, %c0_2] : memref<128x128xbf16, #tpu.memory_space<vmem>>, vector<128x128xbf16>
    %cst = arith.constant dense<0.000000e+00> : vector<32x128xf32>
    %3 = tpu.matmul %1, %2, %cst {dimension_numbers = #tpu.dot_dimension_numbers<[1], [0], [0], [1], [0, 0, 1, 1], [], []>} : vector<32x128xbf16>, vector<128x128xbf16>, vector<32x128xf32> -> vector<32x128xf32>
    %c0_3 = arith.constant 0 : index
    %c0_4 = arith.constant 0 : index
    %4 = vector.load %arg2[%c0_3, %c0_4] : memref<32x128xf32, #tpu.memory_space<vmem>>, vector<32x128xf32>
    %5 = arith.truncf %4 : vector<32x128xf32> to vector<32x128xbf16>
    %c0_5 = arith.constant 0 : index
    %c0_6 = arith.constant 0 : index
    %6 = vector.load %arg4[%c0_5, %c0_6] : memref<128x128xbf16, #tpu.memory_space<vmem>>, vector<128x128xbf16>
    %cst_7 = arith.constant dense<0.000000e+00> : vector<32x128xf32>
    %7 = tpu.matmul %5, %6, %cst_7 {dimension_numbers = #tpu.dot_dimension_numbers<[1], [0], [0], [1], [0, 0, 1, 1], [], []>} : vector<32x128xbf16>, vector<128x128xbf16>, vector<32x128xf32> -> vector<32x128xf32>
    %8 = arith.addf %3, %7 : vector<32x128xf32>
    %c0_8 = arith.constant 0 : index
    %c0_9 = arith.constant 0 : index
    %9 = vector.load %arg5[%c0_8, %c0_9] : memref<1x128xf32, #tpu.memory_space<vmem>>, vector<1x128xf32>
    %10 = vector.broadcast %9 : vector<1x128xf32> to vector<32x128xf32>
    %11 = arith.addf %8, %10 : vector<32x128xf32>
    %cst_10 = arith.constant 0.000000e+00 : f32
    %12 = vector.broadcast %cst_10 : f32 to vector<32x128xf32>
    %13 = arith.maximumf %11, %12 : vector<32x128xf32>
    %14 = arith.truncf %13 : vector<32x128xf32> to vector<32x128xbf16>
    %c0_11 = arith.constant 0 : index
    %c0_12 = arith.constant 0 : index
    %15 = vector.load %arg6[%c0_11, %c0_12] : memref<128x128xbf16, #tpu.memory_space<vmem>>, vector<128x128xbf16>
    %cst_13 = arith.constant dense<0.000000e+00> : vector<32x128xf32>
    %16 = tpu.matmul %14, %15, %cst_13 {dimension_numbers = #tpu.dot_dimension_numbers<[1], [0], [0], [1], [0, 0, 1, 1], [], []>} : vector<32x128xbf16>, vector<128x128xbf16>, vector<32x128xf32> -> vector<32x128xf32>
    %c0_14 = arith.constant 0 : index
    %c0_15 = arith.constant 0 : index
    %17 = vector.load %arg7[%c0_14, %c0_15] : memref<1x128xf32, #tpu.memory_space<vmem>>, vector<1x128xf32>
    %18 = vector.broadcast %17 : vector<1x128xf32> to vector<32x128xf32>
    %19 = arith.addf %16, %18 : vector<32x128xf32>
    %cst_16 = arith.constant 0.000000e+00 : f32
    %20 = vector.broadcast %cst_16 : f32 to vector<32x128xf32>
    %21 = arith.maximumf %19, %20 : vector<32x128xf32>
    %22 = arith.truncf %21 : vector<32x128xf32> to vector<32x128xbf16>
    %c0_17 = arith.constant 0 : index
    %c0_18 = arith.constant 0 : index
    %23 = vector.load %arg8[%c0_17, %c0_18] : memref<128x128xbf16, #tpu.memory_space<vmem>>, vector<128x128xbf16>
    %cst_19 = arith.constant dense<0.000000e+00> : vector<32x128xf32>
    %24 = tpu.matmul %22, %23, %cst_19 {dimension_numbers = #tpu.dot_dimension_numbers<[1], [0], [0], [1], [0, 0, 1, 1], [], []>} : vector<32x128xbf16>, vector<128x128xbf16>, vector<32x128xf32> -> vector<32x128xf32>
    %c0_20 = arith.constant 0 : index
    %c0_21 = arith.constant 0 : index
    %25 = vector.load %arg9[%c0_20, %c0_21] : memref<1x128xf32, #tpu.memory_space<vmem>>, vector<1x128xf32>
    %26 = vector.broadcast %25 : vector<1x128xf32> to vector<32x128xf32>
    %27 = arith.addf %24, %26 : vector<32x128xf32>
    %c0_22 = arith.constant 0 : index
    %c0_23 = arith.constant 0 : index
    %28 = vector.load %arg10[%c0_22, %c0_23] : memref<1x128xf32, #tpu.memory_space<vmem>>, vector<1x128xf32>
    %c0_24 = arith.constant 0 : index
    %c0_25 = arith.constant 0 : index
    %29 = vector.load %arg11[%c0_24, %c0_25] : memref<1x128xf32, #tpu.memory_space<vmem>>, vector<1x128xf32>
    %c0_26 = arith.constant 0 : index
    %c0_27 = arith.constant 0 : index
    %30 = vector.load %arg12[%c0_26, %c0_27] : memref<128x128xf32, #tpu.memory_space<vmem>>, vector<128x128xf32>
    %cst_28 = arith.constant dense<0.000000e+00> : vector<32x128xf32>
    %31 = tpu.matmul %27, %30, %cst_28 {dimension_numbers = #tpu.dot_dimension_numbers<[1], [0], [0], [1], [0, 0, 1, 1], [], []>} : vector<32x128xf32>, vector<128x128xf32>, vector<32x128xf32> -> vector<32x128xf32>
    %32 = arith.mulf %27, %27 : vector<32x128xf32>
    %cst_29 = arith.constant dense<0.000000e+00> : vector<32x128xf32>
    %33 = tpu.matmul %32, %30, %cst_29 {dimension_numbers = #tpu.dot_dimension_numbers<[1], [0], [0], [1], [0, 0, 1, 1], [], []>} : vector<32x128xf32>, vector<128x128xf32>, vector<32x128xf32> -> vector<32x128xf32>
    %34 = arith.mulf %31, %31 : vector<32x128xf32>
    %35 = arith.subf %33, %34 : vector<32x128xf32>
    %cst_30 = arith.constant 0.000000e+00 : f32
    %36 = vector.broadcast %cst_30 : f32 to vector<32x128xf32>
    %37 = arith.maximumf %35, %36 : vector<32x128xf32>
    %38 = arith.subf %27, %31 : vector<32x128xf32>
    %cst_31 = arith.constant 9.99999974E-6 : f32
    %39 = vector.broadcast %cst_31 : f32 to vector<32x128xf32>
    %40 = arith.addf %37, %39 : vector<32x128xf32>
    %41 = math.rsqrt %40 : vector<32x128xf32>
    %42 = arith.mulf %38, %41 : vector<32x128xf32>
    %43 = vector.broadcast %28 : vector<1x128xf32> to vector<32x128xf32>
    %44 = arith.mulf %42, %43 : vector<32x128xf32>
    %45 = vector.broadcast %29 : vector<1x128xf32> to vector<32x128xf32>
    %46 = arith.addf %44, %45 : vector<32x128xf32>
    %47 = arith.addf %0, %46 : vector<32x128xf32>
    %c0_32 = arith.constant 0 : index
    %c0_33 = arith.constant 0 : index
    %48 = vector.load %arg13[%c0_32, %c0_33] : memref<32x128xf32, #tpu.memory_space<vmem>>, vector<32x128xf32>
    tpu.vector_store %arg13[%c0_32, %c0_33], %47 {strides = array<i32>} : memref<32x128xf32, #tpu.memory_space<vmem>>, vector<32x128xf32>,
    return
  }
  func.func @transform_0(%arg0: i32) -> (i32, i32) {
    %c0_i32 = arith.constant 0 : i32
    %c0_i32_0 = arith.constant 0 : i32
    return %arg0, %c0_i32 : i32, i32
  }
  func.func @transform_1(%arg0: i32) -> (i32, i32) {
    %c0_i32 = arith.constant 0 : i32
    %c0_i32_0 = arith.constant 0 : i32
    return %arg0, %c0_i32 : i32, i32
  }
  func.func @transform_2(%arg0: i32) -> (i32, i32) {
    %c0_i32 = arith.constant 0 : i32
    %c0_i32_0 = arith.constant 0 : i32
    %c0_i32_1 = arith.constant 0 : i32
    return %c0_i32, %c0_i32_0 : i32, i32
  }
  func.func @transform_3(%arg0: i32) -> (i32, i32) {
    %c0_i32 = arith.constant 0 : i32
    %c0_i32_0 = arith.constant 0 : i32
    %c0_i32_1 = arith.constant 0 : i32
    return %c0_i32, %c0_i32_0 : i32, i32
  }
  func.func @transform_4(%arg0: i32) -> (i32, i32) {
    %c0_i32 = arith.constant 0 : i32
    %c0_i32_0 = arith.constant 0 : i32
    %c0_i32_1 = arith.constant 0 : i32
    return %c0_i32, %c0_i32_0 : i32, i32
  }
  func.func @transform_5(%arg0: i32) -> (i32, i32) {
    %c0_i32 = arith.constant 0 : i32
    %c0_i32_0 = arith.constant 0 : i32
    %c0_i32_1 = arith.constant 0 : i32
    return %c0_i32, %c0_i32_0 : i32, i32
  }
  func.func @transform_6(%arg0: i32) -> (i32, i32) {
    %c0_i32 = arith.constant 0 : i32
    %c0_i32_0 = arith.constant 0 : i32
    %c0_i32_1 = arith.constant 0 : i32
    return %c0_i32, %c0_i32_0 : i32, i32
  }
  func.func @transform_7(%arg0: i32) -> (i32, i32) {
    %c0_i32 = arith.constant 0 : i32
    %c0_i32_0 = arith.constant 0 : i32
    %c0_i32_1 = arith.constant 0 : i32
    return %c0_i32, %c0_i32_0 : i32, i32
  }
  func.func @transform_8(%arg0: i32) -> (i32, i32) {
    %c0_i32 = arith.constant 0 : i32
    %c0_i32_0 = arith.constant 0 : i32
    %c0_i32_1 = arith.constant 0 : i32
    return %c0_i32, %c0_i32_0 : i32, i32
  }
  func.func @transform_9(%arg0: i32) -> (i32, i32) {
    %c0_i32 = arith.constant 0 : i32
    %c0_i32_0 = arith.constant 0 : i32
    %c0_i32_1 = arith.constant 0 : i32
    return %c0_i32, %c0_i32_0 : i32, i32
  }
  func.func @transform_10(%arg0: i32) -> (i32, i32) {
    %c0_i32 = arith.constant 0 : i32
    %c0_i32_0 = arith.constant 0 : i32
    %c0_i32_1 = arith.constant 0 : i32
    return %c0_i32, %c0_i32_0 : i32, i32
  }
  func.func @transform_11(%arg0: i32) -> (i32, i32) {
    %c0_i32 = arith.constant 0 : i32
    %c0_i32_0 = arith.constant 0 : i32
    %c0_i32_1 = arith.constant 0 : i32
    return %c0_i32, %c0_i32_0 : i32, i32
  }
  func.func @transform_12(%arg0: i32) -> (i32, i32) {
    %c0_i32 = arith.constant 0 : i32
    %c0_i32_0 = arith.constant 0 : i32
    return %arg0, %c0_i32 : i32, i32
  }
}

module attributes {stable_mosaic.version = 11 : i64} {
  func.func @kernel(%arg0: i32, %arg1: memref<32x128xf32, #tpu.memory_space<vmem>>, %arg2: memref<32x128xf32, #tpu.memory_space<vmem>>, %arg3: memref<32x8xf32, #tpu.memory_space<vmem>>, %arg4: memref<32x8xf32, #tpu.memory_space<vmem>>, %arg5: memref<128x128xbf16, #tpu.memory_space<vmem>>, %arg6: memref<128x128xbf16, #tpu.memory_space<vmem>>, %arg7: memref<8x128xf32, #tpu.memory_space<vmem>>, %arg8: memref<8x128xf32, #tpu.memory_space<vmem>>, %arg9: memref<1x128xf32, #tpu.memory_space<vmem>>, %arg10: memref<1x128xf32, #tpu.memory_space<vmem>>, %arg11: memref<128x128xbf16, #tpu.memory_space<vmem>>, %arg12: memref<1x128xf32, #tpu.memory_space<vmem>>, %arg13: memref<128x128xbf16, #tpu.memory_space<vmem>>, %arg14: memref<1x128xf32, #tpu.memory_space<vmem>>, %arg15: memref<1x128xf32, #tpu.memory_space<vmem>>, %arg16: memref<1x128xf32, #tpu.memory_space<vmem>>, %arg17: memref<128x128xf32, #tpu.memory_space<vmem>>, %arg18: memref<32x128xf32, #tpu.memory_space<vmem>>) attributes {dimension_semantics = [#tpu.dimension_semantics<parallel>], iteration_bounds = array<i64: 1>, scalar_prefetch = 0 : i64, scratch_operands = 0 : i64, tpu.core_type = #tpu.core_type<tc>, window_params = [{transform_indices = @transform_0, window_bounds = array<i64: 32, 128>}, {transform_indices = @transform_1, window_bounds = array<i64: 32, 128>}, {transform_indices = @transform_2, window_bounds = array<i64: 32, 8>}, {transform_indices = @transform_3, window_bounds = array<i64: 32, 8>}, {pipeline_mode = #tpu.pipeline_mode<synchronous>, transform_indices = @transform_4, window_bounds = array<i64: 128, 128>}, {pipeline_mode = #tpu.pipeline_mode<synchronous>, transform_indices = @transform_5, window_bounds = array<i64: 128, 128>}, {pipeline_mode = #tpu.pipeline_mode<synchronous>, transform_indices = @transform_6, window_bounds = array<i64: 8, 128>}, {pipeline_mode = #tpu.pipeline_mode<synchronous>, transform_indices = @transform_7, window_bounds = array<i64: 8, 128>}, {pipeline_mode = #tpu.pipeline_mode<synchronous>, transform_indices = @transform_8, window_bounds = array<i64: 1, 128>}, {pipeline_mode = #tpu.pipeline_mode<synchronous>, transform_indices = @transform_9, window_bounds = array<i64: 1, 128>}, {pipeline_mode = #tpu.pipeline_mode<synchronous>, transform_indices = @transform_10, window_bounds = array<i64: 128, 128>}, {pipeline_mode = #tpu.pipeline_mode<synchronous>, transform_indices = @transform_11, window_bounds = array<i64: 1, 128>}, {pipeline_mode = #tpu.pipeline_mode<synchronous>, transform_indices = @transform_12, window_bounds = array<i64: 128, 128>}, {pipeline_mode = #tpu.pipeline_mode<synchronous>, transform_indices = @transform_13, window_bounds = array<i64: 1, 128>}, {pipeline_mode = #tpu.pipeline_mode<synchronous>, transform_indices = @transform_14, window_bounds = array<i64: 1, 128>}, {pipeline_mode = #tpu.pipeline_mode<synchronous>, transform_indices = @transform_15, window_bounds = array<i64: 1, 128>}, {pipeline_mode = #tpu.pipeline_mode<synchronous>, transform_indices = @transform_16, window_bounds = array<i64: 128, 128>}, {transform_indices = @transform_17, window_bounds = array<i64: 32, 128>}]} {
    %c0 = arith.constant 0 : index
    %c0_0 = arith.constant 0 : index
    %0 = vector.load %arg1[%c0, %c0_0] : memref<32x128xf32, #tpu.memory_space<vmem>>, vector<32x128xf32>
    %c0_1 = arith.constant 0 : index
    %c0_2 = arith.constant 0 : index
    %1 = vector.load %arg2[%c0_1, %c0_2] : memref<32x128xf32, #tpu.memory_space<vmem>>, vector<32x128xf32>
    %c0_3 = arith.constant 0 : index
    %c0_4 = arith.constant 0 : index
    %2 = vector.load %arg3[%c0_3, %c0_4] : memref<32x8xf32, #tpu.memory_space<vmem>>, vector<32x8xf32>
    %c0_5 = arith.constant 0 : index
    %c0_6 = arith.constant 0 : index
    %3 = vector.load %arg4[%c0_5, %c0_6] : memref<32x8xf32, #tpu.memory_space<vmem>>, vector<32x8xf32>
    %4 = arith.subf %2, %3 : vector<32x8xf32>
    %5 = arith.mulf %4, %4 : vector<32x8xf32>
    %c0_7 = arith.constant 0 : index
    %c0_8 = arith.constant 0 : index
    %6 = vector.load %arg8[%c0_7, %c0_8] : memref<8x128xf32, #tpu.memory_space<vmem>>, vector<8x128xf32>
    %7 = vector.extract_strided_slice %5 {offsets = [0, 0], sizes = [32, 1], strides = [1, 1]} : vector<32x8xf32> to vector<32x1xf32>
    %8 = vector.extract_strided_slice %6 {offsets = [0, 0], sizes = [1, 128], strides = [1, 1]} : vector<8x128xf32> to vector<1x128xf32>
    %9 = vector.broadcast %7 : vector<32x1xf32> to vector<32x128xf32>
    %10 = vector.broadcast %8 : vector<1x128xf32> to vector<32x128xf32>
    %11 = arith.mulf %9, %10 : vector<32x128xf32>
    %12 = vector.extract_strided_slice %5 {offsets = [0, 1], sizes = [32, 1], strides = [1, 1]} : vector<32x8xf32> to vector<32x1xf32>
    %13 = vector.extract_strided_slice %6 {offsets = [1, 0], sizes = [1, 128], strides = [1, 1]} : vector<8x128xf32> to vector<1x128xf32>
    %14 = vector.broadcast %12 : vector<32x1xf32> to vector<32x128xf32>
    %15 = vector.broadcast %13 : vector<1x128xf32> to vector<32x128xf32>
    %16 = arith.mulf %14, %15 : vector<32x128xf32>
    %17 = arith.addf %11, %16 : vector<32x128xf32>
    %18 = vector.extract_strided_slice %5 {offsets = [0, 2], sizes = [32, 1], strides = [1, 1]} : vector<32x8xf32> to vector<32x1xf32>
    %19 = vector.extract_strided_slice %6 {offsets = [2, 0], sizes = [1, 128], strides = [1, 1]} : vector<8x128xf32> to vector<1x128xf32>
    %20 = vector.broadcast %18 : vector<32x1xf32> to vector<32x128xf32>
    %21 = vector.broadcast %19 : vector<1x128xf32> to vector<32x128xf32>
    %22 = arith.mulf %20, %21 : vector<32x128xf32>
    %23 = arith.addf %17, %22 : vector<32x128xf32>
    %24 = vector.extract_strided_slice %5 {offsets = [0, 3], sizes = [32, 1], strides = [1, 1]} : vector<32x8xf32> to vector<32x1xf32>
    %25 = vector.extract_strided_slice %6 {offsets = [3, 0], sizes = [1, 128], strides = [1, 1]} : vector<8x128xf32> to vector<1x128xf32>
    %26 = vector.broadcast %24 : vector<32x1xf32> to vector<32x128xf32>
    %27 = vector.broadcast %25 : vector<1x128xf32> to vector<32x128xf32>
    %28 = arith.mulf %26, %27 : vector<32x128xf32>
    %29 = arith.addf %23, %28 : vector<32x128xf32>
    %30 = vector.extract_strided_slice %5 {offsets = [0, 4], sizes = [32, 1], strides = [1, 1]} : vector<32x8xf32> to vector<32x1xf32>
    %31 = vector.extract_strided_slice %6 {offsets = [4, 0], sizes = [1, 128], strides = [1, 1]} : vector<8x128xf32> to vector<1x128xf32>
    %32 = vector.broadcast %30 : vector<32x1xf32> to vector<32x128xf32>
    %33 = vector.broadcast %31 : vector<1x128xf32> to vector<32x128xf32>
    %34 = arith.mulf %32, %33 : vector<32x128xf32>
    %35 = arith.addf %29, %34 : vector<32x128xf32>
    %36 = vector.extract_strided_slice %5 {offsets = [0, 5], sizes = [32, 1], strides = [1, 1]} : vector<32x8xf32> to vector<32x1xf32>
    %37 = vector.extract_strided_slice %6 {offsets = [5, 0], sizes = [1, 128], strides = [1, 1]} : vector<8x128xf32> to vector<1x128xf32>
    %38 = vector.broadcast %36 : vector<32x1xf32> to vector<32x128xf32>
    %39 = vector.broadcast %37 : vector<1x128xf32> to vector<32x128xf32>
    %40 = arith.mulf %38, %39 : vector<32x128xf32>
    %41 = arith.addf %35, %40 : vector<32x128xf32>
    %42 = vector.extract_strided_slice %5 {offsets = [0, 6], sizes = [32, 1], strides = [1, 1]} : vector<32x8xf32> to vector<32x1xf32>
    %43 = vector.extract_strided_slice %6 {offsets = [6, 0], sizes = [1, 128], strides = [1, 1]} : vector<8x128xf32> to vector<1x128xf32>
    %44 = vector.broadcast %42 : vector<32x1xf32> to vector<32x128xf32>
    %45 = vector.broadcast %43 : vector<1x128xf32> to vector<32x128xf32>
    %46 = arith.mulf %44, %45 : vector<32x128xf32>
    %47 = arith.addf %41, %46 : vector<32x128xf32>
    %48 = vector.extract_strided_slice %5 {offsets = [0, 7], sizes = [32, 1], strides = [1, 1]} : vector<32x8xf32> to vector<32x1xf32>
    %49 = vector.extract_strided_slice %6 {offsets = [7, 0], sizes = [1, 128], strides = [1, 1]} : vector<8x128xf32> to vector<1x128xf32>
    %50 = vector.broadcast %48 : vector<32x1xf32> to vector<32x128xf32>
    %51 = vector.broadcast %49 : vector<1x128xf32> to vector<32x128xf32>
    %52 = arith.mulf %50, %51 : vector<32x128xf32>
    %53 = arith.addf %47, %52 : vector<32x128xf32>
    %54 = math.sqrt %53 : vector<32x128xf32>
    %55 = arith.truncf %0 : vector<32x128xf32> to vector<32x128xbf16>
    %c0_9 = arith.constant 0 : index
    %c0_10 = arith.constant 0 : index
    %56 = vector.load %arg5[%c0_9, %c0_10] : memref<128x128xbf16, #tpu.memory_space<vmem>>, vector<128x128xbf16>
    %cst = arith.constant dense<0.000000e+00> : vector<32x128xf32>
    %57 = tpu.matmul %55, %56, %cst {dimension_numbers = #tpu.dot_dimension_numbers<[1], [0], [0], [1], [0, 0, 1, 1], [], []>} : vector<32x128xbf16>, vector<128x128xbf16>, vector<32x128xf32> -> vector<32x128xf32>
    %58 = arith.truncf %1 : vector<32x128xf32> to vector<32x128xbf16>
    %c0_11 = arith.constant 0 : index
    %c0_12 = arith.constant 0 : index
    %59 = vector.load %arg6[%c0_11, %c0_12] : memref<128x128xbf16, #tpu.memory_space<vmem>>, vector<128x128xbf16>
    %cst_13 = arith.constant dense<0.000000e+00> : vector<32x128xf32>
    %60 = tpu.matmul %58, %59, %cst_13 {dimension_numbers = #tpu.dot_dimension_numbers<[1], [0], [0], [1], [0, 0, 1, 1], [], []>} : vector<32x128xbf16>, vector<128x128xbf16>, vector<32x128xf32> -> vector<32x128xf32>
    %61 = arith.addf %57, %60 : vector<32x128xf32>
    %c0_14 = arith.constant 0 : index
    %c0_15 = arith.constant 0 : index
    %62 = vector.load %arg7[%c0_14, %c0_15] : memref<8x128xf32, #tpu.memory_space<vmem>>, vector<8x128xf32>
    %63 = vector.extract_strided_slice %4 {offsets = [0, 0], sizes = [32, 1], strides = [1, 1]} : vector<32x8xf32> to vector<32x1xf32>
    %64 = vector.extract_strided_slice %62 {offsets = [0, 0], sizes = [1, 128], strides = [1, 1]} : vector<8x128xf32> to vector<1x128xf32>
    %65 = vector.broadcast %63 : vector<32x1xf32> to vector<32x128xf32>
    %66 = vector.broadcast %64 : vector<1x128xf32> to vector<32x128xf32>
    %67 = arith.mulf %65, %66 : vector<32x128xf32>
    %68 = vector.extract_strided_slice %4 {offsets = [0, 1], sizes = [32, 1], strides = [1, 1]} : vector<32x8xf32> to vector<32x1xf32>
    %69 = vector.extract_strided_slice %62 {offsets = [1, 0], sizes = [1, 128], strides = [1, 1]} : vector<8x128xf32> to vector<1x128xf32>
    %70 = vector.broadcast %68 : vector<32x1xf32> to vector<32x128xf32>
    %71 = vector.broadcast %69 : vector<1x128xf32> to vector<32x128xf32>
    %72 = arith.mulf %70, %71 : vector<32x128xf32>
    %73 = arith.addf %67, %72 : vector<32x128xf32>
    %74 = vector.extract_strided_slice %4 {offsets = [0, 2], sizes = [32, 1], strides = [1, 1]} : vector<32x8xf32> to vector<32x1xf32>
    %75 = vector.extract_strided_slice %62 {offsets = [2, 0], sizes = [1, 128], strides = [1, 1]} : vector<8x128xf32> to vector<1x128xf32>
    %76 = vector.broadcast %74 : vector<32x1xf32> to vector<32x128xf32>
    %77 = vector.broadcast %75 : vector<1x128xf32> to vector<32x128xf32>
    %78 = arith.mulf %76, %77 : vector<32x128xf32>
    %79 = arith.addf %73, %78 : vector<32x128xf32>
    %80 = vector.extract_strided_slice %4 {offsets = [0, 3], sizes = [32, 1], strides = [1, 1]} : vector<32x8xf32> to vector<32x1xf32>
    %81 = vector.extract_strided_slice %62 {offsets = [3, 0], sizes = [1, 128], strides = [1, 1]} : vector<8x128xf32> to vector<1x128xf32>
    %82 = vector.broadcast %80 : vector<32x1xf32> to vector<32x128xf32>
    %83 = vector.broadcast %81 : vector<1x128xf32> to vector<32x128xf32>
    %84 = arith.mulf %82, %83 : vector<32x128xf32>
    %85 = arith.addf %79, %84 : vector<32x128xf32>
    %86 = vector.extract_strided_slice %4 {offsets = [0, 4], sizes = [32, 1], strides = [1, 1]} : vector<32x8xf32> to vector<32x1xf32>
    %87 = vector.extract_strided_slice %62 {offsets = [4, 0], sizes = [1, 128], strides = [1, 1]} : vector<8x128xf32> to vector<1x128xf32>
    %88 = vector.broadcast %86 : vector<32x1xf32> to vector<32x128xf32>
    %89 = vector.broadcast %87 : vector<1x128xf32> to vector<32x128xf32>
    %90 = arith.mulf %88, %89 : vector<32x128xf32>
    %91 = arith.addf %85, %90 : vector<32x128xf32>
    %92 = vector.extract_strided_slice %4 {offsets = [0, 5], sizes = [32, 1], strides = [1, 1]} : vector<32x8xf32> to vector<32x1xf32>
    %93 = vector.extract_strided_slice %62 {offsets = [5, 0], sizes = [1, 128], strides = [1, 1]} : vector<8x128xf32> to vector<1x128xf32>
    %94 = vector.broadcast %92 : vector<32x1xf32> to vector<32x128xf32>
    %95 = vector.broadcast %93 : vector<1x128xf32> to vector<32x128xf32>
    %96 = arith.mulf %94, %95 : vector<32x128xf32>
    %97 = arith.addf %91, %96 : vector<32x128xf32>
    %98 = vector.extract_strided_slice %4 {offsets = [0, 6], sizes = [32, 1], strides = [1, 1]} : vector<32x8xf32> to vector<32x1xf32>
    %99 = vector.extract_strided_slice %62 {offsets = [6, 0], sizes = [1, 128], strides = [1, 1]} : vector<8x128xf32> to vector<1x128xf32>
    %100 = vector.broadcast %98 : vector<32x1xf32> to vector<32x128xf32>
    %101 = vector.broadcast %99 : vector<1x128xf32> to vector<32x128xf32>
    %102 = arith.mulf %100, %101 : vector<32x128xf32>
    %103 = arith.addf %97, %102 : vector<32x128xf32>
    %104 = vector.extract_strided_slice %4 {offsets = [0, 7], sizes = [32, 1], strides = [1, 1]} : vector<32x8xf32> to vector<32x1xf32>
    %105 = vector.extract_strided_slice %62 {offsets = [7, 0], sizes = [1, 128], strides = [1, 1]} : vector<8x128xf32> to vector<1x128xf32>
    %106 = vector.broadcast %104 : vector<32x1xf32> to vector<32x128xf32>
    %107 = vector.broadcast %105 : vector<1x128xf32> to vector<32x128xf32>
    %108 = arith.mulf %106, %107 : vector<32x128xf32>
    %109 = arith.addf %103, %108 : vector<32x128xf32>
    %110 = arith.addf %61, %109 : vector<32x128xf32>
    %c0_16 = arith.constant 0 : index
    %c0_17 = arith.constant 0 : index
    %111 = vector.load %arg9[%c0_16, %c0_17] : memref<1x128xf32, #tpu.memory_space<vmem>>, vector<1x128xf32>
    %112 = vector.broadcast %111 : vector<1x128xf32> to vector<32x128xf32>
    %113 = arith.mulf %54, %112 : vector<32x128xf32>
    %114 = arith.addf %110, %113 : vector<32x128xf32>
    %c0_18 = arith.constant 0 : index
    %c0_19 = arith.constant 0 : index
    %115 = vector.load %arg10[%c0_18, %c0_19] : memref<1x128xf32, #tpu.memory_space<vmem>>, vector<1x128xf32>
    %116 = vector.broadcast %115 : vector<1x128xf32> to vector<32x128xf32>
    %117 = arith.addf %114, %116 : vector<32x128xf32>
    %cst_20 = arith.constant 0.000000e+00 : f32
    %118 = vector.broadcast %cst_20 : f32 to vector<32x128xf32>
    %119 = arith.maximumf %117, %118 : vector<32x128xf32>
    %120 = arith.truncf %119 : vector<32x128xf32> to vector<32x128xbf16>
    %c0_21 = arith.constant 0 : index
    %c0_22 = arith.constant 0 : index
    %121 = vector.load %arg11[%c0_21, %c0_22] : memref<128x128xbf16, #tpu.memory_space<vmem>>, vector<128x128xbf16>
    %cst_23 = arith.constant dense<0.000000e+00> : vector<32x128xf32>
    %122 = tpu.matmul %120, %121, %cst_23 {dimension_numbers = #tpu.dot_dimension_numbers<[1], [0], [0], [1], [0, 0, 1, 1], [], []>} : vector<32x128xbf16>, vector<128x128xbf16>, vector<32x128xf32> -> vector<32x128xf32>
    %c0_24 = arith.constant 0 : index
    %c0_25 = arith.constant 0 : index
    %123 = vector.load %arg12[%c0_24, %c0_25] : memref<1x128xf32, #tpu.memory_space<vmem>>, vector<1x128xf32>
    %124 = vector.broadcast %123 : vector<1x128xf32> to vector<32x128xf32>
    %125 = arith.addf %122, %124 : vector<32x128xf32>
    %cst_26 = arith.constant 0.000000e+00 : f32
    %126 = vector.broadcast %cst_26 : f32 to vector<32x128xf32>
    %127 = arith.maximumf %125, %126 : vector<32x128xf32>
    %128 = arith.truncf %127 : vector<32x128xf32> to vector<32x128xbf16>
    %c0_27 = arith.constant 0 : index
    %c0_28 = arith.constant 0 : index
    %129 = vector.load %arg13[%c0_27, %c0_28] : memref<128x128xbf16, #tpu.memory_space<vmem>>, vector<128x128xbf16>
    %cst_29 = arith.constant dense<0.000000e+00> : vector<32x128xf32>
    %130 = tpu.matmul %128, %129, %cst_29 {dimension_numbers = #tpu.dot_dimension_numbers<[1], [0], [0], [1], [0, 0, 1, 1], [], []>} : vector<32x128xbf16>, vector<128x128xbf16>, vector<32x128xf32> -> vector<32x128xf32>
    %c0_30 = arith.constant 0 : index
    %c0_31 = arith.constant 0 : index
    %131 = vector.load %arg14[%c0_30, %c0_31] : memref<1x128xf32, #tpu.memory_space<vmem>>, vector<1x128xf32>
    %132 = vector.broadcast %131 : vector<1x128xf32> to vector<32x128xf32>
    %133 = arith.addf %130, %132 : vector<32x128xf32>
    %c0_32 = arith.constant 0 : index
    %c0_33 = arith.constant 0 : index
    %134 = vector.load %arg15[%c0_32, %c0_33] : memref<1x128xf32, #tpu.memory_space<vmem>>, vector<1x128xf32>
    %c0_34 = arith.constant 0 : index
    %c0_35 = arith.constant 0 : index
    %135 = vector.load %arg16[%c0_34, %c0_35] : memref<1x128xf32, #tpu.memory_space<vmem>>, vector<1x128xf32>
    %c0_36 = arith.constant 0 : index
    %c0_37 = arith.constant 0 : index
    %136 = vector.load %arg17[%c0_36, %c0_37] : memref<128x128xf32, #tpu.memory_space<vmem>>, vector<128x128xf32>
    %cst_38 = arith.constant dense<0.000000e+00> : vector<32x128xf32>
    %137 = tpu.matmul %133, %136, %cst_38 {dimension_numbers = #tpu.dot_dimension_numbers<[1], [0], [0], [1], [0, 0, 1, 1], [], []>} : vector<32x128xf32>, vector<128x128xf32>, vector<32x128xf32> -> vector<32x128xf32>
    %138 = arith.mulf %133, %133 : vector<32x128xf32>
    %cst_39 = arith.constant dense<0.000000e+00> : vector<32x128xf32>
    %139 = tpu.matmul %138, %136, %cst_39 {dimension_numbers = #tpu.dot_dimension_numbers<[1], [0], [0], [1], [0, 0, 1, 1], [], []>} : vector<32x128xf32>, vector<128x128xf32>, vector<32x128xf32> -> vector<32x128xf32>
    %140 = arith.mulf %137, %137 : vector<32x128xf32>
    %141 = arith.subf %139, %140 : vector<32x128xf32>
    %cst_40 = arith.constant 0.000000e+00 : f32
    %142 = vector.broadcast %cst_40 : f32 to vector<32x128xf32>
    %143 = arith.maximumf %141, %142 : vector<32x128xf32>
    %144 = arith.subf %133, %137 : vector<32x128xf32>
    %cst_41 = arith.constant 9.99999974E-6 : f32
    %145 = vector.broadcast %cst_41 : f32 to vector<32x128xf32>
    %146 = arith.addf %143, %145 : vector<32x128xf32>
    %147 = math.rsqrt %146 : vector<32x128xf32>
    %148 = arith.mulf %144, %147 : vector<32x128xf32>
    %149 = vector.broadcast %134 : vector<1x128xf32> to vector<32x128xf32>
    %150 = arith.mulf %148, %149 : vector<32x128xf32>
    %151 = vector.broadcast %135 : vector<1x128xf32> to vector<32x128xf32>
    %152 = arith.addf %150, %151 : vector<32x128xf32>
    %c0_42 = arith.constant 0 : index
    %c0_43 = arith.constant 0 : index
    %153 = vector.load %arg18[%c0_42, %c0_43] : memref<32x128xf32, #tpu.memory_space<vmem>>, vector<32x128xf32>
    tpu.vector_store %arg18[%c0_42, %c0_43], %152 {strides = array<i32>} : memref<32x128xf32, #tpu.memory_space<vmem>>, vector<32x128xf32>,
    return
  }
  func.func @transform_0(%arg0: i32) -> (i32, i32) {
    %c0_i32 = arith.constant 0 : i32
    %c0_i32_0 = arith.constant 0 : i32
    return %arg0, %c0_i32 : i32, i32
  }
  func.func @transform_1(%arg0: i32) -> (i32, i32) {
    %c0_i32 = arith.constant 0 : i32
    %c0_i32_0 = arith.constant 0 : i32
    return %arg0, %c0_i32 : i32, i32
  }
  func.func @transform_2(%arg0: i32) -> (i32, i32) {
    %c0_i32 = arith.constant 0 : i32
    %c0_i32_0 = arith.constant 0 : i32
    return %arg0, %c0_i32 : i32, i32
  }
  func.func @transform_3(%arg0: i32) -> (i32, i32) {
    %c0_i32 = arith.constant 0 : i32
    %c0_i32_0 = arith.constant 0 : i32
    return %arg0, %c0_i32 : i32, i32
  }
  func.func @transform_4(%arg0: i32) -> (i32, i32) {
    %c0_i32 = arith.constant 0 : i32
    %c0_i32_0 = arith.constant 0 : i32
    %c0_i32_1 = arith.constant 0 : i32
    return %c0_i32, %c0_i32_0 : i32, i32
  }
  func.func @transform_5(%arg0: i32) -> (i32, i32) {
    %c0_i32 = arith.constant 0 : i32
    %c0_i32_0 = arith.constant 0 : i32
    %c0_i32_1 = arith.constant 0 : i32
    return %c0_i32, %c0_i32_0 : i32, i32
  }
  func.func @transform_6(%arg0: i32) -> (i32, i32) {
    %c0_i32 = arith.constant 0 : i32
    %c0_i32_0 = arith.constant 0 : i32
    %c0_i32_1 = arith.constant 0 : i32
    return %c0_i32, %c0_i32_0 : i32, i32
  }
  func.func @transform_7(%arg0: i32) -> (i32, i32) {
    %c0_i32 = arith.constant 0 : i32
    %c0_i32_0 = arith.constant 0 : i32
    %c0_i32_1 = arith.constant 0 : i32
    return %c0_i32, %c0_i32_0 : i32, i32
  }
  func.func @transform_8(%arg0: i32) -> (i32, i32) {
    %c0_i32 = arith.constant 0 : i32
    %c0_i32_0 = arith.constant 0 : i32
    %c0_i32_1 = arith.constant 0 : i32
    return %c0_i32, %c0_i32_0 : i32, i32
  }
  func.func @transform_9(%arg0: i32) -> (i32, i32) {
    %c0_i32 = arith.constant 0 : i32
    %c0_i32_0 = arith.constant 0 : i32
    %c0_i32_1 = arith.constant 0 : i32
    return %c0_i32, %c0_i32_0 : i32, i32
  }
  func.func @transform_10(%arg0: i32) -> (i32, i32) {
    %c0_i32 = arith.constant 0 : i32
    %c0_i32_0 = arith.constant 0 : i32
    %c0_i32_1 = arith.constant 0 : i32
    return %c0_i32, %c0_i32_0 : i32, i32
  }
  func.func @transform_11(%arg0: i32) -> (i32, i32) {
    %c0_i32 = arith.constant 0 : i32
    %c0_i32_0 = arith.constant 0 : i32
    %c0_i32_1 = arith.constant 0 : i32
    return %c0_i32, %c0_i32_0 : i32, i32
  }
  func.func @transform_12(%arg0: i32) -> (i32, i32) {
    %c0_i32 = arith.constant 0 : i32
    %c0_i32_0 = arith.constant 0 : i32
    %c0_i32_1 = arith.constant 0 : i32
    return %c0_i32, %c0_i32_0 : i32, i32
  }
  func.func @transform_13(%arg0: i32) -> (i32, i32) {
    %c0_i32 = arith.constant 0 : i32
    %c0_i32_0 = arith.constant 0 : i32
    %c0_i32_1 = arith.constant 0 : i32
    return %c0_i32, %c0_i32_0 : i32, i32
  }
  func.func @transform_14(%arg0: i32) -> (i32, i32) {
    %c0_i32 = arith.constant 0 : i32
    %c0_i32_0 = arith.constant 0 : i32
    %c0_i32_1 = arith.constant 0 : i32
    return %c0_i32, %c0_i32_0 : i32, i32
  }
  func.func @transform_15(%arg0: i32) -> (i32, i32) {
    %c0_i32 = arith.constant 0 : i32
    %c0_i32_0 = arith.constant 0 : i32
    %c0_i32_1 = arith.constant 0 : i32
    return %c0_i32, %c0_i32_0 : i32, i32
  }
  func.func @transform_16(%arg0: i32) -> (i32, i32) {
    %c0_i32 = arith.constant 0 : i32
    %c0_i32_0 = arith.constant 0 : i32
    %c0_i32_1 = arith.constant 0 : i32
    return %c0_i32, %c0_i32_0 : i32, i32
  }
  func.func @transform_17(%arg0: i32) -> (i32, i32) {
    %c0_i32 = arith.constant 0 : i32
    %c0_i32_0 = arith.constant 0 : i32
    return %arg0, %c0_i32 : i32, i32
  }
}

module attributes {stable_mosaic.version = 11 : i64} {
  func.func @kernel(%arg0: i32, %arg1: memref<16x128xf32, #tpu.memory_space<vmem>>, %arg2: memref<16x128xf32, #tpu.memory_space<vmem>>, %arg3: memref<128x128xbf16, #tpu.memory_space<vmem>>, %arg4: memref<128x128xbf16, #tpu.memory_space<vmem>>, %arg5: memref<1x128xf32, #tpu.memory_space<vmem>>, %arg6: memref<128x128xbf16, #tpu.memory_space<vmem>>, %arg7: memref<1x128xf32, #tpu.memory_space<vmem>>, %arg8: memref<128x128xbf16, #tpu.memory_space<vmem>>, %arg9: memref<1x128xf32, #tpu.memory_space<vmem>>, %arg10: memref<1x128xf32, #tpu.memory_space<vmem>>, %arg11: memref<1x128xf32, #tpu.memory_space<vmem>>, %arg12: memref<128x128xf32, #tpu.memory_space<vmem>>, %arg13: memref<16x128xf32, #tpu.memory_space<vmem>>) attributes {dimension_semantics = [#tpu.dimension_semantics<parallel>], iteration_bounds = array<i64: 1>, scalar_prefetch = 0 : i64, scratch_operands = 0 : i64, tpu.core_type = #tpu.core_type<tc>, window_params = [{transform_indices = @transform_0, window_bounds = array<i64: 16, 128>}, {transform_indices = @transform_1, window_bounds = array<i64: 16, 128>}, {pipeline_mode = #tpu.pipeline_mode<synchronous>, transform_indices = @transform_2, window_bounds = array<i64: 128, 128>}, {pipeline_mode = #tpu.pipeline_mode<synchronous>, transform_indices = @transform_3, window_bounds = array<i64: 128, 128>}, {pipeline_mode = #tpu.pipeline_mode<synchronous>, transform_indices = @transform_4, window_bounds = array<i64: 1, 128>}, {pipeline_mode = #tpu.pipeline_mode<synchronous>, transform_indices = @transform_5, window_bounds = array<i64: 128, 128>}, {pipeline_mode = #tpu.pipeline_mode<synchronous>, transform_indices = @transform_6, window_bounds = array<i64: 1, 128>}, {pipeline_mode = #tpu.pipeline_mode<synchronous>, transform_indices = @transform_7, window_bounds = array<i64: 128, 128>}, {pipeline_mode = #tpu.pipeline_mode<synchronous>, transform_indices = @transform_8, window_bounds = array<i64: 1, 128>}, {pipeline_mode = #tpu.pipeline_mode<synchronous>, transform_indices = @transform_9, window_bounds = array<i64: 1, 128>}, {pipeline_mode = #tpu.pipeline_mode<synchronous>, transform_indices = @transform_10, window_bounds = array<i64: 1, 128>}, {pipeline_mode = #tpu.pipeline_mode<synchronous>, transform_indices = @transform_11, window_bounds = array<i64: 128, 128>}, {transform_indices = @transform_12, window_bounds = array<i64: 16, 128>}]} {
    %c0 = arith.constant 0 : index
    %c0_0 = arith.constant 0 : index
    %0 = vector.load %arg1[%c0, %c0_0] : memref<16x128xf32, #tpu.memory_space<vmem>>, vector<16x128xf32>
    %1 = arith.truncf %0 : vector<16x128xf32> to vector<16x128xbf16>
    %c0_1 = arith.constant 0 : index
    %c0_2 = arith.constant 0 : index
    %2 = vector.load %arg3[%c0_1, %c0_2] : memref<128x128xbf16, #tpu.memory_space<vmem>>, vector<128x128xbf16>
    %cst = arith.constant dense<0.000000e+00> : vector<16x128xf32>
    %3 = tpu.matmul %1, %2, %cst {dimension_numbers = #tpu.dot_dimension_numbers<[1], [0], [0], [1], [0, 0, 1, 1], [], []>} : vector<16x128xbf16>, vector<128x128xbf16>, vector<16x128xf32> -> vector<16x128xf32>
    %c0_3 = arith.constant 0 : index
    %c0_4 = arith.constant 0 : index
    %4 = vector.load %arg2[%c0_3, %c0_4] : memref<16x128xf32, #tpu.memory_space<vmem>>, vector<16x128xf32>
    %5 = arith.truncf %4 : vector<16x128xf32> to vector<16x128xbf16>
    %c0_5 = arith.constant 0 : index
    %c0_6 = arith.constant 0 : index
    %6 = vector.load %arg4[%c0_5, %c0_6] : memref<128x128xbf16, #tpu.memory_space<vmem>>, vector<128x128xbf16>
    %cst_7 = arith.constant dense<0.000000e+00> : vector<16x128xf32>
    %7 = tpu.matmul %5, %6, %cst_7 {dimension_numbers = #tpu.dot_dimension_numbers<[1], [0], [0], [1], [0, 0, 1, 1], [], []>} : vector<16x128xbf16>, vector<128x128xbf16>, vector<16x128xf32> -> vector<16x128xf32>
    %8 = arith.addf %3, %7 : vector<16x128xf32>
    %c0_8 = arith.constant 0 : index
    %c0_9 = arith.constant 0 : index
    %9 = vector.load %arg5[%c0_8, %c0_9] : memref<1x128xf32, #tpu.memory_space<vmem>>, vector<1x128xf32>
    %10 = vector.broadcast %9 : vector<1x128xf32> to vector<16x128xf32>
    %11 = arith.addf %8, %10 : vector<16x128xf32>
    %cst_10 = arith.constant 0.000000e+00 : f32
    %12 = vector.broadcast %cst_10 : f32 to vector<16x128xf32>
    %13 = arith.maximumf %11, %12 : vector<16x128xf32>
    %14 = arith.truncf %13 : vector<16x128xf32> to vector<16x128xbf16>
    %c0_11 = arith.constant 0 : index
    %c0_12 = arith.constant 0 : index
    %15 = vector.load %arg6[%c0_11, %c0_12] : memref<128x128xbf16, #tpu.memory_space<vmem>>, vector<128x128xbf16>
    %cst_13 = arith.constant dense<0.000000e+00> : vector<16x128xf32>
    %16 = tpu.matmul %14, %15, %cst_13 {dimension_numbers = #tpu.dot_dimension_numbers<[1], [0], [0], [1], [0, 0, 1, 1], [], []>} : vector<16x128xbf16>, vector<128x128xbf16>, vector<16x128xf32> -> vector<16x128xf32>
    %c0_14 = arith.constant 0 : index
    %c0_15 = arith.constant 0 : index
    %17 = vector.load %arg7[%c0_14, %c0_15] : memref<1x128xf32, #tpu.memory_space<vmem>>, vector<1x128xf32>
    %18 = vector.broadcast %17 : vector<1x128xf32> to vector<16x128xf32>
    %19 = arith.addf %16, %18 : vector<16x128xf32>
    %cst_16 = arith.constant 0.000000e+00 : f32
    %20 = vector.broadcast %cst_16 : f32 to vector<16x128xf32>
    %21 = arith.maximumf %19, %20 : vector<16x128xf32>
    %22 = arith.truncf %21 : vector<16x128xf32> to vector<16x128xbf16>
    %c0_17 = arith.constant 0 : index
    %c0_18 = arith.constant 0 : index
    %23 = vector.load %arg8[%c0_17, %c0_18] : memref<128x128xbf16, #tpu.memory_space<vmem>>, vector<128x128xbf16>
    %cst_19 = arith.constant dense<0.000000e+00> : vector<16x128xf32>
    %24 = tpu.matmul %22, %23, %cst_19 {dimension_numbers = #tpu.dot_dimension_numbers<[1], [0], [0], [1], [0, 0, 1, 1], [], []>} : vector<16x128xbf16>, vector<128x128xbf16>, vector<16x128xf32> -> vector<16x128xf32>
    %c0_20 = arith.constant 0 : index
    %c0_21 = arith.constant 0 : index
    %25 = vector.load %arg9[%c0_20, %c0_21] : memref<1x128xf32, #tpu.memory_space<vmem>>, vector<1x128xf32>
    %26 = vector.broadcast %25 : vector<1x128xf32> to vector<16x128xf32>
    %27 = arith.addf %24, %26 : vector<16x128xf32>
    %c0_22 = arith.constant 0 : index
    %c0_23 = arith.constant 0 : index
    %28 = vector.load %arg10[%c0_22, %c0_23] : memref<1x128xf32, #tpu.memory_space<vmem>>, vector<1x128xf32>
    %c0_24 = arith.constant 0 : index
    %c0_25 = arith.constant 0 : index
    %29 = vector.load %arg11[%c0_24, %c0_25] : memref<1x128xf32, #tpu.memory_space<vmem>>, vector<1x128xf32>
    %c0_26 = arith.constant 0 : index
    %c0_27 = arith.constant 0 : index
    %30 = vector.load %arg12[%c0_26, %c0_27] : memref<128x128xf32, #tpu.memory_space<vmem>>, vector<128x128xf32>
    %cst_28 = arith.constant dense<0.000000e+00> : vector<16x128xf32>
    %31 = tpu.matmul %27, %30, %cst_28 {dimension_numbers = #tpu.dot_dimension_numbers<[1], [0], [0], [1], [0, 0, 1, 1], [], []>} : vector<16x128xf32>, vector<128x128xf32>, vector<16x128xf32> -> vector<16x128xf32>
    %32 = arith.mulf %27, %27 : vector<16x128xf32>
    %cst_29 = arith.constant dense<0.000000e+00> : vector<16x128xf32>
    %33 = tpu.matmul %32, %30, %cst_29 {dimension_numbers = #tpu.dot_dimension_numbers<[1], [0], [0], [1], [0, 0, 1, 1], [], []>} : vector<16x128xf32>, vector<128x128xf32>, vector<16x128xf32> -> vector<16x128xf32>
    %34 = arith.mulf %31, %31 : vector<16x128xf32>
    %35 = arith.subf %33, %34 : vector<16x128xf32>
    %cst_30 = arith.constant 0.000000e+00 : f32
    %36 = vector.broadcast %cst_30 : f32 to vector<16x128xf32>
    %37 = arith.maximumf %35, %36 : vector<16x128xf32>
    %38 = arith.subf %27, %31 : vector<16x128xf32>
    %cst_31 = arith.constant 9.99999974E-6 : f32
    %39 = vector.broadcast %cst_31 : f32 to vector<16x128xf32>
    %40 = arith.addf %37, %39 : vector<16x128xf32>
    %41 = math.rsqrt %40 : vector<16x128xf32>
    %42 = arith.mulf %38, %41 : vector<16x128xf32>
    %43 = vector.broadcast %28 : vector<1x128xf32> to vector<16x128xf32>
    %44 = arith.mulf %42, %43 : vector<16x128xf32>
    %45 = vector.broadcast %29 : vector<1x128xf32> to vector<16x128xf32>
    %46 = arith.addf %44, %45 : vector<16x128xf32>
    %47 = arith.addf %0, %46 : vector<16x128xf32>
    %c0_32 = arith.constant 0 : index
    %c0_33 = arith.constant 0 : index
    %48 = vector.load %arg13[%c0_32, %c0_33] : memref<16x128xf32, #tpu.memory_space<vmem>>, vector<16x128xf32>
    tpu.vector_store %arg13[%c0_32, %c0_33], %47 {strides = array<i32>} : memref<16x128xf32, #tpu.memory_space<vmem>>, vector<16x128xf32>,
    return
  }
  func.func @transform_0(%arg0: i32) -> (i32, i32) {
    %c0_i32 = arith.constant 0 : i32
    %c0_i32_0 = arith.constant 0 : i32
    return %arg0, %c0_i32 : i32, i32
  }
  func.func @transform_1(%arg0: i32) -> (i32, i32) {
    %c0_i32 = arith.constant 0 : i32
    %c0_i32_0 = arith.constant 0 : i32
    return %arg0, %c0_i32 : i32, i32
  }
  func.func @transform_2(%arg0: i32) -> (i32, i32) {
    %c0_i32 = arith.constant 0 : i32
    %c0_i32_0 = arith.constant 0 : i32
    %c0_i32_1 = arith.constant 0 : i32
    return %c0_i32, %c0_i32_0 : i32, i32
  }
  func.func @transform_3(%arg0: i32) -> (i32, i32) {
    %c0_i32 = arith.constant 0 : i32
    %c0_i32_0 = arith.constant 0 : i32
    %c0_i32_1 = arith.constant 0 : i32
    return %c0_i32, %c0_i32_0 : i32, i32
  }
  func.func @transform_4(%arg0: i32) -> (i32, i32) {
    %c0_i32 = arith.constant 0 : i32
    %c0_i32_0 = arith.constant 0 : i32
    %c0_i32_1 = arith.constant 0 : i32
    return %c0_i32, %c0_i32_0 : i32, i32
  }
  func.func @transform_5(%arg0: i32) -> (i32, i32) {
    %c0_i32 = arith.constant 0 : i32
    %c0_i32_0 = arith.constant 0 : i32
    %c0_i32_1 = arith.constant 0 : i32
    return %c0_i32, %c0_i32_0 : i32, i32
  }
  func.func @transform_6(%arg0: i32) -> (i32, i32) {
    %c0_i32 = arith.constant 0 : i32
    %c0_i32_0 = arith.constant 0 : i32
    %c0_i32_1 = arith.constant 0 : i32
    return %c0_i32, %c0_i32_0 : i32, i32
  }
  func.func @transform_7(%arg0: i32) -> (i32, i32) {
    %c0_i32 = arith.constant 0 : i32
    %c0_i32_0 = arith.constant 0 : i32
    %c0_i32_1 = arith.constant 0 : i32
    return %c0_i32, %c0_i32_0 : i32, i32
  }
  func.func @transform_8(%arg0: i32) -> (i32, i32) {
    %c0_i32 = arith.constant 0 : i32
    %c0_i32_0 = arith.constant 0 : i32
    %c0_i32_1 = arith.constant 0 : i32
    return %c0_i32, %c0_i32_0 : i32, i32
  }
  func.func @transform_9(%arg0: i32) -> (i32, i32) {
    %c0_i32 = arith.constant 0 : i32
    %c0_i32_0 = arith.constant 0 : i32
    %c0_i32_1 = arith.constant 0 : i32
    return %c0_i32, %c0_i32_0 : i32, i32
  }
  func.func @transform_10(%arg0: i32) -> (i32, i32) {
    %c0_i32 = arith.constant 0 : i32
    %c0_i32_0 = arith.constant 0 : i32
    %c0_i32_1 = arith.constant 0 : i32
    return %c0_i32, %c0_i32_0 : i32, i32
  }
  func.func @transform_11(%arg0: i32) -> (i32, i32) {
    %c0_i32 = arith.constant 0 : i32
    %c0_i32_0 = arith.constant 0 : i32
    %c0_i32_1 = arith.constant 0 : i32
    return %c0_i32, %c0_i32_0 : i32, i32
  }
  func.func @transform_12(%arg0: i32) -> (i32, i32) {
    %c0_i32 = arith.constant 0 : i32
    %c0_i32_0 = arith.constant 0 : i32
    return %arg0, %c0_i32 : i32, i32
  }
}

module attributes {stable_mosaic.version = 11 : i64} {
  func.func @kernel(%arg0: i32, %arg1: memref<16x128xf32, #tpu.memory_space<vmem>>, %arg2: memref<16x128xf32, #tpu.memory_space<vmem>>, %arg3: memref<16x8xf32, #tpu.memory_space<vmem>>, %arg4: memref<16x8xf32, #tpu.memory_space<vmem>>, %arg5: memref<128x128xbf16, #tpu.memory_space<vmem>>, %arg6: memref<128x128xbf16, #tpu.memory_space<vmem>>, %arg7: memref<8x128xf32, #tpu.memory_space<vmem>>, %arg8: memref<8x128xf32, #tpu.memory_space<vmem>>, %arg9: memref<1x128xf32, #tpu.memory_space<vmem>>, %arg10: memref<1x128xf32, #tpu.memory_space<vmem>>, %arg11: memref<128x128xbf16, #tpu.memory_space<vmem>>, %arg12: memref<1x128xf32, #tpu.memory_space<vmem>>, %arg13: memref<128x128xbf16, #tpu.memory_space<vmem>>, %arg14: memref<1x128xf32, #tpu.memory_space<vmem>>, %arg15: memref<1x128xf32, #tpu.memory_space<vmem>>, %arg16: memref<1x128xf32, #tpu.memory_space<vmem>>, %arg17: memref<128x128xf32, #tpu.memory_space<vmem>>, %arg18: memref<16x128xf32, #tpu.memory_space<vmem>>) attributes {dimension_semantics = [#tpu.dimension_semantics<parallel>], iteration_bounds = array<i64: 1>, scalar_prefetch = 0 : i64, scratch_operands = 0 : i64, tpu.core_type = #tpu.core_type<tc>, window_params = [{transform_indices = @transform_0, window_bounds = array<i64: 16, 128>}, {transform_indices = @transform_1, window_bounds = array<i64: 16, 128>}, {transform_indices = @transform_2, window_bounds = array<i64: 16, 8>}, {transform_indices = @transform_3, window_bounds = array<i64: 16, 8>}, {pipeline_mode = #tpu.pipeline_mode<synchronous>, transform_indices = @transform_4, window_bounds = array<i64: 128, 128>}, {pipeline_mode = #tpu.pipeline_mode<synchronous>, transform_indices = @transform_5, window_bounds = array<i64: 128, 128>}, {pipeline_mode = #tpu.pipeline_mode<synchronous>, transform_indices = @transform_6, window_bounds = array<i64: 8, 128>}, {pipeline_mode = #tpu.pipeline_mode<synchronous>, transform_indices = @transform_7, window_bounds = array<i64: 8, 128>}, {pipeline_mode = #tpu.pipeline_mode<synchronous>, transform_indices = @transform_8, window_bounds = array<i64: 1, 128>}, {pipeline_mode = #tpu.pipeline_mode<synchronous>, transform_indices = @transform_9, window_bounds = array<i64: 1, 128>}, {pipeline_mode = #tpu.pipeline_mode<synchronous>, transform_indices = @transform_10, window_bounds = array<i64: 128, 128>}, {pipeline_mode = #tpu.pipeline_mode<synchronous>, transform_indices = @transform_11, window_bounds = array<i64: 1, 128>}, {pipeline_mode = #tpu.pipeline_mode<synchronous>, transform_indices = @transform_12, window_bounds = array<i64: 128, 128>}, {pipeline_mode = #tpu.pipeline_mode<synchronous>, transform_indices = @transform_13, window_bounds = array<i64: 1, 128>}, {pipeline_mode = #tpu.pipeline_mode<synchronous>, transform_indices = @transform_14, window_bounds = array<i64: 1, 128>}, {pipeline_mode = #tpu.pipeline_mode<synchronous>, transform_indices = @transform_15, window_bounds = array<i64: 1, 128>}, {pipeline_mode = #tpu.pipeline_mode<synchronous>, transform_indices = @transform_16, window_bounds = array<i64: 128, 128>}, {transform_indices = @transform_17, window_bounds = array<i64: 16, 128>}]} {
    %c0 = arith.constant 0 : index
    %c0_0 = arith.constant 0 : index
    %0 = vector.load %arg1[%c0, %c0_0] : memref<16x128xf32, #tpu.memory_space<vmem>>, vector<16x128xf32>
    %c0_1 = arith.constant 0 : index
    %c0_2 = arith.constant 0 : index
    %1 = vector.load %arg2[%c0_1, %c0_2] : memref<16x128xf32, #tpu.memory_space<vmem>>, vector<16x128xf32>
    %c0_3 = arith.constant 0 : index
    %c0_4 = arith.constant 0 : index
    %2 = vector.load %arg3[%c0_3, %c0_4] : memref<16x8xf32, #tpu.memory_space<vmem>>, vector<16x8xf32>
    %c0_5 = arith.constant 0 : index
    %c0_6 = arith.constant 0 : index
    %3 = vector.load %arg4[%c0_5, %c0_6] : memref<16x8xf32, #tpu.memory_space<vmem>>, vector<16x8xf32>
    %4 = arith.subf %2, %3 : vector<16x8xf32>
    %5 = arith.mulf %4, %4 : vector<16x8xf32>
    %c0_7 = arith.constant 0 : index
    %c0_8 = arith.constant 0 : index
    %6 = vector.load %arg8[%c0_7, %c0_8] : memref<8x128xf32, #tpu.memory_space<vmem>>, vector<8x128xf32>
    %7 = vector.extract_strided_slice %5 {offsets = [0, 0], sizes = [16, 1], strides = [1, 1]} : vector<16x8xf32> to vector<16x1xf32>
    %8 = vector.extract_strided_slice %6 {offsets = [0, 0], sizes = [1, 128], strides = [1, 1]} : vector<8x128xf32> to vector<1x128xf32>
    %9 = vector.broadcast %7 : vector<16x1xf32> to vector<16x128xf32>
    %10 = vector.broadcast %8 : vector<1x128xf32> to vector<16x128xf32>
    %11 = arith.mulf %9, %10 : vector<16x128xf32>
    %12 = vector.extract_strided_slice %5 {offsets = [0, 1], sizes = [16, 1], strides = [1, 1]} : vector<16x8xf32> to vector<16x1xf32>
    %13 = vector.extract_strided_slice %6 {offsets = [1, 0], sizes = [1, 128], strides = [1, 1]} : vector<8x128xf32> to vector<1x128xf32>
    %14 = vector.broadcast %12 : vector<16x1xf32> to vector<16x128xf32>
    %15 = vector.broadcast %13 : vector<1x128xf32> to vector<16x128xf32>
    %16 = arith.mulf %14, %15 : vector<16x128xf32>
    %17 = arith.addf %11, %16 : vector<16x128xf32>
    %18 = vector.extract_strided_slice %5 {offsets = [0, 2], sizes = [16, 1], strides = [1, 1]} : vector<16x8xf32> to vector<16x1xf32>
    %19 = vector.extract_strided_slice %6 {offsets = [2, 0], sizes = [1, 128], strides = [1, 1]} : vector<8x128xf32> to vector<1x128xf32>
    %20 = vector.broadcast %18 : vector<16x1xf32> to vector<16x128xf32>
    %21 = vector.broadcast %19 : vector<1x128xf32> to vector<16x128xf32>
    %22 = arith.mulf %20, %21 : vector<16x128xf32>
    %23 = arith.addf %17, %22 : vector<16x128xf32>
    %24 = vector.extract_strided_slice %5 {offsets = [0, 3], sizes = [16, 1], strides = [1, 1]} : vector<16x8xf32> to vector<16x1xf32>
    %25 = vector.extract_strided_slice %6 {offsets = [3, 0], sizes = [1, 128], strides = [1, 1]} : vector<8x128xf32> to vector<1x128xf32>
    %26 = vector.broadcast %24 : vector<16x1xf32> to vector<16x128xf32>
    %27 = vector.broadcast %25 : vector<1x128xf32> to vector<16x128xf32>
    %28 = arith.mulf %26, %27 : vector<16x128xf32>
    %29 = arith.addf %23, %28 : vector<16x128xf32>
    %30 = vector.extract_strided_slice %5 {offsets = [0, 4], sizes = [16, 1], strides = [1, 1]} : vector<16x8xf32> to vector<16x1xf32>
    %31 = vector.extract_strided_slice %6 {offsets = [4, 0], sizes = [1, 128], strides = [1, 1]} : vector<8x128xf32> to vector<1x128xf32>
    %32 = vector.broadcast %30 : vector<16x1xf32> to vector<16x128xf32>
    %33 = vector.broadcast %31 : vector<1x128xf32> to vector<16x128xf32>
    %34 = arith.mulf %32, %33 : vector<16x128xf32>
    %35 = arith.addf %29, %34 : vector<16x128xf32>
    %36 = vector.extract_strided_slice %5 {offsets = [0, 5], sizes = [16, 1], strides = [1, 1]} : vector<16x8xf32> to vector<16x1xf32>
    %37 = vector.extract_strided_slice %6 {offsets = [5, 0], sizes = [1, 128], strides = [1, 1]} : vector<8x128xf32> to vector<1x128xf32>
    %38 = vector.broadcast %36 : vector<16x1xf32> to vector<16x128xf32>
    %39 = vector.broadcast %37 : vector<1x128xf32> to vector<16x128xf32>
    %40 = arith.mulf %38, %39 : vector<16x128xf32>
    %41 = arith.addf %35, %40 : vector<16x128xf32>
    %42 = vector.extract_strided_slice %5 {offsets = [0, 6], sizes = [16, 1], strides = [1, 1]} : vector<16x8xf32> to vector<16x1xf32>
    %43 = vector.extract_strided_slice %6 {offsets = [6, 0], sizes = [1, 128], strides = [1, 1]} : vector<8x128xf32> to vector<1x128xf32>
    %44 = vector.broadcast %42 : vector<16x1xf32> to vector<16x128xf32>
    %45 = vector.broadcast %43 : vector<1x128xf32> to vector<16x128xf32>
    %46 = arith.mulf %44, %45 : vector<16x128xf32>
    %47 = arith.addf %41, %46 : vector<16x128xf32>
    %48 = vector.extract_strided_slice %5 {offsets = [0, 7], sizes = [16, 1], strides = [1, 1]} : vector<16x8xf32> to vector<16x1xf32>
    %49 = vector.extract_strided_slice %6 {offsets = [7, 0], sizes = [1, 128], strides = [1, 1]} : vector<8x128xf32> to vector<1x128xf32>
    %50 = vector.broadcast %48 : vector<16x1xf32> to vector<16x128xf32>
    %51 = vector.broadcast %49 : vector<1x128xf32> to vector<16x128xf32>
    %52 = arith.mulf %50, %51 : vector<16x128xf32>
    %53 = arith.addf %47, %52 : vector<16x128xf32>
    %54 = math.sqrt %53 : vector<16x128xf32>
    %55 = arith.truncf %0 : vector<16x128xf32> to vector<16x128xbf16>
    %c0_9 = arith.constant 0 : index
    %c0_10 = arith.constant 0 : index
    %56 = vector.load %arg5[%c0_9, %c0_10] : memref<128x128xbf16, #tpu.memory_space<vmem>>, vector<128x128xbf16>
    %cst = arith.constant dense<0.000000e+00> : vector<16x128xf32>
    %57 = tpu.matmul %55, %56, %cst {dimension_numbers = #tpu.dot_dimension_numbers<[1], [0], [0], [1], [0, 0, 1, 1], [], []>} : vector<16x128xbf16>, vector<128x128xbf16>, vector<16x128xf32> -> vector<16x128xf32>
    %58 = arith.truncf %1 : vector<16x128xf32> to vector<16x128xbf16>
    %c0_11 = arith.constant 0 : index
    %c0_12 = arith.constant 0 : index
    %59 = vector.load %arg6[%c0_11, %c0_12] : memref<128x128xbf16, #tpu.memory_space<vmem>>, vector<128x128xbf16>
    %cst_13 = arith.constant dense<0.000000e+00> : vector<16x128xf32>
    %60 = tpu.matmul %58, %59, %cst_13 {dimension_numbers = #tpu.dot_dimension_numbers<[1], [0], [0], [1], [0, 0, 1, 1], [], []>} : vector<16x128xbf16>, vector<128x128xbf16>, vector<16x128xf32> -> vector<16x128xf32>
    %61 = arith.addf %57, %60 : vector<16x128xf32>
    %c0_14 = arith.constant 0 : index
    %c0_15 = arith.constant 0 : index
    %62 = vector.load %arg7[%c0_14, %c0_15] : memref<8x128xf32, #tpu.memory_space<vmem>>, vector<8x128xf32>
    %63 = vector.extract_strided_slice %4 {offsets = [0, 0], sizes = [16, 1], strides = [1, 1]} : vector<16x8xf32> to vector<16x1xf32>
    %64 = vector.extract_strided_slice %62 {offsets = [0, 0], sizes = [1, 128], strides = [1, 1]} : vector<8x128xf32> to vector<1x128xf32>
    %65 = vector.broadcast %63 : vector<16x1xf32> to vector<16x128xf32>
    %66 = vector.broadcast %64 : vector<1x128xf32> to vector<16x128xf32>
    %67 = arith.mulf %65, %66 : vector<16x128xf32>
    %68 = vector.extract_strided_slice %4 {offsets = [0, 1], sizes = [16, 1], strides = [1, 1]} : vector<16x8xf32> to vector<16x1xf32>
    %69 = vector.extract_strided_slice %62 {offsets = [1, 0], sizes = [1, 128], strides = [1, 1]} : vector<8x128xf32> to vector<1x128xf32>
    %70 = vector.broadcast %68 : vector<16x1xf32> to vector<16x128xf32>
    %71 = vector.broadcast %69 : vector<1x128xf32> to vector<16x128xf32>
    %72 = arith.mulf %70, %71 : vector<16x128xf32>
    %73 = arith.addf %67, %72 : vector<16x128xf32>
    %74 = vector.extract_strided_slice %4 {offsets = [0, 2], sizes = [16, 1], strides = [1, 1]} : vector<16x8xf32> to vector<16x1xf32>
    %75 = vector.extract_strided_slice %62 {offsets = [2, 0], sizes = [1, 128], strides = [1, 1]} : vector<8x128xf32> to vector<1x128xf32>
    %76 = vector.broadcast %74 : vector<16x1xf32> to vector<16x128xf32>
    %77 = vector.broadcast %75 : vector<1x128xf32> to vector<16x128xf32>
    %78 = arith.mulf %76, %77 : vector<16x128xf32>
    %79 = arith.addf %73, %78 : vector<16x128xf32>
    %80 = vector.extract_strided_slice %4 {offsets = [0, 3], sizes = [16, 1], strides = [1, 1]} : vector<16x8xf32> to vector<16x1xf32>
    %81 = vector.extract_strided_slice %62 {offsets = [3, 0], sizes = [1, 128], strides = [1, 1]} : vector<8x128xf32> to vector<1x128xf32>
    %82 = vector.broadcast %80 : vector<16x1xf32> to vector<16x128xf32>
    %83 = vector.broadcast %81 : vector<1x128xf32> to vector<16x128xf32>
    %84 = arith.mulf %82, %83 : vector<16x128xf32>
    %85 = arith.addf %79, %84 : vector<16x128xf32>
    %86 = vector.extract_strided_slice %4 {offsets = [0, 4], sizes = [16, 1], strides = [1, 1]} : vector<16x8xf32> to vector<16x1xf32>
    %87 = vector.extract_strided_slice %62 {offsets = [4, 0], sizes = [1, 128], strides = [1, 1]} : vector<8x128xf32> to vector<1x128xf32>
    %88 = vector.broadcast %86 : vector<16x1xf32> to vector<16x128xf32>
    %89 = vector.broadcast %87 : vector<1x128xf32> to vector<16x128xf32>
    %90 = arith.mulf %88, %89 : vector<16x128xf32>
    %91 = arith.addf %85, %90 : vector<16x128xf32>
    %92 = vector.extract_strided_slice %4 {offsets = [0, 5], sizes = [16, 1], strides = [1, 1]} : vector<16x8xf32> to vector<16x1xf32>
    %93 = vector.extract_strided_slice %62 {offsets = [5, 0], sizes = [1, 128], strides = [1, 1]} : vector<8x128xf32> to vector<1x128xf32>
    %94 = vector.broadcast %92 : vector<16x1xf32> to vector<16x128xf32>
    %95 = vector.broadcast %93 : vector<1x128xf32> to vector<16x128xf32>
    %96 = arith.mulf %94, %95 : vector<16x128xf32>
    %97 = arith.addf %91, %96 : vector<16x128xf32>
    %98 = vector.extract_strided_slice %4 {offsets = [0, 6], sizes = [16, 1], strides = [1, 1]} : vector<16x8xf32> to vector<16x1xf32>
    %99 = vector.extract_strided_slice %62 {offsets = [6, 0], sizes = [1, 128], strides = [1, 1]} : vector<8x128xf32> to vector<1x128xf32>
    %100 = vector.broadcast %98 : vector<16x1xf32> to vector<16x128xf32>
    %101 = vector.broadcast %99 : vector<1x128xf32> to vector<16x128xf32>
    %102 = arith.mulf %100, %101 : vector<16x128xf32>
    %103 = arith.addf %97, %102 : vector<16x128xf32>
    %104 = vector.extract_strided_slice %4 {offsets = [0, 7], sizes = [16, 1], strides = [1, 1]} : vector<16x8xf32> to vector<16x1xf32>
    %105 = vector.extract_strided_slice %62 {offsets = [7, 0], sizes = [1, 128], strides = [1, 1]} : vector<8x128xf32> to vector<1x128xf32>
    %106 = vector.broadcast %104 : vector<16x1xf32> to vector<16x128xf32>
    %107 = vector.broadcast %105 : vector<1x128xf32> to vector<16x128xf32>
    %108 = arith.mulf %106, %107 : vector<16x128xf32>
    %109 = arith.addf %103, %108 : vector<16x128xf32>
    %110 = arith.addf %61, %109 : vector<16x128xf32>
    %c0_16 = arith.constant 0 : index
    %c0_17 = arith.constant 0 : index
    %111 = vector.load %arg9[%c0_16, %c0_17] : memref<1x128xf32, #tpu.memory_space<vmem>>, vector<1x128xf32>
    %112 = vector.broadcast %111 : vector<1x128xf32> to vector<16x128xf32>
    %113 = arith.mulf %54, %112 : vector<16x128xf32>
    %114 = arith.addf %110, %113 : vector<16x128xf32>
    %c0_18 = arith.constant 0 : index
    %c0_19 = arith.constant 0 : index
    %115 = vector.load %arg10[%c0_18, %c0_19] : memref<1x128xf32, #tpu.memory_space<vmem>>, vector<1x128xf32>
    %116 = vector.broadcast %115 : vector<1x128xf32> to vector<16x128xf32>
    %117 = arith.addf %114, %116 : vector<16x128xf32>
    %cst_20 = arith.constant 0.000000e+00 : f32
    %118 = vector.broadcast %cst_20 : f32 to vector<16x128xf32>
    %119 = arith.maximumf %117, %118 : vector<16x128xf32>
    %120 = arith.truncf %119 : vector<16x128xf32> to vector<16x128xbf16>
    %c0_21 = arith.constant 0 : index
    %c0_22 = arith.constant 0 : index
    %121 = vector.load %arg11[%c0_21, %c0_22] : memref<128x128xbf16, #tpu.memory_space<vmem>>, vector<128x128xbf16>
    %cst_23 = arith.constant dense<0.000000e+00> : vector<16x128xf32>
    %122 = tpu.matmul %120, %121, %cst_23 {dimension_numbers = #tpu.dot_dimension_numbers<[1], [0], [0], [1], [0, 0, 1, 1], [], []>} : vector<16x128xbf16>, vector<128x128xbf16>, vector<16x128xf32> -> vector<16x128xf32>
    %c0_24 = arith.constant 0 : index
    %c0_25 = arith.constant 0 : index
    %123 = vector.load %arg12[%c0_24, %c0_25] : memref<1x128xf32, #tpu.memory_space<vmem>>, vector<1x128xf32>
    %124 = vector.broadcast %123 : vector<1x128xf32> to vector<16x128xf32>
    %125 = arith.addf %122, %124 : vector<16x128xf32>
    %cst_26 = arith.constant 0.000000e+00 : f32
    %126 = vector.broadcast %cst_26 : f32 to vector<16x128xf32>
    %127 = arith.maximumf %125, %126 : vector<16x128xf32>
    %128 = arith.truncf %127 : vector<16x128xf32> to vector<16x128xbf16>
    %c0_27 = arith.constant 0 : index
    %c0_28 = arith.constant 0 : index
    %129 = vector.load %arg13[%c0_27, %c0_28] : memref<128x128xbf16, #tpu.memory_space<vmem>>, vector<128x128xbf16>
    %cst_29 = arith.constant dense<0.000000e+00> : vector<16x128xf32>
    %130 = tpu.matmul %128, %129, %cst_29 {dimension_numbers = #tpu.dot_dimension_numbers<[1], [0], [0], [1], [0, 0, 1, 1], [], []>} : vector<16x128xbf16>, vector<128x128xbf16>, vector<16x128xf32> -> vector<16x128xf32>
    %c0_30 = arith.constant 0 : index
    %c0_31 = arith.constant 0 : index
    %131 = vector.load %arg14[%c0_30, %c0_31] : memref<1x128xf32, #tpu.memory_space<vmem>>, vector<1x128xf32>
    %132 = vector.broadcast %131 : vector<1x128xf32> to vector<16x128xf32>
    %133 = arith.addf %130, %132 : vector<16x128xf32>
    %c0_32 = arith.constant 0 : index
    %c0_33 = arith.constant 0 : index
    %134 = vector.load %arg15[%c0_32, %c0_33] : memref<1x128xf32, #tpu.memory_space<vmem>>, vector<1x128xf32>
    %c0_34 = arith.constant 0 : index
    %c0_35 = arith.constant 0 : index
    %135 = vector.load %arg16[%c0_34, %c0_35] : memref<1x128xf32, #tpu.memory_space<vmem>>, vector<1x128xf32>
    %c0_36 = arith.constant 0 : index
    %c0_37 = arith.constant 0 : index
    %136 = vector.load %arg17[%c0_36, %c0_37] : memref<128x128xf32, #tpu.memory_space<vmem>>, vector<128x128xf32>
    %cst_38 = arith.constant dense<0.000000e+00> : vector<16x128xf32>
    %137 = tpu.matmul %133, %136, %cst_38 {dimension_numbers = #tpu.dot_dimension_numbers<[1], [0], [0], [1], [0, 0, 1, 1], [], []>} : vector<16x128xf32>, vector<128x128xf32>, vector<16x128xf32> -> vector<16x128xf32>
    %138 = arith.mulf %133, %133 : vector<16x128xf32>
    %cst_39 = arith.constant dense<0.000000e+00> : vector<16x128xf32>
    %139 = tpu.matmul %138, %136, %cst_39 {dimension_numbers = #tpu.dot_dimension_numbers<[1], [0], [0], [1], [0, 0, 1, 1], [], []>} : vector<16x128xf32>, vector<128x128xf32>, vector<16x128xf32> -> vector<16x128xf32>
    %140 = arith.mulf %137, %137 : vector<16x128xf32>
    %141 = arith.subf %139, %140 : vector<16x128xf32>
    %cst_40 = arith.constant 0.000000e+00 : f32
    %142 = vector.broadcast %cst_40 : f32 to vector<16x128xf32>
    %143 = arith.maximumf %141, %142 : vector<16x128xf32>
    %144 = arith.subf %133, %137 : vector<16x128xf32>
    %cst_41 = arith.constant 9.99999974E-6 : f32
    %145 = vector.broadcast %cst_41 : f32 to vector<16x128xf32>
    %146 = arith.addf %143, %145 : vector<16x128xf32>
    %147 = math.rsqrt %146 : vector<16x128xf32>
    %148 = arith.mulf %144, %147 : vector<16x128xf32>
    %149 = vector.broadcast %134 : vector<1x128xf32> to vector<16x128xf32>
    %150 = arith.mulf %148, %149 : vector<16x128xf32>
    %151 = vector.broadcast %135 : vector<1x128xf32> to vector<16x128xf32>
    %152 = arith.addf %150, %151 : vector<16x128xf32>
    %c0_42 = arith.constant 0 : index
    %c0_43 = arith.constant 0 : index
    %153 = vector.load %arg18[%c0_42, %c0_43] : memref<16x128xf32, #tpu.memory_space<vmem>>, vector<16x128xf32>
    tpu.vector_store %arg18[%c0_42, %c0_43], %152 {strides = array<i32>} : memref<16x128xf32, #tpu.memory_space<vmem>>, vector<16x128xf32>,
    return
  }
  func.func @transform_0(%arg0: i32) -> (i32, i32) {
    %c0_i32 = arith.constant 0 : i32
    %c0_i32_0 = arith.constant 0 : i32
    return %arg0, %c0_i32 : i32, i32
  }
  func.func @transform_1(%arg0: i32) -> (i32, i32) {
    %c0_i32 = arith.constant 0 : i32
    %c0_i32_0 = arith.constant 0 : i32
    return %arg0, %c0_i32 : i32, i32
  }
  func.func @transform_2(%arg0: i32) -> (i32, i32) {
    %c0_i32 = arith.constant 0 : i32
    %c0_i32_0 = arith.constant 0 : i32
    return %arg0, %c0_i32 : i32, i32
  }
  func.func @transform_3(%arg0: i32) -> (i32, i32) {
    %c0_i32 = arith.constant 0 : i32
    %c0_i32_0 = arith.constant 0 : i32
    return %arg0, %c0_i32 : i32, i32
  }
  func.func @transform_4(%arg0: i32) -> (i32, i32) {
    %c0_i32 = arith.constant 0 : i32
    %c0_i32_0 = arith.constant 0 : i32
    %c0_i32_1 = arith.constant 0 : i32
    return %c0_i32, %c0_i32_0 : i32, i32
  }
  func.func @transform_5(%arg0: i32) -> (i32, i32) {
    %c0_i32 = arith.constant 0 : i32
    %c0_i32_0 = arith.constant 0 : i32
    %c0_i32_1 = arith.constant 0 : i32
    return %c0_i32, %c0_i32_0 : i32, i32
  }
  func.func @transform_6(%arg0: i32) -> (i32, i32) {
    %c0_i32 = arith.constant 0 : i32
    %c0_i32_0 = arith.constant 0 : i32
    %c0_i32_1 = arith.constant 0 : i32
    return %c0_i32, %c0_i32_0 : i32, i32
  }
  func.func @transform_7(%arg0: i32) -> (i32, i32) {
    %c0_i32 = arith.constant 0 : i32
    %c0_i32_0 = arith.constant 0 : i32
    %c0_i32_1 = arith.constant 0 : i32
    return %c0_i32, %c0_i32_0 : i32, i32
  }
  func.func @transform_8(%arg0: i32) -> (i32, i32) {
    %c0_i32 = arith.constant 0 : i32
    %c0_i32_0 = arith.constant 0 : i32
    %c0_i32_1 = arith.constant 0 : i32
    return %c0_i32, %c0_i32_0 : i32, i32
  }
  func.func @transform_9(%arg0: i32) -> (i32, i32) {
    %c0_i32 = arith.constant 0 : i32
    %c0_i32_0 = arith.constant 0 : i32
    %c0_i32_1 = arith.constant 0 : i32
    return %c0_i32, %c0_i32_0 : i32, i32
  }
  func.func @transform_10(%arg0: i32) -> (i32, i32) {
    %c0_i32 = arith.constant 0 : i32
    %c0_i32_0 = arith.constant 0 : i32
    %c0_i32_1 = arith.constant 0 : i32
    return %c0_i32, %c0_i32_0 : i32, i32
  }
  func.func @transform_11(%arg0: i32) -> (i32, i32) {
    %c0_i32 = arith.constant 0 : i32
    %c0_i32_0 = arith.constant 0 : i32
    %c0_i32_1 = arith.constant 0 : i32
    return %c0_i32, %c0_i32_0 : i32, i32
  }
  func.func @transform_12(%arg0: i32) -> (i32, i32) {
    %c0_i32 = arith.constant 0 : i32
    %c0_i32_0 = arith.constant 0 : i32
    %c0_i32_1 = arith.constant 0 : i32
    return %c0_i32, %c0_i32_0 : i32, i32
  }
  func.func @transform_13(%arg0: i32) -> (i32, i32) {
    %c0_i32 = arith.constant 0 : i32
    %c0_i32_0 = arith.constant 0 : i32
    %c0_i32_1 = arith.constant 0 : i32
    return %c0_i32, %c0_i32_0 : i32, i32
  }
  func.func @transform_14(%arg0: i32) -> (i32, i32) {
    %c0_i32 = arith.constant 0 : i32
    %c0_i32_0 = arith.constant 0 : i32
    %c0_i32_1 = arith.constant 0 : i32
    return %c0_i32, %c0_i32_0 : i32, i32
  }
  func.func @transform_15(%arg0: i32) -> (i32, i32) {
    %c0_i32 = arith.constant 0 : i32
    %c0_i32_0 = arith.constant 0 : i32
    %c0_i32_1 = arith.constant 0 : i32
    return %c0_i32, %c0_i32_0 : i32, i32
  }
  func.func @transform_16(%arg0: i32) -> (i32, i32) {
    %c0_i32 = arith.constant 0 : i32
    %c0_i32_0 = arith.constant 0 : i32
    %c0_i32_1 = arith.constant 0 : i32
    return %c0_i32, %c0_i32_0 : i32, i32
  }
  func.func @transform_17(%arg0: i32) -> (i32, i32) {
    %c0_i32 = arith.constant 0 : i32
    %c0_i32_0 = arith.constant 0 : i32
    return %arg0, %c0_i32 : i32, i32
  }
}

module attributes {stable_mosaic.version = 11 : i64} {
  func.func @kernel(%arg0: i32, %arg1: memref<8x128xf32, #tpu.memory_space<vmem>>, %arg2: memref<8x128xf32, #tpu.memory_space<vmem>>, %arg3: memref<128x128xbf16, #tpu.memory_space<vmem>>, %arg4: memref<128x128xbf16, #tpu.memory_space<vmem>>, %arg5: memref<1x128xf32, #tpu.memory_space<vmem>>, %arg6: memref<128x128xbf16, #tpu.memory_space<vmem>>, %arg7: memref<1x128xf32, #tpu.memory_space<vmem>>, %arg8: memref<128x128xbf16, #tpu.memory_space<vmem>>, %arg9: memref<1x128xf32, #tpu.memory_space<vmem>>, %arg10: memref<1x128xf32, #tpu.memory_space<vmem>>, %arg11: memref<1x128xf32, #tpu.memory_space<vmem>>, %arg12: memref<128x128xf32, #tpu.memory_space<vmem>>, %arg13: memref<8x128xf32, #tpu.memory_space<vmem>>) attributes {dimension_semantics = [#tpu.dimension_semantics<parallel>], iteration_bounds = array<i64: 1>, scalar_prefetch = 0 : i64, scratch_operands = 0 : i64, tpu.core_type = #tpu.core_type<tc>, window_params = [{transform_indices = @transform_0, window_bounds = array<i64: 8, 128>}, {transform_indices = @transform_1, window_bounds = array<i64: 8, 128>}, {pipeline_mode = #tpu.pipeline_mode<synchronous>, transform_indices = @transform_2, window_bounds = array<i64: 128, 128>}, {pipeline_mode = #tpu.pipeline_mode<synchronous>, transform_indices = @transform_3, window_bounds = array<i64: 128, 128>}, {pipeline_mode = #tpu.pipeline_mode<synchronous>, transform_indices = @transform_4, window_bounds = array<i64: 1, 128>}, {pipeline_mode = #tpu.pipeline_mode<synchronous>, transform_indices = @transform_5, window_bounds = array<i64: 128, 128>}, {pipeline_mode = #tpu.pipeline_mode<synchronous>, transform_indices = @transform_6, window_bounds = array<i64: 1, 128>}, {pipeline_mode = #tpu.pipeline_mode<synchronous>, transform_indices = @transform_7, window_bounds = array<i64: 128, 128>}, {pipeline_mode = #tpu.pipeline_mode<synchronous>, transform_indices = @transform_8, window_bounds = array<i64: 1, 128>}, {pipeline_mode = #tpu.pipeline_mode<synchronous>, transform_indices = @transform_9, window_bounds = array<i64: 1, 128>}, {pipeline_mode = #tpu.pipeline_mode<synchronous>, transform_indices = @transform_10, window_bounds = array<i64: 1, 128>}, {pipeline_mode = #tpu.pipeline_mode<synchronous>, transform_indices = @transform_11, window_bounds = array<i64: 128, 128>}, {transform_indices = @transform_12, window_bounds = array<i64: 8, 128>}]} {
    %c0 = arith.constant 0 : index
    %c0_0 = arith.constant 0 : index
    %0 = vector.load %arg1[%c0, %c0_0] : memref<8x128xf32, #tpu.memory_space<vmem>>, vector<8x128xf32>
    %1 = arith.truncf %0 : vector<8x128xf32> to vector<8x128xbf16>
    %c0_1 = arith.constant 0 : index
    %c0_2 = arith.constant 0 : index
    %2 = vector.load %arg3[%c0_1, %c0_2] : memref<128x128xbf16, #tpu.memory_space<vmem>>, vector<128x128xbf16>
    %cst = arith.constant dense<0.000000e+00> : vector<8x128xf32>
    %3 = tpu.matmul %1, %2, %cst {dimension_numbers = #tpu.dot_dimension_numbers<[1], [0], [0], [1], [0, 0, 1, 1], [], []>} : vector<8x128xbf16>, vector<128x128xbf16>, vector<8x128xf32> -> vector<8x128xf32>
    %c0_3 = arith.constant 0 : index
    %c0_4 = arith.constant 0 : index
    %4 = vector.load %arg2[%c0_3, %c0_4] : memref<8x128xf32, #tpu.memory_space<vmem>>, vector<8x128xf32>
    %5 = arith.truncf %4 : vector<8x128xf32> to vector<8x128xbf16>
    %c0_5 = arith.constant 0 : index
    %c0_6 = arith.constant 0 : index
    %6 = vector.load %arg4[%c0_5, %c0_6] : memref<128x128xbf16, #tpu.memory_space<vmem>>, vector<128x128xbf16>
    %cst_7 = arith.constant dense<0.000000e+00> : vector<8x128xf32>
    %7 = tpu.matmul %5, %6, %cst_7 {dimension_numbers = #tpu.dot_dimension_numbers<[1], [0], [0], [1], [0, 0, 1, 1], [], []>} : vector<8x128xbf16>, vector<128x128xbf16>, vector<8x128xf32> -> vector<8x128xf32>
    %8 = arith.addf %3, %7 : vector<8x128xf32>
    %c0_8 = arith.constant 0 : index
    %c0_9 = arith.constant 0 : index
    %9 = vector.load %arg5[%c0_8, %c0_9] : memref<1x128xf32, #tpu.memory_space<vmem>>, vector<1x128xf32>
    %10 = vector.broadcast %9 : vector<1x128xf32> to vector<8x128xf32>
    %11 = arith.addf %8, %10 : vector<8x128xf32>
    %cst_10 = arith.constant 0.000000e+00 : f32
    %12 = vector.broadcast %cst_10 : f32 to vector<8x128xf32>
    %13 = arith.maximumf %11, %12 : vector<8x128xf32>
    %14 = arith.truncf %13 : vector<8x128xf32> to vector<8x128xbf16>
    %c0_11 = arith.constant 0 : index
    %c0_12 = arith.constant 0 : index
    %15 = vector.load %arg6[%c0_11, %c0_12] : memref<128x128xbf16, #tpu.memory_space<vmem>>, vector<128x128xbf16>
    %cst_13 = arith.constant dense<0.000000e+00> : vector<8x128xf32>
    %16 = tpu.matmul %14, %15, %cst_13 {dimension_numbers = #tpu.dot_dimension_numbers<[1], [0], [0], [1], [0, 0, 1, 1], [], []>} : vector<8x128xbf16>, vector<128x128xbf16>, vector<8x128xf32> -> vector<8x128xf32>
    %c0_14 = arith.constant 0 : index
    %c0_15 = arith.constant 0 : index
    %17 = vector.load %arg7[%c0_14, %c0_15] : memref<1x128xf32, #tpu.memory_space<vmem>>, vector<1x128xf32>
    %18 = vector.broadcast %17 : vector<1x128xf32> to vector<8x128xf32>
    %19 = arith.addf %16, %18 : vector<8x128xf32>
    %cst_16 = arith.constant 0.000000e+00 : f32
    %20 = vector.broadcast %cst_16 : f32 to vector<8x128xf32>
    %21 = arith.maximumf %19, %20 : vector<8x128xf32>
    %22 = arith.truncf %21 : vector<8x128xf32> to vector<8x128xbf16>
    %c0_17 = arith.constant 0 : index
    %c0_18 = arith.constant 0 : index
    %23 = vector.load %arg8[%c0_17, %c0_18] : memref<128x128xbf16, #tpu.memory_space<vmem>>, vector<128x128xbf16>
    %cst_19 = arith.constant dense<0.000000e+00> : vector<8x128xf32>
    %24 = tpu.matmul %22, %23, %cst_19 {dimension_numbers = #tpu.dot_dimension_numbers<[1], [0], [0], [1], [0, 0, 1, 1], [], []>} : vector<8x128xbf16>, vector<128x128xbf16>, vector<8x128xf32> -> vector<8x128xf32>
    %c0_20 = arith.constant 0 : index
    %c0_21 = arith.constant 0 : index
    %25 = vector.load %arg9[%c0_20, %c0_21] : memref<1x128xf32, #tpu.memory_space<vmem>>, vector<1x128xf32>
    %26 = vector.broadcast %25 : vector<1x128xf32> to vector<8x128xf32>
    %27 = arith.addf %24, %26 : vector<8x128xf32>
    %c0_22 = arith.constant 0 : index
    %c0_23 = arith.constant 0 : index
    %28 = vector.load %arg10[%c0_22, %c0_23] : memref<1x128xf32, #tpu.memory_space<vmem>>, vector<1x128xf32>
    %c0_24 = arith.constant 0 : index
    %c0_25 = arith.constant 0 : index
    %29 = vector.load %arg11[%c0_24, %c0_25] : memref<1x128xf32, #tpu.memory_space<vmem>>, vector<1x128xf32>
    %c0_26 = arith.constant 0 : index
    %c0_27 = arith.constant 0 : index
    %30 = vector.load %arg12[%c0_26, %c0_27] : memref<128x128xf32, #tpu.memory_space<vmem>>, vector<128x128xf32>
    %cst_28 = arith.constant dense<0.000000e+00> : vector<8x128xf32>
    %31 = tpu.matmul %27, %30, %cst_28 {dimension_numbers = #tpu.dot_dimension_numbers<[1], [0], [0], [1], [0, 0, 1, 1], [], []>} : vector<8x128xf32>, vector<128x128xf32>, vector<8x128xf32> -> vector<8x128xf32>
    %32 = arith.mulf %27, %27 : vector<8x128xf32>
    %cst_29 = arith.constant dense<0.000000e+00> : vector<8x128xf32>
    %33 = tpu.matmul %32, %30, %cst_29 {dimension_numbers = #tpu.dot_dimension_numbers<[1], [0], [0], [1], [0, 0, 1, 1], [], []>} : vector<8x128xf32>, vector<128x128xf32>, vector<8x128xf32> -> vector<8x128xf32>
    %34 = arith.mulf %31, %31 : vector<8x128xf32>
    %35 = arith.subf %33, %34 : vector<8x128xf32>
    %cst_30 = arith.constant 0.000000e+00 : f32
    %36 = vector.broadcast %cst_30 : f32 to vector<8x128xf32>
    %37 = arith.maximumf %35, %36 : vector<8x128xf32>
    %38 = arith.subf %27, %31 : vector<8x128xf32>
    %cst_31 = arith.constant 9.99999974E-6 : f32
    %39 = vector.broadcast %cst_31 : f32 to vector<8x128xf32>
    %40 = arith.addf %37, %39 : vector<8x128xf32>
    %41 = math.rsqrt %40 : vector<8x128xf32>
    %42 = arith.mulf %38, %41 : vector<8x128xf32>
    %43 = vector.broadcast %28 : vector<1x128xf32> to vector<8x128xf32>
    %44 = arith.mulf %42, %43 : vector<8x128xf32>
    %45 = vector.broadcast %29 : vector<1x128xf32> to vector<8x128xf32>
    %46 = arith.addf %44, %45 : vector<8x128xf32>
    %47 = arith.addf %0, %46 : vector<8x128xf32>
    %c0_32 = arith.constant 0 : index
    %c0_33 = arith.constant 0 : index
    %48 = vector.load %arg13[%c0_32, %c0_33] : memref<8x128xf32, #tpu.memory_space<vmem>>, vector<8x128xf32>
    tpu.vector_store %arg13[%c0_32, %c0_33], %47 {strides = array<i32>} : memref<8x128xf32, #tpu.memory_space<vmem>>, vector<8x128xf32>,
    return
  }
  func.func @transform_0(%arg0: i32) -> (i32, i32) {
    %c0_i32 = arith.constant 0 : i32
    %c0_i32_0 = arith.constant 0 : i32
    return %arg0, %c0_i32 : i32, i32
  }
  func.func @transform_1(%arg0: i32) -> (i32, i32) {
    %c0_i32 = arith.constant 0 : i32
    %c0_i32_0 = arith.constant 0 : i32
    return %arg0, %c0_i32 : i32, i32
  }
  func.func @transform_2(%arg0: i32) -> (i32, i32) {
    %c0_i32 = arith.constant 0 : i32
    %c0_i32_0 = arith.constant 0 : i32
    %c0_i32_1 = arith.constant 0 : i32
    return %c0_i32, %c0_i32_0 : i32, i32
  }
  func.func @transform_3(%arg0: i32) -> (i32, i32) {
    %c0_i32 = arith.constant 0 : i32
    %c0_i32_0 = arith.constant 0 : i32
    %c0_i32_1 = arith.constant 0 : i32
    return %c0_i32, %c0_i32_0 : i32, i32
  }
  func.func @transform_4(%arg0: i32) -> (i32, i32) {
    %c0_i32 = arith.constant 0 : i32
    %c0_i32_0 = arith.constant 0 : i32
    %c0_i32_1 = arith.constant 0 : i32
    return %c0_i32, %c0_i32_0 : i32, i32
  }
  func.func @transform_5(%arg0: i32) -> (i32, i32) {
    %c0_i32 = arith.constant 0 : i32
    %c0_i32_0 = arith.constant 0 : i32
    %c0_i32_1 = arith.constant 0 : i32
    return %c0_i32, %c0_i32_0 : i32, i32
  }
  func.func @transform_6(%arg0: i32) -> (i32, i32) {
    %c0_i32 = arith.constant 0 : i32
    %c0_i32_0 = arith.constant 0 : i32
    %c0_i32_1 = arith.constant 0 : i32
    return %c0_i32, %c0_i32_0 : i32, i32
  }
  func.func @transform_7(%arg0: i32) -> (i32, i32) {
    %c0_i32 = arith.constant 0 : i32
    %c0_i32_0 = arith.constant 0 : i32
    %c0_i32_1 = arith.constant 0 : i32
    return %c0_i32, %c0_i32_0 : i32, i32
  }
  func.func @transform_8(%arg0: i32) -> (i32, i32) {
    %c0_i32 = arith.constant 0 : i32
    %c0_i32_0 = arith.constant 0 : i32
    %c0_i32_1 = arith.constant 0 : i32
    return %c0_i32, %c0_i32_0 : i32, i32
  }
  func.func @transform_9(%arg0: i32) -> (i32, i32) {
    %c0_i32 = arith.constant 0 : i32
    %c0_i32_0 = arith.constant 0 : i32
    %c0_i32_1 = arith.constant 0 : i32
    return %c0_i32, %c0_i32_0 : i32, i32
  }
  func.func @transform_10(%arg0: i32) -> (i32, i32) {
    %c0_i32 = arith.constant 0 : i32
    %c0_i32_0 = arith.constant 0 : i32
    %c0_i32_1 = arith.constant 0 : i32
    return %c0_i32, %c0_i32_0 : i32, i32
  }
  func.func @transform_11(%arg0: i32) -> (i32, i32) {
    %c0_i32 = arith.constant 0 : i32
    %c0_i32_0 = arith.constant 0 : i32
    %c0_i32_1 = arith.constant 0 : i32
    return %c0_i32, %c0_i32_0 : i32, i32
  }
  func.func @transform_12(%arg0: i32) -> (i32, i32) {
    %c0_i32 = arith.constant 0 : i32
    %c0_i32_0 = arith.constant 0 : i32
    return %arg0, %c0_i32 : i32, i32
  }
}

module attributes {stable_mosaic.version = 11 : i64} {
  func.func @kernel(%arg0: i32, %arg1: memref<32x128xf32, #tpu.memory_space<vmem>>, %arg2: memref<32x16xf32, #tpu.memory_space<vmem>>, %arg3: memref<1x12xf32, #tpu.memory_space<vmem>>, %arg4: memref<1x12xf32, #tpu.memory_space<vmem>>, %arg5: memref<16x12xf32, #tpu.memory_space<vmem>>, %arg6: memref<16x12xf32, #tpu.memory_space<vmem>>, %arg7: memref<128x128xbf16, #tpu.memory_space<vmem>>, %arg8: memref<1x128xf32, #tpu.memory_space<vmem>>, %arg9: memref<128x128xbf16, #tpu.memory_space<vmem>>, %arg10: memref<1x128xf32, #tpu.memory_space<vmem>>, %arg11: memref<128x12xbf16, #tpu.memory_space<vmem>>, %arg12: memref<1x12xf32, #tpu.memory_space<vmem>>, %arg13: memref<32x12xf32, #tpu.memory_space<vmem>>) attributes {dimension_semantics = [#tpu.dimension_semantics<parallel>], iteration_bounds = array<i64: 1>, scalar_prefetch = 0 : i64, scratch_operands = 0 : i64, tpu.core_type = #tpu.core_type<tc>, window_params = [{transform_indices = @transform_0, window_bounds = array<i64: 32, 128>}, {transform_indices = @transform_1, window_bounds = array<i64: 32, 16>}, {pipeline_mode = #tpu.pipeline_mode<synchronous>, transform_indices = @transform_2, window_bounds = array<i64: 1, 12>}, {pipeline_mode = #tpu.pipeline_mode<synchronous>, transform_indices = @transform_3, window_bounds = array<i64: 1, 12>}, {pipeline_mode = #tpu.pipeline_mode<synchronous>, transform_indices = @transform_4, window_bounds = array<i64: 16, 12>}, {pipeline_mode = #tpu.pipeline_mode<synchronous>, transform_indices = @transform_5, window_bounds = array<i64: 16, 12>}, {pipeline_mode = #tpu.pipeline_mode<synchronous>, transform_indices = @transform_6, window_bounds = array<i64: 128, 128>}, {pipeline_mode = #tpu.pipeline_mode<synchronous>, transform_indices = @transform_7, window_bounds = array<i64: 1, 128>}, {pipeline_mode = #tpu.pipeline_mode<synchronous>, transform_indices = @transform_8, window_bounds = array<i64: 128, 128>}, {pipeline_mode = #tpu.pipeline_mode<synchronous>, transform_indices = @transform_9, window_bounds = array<i64: 1, 128>}, {pipeline_mode = #tpu.pipeline_mode<synchronous>, transform_indices = @transform_10, window_bounds = array<i64: 128, 12>}, {pipeline_mode = #tpu.pipeline_mode<synchronous>, transform_indices = @transform_11, window_bounds = array<i64: 1, 12>}, {transform_indices = @transform_12, window_bounds = array<i64: 32, 12>}]} {
    %c0 = arith.constant 0 : index
    %c0_0 = arith.constant 0 : index
    %0 = vector.load %arg2[%c0, %c0_0] : memref<32x16xf32, #tpu.memory_space<vmem>>, vector<32x16xf32>
    %c0_1 = arith.constant 0 : index
    %c0_2 = arith.constant 0 : index
    %1 = vector.load %arg1[%c0_1, %c0_2] : memref<32x128xf32, #tpu.memory_space<vmem>>, vector<32x128xf32>
    %2 = arith.truncf %1 : vector<32x128xf32> to vector<32x128xbf16>
    %c0_3 = arith.constant 0 : index
    %c0_4 = arith.constant 0 : index
    %3 = vector.load %arg7[%c0_3, %c0_4] : memref<128x128xbf16, #tpu.memory_space<vmem>>, vector<128x128xbf16>
    %cst = arith.constant dense<0.000000e+00> : vector<32x128xf32>
    %4 = tpu.matmul %2, %3, %cst {dimension_numbers = #tpu.dot_dimension_numbers<[1], [0], [0], [1], [0, 0, 1, 1], [], []>} : vector<32x128xbf16>, vector<128x128xbf16>, vector<32x128xf32> -> vector<32x128xf32>
    %c0_5 = arith.constant 0 : index
    %c0_6 = arith.constant 0 : index
    %5 = vector.load %arg8[%c0_5, %c0_6] : memref<1x128xf32, #tpu.memory_space<vmem>>, vector<1x128xf32>
    %6 = vector.broadcast %5 : vector<1x128xf32> to vector<32x128xf32>
    %7 = arith.addf %4, %6 : vector<32x128xf32>
    %cst_7 = arith.constant 0.000000e+00 : f32
    %8 = vector.broadcast %cst_7 : f32 to vector<32x128xf32>
    %9 = arith.maximumf %7, %8 : vector<32x128xf32>
    %10 = arith.truncf %9 : vector<32x128xf32> to vector<32x128xbf16>
    %c0_8 = arith.constant 0 : index
    %c0_9 = arith.constant 0 : index
    %11 = vector.load %arg9[%c0_8, %c0_9] : memref<128x128xbf16, #tpu.memory_space<vmem>>, vector<128x128xbf16>
    %cst_10 = arith.constant dense<0.000000e+00> : vector<32x128xf32>
    %12 = tpu.matmul %10, %11, %cst_10 {dimension_numbers = #tpu.dot_dimension_numbers<[1], [0], [0], [1], [0, 0, 1, 1], [], []>} : vector<32x128xbf16>, vector<128x128xbf16>, vector<32x128xf32> -> vector<32x128xf32>
    %c0_11 = arith.constant 0 : index
    %c0_12 = arith.constant 0 : index
    %13 = vector.load %arg10[%c0_11, %c0_12] : memref<1x128xf32, #tpu.memory_space<vmem>>, vector<1x128xf32>
    %14 = vector.broadcast %13 : vector<1x128xf32> to vector<32x128xf32>
    %15 = arith.addf %12, %14 : vector<32x128xf32>
    %cst_13 = arith.constant 0.000000e+00 : f32
    %16 = vector.broadcast %cst_13 : f32 to vector<32x128xf32>
    %17 = arith.maximumf %15, %16 : vector<32x128xf32>
    %18 = arith.truncf %17 : vector<32x128xf32> to vector<32x128xbf16>
    %c0_14 = arith.constant 0 : index
    %c0_15 = arith.constant 0 : index
    %19 = vector.load %arg11[%c0_14, %c0_15] : memref<128x12xbf16, #tpu.memory_space<vmem>>, vector<128x12xbf16>
    %cst_16 = arith.constant dense<0.000000e+00> : vector<32x12xf32>
    %20 = tpu.matmul %18, %19, %cst_16 {dimension_numbers = #tpu.dot_dimension_numbers<[1], [0], [0], [1], [0, 0, 1, 1], [], []>} : vector<32x128xbf16>, vector<128x12xbf16>, vector<32x12xf32> -> vector<32x12xf32>
    %c0_17 = arith.constant 0 : index
    %c0_18 = arith.constant 0 : index
    %21 = vector.load %arg12[%c0_17, %c0_18] : memref<1x12xf32, #tpu.memory_space<vmem>>, vector<1x12xf32>
    %22 = vector.broadcast %21 : vector<1x12xf32> to vector<32x12xf32>
    %23 = arith.addf %20, %22 : vector<32x12xf32>
    %c0_19 = arith.constant 0 : index
    %c0_20 = arith.constant 0 : index
    %24 = vector.load %arg3[%c0_19, %c0_20] : memref<1x12xf32, #tpu.memory_space<vmem>>, vector<1x12xf32>
    %25 = vector.broadcast %24 : vector<1x12xf32> to vector<32x12xf32>
    %26 = arith.mulf %23, %25 : vector<32x12xf32>
    %c0_21 = arith.constant 0 : index
    %c0_22 = arith.constant 0 : index
    %27 = vector.load %arg4[%c0_21, %c0_22] : memref<1x12xf32, #tpu.memory_space<vmem>>, vector<1x12xf32>
    %28 = vector.broadcast %27 : vector<1x12xf32> to vector<32x12xf32>
    %29 = arith.addf %26, %28 : vector<32x12xf32>
    %c0_23 = arith.constant 0 : index
    %c0_24 = arith.constant 0 : index
    %30 = vector.load %arg5[%c0_23, %c0_24] : memref<16x12xf32, #tpu.memory_space<vmem>>, vector<16x12xf32>
    %31 = vector.extract_strided_slice %0 {offsets = [0, 0], sizes = [32, 1], strides = [1, 1]} : vector<32x16xf32> to vector<32x1xf32>
    %32 = vector.extract_strided_slice %30 {offsets = [0, 0], sizes = [1, 12], strides = [1, 1]} : vector<16x12xf32> to vector<1x12xf32>
    %33 = vector.broadcast %31 : vector<32x1xf32> to vector<32x12xf32>
    %34 = vector.broadcast %32 : vector<1x12xf32> to vector<32x12xf32>
    %35 = arith.mulf %33, %34 : vector<32x12xf32>
    %36 = vector.extract_strided_slice %0 {offsets = [0, 1], sizes = [32, 1], strides = [1, 1]} : vector<32x16xf32> to vector<32x1xf32>
    %37 = vector.extract_strided_slice %30 {offsets = [1, 0], sizes = [1, 12], strides = [1, 1]} : vector<16x12xf32> to vector<1x12xf32>
    %38 = vector.broadcast %36 : vector<32x1xf32> to vector<32x12xf32>
    %39 = vector.broadcast %37 : vector<1x12xf32> to vector<32x12xf32>
    %40 = arith.mulf %38, %39 : vector<32x12xf32>
    %41 = arith.addf %35, %40 : vector<32x12xf32>
    %42 = vector.extract_strided_slice %0 {offsets = [0, 2], sizes = [32, 1], strides = [1, 1]} : vector<32x16xf32> to vector<32x1xf32>
    %43 = vector.extract_strided_slice %30 {offsets = [2, 0], sizes = [1, 12], strides = [1, 1]} : vector<16x12xf32> to vector<1x12xf32>
    %44 = vector.broadcast %42 : vector<32x1xf32> to vector<32x12xf32>
    %45 = vector.broadcast %43 : vector<1x12xf32> to vector<32x12xf32>
    %46 = arith.mulf %44, %45 : vector<32x12xf32>
    %47 = arith.addf %41, %46 : vector<32x12xf32>
    %48 = vector.extract_strided_slice %0 {offsets = [0, 3], sizes = [32, 1], strides = [1, 1]} : vector<32x16xf32> to vector<32x1xf32>
    %49 = vector.extract_strided_slice %30 {offsets = [3, 0], sizes = [1, 12], strides = [1, 1]} : vector<16x12xf32> to vector<1x12xf32>
    %50 = vector.broadcast %48 : vector<32x1xf32> to vector<32x12xf32>
    %51 = vector.broadcast %49 : vector<1x12xf32> to vector<32x12xf32>
    %52 = arith.mulf %50, %51 : vector<32x12xf32>
    %53 = arith.addf %47, %52 : vector<32x12xf32>
    %54 = vector.extract_strided_slice %0 {offsets = [0, 4], sizes = [32, 1], strides = [1, 1]} : vector<32x16xf32> to vector<32x1xf32>
    %55 = vector.extract_strided_slice %30 {offsets = [4, 0], sizes = [1, 12], strides = [1, 1]} : vector<16x12xf32> to vector<1x12xf32>
    %56 = vector.broadcast %54 : vector<32x1xf32> to vector<32x12xf32>
    %57 = vector.broadcast %55 : vector<1x12xf32> to vector<32x12xf32>
    %58 = arith.mulf %56, %57 : vector<32x12xf32>
    %59 = arith.addf %53, %58 : vector<32x12xf32>
    %60 = vector.extract_strided_slice %0 {offsets = [0, 5], sizes = [32, 1], strides = [1, 1]} : vector<32x16xf32> to vector<32x1xf32>
    %61 = vector.extract_strided_slice %30 {offsets = [5, 0], sizes = [1, 12], strides = [1, 1]} : vector<16x12xf32> to vector<1x12xf32>
    %62 = vector.broadcast %60 : vector<32x1xf32> to vector<32x12xf32>
    %63 = vector.broadcast %61 : vector<1x12xf32> to vector<32x12xf32>
    %64 = arith.mulf %62, %63 : vector<32x12xf32>
    %65 = arith.addf %59, %64 : vector<32x12xf32>
    %66 = vector.extract_strided_slice %0 {offsets = [0, 6], sizes = [32, 1], strides = [1, 1]} : vector<32x16xf32> to vector<32x1xf32>
    %67 = vector.extract_strided_slice %30 {offsets = [6, 0], sizes = [1, 12], strides = [1, 1]} : vector<16x12xf32> to vector<1x12xf32>
    %68 = vector.broadcast %66 : vector<32x1xf32> to vector<32x12xf32>
    %69 = vector.broadcast %67 : vector<1x12xf32> to vector<32x12xf32>
    %70 = arith.mulf %68, %69 : vector<32x12xf32>
    %71 = arith.addf %65, %70 : vector<32x12xf32>
    %72 = vector.extract_strided_slice %0 {offsets = [0, 7], sizes = [32, 1], strides = [1, 1]} : vector<32x16xf32> to vector<32x1xf32>
    %73 = vector.extract_strided_slice %30 {offsets = [7, 0], sizes = [1, 12], strides = [1, 1]} : vector<16x12xf32> to vector<1x12xf32>
    %74 = vector.broadcast %72 : vector<32x1xf32> to vector<32x12xf32>
    %75 = vector.broadcast %73 : vector<1x12xf32> to vector<32x12xf32>
    %76 = arith.mulf %74, %75 : vector<32x12xf32>
    %77 = arith.addf %71, %76 : vector<32x12xf32>
    %78 = vector.extract_strided_slice %0 {offsets = [0, 8], sizes = [32, 1], strides = [1, 1]} : vector<32x16xf32> to vector<32x1xf32>
    %79 = vector.extract_strided_slice %30 {offsets = [8, 0], sizes = [1, 12], strides = [1, 1]} : vector<16x12xf32> to vector<1x12xf32>
    %80 = vector.broadcast %78 : vector<32x1xf32> to vector<32x12xf32>
    %81 = vector.broadcast %79 : vector<1x12xf32> to vector<32x12xf32>
    %82 = arith.mulf %80, %81 : vector<32x12xf32>
    %83 = arith.addf %77, %82 : vector<32x12xf32>
    %84 = vector.extract_strided_slice %0 {offsets = [0, 9], sizes = [32, 1], strides = [1, 1]} : vector<32x16xf32> to vector<32x1xf32>
    %85 = vector.extract_strided_slice %30 {offsets = [9, 0], sizes = [1, 12], strides = [1, 1]} : vector<16x12xf32> to vector<1x12xf32>
    %86 = vector.broadcast %84 : vector<32x1xf32> to vector<32x12xf32>
    %87 = vector.broadcast %85 : vector<1x12xf32> to vector<32x12xf32>
    %88 = arith.mulf %86, %87 : vector<32x12xf32>
    %89 = arith.addf %83, %88 : vector<32x12xf32>
    %90 = vector.extract_strided_slice %0 {offsets = [0, 10], sizes = [32, 1], strides = [1, 1]} : vector<32x16xf32> to vector<32x1xf32>
    %91 = vector.extract_strided_slice %30 {offsets = [10, 0], sizes = [1, 12], strides = [1, 1]} : vector<16x12xf32> to vector<1x12xf32>
    %92 = vector.broadcast %90 : vector<32x1xf32> to vector<32x12xf32>
    %93 = vector.broadcast %91 : vector<1x12xf32> to vector<32x12xf32>
    %94 = arith.mulf %92, %93 : vector<32x12xf32>
    %95 = arith.addf %89, %94 : vector<32x12xf32>
    %96 = vector.extract_strided_slice %0 {offsets = [0, 11], sizes = [32, 1], strides = [1, 1]} : vector<32x16xf32> to vector<32x1xf32>
    %97 = vector.extract_strided_slice %30 {offsets = [11, 0], sizes = [1, 12], strides = [1, 1]} : vector<16x12xf32> to vector<1x12xf32>
    %98 = vector.broadcast %96 : vector<32x1xf32> to vector<32x12xf32>
    %99 = vector.broadcast %97 : vector<1x12xf32> to vector<32x12xf32>
    %100 = arith.mulf %98, %99 : vector<32x12xf32>
    %101 = arith.addf %95, %100 : vector<32x12xf32>
    %102 = vector.extract_strided_slice %0 {offsets = [0, 12], sizes = [32, 1], strides = [1, 1]} : vector<32x16xf32> to vector<32x1xf32>
    %103 = vector.extract_strided_slice %30 {offsets = [12, 0], sizes = [1, 12], strides = [1, 1]} : vector<16x12xf32> to vector<1x12xf32>
    %104 = vector.broadcast %102 : vector<32x1xf32> to vector<32x12xf32>
    %105 = vector.broadcast %103 : vector<1x12xf32> to vector<32x12xf32>
    %106 = arith.mulf %104, %105 : vector<32x12xf32>
    %107 = arith.addf %101, %106 : vector<32x12xf32>
    %108 = vector.extract_strided_slice %0 {offsets = [0, 13], sizes = [32, 1], strides = [1, 1]} : vector<32x16xf32> to vector<32x1xf32>
    %109 = vector.extract_strided_slice %30 {offsets = [13, 0], sizes = [1, 12], strides = [1, 1]} : vector<16x12xf32> to vector<1x12xf32>
    %110 = vector.broadcast %108 : vector<32x1xf32> to vector<32x12xf32>
    %111 = vector.broadcast %109 : vector<1x12xf32> to vector<32x12xf32>
    %112 = arith.mulf %110, %111 : vector<32x12xf32>
    %113 = arith.addf %107, %112 : vector<32x12xf32>
    %114 = vector.extract_strided_slice %0 {offsets = [0, 14], sizes = [32, 1], strides = [1, 1]} : vector<32x16xf32> to vector<32x1xf32>
    %115 = vector.extract_strided_slice %30 {offsets = [14, 0], sizes = [1, 12], strides = [1, 1]} : vector<16x12xf32> to vector<1x12xf32>
    %116 = vector.broadcast %114 : vector<32x1xf32> to vector<32x12xf32>
    %117 = vector.broadcast %115 : vector<1x12xf32> to vector<32x12xf32>
    %118 = arith.mulf %116, %117 : vector<32x12xf32>
    %119 = arith.addf %113, %118 : vector<32x12xf32>
    %120 = vector.extract_strided_slice %0 {offsets = [0, 15], sizes = [32, 1], strides = [1, 1]} : vector<32x16xf32> to vector<32x1xf32>
    %121 = vector.extract_strided_slice %30 {offsets = [15, 0], sizes = [1, 12], strides = [1, 1]} : vector<16x12xf32> to vector<1x12xf32>
    %122 = vector.broadcast %120 : vector<32x1xf32> to vector<32x12xf32>
    %123 = vector.broadcast %121 : vector<1x12xf32> to vector<32x12xf32>
    %124 = arith.mulf %122, %123 : vector<32x12xf32>
    %125 = arith.addf %119, %124 : vector<32x12xf32>
    %c0_25 = arith.constant 0 : index
    %c0_26 = arith.constant 0 : index
    %126 = vector.load %arg6[%c0_25, %c0_26] : memref<16x12xf32, #tpu.memory_space<vmem>>, vector<16x12xf32>
    %127 = vector.extract_strided_slice %0 {offsets = [0, 0], sizes = [32, 1], strides = [1, 1]} : vector<32x16xf32> to vector<32x1xf32>
    %128 = vector.extract_strided_slice %126 {offsets = [0, 0], sizes = [1, 12], strides = [1, 1]} : vector<16x12xf32> to vector<1x12xf32>
    %129 = vector.broadcast %127 : vector<32x1xf32> to vector<32x12xf32>
    %130 = vector.broadcast %128 : vector<1x12xf32> to vector<32x12xf32>
    %131 = arith.mulf %129, %130 : vector<32x12xf32>
    %132 = vector.extract_strided_slice %0 {offsets = [0, 1], sizes = [32, 1], strides = [1, 1]} : vector<32x16xf32> to vector<32x1xf32>
    %133 = vector.extract_strided_slice %126 {offsets = [1, 0], sizes = [1, 12], strides = [1, 1]} : vector<16x12xf32> to vector<1x12xf32>
    %134 = vector.broadcast %132 : vector<32x1xf32> to vector<32x12xf32>
    %135 = vector.broadcast %133 : vector<1x12xf32> to vector<32x12xf32>
    %136 = arith.mulf %134, %135 : vector<32x12xf32>
    %137 = arith.addf %131, %136 : vector<32x12xf32>
    %138 = vector.extract_strided_slice %0 {offsets = [0, 2], sizes = [32, 1], strides = [1, 1]} : vector<32x16xf32> to vector<32x1xf32>
    %139 = vector.extract_strided_slice %126 {offsets = [2, 0], sizes = [1, 12], strides = [1, 1]} : vector<16x12xf32> to vector<1x12xf32>
    %140 = vector.broadcast %138 : vector<32x1xf32> to vector<32x12xf32>
    %141 = vector.broadcast %139 : vector<1x12xf32> to vector<32x12xf32>
    %142 = arith.mulf %140, %141 : vector<32x12xf32>
    %143 = arith.addf %137, %142 : vector<32x12xf32>
    %144 = vector.extract_strided_slice %0 {offsets = [0, 3], sizes = [32, 1], strides = [1, 1]} : vector<32x16xf32> to vector<32x1xf32>
    %145 = vector.extract_strided_slice %126 {offsets = [3, 0], sizes = [1, 12], strides = [1, 1]} : vector<16x12xf32> to vector<1x12xf32>
    %146 = vector.broadcast %144 : vector<32x1xf32> to vector<32x12xf32>
    %147 = vector.broadcast %145 : vector<1x12xf32> to vector<32x12xf32>
    %148 = arith.mulf %146, %147 : vector<32x12xf32>
    %149 = arith.addf %143, %148 : vector<32x12xf32>
    %150 = vector.extract_strided_slice %0 {offsets = [0, 4], sizes = [32, 1], strides = [1, 1]} : vector<32x16xf32> to vector<32x1xf32>
    %151 = vector.extract_strided_slice %126 {offsets = [4, 0], sizes = [1, 12], strides = [1, 1]} : vector<16x12xf32> to vector<1x12xf32>
    %152 = vector.broadcast %150 : vector<32x1xf32> to vector<32x12xf32>
    %153 = vector.broadcast %151 : vector<1x12xf32> to vector<32x12xf32>
    %154 = arith.mulf %152, %153 : vector<32x12xf32>
    %155 = arith.addf %149, %154 : vector<32x12xf32>
    %156 = vector.extract_strided_slice %0 {offsets = [0, 5], sizes = [32, 1], strides = [1, 1]} : vector<32x16xf32> to vector<32x1xf32>
    %157 = vector.extract_strided_slice %126 {offsets = [5, 0], sizes = [1, 12], strides = [1, 1]} : vector<16x12xf32> to vector<1x12xf32>
    %158 = vector.broadcast %156 : vector<32x1xf32> to vector<32x12xf32>
    %159 = vector.broadcast %157 : vector<1x12xf32> to vector<32x12xf32>
    %160 = arith.mulf %158, %159 : vector<32x12xf32>
    %161 = arith.addf %155, %160 : vector<32x12xf32>
    %162 = vector.extract_strided_slice %0 {offsets = [0, 6], sizes = [32, 1], strides = [1, 1]} : vector<32x16xf32> to vector<32x1xf32>
    %163 = vector.extract_strided_slice %126 {offsets = [6, 0], sizes = [1, 12], strides = [1, 1]} : vector<16x12xf32> to vector<1x12xf32>
    %164 = vector.broadcast %162 : vector<32x1xf32> to vector<32x12xf32>
    %165 = vector.broadcast %163 : vector<1x12xf32> to vector<32x12xf32>
    %166 = arith.mulf %164, %165 : vector<32x12xf32>
    %167 = arith.addf %161, %166 : vector<32x12xf32>
    %168 = vector.extract_strided_slice %0 {offsets = [0, 7], sizes = [32, 1], strides = [1, 1]} : vector<32x16xf32> to vector<32x1xf32>
    %169 = vector.extract_strided_slice %126 {offsets = [7, 0], sizes = [1, 12], strides = [1, 1]} : vector<16x12xf32> to vector<1x12xf32>
    %170 = vector.broadcast %168 : vector<32x1xf32> to vector<32x12xf32>
    %171 = vector.broadcast %169 : vector<1x12xf32> to vector<32x12xf32>
    %172 = arith.mulf %170, %171 : vector<32x12xf32>
    %173 = arith.addf %167, %172 : vector<32x12xf32>
    %174 = vector.extract_strided_slice %0 {offsets = [0, 8], sizes = [32, 1], strides = [1, 1]} : vector<32x16xf32> to vector<32x1xf32>
    %175 = vector.extract_strided_slice %126 {offsets = [8, 0], sizes = [1, 12], strides = [1, 1]} : vector<16x12xf32> to vector<1x12xf32>
    %176 = vector.broadcast %174 : vector<32x1xf32> to vector<32x12xf32>
    %177 = vector.broadcast %175 : vector<1x12xf32> to vector<32x12xf32>
    %178 = arith.mulf %176, %177 : vector<32x12xf32>
    %179 = arith.addf %173, %178 : vector<32x12xf32>
    %180 = vector.extract_strided_slice %0 {offsets = [0, 9], sizes = [32, 1], strides = [1, 1]} : vector<32x16xf32> to vector<32x1xf32>
    %181 = vector.extract_strided_slice %126 {offsets = [9, 0], sizes = [1, 12], strides = [1, 1]} : vector<16x12xf32> to vector<1x12xf32>
    %182 = vector.broadcast %180 : vector<32x1xf32> to vector<32x12xf32>
    %183 = vector.broadcast %181 : vector<1x12xf32> to vector<32x12xf32>
    %184 = arith.mulf %182, %183 : vector<32x12xf32>
    %185 = arith.addf %179, %184 : vector<32x12xf32>
    %186 = vector.extract_strided_slice %0 {offsets = [0, 10], sizes = [32, 1], strides = [1, 1]} : vector<32x16xf32> to vector<32x1xf32>
    %187 = vector.extract_strided_slice %126 {offsets = [10, 0], sizes = [1, 12], strides = [1, 1]} : vector<16x12xf32> to vector<1x12xf32>
    %188 = vector.broadcast %186 : vector<32x1xf32> to vector<32x12xf32>
    %189 = vector.broadcast %187 : vector<1x12xf32> to vector<32x12xf32>
    %190 = arith.mulf %188, %189 : vector<32x12xf32>
    %191 = arith.addf %185, %190 : vector<32x12xf32>
    %192 = vector.extract_strided_slice %0 {offsets = [0, 11], sizes = [32, 1], strides = [1, 1]} : vector<32x16xf32> to vector<32x1xf32>
    %193 = vector.extract_strided_slice %126 {offsets = [11, 0], sizes = [1, 12], strides = [1, 1]} : vector<16x12xf32> to vector<1x12xf32>
    %194 = vector.broadcast %192 : vector<32x1xf32> to vector<32x12xf32>
    %195 = vector.broadcast %193 : vector<1x12xf32> to vector<32x12xf32>
    %196 = arith.mulf %194, %195 : vector<32x12xf32>
    %197 = arith.addf %191, %196 : vector<32x12xf32>
    %198 = vector.extract_strided_slice %0 {offsets = [0, 12], sizes = [32, 1], strides = [1, 1]} : vector<32x16xf32> to vector<32x1xf32>
    %199 = vector.extract_strided_slice %126 {offsets = [12, 0], sizes = [1, 12], strides = [1, 1]} : vector<16x12xf32> to vector<1x12xf32>
    %200 = vector.broadcast %198 : vector<32x1xf32> to vector<32x12xf32>
    %201 = vector.broadcast %199 : vector<1x12xf32> to vector<32x12xf32>
    %202 = arith.mulf %200, %201 : vector<32x12xf32>
    %203 = arith.addf %197, %202 : vector<32x12xf32>
    %204 = vector.extract_strided_slice %0 {offsets = [0, 13], sizes = [32, 1], strides = [1, 1]} : vector<32x16xf32> to vector<32x1xf32>
    %205 = vector.extract_strided_slice %126 {offsets = [13, 0], sizes = [1, 12], strides = [1, 1]} : vector<16x12xf32> to vector<1x12xf32>
    %206 = vector.broadcast %204 : vector<32x1xf32> to vector<32x12xf32>
    %207 = vector.broadcast %205 : vector<1x12xf32> to vector<32x12xf32>
    %208 = arith.mulf %206, %207 : vector<32x12xf32>
    %209 = arith.addf %203, %208 : vector<32x12xf32>
    %210 = vector.extract_strided_slice %0 {offsets = [0, 14], sizes = [32, 1], strides = [1, 1]} : vector<32x16xf32> to vector<32x1xf32>
    %211 = vector.extract_strided_slice %126 {offsets = [14, 0], sizes = [1, 12], strides = [1, 1]} : vector<16x12xf32> to vector<1x12xf32>
    %212 = vector.broadcast %210 : vector<32x1xf32> to vector<32x12xf32>
    %213 = vector.broadcast %211 : vector<1x12xf32> to vector<32x12xf32>
    %214 = arith.mulf %212, %213 : vector<32x12xf32>
    %215 = arith.addf %209, %214 : vector<32x12xf32>
    %216 = vector.extract_strided_slice %0 {offsets = [0, 15], sizes = [32, 1], strides = [1, 1]} : vector<32x16xf32> to vector<32x1xf32>
    %217 = vector.extract_strided_slice %126 {offsets = [15, 0], sizes = [1, 12], strides = [1, 1]} : vector<16x12xf32> to vector<1x12xf32>
    %218 = vector.broadcast %216 : vector<32x1xf32> to vector<32x12xf32>
    %219 = vector.broadcast %217 : vector<1x12xf32> to vector<32x12xf32>
    %220 = arith.mulf %218, %219 : vector<32x12xf32>
    %221 = arith.addf %215, %220 : vector<32x12xf32>
    %222 = arith.mulf %29, %221 : vector<32x12xf32>
    %223 = arith.addf %125, %222 : vector<32x12xf32>
    %c0_27 = arith.constant 0 : index
    %c0_28 = arith.constant 0 : index
    %224 = vector.load %arg13[%c0_27, %c0_28] : memref<32x12xf32, #tpu.memory_space<vmem>>, vector<32x12xf32>
    tpu.vector_store %arg13[%c0_27, %c0_28], %223 {strides = array<i32>} : memref<32x12xf32, #tpu.memory_space<vmem>>, vector<32x12xf32>,
    return
  }
  func.func @transform_0(%arg0: i32) -> (i32, i32) {
    %c0_i32 = arith.constant 0 : i32
    %c0_i32_0 = arith.constant 0 : i32
    return %arg0, %c0_i32 : i32, i32
  }
  func.func @transform_1(%arg0: i32) -> (i32, i32) {
    %c0_i32 = arith.constant 0 : i32
    %c0_i32_0 = arith.constant 0 : i32
    return %arg0, %c0_i32 : i32, i32
  }
  func.func @transform_2(%arg0: i32) -> (i32, i32) {
    %c0_i32 = arith.constant 0 : i32
    %c0_i32_0 = arith.constant 0 : i32
    %c0_i32_1 = arith.constant 0 : i32
    return %c0_i32, %c0_i32_0 : i32, i32
  }
  func.func @transform_3(%arg0: i32) -> (i32, i32) {
    %c0_i32 = arith.constant 0 : i32
    %c0_i32_0 = arith.constant 0 : i32
    %c0_i32_1 = arith.constant 0 : i32
    return %c0_i32, %c0_i32_0 : i32, i32
  }
  func.func @transform_4(%arg0: i32) -> (i32, i32) {
    %c0_i32 = arith.constant 0 : i32
    %c0_i32_0 = arith.constant 0 : i32
    %c0_i32_1 = arith.constant 0 : i32
    return %c0_i32, %c0_i32_0 : i32, i32
  }
  func.func @transform_5(%arg0: i32) -> (i32, i32) {
    %c0_i32 = arith.constant 0 : i32
    %c0_i32_0 = arith.constant 0 : i32
    %c0_i32_1 = arith.constant 0 : i32
    return %c0_i32, %c0_i32_0 : i32, i32
  }
  func.func @transform_6(%arg0: i32) -> (i32, i32) {
    %c0_i32 = arith.constant 0 : i32
    %c0_i32_0 = arith.constant 0 : i32
    %c0_i32_1 = arith.constant 0 : i32
    return %c0_i32, %c0_i32_0 : i32, i32
  }
  func.func @transform_7(%arg0: i32) -> (i32, i32) {
    %c0_i32 = arith.constant 0 : i32
    %c0_i32_0 = arith.constant 0 : i32
    %c0_i32_1 = arith.constant 0 : i32
    return %c0_i32, %c0_i32_0 : i32, i32
  }
  func.func @transform_8(%arg0: i32) -> (i32, i32) {
    %c0_i32 = arith.constant 0 : i32
    %c0_i32_0 = arith.constant 0 : i32
    %c0_i32_1 = arith.constant 0 : i32
    return %c0_i32, %c0_i32_0 : i32, i32
  }
  func.func @transform_9(%arg0: i32) -> (i32, i32) {
    %c0_i32 = arith.constant 0 : i32
    %c0_i32_0 = arith.constant 0 : i32
    %c0_i32_1 = arith.constant 0 : i32
    return %c0_i32, %c0_i32_0 : i32, i32
  }
  func.func @transform_10(%arg0: i32) -> (i32, i32) {
    %c0_i32 = arith.constant 0 : i32
    %c0_i32_0 = arith.constant 0 : i32
    %c0_i32_1 = arith.constant 0 : i32
    return %c0_i32, %c0_i32_0 : i32, i32
  }
  func.func @transform_11(%arg0: i32) -> (i32, i32) {
    %c0_i32 = arith.constant 0 : i32
    %c0_i32_0 = arith.constant 0 : i32
    %c0_i32_1 = arith.constant 0 : i32
    return %c0_i32, %c0_i32_0 : i32, i32
  }
  func.func @transform_12(%arg0: i32) -> (i32, i32) {
    %c0_i32 = arith.constant 0 : i32
    %c0_i32_0 = arith.constant 0 : i32
    return %arg0, %c0_i32 : i32, i32
  }
}

</mosaic_0001>

<llo_original>
// kernel: _forward.12
$region0: #{_forward.12}
  #allocation0 [shape = 'u32[]', space=smem, size = 0x4, offset = 0x4, fixed_abs, tag = 'smem constant byte address 0x4 - core index']
  #allocation1 [shape = 'u32[72,128]{1,0:T(1,128)}', space=vmem, size = 0x9000, scoped, tag = 'internal scratch']
  %s0 = inlined_call_operand.vmem [shape: f32[32,24], index: 0, kind: input, shape index: {}]
  %s1 = inlined_call_operand.vmem [shape: f32[1,24], index: 1, kind: input, shape index: {}]
  %s2 = inlined_call_operand.vmem [shape: f32[1,24], index: 2, kind: input, shape index: {}]
  %s3 = inlined_call_operand.vmem [shape: bf16[24,128], index: 3, kind: input, shape index: {}]
  %s4 = inlined_call_operand.vmem [shape: f32[1,128], index: 4, kind: input, shape index: {}, may-alias: {4,6,8,10}]
  %s5 = inlined_call_operand.vmem [shape: bf16[128,128], index: 5, kind: input, shape index: {}]
  %s6 = inlined_call_operand.vmem [shape: f32[1,128], index: 6, kind: input, shape index: {}, may-alias: {4,6,8,10}]
  %s7 = inlined_call_operand.vmem [shape: bf16[128,128], index: 7, kind: input, shape index: {}]
  %s8 = inlined_call_operand.vmem [shape: f32[1,128], index: 8, kind: input, shape index: {}, may-alias: {4,6,8,10}]
  %s9 = inlined_call_operand.vmem [shape: f32[1,128], index: 9, kind: input, shape index: {}]
  %s10 = inlined_call_operand.vmem [shape: f32[1,128], index: 10, kind: input, shape index: {}, may-alias: {4,6,8,10}]
  %s11 = inlined_call_operand.vmem [shape: f32[128,128], index: 11, kind: input, shape index: {}]
  %s12 = inlined_call_operand.vmem [shape: f32[32,128], index: 12, kind: output, shape index: {}]
  %s13 = sld [smem:[#allocation0]]
  $region58: #{_forward.12} parent=0
    _
  %s15 = ssub.s32 1, %s13
  %s16 = scalar_select 0, %s15, %s13
  // Predicated region
  $region2: #{_forward.12} parent=0 // pred_check
    _
  $region3: #{_forward.12} parent=0 // pred_check_branch
    %18 = sbr.rel (0) target = $region5
  $region4: #{_forward.12} parent=0 // pred_region
    _
  $region5: #{_forward.12} parent=0 // pred_fallthru
    _
  // Predicated region
  $region6: #{_forward.12} parent=0 // pred_check
    _
  $region7: #{_forward.12} parent=0 // pred_check_branch
    %20 = sbr.rel (0) target = $region9
  $region8: #{_forward.12} parent=0 // pred_region
    _
  $region9: #{_forward.12} parent=0 // pred_fallthru
    _
  // Predicated region
  $region10: #{_forward.12} parent=0 // pred_check
    _
  $region11: #{_forward.12} parent=0 // pred_check_branch
    %22 = sbr.rel (0) target = $region13
  $region12: #{_forward.12} parent=0 // pred_region
    _
  $region13: #{_forward.12} parent=0 // pred_fallthru
    _
  // Predicated region
  $region14: #{_forward.12} parent=0 // pred_check
    _
  $region15: #{_forward.12} parent=0 // pred_check_branch
    %24 = sbr.rel (0) target = $region17
  $region16: #{_forward.12} parent=0 // pred_region
    _
  $region17: #{_forward.12} parent=0 // pred_fallthru
    _
  // Predicated region
  $region18: #{_forward.12} parent=0 // pred_check
    _
  $region19: #{_forward.12} parent=0 // pred_check_branch
    %26 = sbr.rel (0) target = $region21
  $region20: #{_forward.12} parent=0 // pred_region
    _
  $region21: #{_forward.12} parent=0 // pred_fallthru
    _
  // Predicated region
  $region22: #{_forward.12} parent=0 // pred_check
    _
  $region23: #{_forward.12} parent=0 // pred_check_branch
    %28 = sbr.rel (0) target = $region25
  $region24: #{_forward.12} parent=0 // pred_region
    _
  $region25: #{_forward.12} parent=0 // pred_fallthru
    _
  // Predicated region
  $region26: #{_forward.12} parent=0 // pred_check
    _
  $region27: #{_forward.12} parent=0 // pred_check_branch
    %30 = sbr.rel (0) target = $region29
  $region28: #{_forward.12} parent=0 // pred_region
    _
  $region29: #{_forward.12} parent=0 // pred_fallthru
    _
  // Predicated region
  $region30: #{_forward.12} parent=0 // pred_check
    _
  $region31: #{_forward.12} parent=0 // pred_check_branch
    %32 = sbr.rel (0) target = $region33
  $region32: #{_forward.12} parent=0 // pred_region
    _
  $region33: #{_forward.12} parent=0 // pred_fallthru
    _
  // Predicated region
  $region34: #{_forward.12} parent=0 // pred_check
    _
  $region35: #{_forward.12} parent=0 // pred_check_branch
    %34 = sbr.rel (0) target = $region37
  $region36: #{_forward.12} parent=0 // pred_region
    _
  $region37: #{_forward.12} parent=0 // pred_fallthru
    _
  // Predicated region
  $region38: #{_forward.12} parent=0 // pred_check
    _
  $region39: #{_forward.12} parent=0 // pred_check_branch
    %36 = sbr.rel (0) target = $region41
  $region40: #{_forward.12} parent=0 // pred_region
    _
  $region41: #{_forward.12} parent=0 // pred_fallthru
    _
  // Predicated region
  $region42: #{_forward.12} parent=0 // pred_check
    _
  $region43: #{_forward.12} parent=0 // pred_check_branch
    %38 = sbr.rel (0) target = $region45
  $region44: #{_forward.12} parent=0 // pred_region
    _
  $region45: #{_forward.12} parent=0 // pred_fallthru
    _
  // Predicated region
  $region46: #{_forward.12} parent=0 // pred_check
    _
  $region47: #{_forward.12} parent=0 // pred_check_branch
    %40 = sbr.rel (0) target = $region49
  $region48: #{_forward.12} parent=0 // pred_region
    _
  $region49: #{_forward.12} parent=0 // pred_fallthru
    _
  %v42 = vld [vmem:[%s0] sm:$0xff]
  %v43 = vld [vmem:[%s0 + $0x8] sm:$0xff]
  %v44 = vld [vmem:[%s0 + $0x10] sm:$0xff]
  %v45 = vld [vmem:[%s0 + $0x18] sm:$0xff]
  %v46 = vld [vmem:[%s1] sm:$0x1]
  %v48 = vperm.slane %v46, 0
  %v50 = vsub.f32 %v42, %v48
  %v51 = vsub.f32 %v43, %v48
  %v52 = vsub.f32 %v44, %v48
  %v53 = vsub.f32 %v45, %v48
  %v54 = vld [vmem:[%s2] sm:$0x1]
  %v56 = vperm.slane %v54, 0
  %v58 = vmul.f32 %v50, %v56
  %v59 = vmul.f32 %v51, %v56
  %v60 = vmul.f32 %v52, %v56
  %v61 = vmul.f32 %v53, %v56
  %v62 = vpack.c.bf16 %v59, %v58
  %v63 = vpack.c.bf16 %v61, %v60
  %v64 = vld [vmem:[%s3] sm:$0xf]
  %v65 = vld [vmem:[%s3 + $0x4] sm:$0xf]
  %v66 = vld [vmem:[%s3 + $0x8] sm:$0xf]
  %v67 = vld [vmem:[%s4] sm:$0x1]
  %v69 = vperm.slane %v67, 0
  %v74 = vunpack.c.l.b16 %v64
  %v75 = vunpack.c.l.b16 %v65
  %v76 = vunpack.c.l.b16 %v66
  %v77 = vpack.c.b16 %v75, %v74
  %v78 = vpack.c.b16 %v76, %v76
  %vm80 = vcmask 195584
  %v82 = vsel %vm80, %v62, 0
  %v85 = vsel %vm80, %v63, 0
  %vm87 = vcmask 1043456
  %v89 = vsel %vm87, %v78, 0
  %91 = vmatpush.bf16.msra.mxu0 0
  %92 = vmatpush.bf16.msra.mxu0 0
  %93 = vmatpush.bf16.msra.mxu0 0
  %94 = vmatpush.bf16.msra.mxu0 0
  %95 = vmatpush.bf16.msra.mxu0 0
  %96 = vmatpush.bf16.msra.mxu0 0
  %97 = vmatpush.bf16.msra.mxu0 %v89
  %98 = vmatpush.bf16.msra.mxu0 %v77
  %99 = vmatmul.bf16.gmra.mxu0 %v82
  %v100 = vpop.f32.mrf.mxu0
  %v101 = vadd.f32 %v69, %v100
  %v102 = vpop.f32.mrf.mxu0
  %v103 = vadd.f32 %v69, %v102
  %104 = vmatmul.bf16.gmra.mxu0 %v85
  %v105 = vpop.f32.mrf.mxu0
  %v106 = vadd.f32 %v69, %v105
  %v107 = vpop.f32.mrf.mxu0
  %v108 = vadd.f32 %v69, %v107
  %109 = vdwg.mxu0
  %v110 = vmax.f32 %v101, 0.0
  %v111 = vmax.f32 %v103, 0.0
  %v112 = vmax.f32 %v106, 0.0
  %v113 = vmax.f32 %v108, 0.0
  %v114 = vpack.c.bf16 %v111, %v110
  %v115 = vpack.c.bf16 %v113, %v112
  %v116 = vld [vmem:[%s5] sm:$0xf]
  %v117 = vld [vmem:[%s5 + $0x4] sm:$0xf]
  %v118 = vld [vmem:[%s5 + $0x8] sm:$0xf]
  %v119 = vld [vmem:[%s5 + $0xc] sm:$0xf]
  %v120 = vld [vmem:[%s5 + $0x10] sm:$0xf]
  %v121 = vld [vmem:[%s5 + $0x14] sm:$0xf]
  %v122 = vld [vmem:[%s5 + $0x18] sm:$0xf]
  %v123 = vld [vmem:[%s5 + $0x1c] sm:$0xf]
  %v124 = vld [vmem:[%s5 + $0x20] sm:$0xf]
  %v125 = vld [vmem:[%s5 + $0x24] sm:$0xf]
  %v126 = vld [vmem:[%s5 + $0x28] sm:$0xf]
  %v127 = vld [vmem:[%s5 + $0x2c] sm:$0xf]
  %v128 = vld [vmem:[%s5 + $0x30] sm:$0xf]
  %v129 = vld [vmem:[%s5 + $0x34] sm:$0xf]
  %v130 = vld [vmem:[%s5 + $0x38] sm:$0xf]
  %v131 = vld [vmem:[%s5 + $0x3c] sm:$0xf]
  %v132 = vld [vmem:[%s6] sm:$0x1]
  %v134 = vperm.slane %v132, 0
  %v152 = vunpack.c.l.b16 %v116
  %v153 = vunpack.c.l.b16 %v117
  %v154 = vunpack.c.l.b16 %v118
  %v155 = vunpack.c.l.b16 %v119
  %v156 = vunpack.c.l.b16 %v120
  %v157 = vunpack.c.l.b16 %v121
  %v158 = vunpack.c.l.b16 %v122
  %v159 = vunpack.c.l.b16 %v123
  %v160 = vunpack.c.l.b16 %v124
  %v161 = vunpack.c.l.b16 %v125
  %v162 = vunpack.c.l.b16 %v126
  %v163 = vunpack.c.l.b16 %v127
  %v164 = vunpack.c.l.b16 %v128
  %v165 = vunpack.c.l.b16 %v129
  %v166 = vunpack.c.l.b16 %v130
  %v167 = vunpack.c.l.b16 %v131
  %v168 = vpack.c.b16 %v153, %v152
  %v169 = vpack.c.b16 %v155, %v154
  %v170 = vpack.c.b16 %v157, %v156
  %v171 = vpack.c.b16 %v159, %v158
  %v172 = vpack.c.b16 %v161, %v160
  %v173 = vpack.c.b16 %v163, %v162
  %v174 = vpack.c.b16 %v165, %v164
  %v175 = vpack.c.b16 %v167, %v166
  %184 = vmatpush.bf16.msra.mxu0 %v175
  %185 = vmatpush.bf16.msra.mxu0 %v174
  %186 = vmatpush.bf16.msra.mxu0 %v173
  %187 = vmatpush.bf16.msra.mxu0 %v172
  %188 = vmatpush.bf16.msra.mxu0 %v171
  %189 = vmatpush.bf16.msra.mxu0 %v170
  %190 = vmatpush.bf16.msra.mxu0 %v169
  %191 = vmatpush.bf16.msra.mxu0 %v168
  %192 = vmatmul.bf16.gmra.mxu0 %v114
  %v193 = vpop.f32.mrf.mxu0
  %v194 = vadd.f32 %v134, %v193
  %v195 = vpop.f32.mrf.mxu0
  %v196 = vadd.f32 %v134, %v195
  %197 = vmatmul.bf16.gmra.mxu0 %v115
  %v198 = vpop.f32.mrf.mxu0
  %v199 = vadd.f32 %v134, %v198
  %v200 = vpop.f32.mrf.mxu0
  %v201 = vadd.f32 %v134, %v200
  %202 = vdwg.mxu0
  %v203 = vmax.f32 %v194, 0.0
  %v204 = vmax.f32 %v196, 0.0
  %v205 = vmax.f32 %v199, 0.0
  %v206 = vmax.f32 %v201, 0.0
  %v207 = vpack.c.bf16 %v204, %v203
  %v208 = vpack.c.bf16 %v206, %v205
  %v209 = vld [vmem:[%s7] sm:$0xf]
  %v210 = vld [vmem:[%s7 + $0x4] sm:$0xf]
  %v211 = vld [vmem:[%s7 + $0x8] sm:$0xf]
  %v212 = vld [vmem:[%s7 + $0xc] sm:$0xf]
  %v213 = vld [vmem:[%s7 + $0x10] sm:$0xf]
  %v214 = vld [vmem:[%s7 + $0x14] sm:$0xf]
  %v215 = vld [vmem:[%s7 + $0x18] sm:$0xf]
  %v216 = vld [vmem:[%s7 + $0x1c] sm:$0xf]
  %v217 = vld [vmem:[%s7 + $0x20] sm:$0xf]
  %v218 = vld [vmem:[%s7 + $0x24] sm:$0xf]
  %v219 = vld [vmem:[%s7 + $0x28] sm:$0xf]
  %v220 = vld [vmem:[%s7 + $0x2c] sm:$0xf]
  %v221 = vld [vmem:[%s7 + $0x30] sm:$0xf]
  %v222 = vld [vmem:[%s7 + $0x34] sm:$0xf]
  %v223 = vld [vmem:[%s7 + $0x38] sm:$0xf]
  %v224 = vld [vmem:[%s7 + $0x3c] sm:$0xf]
  %v225 = vld [vmem:[%s8] sm:$0x1]
  %v227 = vperm.slane %v225, 0
  %v245 = vunpack.c.l.b16 %v209
  %v246 = vunpack.c.l.b16 %v210
  %v247 = vunpack.c.l.b16 %v211
  %v248 = vunpack.c.l.b16 %v212
  %v249 = vunpack.c.l.b16 %v213
  %v250 = vunpack.c.l.b16 %v214
  %v251 = vunpack.c.l.b16 %v215
  %v252 = vunpack.c.l.b16 %v216
  %v253 = vunpack.c.l.b16 %v217
  %v254 = vunpack.c.l.b16 %v218
  %v255 = vunpack.c.l.b16 %v219
  %v256 = vunpack.c.l.b16 %v220
  %v257 = vunpack.c.l.b16 %v221
  %v258 = vunpack.c.l.b16 %v222
  %v259 = vunpack.c.l.b16 %v223
  %v260 = vunpack.c.l.b16 %v224
  %v261 = vpack.c.b16 %v246, %v245
  %v262 = vpack.c.b16 %v248, %v247
  %v263 = vpack.c.b16 %v250, %v249
  %v264 = vpack.c.b16 %v252, %v251
  %v265 = vpack.c.b16 %v254, %v253
  %v266 = vpack.c.b16 %v256, %v255
  %v267 = vpack.c.b16 %v258, %v257
  %v268 = vpack.c.b16 %v260, %v259
  %277 = vmatpush.bf16.msra.mxu0 %v268
  %278 = vmatpush.bf16.msra.mxu0 %v267
  %279 = vmatpush.bf16.msra.mxu0 %v266
  %280 = vmatpush.bf16.msra.mxu0 %v265
  %281 = vmatpush.bf16.msra.mxu0 %v264
  %282 = vmatpush.bf16.msra.mxu0 %v263
  %283 = vmatpush.bf16.msra.mxu0 %v262
  %284 = vmatpush.bf16.msra.mxu0 %v261
  %285 = vmatmul.bf16.gmra.mxu0 %v207
  %v286 = vpop.f32.mrf.mxu0
  %v287 = vadd.f32 %v227, %v286
  %v288 = vpop.f32.mrf.mxu0
  %v289 = vadd.f32 %v227, %v288
  %290 = vmatmul.bf16.gmra.mxu0 %v208
  %v291 = vpop.f32.mrf.mxu0
  %v292 = vadd.f32 %v227, %v291
  %v293 = vpop.f32.mrf.mxu0
  %v294 = vadd.f32 %v227, %v293
  %295 = vdwg.mxu0
  %v296 = vld [vmem:[%s9] sm:$0x1]
  %v297 = vld [vmem:[%s10] sm:$0x1]
  %v298 = vld [vmem:[%s11] sm:$0xff]
  %v299 = vld [vmem:[%s11 + $0x8] sm:$0xff]
  %v300 = vld [vmem:[%s11 + $0x10] sm:$0xff]
  %v301 = vld [vmem:[%s11 + $0x18] sm:$0xff]
  %v302 = vld [vmem:[%s11 + $0x20] sm:$0xff]
  %v303 = vld [vmem:[%s11 + $0x28] sm:$0xff]
  %v304 = vld [vmem:[%s11 + $0x30] sm:$0xff]
  %v305 = vld [vmem:[%s11 + $0x38] sm:$0xff]
  %v306 = vld [vmem:[%s11 + $0x40] sm:$0xff]
  %v307 = vld [vmem:[%s11 + $0x48] sm:$0xff]
  %v308 = vld [vmem:[%s11 + $0x50] sm:$0xff]
  %v309 = vld [vmem:[%s11 + $0x58] sm:$0xff]
  %v310 = vld [vmem:[%s11 + $0x60] sm:$0xff]
  %v311 = vld [vmem:[%s11 + $0x68] sm:$0xff]
  %v312 = vld [vmem:[%s11 + $0x70] sm:$0xff]
  %v313 = vld [vmem:[%s11 + $0x78] sm:$0xff]
  %314 = vmatpush.msra.mxu0 %v313
  %315 = vmatpush.msra.mxu0 %v312
  %316 = vmatpush.msra.mxu0 %v311
  %317 = vmatpush.msra.mxu0 %v310
  %318 = vmatpush.msra.mxu0 %v309
  %319 = vmatpush.msra.mxu0 %v308
  %320 = vmatpush.msra.mxu0 %v307
  %321 = vmatpush.msra.mxu0 %v306
  %322 = vmatpush.msra.mxu0 %v305
  %323 = vmatpush.msra.mxu0 %v304
  %324 = vmatpush.msra.mxu0 %v303
  %325 = vmatpush.msra.mxu0 %v302
  %326 = vmatpush.msra.mxu0 %v301
  %327 = vmatpush.msra.mxu0 %v300
  %328 = vmatpush.msra.mxu0 %v299
  %329 = vmatpush.msra.mxu0 %v298
  %330 = vmatmul.f32.gmra.mxu0 %v287
  %v331 = vpop.f32.mrf.mxu0
  %v332 = vadd.f32 0.0, %v331
  %333 = vmatmul.f32.gmra.mxu0 %v289
  %v334 = vpop.f32.mrf.mxu0
  %v335 = vadd.f32 0.0, %v334
  %336 = vmatmul.f32.gmra.mxu0 %v292
  %v337 = vpop.f32.mrf.mxu0
  %v338 = vadd.f32 0.0, %v337
  %339 = vmatmul.f32.gmra.mxu0 %v294
  %v340 = vpop.f32.mrf.mxu0
  %v341 = vadd.f32 0.0, %v340
  %342 = vdwg.mxu0
  %v343 = vmul.f32 %v287, %v287
  %v344 = vmul.f32 %v289, %v289
  %v345 = vmul.f32 %v292, %v292
  %v346 = vmul.f32 %v294, %v294
  %347 = vmatpush.msra.mxu0 %v313
  %348 = vmatpush.msra.mxu0 %v312
  %349 = vmatpush.msra.mxu0 %v311
  %350 = vmatpush.msra.mxu0 %v310
  %351 = vmatpush.msra.mxu0 %v309
  %352 = vmatpush.msra.mxu0 %v308
  %353 = vmatpush.msra.mxu0 %v307
  %354 = vmatpush.msra.mxu0 %v306
  %355 = vmatpush.msra.mxu0 %v305
  %356 = vmatpush.msra.mxu0 %v304
  %357 = vmatpush.msra.mxu0 %v303
  %358 = vmatpush.msra.mxu0 %v302
  %359 = vmatpush.msra.mxu0 %v301
  %360 = vmatpush.msra.mxu0 %v300
  %361 = vmatpush.msra.mxu0 %v299
  %362 = vmatpush.msra.mxu0 %v298
  %363 = vmatmul.f32.gmra.mxu0 %v343
  %v364 = vpop.f32.mrf.mxu0
  %v365 = vadd.f32 0.0, %v364
  %366 = vmatmul.f32.gmra.mxu0 %v344
  %v367 = vpop.f32.mrf.mxu0
  %v368 = vadd.f32 0.0, %v367
  %369 = vmatmul.f32.gmra.mxu0 %v345
  %v370 = vpop.f32.mrf.mxu0
  %v371 = vadd.f32 0.0, %v370
  %372 = vmatmul.f32.gmra.mxu0 %v346
  %v373 = vpop.f32.mrf.mxu0
  %v374 = vadd.f32 0.0, %v373
  %375 = vdwg.mxu0
  %v376 = vmul.f32 %v332, %v332
  %v377 = vmul.f32 %v335, %v335
  %v378 = vmul.f32 %v338, %v338
  %v379 = vmul.f32 %v341, %v341
  %v380 = vsub.f32 %v365, %v376
  %v381 = vsub.f32 %v368, %v377
  %v382 = vsub.f32 %v371, %v378
  %v383 = vsub.f32 %v374, %v379
  %v384 = vmax.f32 %v380, 0.0
  %v385 = vmax.f32 %v381, 0.0
  %v386 = vmax.f32 %v382, 0.0
  %v387 = vmax.f32 %v383, 0.0
  %v388 = vsub.f32 %v287, %v332
  %v389 = vsub.f32 %v289, %v335
  %v390 = vsub.f32 %v292, %v338
  %v391 = vsub.f32 %v294, %v341
  %v392 = vadd.f32 %v384, 1e-05
  %v393 = vadd.f32 %v385, 1e-05
  %v394 = vadd.f32 %v386, 1e-05
  %v395 = vadd.f32 %v387, 1e-05
  %v396 = vrsqrt.pop %v392
  %v397 = vmul.f32 %v396, %v392
  %v398 = vmul.f32 %v397, %v396
  %v399 = vmul.f32 0.5, %v398
  %v400 = vsub.f32 1.5, %v399
  %v401 = vmul.f32 %v396, %v400
  %vm402 = vweird.f32 %v392
  %vm403 = vweird.f32 %v396
  %vm404 = vmor %vm402, %vm403
  %v405 = vsel %vm404, %v396, %v401
  %v406 = vrsqrt.pop %v393
  %v407 = vmul.f32 %v406, %v393
  %v408 = vmul.f32 %v407, %v406
  %v409 = vmul.f32 0.5, %v408
  %v410 = vsub.f32 1.5, %v409
  %v411 = vmul.f32 %v406, %v410
  %vm412 = vweird.f32 %v393
  %vm413 = vweird.f32 %v406
  %vm414 = vmor %vm412, %vm413
  %v415 = vsel %vm414, %v406, %v411
  %v416 = vrsqrt.pop %v394
  %v417 = vmul.f32 %v416, %v394
  %v418 = vmul.f32 %v417, %v416
  %v419 = vmul.f32 0.5, %v418
  %v420 = vsub.f32 1.5, %v419
  %v421 = vmul.f32 %v416, %v420
  %vm422 = vweird.f32 %v394
  %vm423 = vweird.f32 %v416
  %vm424 = vmor %vm422, %vm423
  %v425 = vsel %vm424, %v416, %v421
  %v426 = vrsqrt.pop %v395
  %v427 = vmul.f32 %v426, %v395
  %v428 = vmul.f32 %v427, %v426
  %v429 = vmul.f32 0.5, %v428
  %v430 = vsub.f32 1.5, %v429
  %v431 = vmul.f32 %v426, %v430
  %vm432 = vweird.f32 %v395
  %vm433 = vweird.f32 %v426
  %vm434 = vmor %vm432, %vm433
  %v435 = vsel %vm434, %v426, %v431
  %v436 = vmul.f32 %v388, %v405
  %v437 = vmul.f32 %v389, %v415
  %v438 = vmul.f32 %v390, %v425
  %v439 = vmul.f32 %v391, %v435
  %v441 = vperm.slane %v296, 0
  %v443 = vmul.f32 %v436, %v441
  %v444 = vmul.f32 %v437, %v441
  %v445 = vmul.f32 %v438, %v441
  %v446 = vmul.f32 %v439, %v441
  %v448 = vperm.slane %v297, 0
  %v450 = vadd.f32 %v443, %v448
  %v451 = vadd.f32 %v444, %v448
  %v452 = vadd.f32 %v445, %v448
  %v453 = vadd.f32 %v446, %v448
  %454 = vst [vmem:[%s12] sm:$0xff] %v450
  %455 = vst [vmem:[%s12 + $0x8] sm:$0xff] %v451
  %456 = vst [vmem:[%s12 + $0x10] sm:$0xff] %v452
  %457 = vst [vmem:[%s12 + $0x18] sm:$0xff] %v453
  // Predicated region
  $region50: #{_forward.12} parent=0 // pred_check
    _
  $region51: #{_forward.12} parent=0 // pred_check_branch
    %459 = sbr.rel (0) target = $region53
  $region52: #{_forward.12} parent=0 // pred_region
    _
  $region53: #{_forward.12} parent=0 // pred_fallthru
    _
  // Predicated region
  $region54: #{_forward.12} parent=0 // pred_check
    _
  $region55: #{_forward.12} parent=0 // pred_check_branch
    %461 = sbr.rel (0) target = $region57
  $region56: #{_forward.12} parent=0 // pred_region
    _
  $region57: #{_forward.12} parent=0 // pred_fallthru
    _

// kernel: _forward.13
$region0: #{_forward.13}
  #allocation0 [shape = 'u32[]', space=smem, size = 0x4, offset = 0x4, fixed_abs, tag = 'smem constant byte address 0x4 - core index']
  #allocation1 [shape = 'u32[72,128]{1,0:T(1,128)}', space=vmem, size = 0x9000, scoped, tag = 'internal scratch']
  %s0 = inlined_call_operand.vmem [shape: f32[64,128], index: 0, kind: input, shape index: {}]
  %s1 = inlined_call_operand.vmem [shape: f32[64,128], index: 1, kind: input, shape index: {}]
  %s2 = inlined_call_operand.vmem [shape: f32[64,8], index: 2, kind: input, shape index: {}]
  %s3 = inlined_call_operand.vmem [shape: f32[64,8], index: 3, kind: input, shape index: {}]
  %s4 = inlined_call_operand.vmem [shape: bf16[128,128], index: 4, kind: input, shape index: {}]
  %s5 = inlined_call_operand.vmem [shape: bf16[128,128], index: 5, kind: input, shape index: {}]
  %s6 = inlined_call_operand.vmem [shape: f32[8,128], index: 6, kind: input, shape index: {}]
  %s7 = inlined_call_operand.vmem [shape: f32[8,128], index: 7, kind: input, shape index: {}]
  %s8 = inlined_call_operand.vmem [shape: f32[1,128], index: 8, kind: input, shape index: {}]
  %s9 = inlined_call_operand.vmem [shape: f32[1,128], index: 9, kind: input, shape index: {}, may-alias: {9,11,13,15}]
  %s10 = inlined_call_operand.vmem [shape: bf16[128,128], index: 10, kind: input, shape index: {}]
  %s11 = inlined_call_operand.vmem [shape: f32[1,128], index: 11, kind: input, shape index: {}, may-alias: {9,11,13,15}]
  %s12 = inlined_call_operand.vmem [shape: bf16[128,128], index: 12, kind: input, shape index: {}]
  %s13 = inlined_call_operand.vmem [shape: f32[1,128], index: 13, kind: input, shape index: {}, may-alias: {9,11,13,15}]
  %s14 = inlined_call_operand.vmem [shape: f32[1,128], index: 14, kind: input, shape index: {}]
  %s15 = inlined_call_operand.vmem [shape: f32[1,128], index: 15, kind: input, shape index: {}, may-alias: {9,11,13,15}]
  %s16 = inlined_call_operand.vmem [shape: f32[128,128], index: 16, kind: input, shape index: {}]
  %s17 = inlined_call_operand.vmem [shape: f32[64,128], index: 17, kind: output, shape index: {}]
  %s18 = sld [smem:[#allocation0]]
  $region78: #{_forward.13} parent=0
    _
  %s20 = ssub.s32 1, %s18
  %s21 = scalar_select 0, %s20, %s18
  // Predicated region
  $region2: #{_forward.13} parent=0 // pred_check
    _
  $region3: #{_forward.13} parent=0 // pred_check_branch
    %23 = sbr.rel (0) target = $region5
  $region4: #{_forward.13} parent=0 // pred_region
    _
  $region5: #{_forward.13} parent=0 // pred_fallthru
    _
  // Predicated region
  $region6: #{_forward.13} parent=0 // pred_check
    _
  $region7: #{_forward.13} parent=0 // pred_check_branch
    %25 = sbr.rel (0) target = $region9
  $region8: #{_forward.13} parent=0 // pred_region
    _
  $region9: #{_forward.13} parent=0 // pred_fallthru
    _
  // Predicated region
  $region10: #{_forward.13} parent=0 // pred_check
    _
  $region11: #{_forward.13} parent=0 // pred_check_branch
    %27 = sbr.rel (0) target = $region13
  $region12: #{_forward.13} parent=0 // pred_region
    _
  $region13: #{_forward.13} parent=0 // pred_fallthru
    _
  // Predicated region
  $region14: #{_forward.13} parent=0 // pred_check
    _
  $region15: #{_forward.13} parent=0 // pred_check_branch
    %29 = sbr.rel (0) target = $region17
  $region16: #{_forward.13} parent=0 // pred_region
    _
  $region17: #{_forward.13} parent=0 // pred_fallthru
    _
  // Predicated region
  $region18: #{_forward.13} parent=0 // pred_check
    _
  $region19: #{_forward.13} parent=0 // pred_check_branch
    %31 = sbr.rel (0) target = $region21
  $region20: #{_forward.13} parent=0 // pred_region
    _
  $region21: #{_forward.13} parent=0 // pred_fallthru
    _
  // Predicated region
  $region22: #{_forward.13} parent=0 // pred_check
    _
  $region23: #{_forward.13} parent=0 // pred_check_branch
    %33 = sbr.rel (0) target = $region25
  $region24: #{_forward.13} parent=0 // pred_region
    _
  $region25: #{_forward.13} parent=0 // pred_fallthru
    _
  // Predicated region
  $region26: #{_forward.13} parent=0 // pred_check
    _
  $region27: #{_forward.13} parent=0 // pred_check_branch
    %35 = sbr.rel (0) target = $region29
  $region28: #{_forward.13} parent=0 // pred_region
    _
  $region29: #{_forward.13} parent=0 // pred_fallthru
    _
  // Predicated region
  $region30: #{_forward.13} parent=0 // pred_check
    _
  $region31: #{_forward.13} parent=0 // pred_check_branch
    %37 = sbr.rel (0) target = $region33
  $region32: #{_forward.13} parent=0 // pred_region
    _
  $region33: #{_forward.13} parent=0 // pred_fallthru
    _
  // Predicated region
  $region34: #{_forward.13} parent=0 // pred_check
    _
  $region35: #{_forward.13} parent=0 // pred_check_branch
    %39 = sbr.rel (0) target = $region37
  $region36: #{_forward.13} parent=0 // pred_region
    _
  $region37: #{_forward.13} parent=0 // pred_fallthru
    _
  // Predicated region
  $region38: #{_forward.13} parent=0 // pred_check
    _
  $region39: #{_forward.13} parent=0 // pred_check_branch
    %41 = sbr.rel (0) target = $region41
  $region40: #{_forward.13} parent=0 // pred_region
    _
  $region41: #{_forward.13} parent=0 // pred_fallthru
    _
  // Predicated region
  $region42: #{_forward.13} parent=0 // pred_check
    _
  $region43: #{_forward.13} parent=0 // pred_check_branch
    %43 = sbr.rel (0) target = $region45
  $region44: #{_forward.13} parent=0 // pred_region
    _
  $region45: #{_forward.13} parent=0 // pred_fallthru
    _
  // Predicated region
  $region46: #{_forward.13} parent=0 // pred_check
    _
  $region47: #{_forward.13} parent=0 // pred_check_branch
    %45 = sbr.rel (0) target = $region49
  $region48: #{_forward.13} parent=0 // pred_region
    _
  $region49: #{_forward.13} parent=0 // pred_fallthru
    _
  // Predicated region
  $region50: #{_forward.13} parent=0 // pred_check
    _
  $region51: #{_forward.13} parent=0 // pred_check_branch
    %47 = sbr.rel (0) target = $region53
  $region52: #{_forward.13} parent=0 // pred_region
    _
  $region53: #{_forward.13} parent=0 // pred_fallthru
    _
  // Predicated region
  $region54: #{_forward.13} parent=0 // pred_check
    _
  $region55: #{_forward.13} parent=0 // pred_check_branch
    %49 = sbr.rel (0) target = $region57
  $region56: #{_forward.13} parent=0 // pred_region
    _
  $region57: #{_forward.13} parent=0 // pred_fallthru
    _
  // Predicated region
  $region58: #{_forward.13} parent=0 // pred_check
    _
  $region59: #{_forward.13} parent=0 // pred_check_branch
    %51 = sbr.rel (0) target = $region61
  $region60: #{_forward.13} parent=0 // pred_region
    _
  $region61: #{_forward.13} parent=0 // pred_fallthru
    _
  // Predicated region
  $region62: #{_forward.13} parent=0 // pred_check
    _
  $region63: #{_forward.13} parent=0 // pred_check_branch
    %53 = sbr.rel (0) target = $region65
  $region64: #{_forward.13} parent=0 // pred_region
    _
  $region65: #{_forward.13} parent=0 // pred_fallthru
    _
  // Predicated region
  $region66: #{_forward.13} parent=0 // pred_check
    _
  $region67: #{_forward.13} parent=0 // pred_check_branch
    %55 = sbr.rel (0) target = $region69
  $region68: #{_forward.13} parent=0 // pred_region
    _
  $region69: #{_forward.13} parent=0 // pred_fallthru
    _
  %v56 = vld [vmem:[%s0] sm:$0xff]
  %v57 = vld [vmem:[%s0 + $0x8] sm:$0xff]
  %v58 = vld [vmem:[%s0 + $0x10] sm:$0xff]
  %v59 = vld [vmem:[%s0 + $0x18] sm:$0xff]
  %v60 = vld [vmem:[%s0 + $0x20] sm:$0xff]
  %v61 = vld [vmem:[%s0 + $0x28] sm:$0xff]
  %v62 = vld [vmem:[%s0 + $0x30] sm:$0xff]
  %v63 = vld [vmem:[%s0 + $0x38] sm:$0xff]
  %v64 = vld [vmem:[%s1] sm:$0xff]
  %v65 = vld [vmem:[%s1 + $0x8] sm:$0xff]
  %v66 = vld [vmem:[%s1 + $0x10] sm:$0xff]
  %v67 = vld [vmem:[%s1 + $0x18] sm:$0xff]
  %v68 = vld [vmem:[%s1 + $0x20] sm:$0xff]
  %v69 = vld [vmem:[%s1 + $0x28] sm:$0xff]
  %v70 = vld [vmem:[%s1 + $0x30] sm:$0xff]
  %v71 = vld [vmem:[%s1 + $0x38] sm:$0xff]
  %v72 = vld [vmem:[%s2] sm:$0xff]
  %v73 = vld [vmem:[%s2 + $0x8] sm:$0xff]
  %v74 = vld [vmem:[%s2 + $0x10] sm:$0xff]
  %v75 = vld [vmem:[%s2 + $0x18] sm:$0xff]
  %v76 = vld [vmem:[%s2 + $0x20] sm:$0xff]
  %v77 = vld [vmem:[%s2 + $0x28] sm:$0xff]
  %v78 = vld [vmem:[%s2 + $0x30] sm:$0xff]
  %v79 = vld [vmem:[%s2 + $0x38] sm:$0xff]
  %v80 = vld [vmem:[%s3] sm:$0xff]
  %v81 = vld [vmem:[%s3 + $0x8] sm:$0xff]
  %v82 = vld [vmem:[%s3 + $0x10] sm:$0xff]
  %v83 = vld [vmem:[%s3 + $0x18] sm:$0xff]
  %v84 = vld [vmem:[%s3 + $0x20] sm:$0xff]
  %v85 = vld [vmem:[%s3 + $0x28] sm:$0xff]
  %v86 = vld [vmem:[%s3 + $0x30] sm:$0xff]
  %v87 = vld [vmem:[%s3 + $0x38] sm:$0xff]
  %v88 = vsub.f32 %v72, %v80
  %v89 = vsub.f32 %v73, %v81
  %v90 = vsub.f32 %v74, %v82
  %v91 = vsub.f32 %v75, %v83
  %v92 = vsub.f32 %v76, %v84
  %v93 = vsub.f32 %v77, %v85
  %v94 = vsub.f32 %v78, %v86
  %v95 = vsub.f32 %v79, %v87
  %v96 = vmul.f32 %v88, %v88
  %v97 = vmul.f32 %v89, %v89
  %v98 = vmul.f32 %v90, %v90
  %v99 = vmul.f32 %v91, %v91
  %v100 = vmul.f32 %v92, %v92
  %v101 = vmul.f32 %v93, %v93
  %v102 = vmul.f32 %v94, %v94
  %v103 = vmul.f32 %v95, %v95
  %v104 = vld [vmem:[%s7] sm:$0xff]
  %106 = vset.pattern.permute.xlu0 0
  %107 = vperm.xlu0 %106, %v96
  %v108 = vpop.permute.xlu0 %107
  %111 = vset.pattern.permute.xlu0 0
  %112 = vperm.xlu0 %111, %v97
  %v113 = vpop.permute.xlu0 %112
  %116 = vset.pattern.permute.xlu0 0
  %117 = vperm.xlu0 %116, %v98
  %v118 = vpop.permute.xlu0 %117
  %121 = vset.pattern.permute.xlu0 0
  %122 = vperm.xlu0 %121, %v99
  %v123 = vpop.permute.xlu0 %122
  %126 = vset.pattern.permute.xlu0 0
  %127 = vperm.xlu0 %126, %v100
  %v128 = vpop.permute.xlu0 %127
  %131 = vset.pattern.permute.xlu0 0
  %132 = vperm.xlu0 %131, %v101
  %v133 = vpop.permute.xlu0 %132
  %136 = vset.pattern.permute.xlu0 0
  %137 = vperm.xlu0 %136, %v102
  %v138 = vpop.permute.xlu0 %137
  %141 = vset.pattern.permute.xlu0 0
  %142 = vperm.xlu0 %141, %v103
  %v143 = vpop.permute.xlu0 %142
  %v145 = vperm.slane %v104, 0
  %v146 = vmul.f32 %v108, %v145
  %v147 = vmul.f32 %v113, %v145
  %v148 = vmul.f32 %v118, %v145
  %v149 = vmul.f32 %v123, %v145
  %v150 = vmul.f32 %v128, %v145
  %v151 = vmul.f32 %v133, %v145
  %v152 = vmul.f32 %v138, %v145
  %v153 = vmul.f32 %v143, %v145
  %154 = vset.pattern.permute.xlu0 1
  %155 = vperm.xlu0 %154, %v96
  %v156 = vpop.permute.xlu0 %155
  %158 = vset.pattern.permute.xlu0 1
  %159 = vperm.xlu0 %158, %v97
  %v160 = vpop.permute.xlu0 %159
  %162 = vset.pattern.permute.xlu0 1
  %163 = vperm.xlu0 %162, %v98
  %v164 = vpop.permute.xlu0 %163
  %166 = vset.pattern.permute.xlu0 1
  %167 = vperm.xlu0 %166, %v99
  %v168 = vpop.permute.xlu0 %167
  %170 = vset.pattern.permute.xlu0 1
  %171 = vperm.xlu0 %170, %v100
  %v172 = vpop.permute.xlu0 %171
  %174 = vset.pattern.permute.xlu0 1
  %175 = vperm.xlu0 %174, %v101
  %v176 = vpop.permute.xlu0 %175
  %178 = vset.pattern.permute.xlu0 1
  %179 = vperm.xlu0 %178, %v102
  %v180 = vpop.permute.xlu0 %179
  %182 = vset.pattern.permute.xlu0 1
  %183 = vperm.xlu0 %182, %v103
  %v184 = vpop.permute.xlu0 %183
  %v186 = vperm.slane %v104, 1
  %v187 = vmul.f32 %v156, %v186
  %v188 = vmul.f32 %v160, %v186
  %v189 = vmul.f32 %v164, %v186
  %v190 = vmul.f32 %v168, %v186
  %v191 = vmul.f32 %v172, %v186
  %v192 = vmul.f32 %v176, %v186
  %v193 = vmul.f32 %v180, %v186
  %v194 = vmul.f32 %v184, %v186
  %v195 = vadd.f32 %v146, %v187
  %v196 = vadd.f32 %v147, %v188
  %v197 = vadd.f32 %v148, %v189
  %v198 = vadd.f32 %v149, %v190
  %v199 = vadd.f32 %v150, %v191
  %v200 = vadd.f32 %v151, %v192
  %v201 = vadd.f32 %v152, %v193
  %v202 = vadd.f32 %v153, %v194
  %203 = vset.pattern.permute.xlu0 2
  %204 = vperm.xlu0 %203, %v96
  %v205 = vpop.permute.xlu0 %204
  %207 = vset.pattern.permute.xlu0 2
  %208 = vperm.xlu0 %207, %v97
  %v209 = vpop.permute.xlu0 %208
  %211 = vset.pattern.permute.xlu0 2
  %212 = vperm.xlu0 %211, %v98
  %v213 = vpop.permute.xlu0 %212
  %215 = vset.pattern.permute.xlu0 2
  %216 = vperm.xlu0 %215, %v99
  %v217 = vpop.permute.xlu0 %216
  %219 = vset.pattern.permute.xlu0 2
  %220 = vperm.xlu0 %219, %v100
  %v221 = vpop.permute.xlu0 %220
  %223 = vset.pattern.permute.xlu0 2
  %224 = vperm.xlu0 %223, %v101
  %v225 = vpop.permute.xlu0 %224
  %227 = vset.pattern.permute.xlu0 2
  %228 = vperm.xlu0 %227, %v102
  %v229 = vpop.permute.xlu0 %228
  %231 = vset.pattern.permute.xlu0 2
  %232 = vperm.xlu0 %231, %v103
  %v233 = vpop.permute.xlu0 %232
  %v235 = vperm.slane %v104, 2
  %v236 = vmul.f32 %v205, %v235
  %v237 = vmul.f32 %v209, %v235
  %v238 = vmul.f32 %v213, %v235
  %v239 = vmul.f32 %v217, %v235
  %v240 = vmul.f32 %v221, %v235
  %v241 = vmul.f32 %v225, %v235
  %v242 = vmul.f32 %v229, %v235
  %v243 = vmul.f32 %v233, %v235
  %v244 = vadd.f32 %v195, %v236
  %v245 = vadd.f32 %v196, %v237
  %v246 = vadd.f32 %v197, %v238
  %v247 = vadd.f32 %v198, %v239
  %v248 = vadd.f32 %v199, %v240
  %v249 = vadd.f32 %v200, %v241
  %v250 = vadd.f32 %v201, %v242
  %v251 = vadd.f32 %v202, %v243
  %252 = vset.pattern.permute.xlu0 3
  %253 = vperm.xlu0 %252, %v96
  %v254 = vpop.permute.xlu0 %253
  %256 = vset.pattern.permute.xlu0 3
  %257 = vperm.xlu0 %256, %v97
  %v258 = vpop.permute.xlu0 %257
  %260 = vset.pattern.permute.xlu0 3
  %261 = vperm.xlu0 %260, %v98
  %v262 = vpop.permute.xlu0 %261
  %264 = vset.pattern.permute.xlu0 3
  %265 = vperm.xlu0 %264, %v99
  %v266 = vpop.permute.xlu0 %265
  %268 = vset.pattern.permute.xlu0 3
  %269 = vperm.xlu0 %268, %v100
  %v270 = vpop.permute.xlu0 %269
  %272 = vset.pattern.permute.xlu0 3
  %273 = vperm.xlu0 %272, %v101
  %v274 = vpop.permute.xlu0 %273
  %276 = vset.pattern.permute.xlu0 3
  %277 = vperm.xlu0 %276, %v102
  %v278 = vpop.permute.xlu0 %277
  %280 = vset.pattern.permute.xlu0 3
  %281 = vperm.xlu0 %280, %v103
  %v282 = vpop.permute.xlu0 %281
  %v284 = vperm.slane %v104, 3
  %v285 = vmul.f32 %v254, %v284
  %v286 = vmul.f32 %v258, %v284
  %v287 = vmul.f32 %v262, %v284
  %v288 = vmul.f32 %v266, %v284
  %v289 = vmul.f32 %v270, %v284
  %v290 = vmul.f32 %v274, %v284
  %v291 = vmul.f32 %v278, %v284
  %v292 = vmul.f32 %v282, %v284
  %v293 = vadd.f32 %v244, %v285
  %v294 = vadd.f32 %v245, %v286
  %v295 = vadd.f32 %v246, %v287
  %v296 = vadd.f32 %v247, %v288
  %v297 = vadd.f32 %v248, %v289
  %v298 = vadd.f32 %v249, %v290
  %v299 = vadd.f32 %v250, %v291
  %v300 = vadd.f32 %v251, %v292
  %301 = vset.pattern.permute.xlu0 4
  %302 = vperm.xlu0 %301, %v96
  %v303 = vpop.permute.xlu0 %302
  %305 = vset.pattern.permute.xlu0 4
  %306 = vperm.xlu0 %305, %v97
  %v307 = vpop.permute.xlu0 %306
  %309 = vset.pattern.permute.xlu0 4
  %310 = vperm.xlu0 %309, %v98
  %v311 = vpop.permute.xlu0 %310
  %313 = vset.pattern.permute.xlu0 4
  %314 = vperm.xlu0 %313, %v99
  %v315 = vpop.permute.xlu0 %314
  %317 = vset.pattern.permute.xlu0 4
  %318 = vperm.xlu0 %317, %v100
  %v319 = vpop.permute.xlu0 %318
  %321 = vset.pattern.permute.xlu0 4
  %322 = vperm.xlu0 %321, %v101
  %v323 = vpop.permute.xlu0 %322
  %325 = vset.pattern.permute.xlu0 4
  %326 = vperm.xlu0 %325, %v102
  %v327 = vpop.permute.xlu0 %326
  %329 = vset.pattern.permute.xlu0 4
  %330 = vperm.xlu0 %329, %v103
  %v331 = vpop.permute.xlu0 %330
  %v333 = vperm.slane %v104, 4
  %v334 = vmul.f32 %v303, %v333
  %v335 = vmul.f32 %v307, %v333
  %v336 = vmul.f32 %v311, %v333
  %v337 = vmul.f32 %v315, %v333
  %v338 = vmul.f32 %v319, %v333
  %v339 = vmul.f32 %v323, %v333
  %v340 = vmul.f32 %v327, %v333
  %v341 = vmul.f32 %v331, %v333
  %v342 = vadd.f32 %v293, %v334
  %v343 = vadd.f32 %v294, %v335
  %v344 = vadd.f32 %v295, %v336
  %v345 = vadd.f32 %v296, %v337
  %v346 = vadd.f32 %v297, %v338
  %v347 = vadd.f32 %v298, %v339
  %v348 = vadd.f32 %v299, %v340
  %v349 = vadd.f32 %v300, %v341
  %350 = vset.pattern.permute.xlu0 5
  %351 = vperm.xlu0 %350, %v96
  %v352 = vpop.permute.xlu0 %351
  %354 = vset.pattern.permute.xlu0 5
  %355 = vperm.xlu0 %354, %v97
  %v356 = vpop.permute.xlu0 %355
  %358 = vset.pattern.permute.xlu0 5
  %359 = vperm.xlu0 %358, %v98
  %v360 = vpop.permute.xlu0 %359
  %362 = vset.pattern.permute.xlu0 5
  %363 = vperm.xlu0 %362, %v99
  %v364 = vpop.permute.xlu0 %363
  %366 = vset.pattern.permute.xlu0 5
  %367 = vperm.xlu0 %366, %v100
  %v368 = vpop.permute.xlu0 %367
  %370 = vset.pattern.permute.xlu0 5
  %371 = vperm.xlu0 %370, %v101
  %v372 = vpop.permute.xlu0 %371
  %374 = vset.pattern.permute.xlu0 5
  %375 = vperm.xlu0 %374, %v102
  %v376 = vpop.permute.xlu0 %375
  %378 = vset.pattern.permute.xlu0 5
  %379 = vperm.xlu0 %378, %v103
  %v380 = vpop.permute.xlu0 %379
  %v382 = vperm.slane %v104, 5
  %v383 = vmul.f32 %v352, %v382
  %v384 = vmul.f32 %v356, %v382
  %v385 = vmul.f32 %v360, %v382
  %v386 = vmul.f32 %v364, %v382
  %v387 = vmul.f32 %v368, %v382
  %v388 = vmul.f32 %v372, %v382
  %v389 = vmul.f32 %v376, %v382
  %v390 = vmul.f32 %v380, %v382
  %v391 = vadd.f32 %v342, %v383
  %v392 = vadd.f32 %v343, %v384
  %v393 = vadd.f32 %v344, %v385
  %v394 = vadd.f32 %v345, %v386
  %v395 = vadd.f32 %v346, %v387
  %v396 = vadd.f32 %v347, %v388
  %v397 = vadd.f32 %v348, %v389
  %v398 = vadd.f32 %v349, %v390
  %399 = vset.pattern.permute.xlu0 6
  %400 = vperm.xlu0 %399, %v96
  %v401 = vpop.permute.xlu0 %400
  %403 = vset.pattern.permute.xlu0 6
  %404 = vperm.xlu0 %403, %v97
  %v405 = vpop.permute.xlu0 %404
  %407 = vset.pattern.permute.xlu0 6
  %408 = vperm.xlu0 %407, %v98
  %v409 = vpop.permute.xlu0 %408
  %411 = vset.pattern.permute.xlu0 6
  %412 = vperm.xlu0 %411, %v99
  %v413 = vpop.permute.xlu0 %412
  %415 = vset.pattern.permute.xlu0 6
  %416 = vperm.xlu0 %415, %v100
  %v417 = vpop.permute.xlu0 %416
  %419 = vset.pattern.permute.xlu0 6
  %420 = vperm.xlu0 %419, %v101
  %v421 = vpop.permute.xlu0 %420
  %423 = vset.pattern.permute.xlu0 6
  %424 = vperm.xlu0 %423, %v102
  %v425 = vpop.permute.xlu0 %424
  %427 = vset.pattern.permute.xlu0 6
  %428 = vperm.xlu0 %427, %v103
  %v429 = vpop.permute.xlu0 %428
  %v431 = vperm.slane %v104, 6
  %v432 = vmul.f32 %v401, %v431
  %v433 = vmul.f32 %v405, %v431
  %v434 = vmul.f32 %v409, %v431
  %v435 = vmul.f32 %v413, %v431
  %v436 = vmul.f32 %v417, %v431
  %v437 = vmul.f32 %v421, %v431
  %v438 = vmul.f32 %v425, %v431
  %v439 = vmul.f32 %v429, %v431
  %v440 = vadd.f32 %v391, %v432
  %v441 = vadd.f32 %v392, %v433
  %v442 = vadd.f32 %v393, %v434
  %v443 = vadd.f32 %v394, %v435
  %v444 = vadd.f32 %v395, %v436
  %v445 = vadd.f32 %v396, %v437
  %v446 = vadd.f32 %v397, %v438
  %v447 = vadd.f32 %v398, %v439
  %448 = vset.pattern.permute.xlu0 7
  %449 = vperm.xlu0 %448, %v96
  %v450 = vpop.permute.xlu0 %449
  %452 = vset.pattern.permute.xlu0 7
  %453 = vperm.xlu0 %452, %v97
  %v454 = vpop.permute.xlu0 %453
  %456 = vset.pattern.permute.xlu0 7
  %457 = vperm.xlu0 %456, %v98
  %v458 = vpop.permute.xlu0 %457
  %460 = vset.pattern.permute.xlu0 7
  %461 = vperm.xlu0 %460, %v99
  %v462 = vpop.permute.xlu0 %461
  %464 = vset.pattern.permute.xlu0 7
  %465 = vperm.xlu0 %464, %v100
  %v466 = vpop.permute.xlu0 %465
  %468 = vset.pattern.permute.xlu0 7
  %469 = vperm.xlu0 %468, %v101
  %v470 = vpop.permute.xlu0 %469
  %472 = vset.pattern.permute.xlu0 7
  %473 = vperm.xlu0 %472, %v102
  %v474 = vpop.permute.xlu0 %473
  %476 = vset.pattern.permute.xlu0 7
  %477 = vperm.xlu0 %476, %v103
  %v478 = vpop.permute.xlu0 %477
  %v480 = vperm.slane %v104, 7
  %v481 = vmul.f32 %v450, %v480
  %v482 = vmul.f32 %v454, %v480
  %v483 = vmul.f32 %v458, %v480
  %v484 = vmul.f32 %v462, %v480
  %v485 = vmul.f32 %v466, %v480
  %v486 = vmul.f32 %v470, %v480
  %v487 = vmul.f32 %v474, %v480
  %v488 = vmul.f32 %v478, %v480
  %v489 = vadd.f32 %v440, %v481
  %v490 = vadd.f32 %v441, %v482
  %v491 = vadd.f32 %v442, %v483
  %v492 = vadd.f32 %v443, %v484
  %v493 = vadd.f32 %v444, %v485
  %v494 = vadd.f32 %v445, %v486
  %v495 = vadd.f32 %v446, %v487
  %v496 = vadd.f32 %v447, %v488
  %v497 = vrsqrt.pop %v489
  %v498 = vmul.f32 %v497, %v489
  %v499 = vmul.f32 %v498, %v497
  %v500 = vmul.f32 0.5, %v499
  %v501 = vsub.f32 1.5, %v500
  %v502 = vmul.f32 %v497, %v501
  %v503 = vmul.f32 %v489, %v502
  %vm504 = vcmp.eq.f32.partialorder %v489, inf
  %v505 = vsel %vm504, %v489, %v503
  %vm506 = vcmp.eq.f32.partialorder %v489, 0.0
  %v507 = vand.u32 %v489, 2147483648
  %v508 = vsel %vm506, %v507, %v505
  %v509 = vrsqrt.pop %v490
  %v510 = vmul.f32 %v509, %v490
  %v511 = vmul.f32 %v510, %v509
  %v512 = vmul.f32 0.5, %v511
  %v513 = vsub.f32 1.5, %v512
  %v514 = vmul.f32 %v509, %v513
  %v515 = vmul.f32 %v490, %v514
  %vm516 = vcmp.eq.f32.partialorder %v490, inf
  %v517 = vsel %vm516, %v490, %v515
  %vm518 = vcmp.eq.f32.partialorder %v490, 0.0
  %v519 = vand.u32 %v490, 2147483648
  %v520 = vsel %vm518, %v519, %v517
  %v521 = vrsqrt.pop %v491
  %v522 = vmul.f32 %v521, %v491
  %v523 = vmul.f32 %v522, %v521
  %v524 = vmul.f32 0.5, %v523
  %v525 = vsub.f32 1.5, %v524
  %v526 = vmul.f32 %v521, %v525
  %v527 = vmul.f32 %v491, %v526
  %vm528 = vcmp.eq.f32.partialorder %v491, inf
  %v529 = vsel %vm528, %v491, %v527
  %vm530 = vcmp.eq.f32.partialorder %v491, 0.0
  %v531 = vand.u32 %v491, 2147483648
  %v532 = vsel %vm530, %v531, %v529
  %v533 = vrsqrt.pop %v492
  %v534 = vmul.f32 %v533, %v492
  %v535 = vmul.f32 %v534, %v533
  %v536 = vmul.f32 0.5, %v535
  %v537 = vsub.f32 1.5, %v536
  %v538 = vmul.f32 %v533, %v537
  %v539 = vmul.f32 %v492, %v538
  %vm540 = vcmp.eq.f32.partialorder %v492, inf
  %v541 = vsel %vm540, %v492, %v539
  %vm542 = vcmp.eq.f32.partialorder %v492, 0.0
  %v543 = vand.u32 %v492, 2147483648
  %v544 = vsel %vm542, %v543, %v541
  %v545 = vrsqrt.pop %v493
  %v546 = vmul.f32 %v545, %v493
  %v547 = vmul.f32 %v546, %v545
  %v548 = vmul.f32 0.5, %v547
  %v549 = vsub.f32 1.5, %v548
  %v550 = vmul.f32 %v545, %v549
  %v551 = vmul.f32 %v493, %v550
  %vm552 = vcmp.eq.f32.partialorder %v493, inf
  %v553 = vsel %vm552, %v493, %v551
  %vm554 = vcmp.eq.f32.partialorder %v493, 0.0
  %v555 = vand.u32 %v493, 2147483648
  %v556 = vsel %vm554, %v555, %v553
  %v557 = vrsqrt.pop %v494
  %v558 = vmul.f32 %v557, %v494
  %v559 = vmul.f32 %v558, %v557
  %v560 = vmul.f32 0.5, %v559
  %v561 = vsub.f32 1.5, %v560
  %v562 = vmul.f32 %v557, %v561
  %v563 = vmul.f32 %v494, %v562
  %vm564 = vcmp.eq.f32.partialorder %v494, inf
  %v565 = vsel %vm564, %v494, %v563
  %vm566 = vcmp.eq.f32.partialorder %v494, 0.0
  %v567 = vand.u32 %v494, 2147483648
  %v568 = vsel %vm566, %v567, %v565
  %v569 = vrsqrt.pop %v495
  %v570 = vmul.f32 %v569, %v495
  %v571 = vmul.f32 %v570, %v569
  %v572 = vmul.f32 0.5, %v571
  %v573 = vsub.f32 1.5, %v572
  %v574 = vmul.f32 %v569, %v573
  %v575 = vmul.f32 %v495, %v574
  %vm576 = vcmp.eq.f32.partialorder %v495, inf
  %v577 = vsel %vm576, %v495, %v575
  %vm578 = vcmp.eq.f32.partialorder %v495, 0.0
  %v579 = vand.u32 %v495, 2147483648
  %v580 = vsel %vm578, %v579, %v577
  %v581 = vrsqrt.pop %v496
  %v582 = vmul.f32 %v581, %v496
  %v583 = vmul.f32 %v582, %v581
  %v584 = vmul.f32 0.5, %v583
  %v585 = vsub.f32 1.5, %v584
  %v586 = vmul.f32 %v581, %v585
  %v587 = vmul.f32 %v496, %v586
  %vm588 = vcmp.eq.f32.partialorder %v496, inf
  %v589 = vsel %vm588, %v496, %v587
  %vm590 = vcmp.eq.f32.partialorder %v496, 0.0
  %v591 = vand.u32 %v496, 2147483648
  %v592 = vsel %vm590, %v591, %v589
  %v593 = vpack.c.bf16 %v57, %v56
  %v594 = vpack.c.bf16 %v59, %v58
  %v595 = vpack.c.bf16 %v61, %v60
  %v596 = vpack.c.bf16 %v63, %v62
  %v597 = vld [vmem:[%s4] sm:$0xf]
  %v598 = vld [vmem:[%s4 + $0x4] sm:$0xf]
  %v599 = vld [vmem:[%s4 + $0x8] sm:$0xf]
  %v600 = vld [vmem:[%s4 + $0xc] sm:$0xf]
  %v601 = vld [vmem:[%s4 + $0x10] sm:$0xf]
  %v602 = vld [vmem:[%s4 + $0x14] sm:$0xf]
  %v603 = vld [vmem:[%s4 + $0x18] sm:$0xf]
  %v604 = vld [vmem:[%s4 + $0x1c] sm:$0xf]
  %v605 = vld [vmem:[%s4 + $0x20] sm:$0xf]
  %v606 = vld [vmem:[%s4 + $0x24] sm:$0xf]
  %v607 = vld [vmem:[%s4 + $0x28] sm:$0xf]
  %v608 = vld [vmem:[%s4 + $0x2c] sm:$0xf]
  %v609 = vld [vmem:[%s4 + $0x30] sm:$0xf]
  %v610 = vld [vmem:[%s4 + $0x34] sm:$0xf]
  %v611 = vld [vmem:[%s4 + $0x38] sm:$0xf]
  %v612 = vld [vmem:[%s4 + $0x3c] sm:$0xf]
  %v613 = vpack.c.bf16 %v65, %v64
  %v614 = vpack.c.bf16 %v67, %v66
  %v615 = vpack.c.bf16 %v69, %v68
  %v616 = vpack.c.bf16 %v71, %v70
  %v617 = vld [vmem:[%s5] sm:$0xf]
  %v618 = vld [vmem:[%s5 + $0x4] sm:$0xf]
  %v619 = vld [vmem:[%s5 + $0x8] sm:$0xf]
  %v620 = vld [vmem:[%s5 + $0xc] sm:$0xf]
  %v621 = vld [vmem:[%s5 + $0x10] sm:$0xf]
  %v622 = vld [vmem:[%s5 + $0x14] sm:$0xf]
  %v623 = vld [vmem:[%s5 + $0x18] sm:$0xf]
  %v624 = vld [vmem:[%s5 + $0x1c] sm:$0xf]
  %v625 = vld [vmem:[%s5 + $0x20] sm:$0xf]
  %v626 = vld [vmem:[%s5 + $0x24] sm:$0xf]
  %v627 = vld [vmem:[%s5 + $0x28] sm:$0xf]
  %v628 = vld [vmem:[%s5 + $0x2c] sm:$0xf]
  %v629 = vld [vmem:[%s5 + $0x30] sm:$0xf]
  %v630 = vld [vmem:[%s5 + $0x34] sm:$0xf]
  %v631 = vld [vmem:[%s5 + $0x38] sm:$0xf]
  %v632 = vld [vmem:[%s5 + $0x3c] sm:$0xf]
  %v649 = vunpack.c.l.b16 %v617
  %v650 = vunpack.c.l.b16 %v618
  %v651 = vunpack.c.l.b16 %v619
  %v652 = vunpack.c.l.b16 %v620
  %v653 = vunpack.c.l.b16 %v621
  %v654 = vunpack.c.l.b16 %v622
  %v655 = vunpack.c.l.b16 %v623
  %v656 = vunpack.c.l.b16 %v624
  %v657 = vunpack.c.l.b16 %v625
  %v658 = vunpack.c.l.b16 %v626
  %v659 = vunpack.c.l.b16 %v627
  %v660 = vunpack.c.l.b16 %v628
  %v661 = vunpack.c.l.b16 %v629
  %v662 = vunpack.c.l.b16 %v630
  %v663 = vunpack.c.l.b16 %v631
  %v664 = vunpack.c.l.b16 %v632
  %v665 = vpack.c.b16 %v650, %v649
  %v666 = vpack.c.b16 %v652, %v651
  %v667 = vpack.c.b16 %v654, %v653
  %v668 = vpack.c.b16 %v656, %v655
  %v669 = vpack.c.b16 %v658, %v657
  %v670 = vpack.c.b16 %v660, %v659
  %v671 = vpack.c.b16 %v662, %v661
  %v672 = vpack.c.b16 %v664, %v663
  %681 = vmatpush.bf16.msra.mxu0 %v672
  %682 = vmatpush.bf16.msra.mxu0 %v671
  %683 = vmatpush.bf16.msra.mxu0 %v670
  %684 = vmatpush.bf16.msra.mxu0 %v669
  %685 = vmatpush.bf16.msra.mxu0 %v668
  %686 = vmatpush.bf16.msra.mxu0 %v667
  %687 = vmatpush.bf16.msra.mxu0 %v666
  %688 = vmatpush.bf16.msra.mxu0 %v665
  %689 = vmatmul.bf16.gmra.mxu0 %v613
  %v690 = vpop.f32.mrf.mxu0
  %v691 = vadd.f32 0.0, %v690
  %v692 = vpop.f32.mrf.mxu0
  %v693 = vadd.f32 0.0, %v692
  %694 = vmatmul.bf16.gmra.mxu0 %v614
  %v695 = vpop.f32.mrf.mxu0
  %v696 = vadd.f32 0.0, %v695
  %v697 = vpop.f32.mrf.mxu0
  %v698 = vadd.f32 0.0, %v697
  %699 = vmatmul.bf16.gmra.mxu0 %v615
  %v700 = vpop.f32.mrf.mxu0
  %v701 = vadd.f32 0.0, %v700
  %v702 = vpop.f32.mrf.mxu0
  %v703 = vadd.f32 0.0, %v702
  %704 = vmatmul.bf16.gmra.mxu0 %v616
  %v705 = vpop.f32.mrf.mxu0
  %v706 = vadd.f32 0.0, %v705
  %v707 = vpop.f32.mrf.mxu0
  %v708 = vadd.f32 0.0, %v707
  %709 = vdwg.mxu0
  %v726 = vunpack.c.l.b16 %v597
  %v727 = vunpack.c.l.b16 %v598
  %v728 = vunpack.c.l.b16 %v599
  %v729 = vunpack.c.l.b16 %v600
  %v730 = vunpack.c.l.b16 %v601
  %v731 = vunpack.c.l.b16 %v602
  %v732 = vunpack.c.l.b16 %v603
  %v733 = vunpack.c.l.b16 %v604
  %v734 = vunpack.c.l.b16 %v605
  %v735 = vunpack.c.l.b16 %v606
  %v736 = vunpack.c.l.b16 %v607
  %v737 = vunpack.c.l.b16 %v608
  %v738 = vunpack.c.l.b16 %v609
  %v739 = vunpack.c.l.b16 %v610
  %v740 = vunpack.c.l.b16 %v611
  %v741 = vunpack.c.l.b16 %v612
  %v742 = vpack.c.b16 %v727, %v726
  %v743 = vpack.c.b16 %v729, %v728
  %v744 = vpack.c.b16 %v731, %v730
  %v745 = vpack.c.b16 %v733, %v732
  %v746 = vpack.c.b16 %v735, %v734
  %v747 = vpack.c.b16 %v737, %v736
  %v748 = vpack.c.b16 %v739, %v738
  %v749 = vpack.c.b16 %v741, %v740
  %758 = vmatpush.bf16.msra.mxu0 %v749
  %759 = vmatpush.bf16.msra.mxu0 %v748
  %760 = vmatpush.bf16.msra.mxu0 %v747
  %761 = vmatpush.bf16.msra.mxu0 %v746
  %762 = vmatpush.bf16.msra.mxu0 %v745
  %763 = vmatpush.bf16.msra.mxu0 %v744
  %764 = vmatpush.bf16.msra.mxu0 %v743
  %765 = vmatpush.bf16.msra.mxu0 %v742
  %766 = vmatmul.bf16.gmra.mxu0 %v593
  %v767 = vpop.f32.mrf.mxu0
  %v768 = vadd.f32 %v691, %v767
  %v769 = vpop.f32.mrf.mxu0
  %v770 = vadd.f32 %v693, %v769
  %771 = vmatmul.bf16.gmra.mxu0 %v594
  %v772 = vpop.f32.mrf.mxu0
  %v773 = vadd.f32 %v696, %v772
  %v774 = vpop.f32.mrf.mxu0
  %v775 = vadd.f32 %v698, %v774
  %776 = vmatmul.bf16.gmra.mxu0 %v595
  %v777 = vpop.f32.mrf.mxu0
  %v778 = vadd.f32 %v701, %v777
  %v779 = vpop.f32.mrf.mxu0
  %v780 = vadd.f32 %v703, %v779
  %781 = vmatmul.bf16.gmra.mxu0 %v596
  %v782 = vpop.f32.mrf.mxu0
  %v783 = vadd.f32 %v706, %v782
  %v784 = vpop.f32.mrf.mxu0
  %v785 = vadd.f32 %v708, %v784
  %786 = vdwg.mxu0
  %v787 = vld [vmem:[%s6] sm:$0xff]
  %789 = vset.pattern.permute.xlu0 0
  %790 = vperm.xlu0 %789, %v88
  %v791 = vpop.permute.xlu0 %790
  %794 = vset.pattern.permute.xlu0 0
  %795 = vperm.xlu0 %794, %v89
  %v796 = vpop.permute.xlu0 %795
  %799 = vset.pattern.permute.xlu0 0
  %800 = vperm.xlu0 %799, %v90
  %v801 = vpop.permute.xlu0 %800
  %804 = vset.pattern.permute.xlu0 0
  %805 = vperm.xlu0 %804, %v91
  %v806 = vpop.permute.xlu0 %805
  %809 = vset.pattern.permute.xlu0 0
  %810 = vperm.xlu0 %809, %v92
  %v811 = vpop.permute.xlu0 %810
  %814 = vset.pattern.permute.xlu0 0
  %815 = vperm.xlu0 %814, %v93
  %v816 = vpop.permute.xlu0 %815
  %819 = vset.pattern.permute.xlu0 0
  %820 = vperm.xlu0 %819, %v94
  %v821 = vpop.permute.xlu0 %820
  %824 = vset.pattern.permute.xlu0 0
  %825 = vperm.xlu0 %824, %v95
  %v826 = vpop.permute.xlu0 %825
  %v828 = vperm.slane %v787, 0
  %v829 = vmul.f32 %v791, %v828
  %v830 = vmul.f32 %v796, %v828
  %v831 = vmul.f32 %v801, %v828
  %v832 = vmul.f32 %v806, %v828
  %v833 = vmul.f32 %v811, %v828
  %v834 = vmul.f32 %v816, %v828
  %v835 = vmul.f32 %v821, %v828
  %v836 = vmul.f32 %v826, %v828
  %837 = vset.pattern.permute.xlu0 1
  %838 = vperm.xlu0 %837, %v88
  %v839 = vpop.permute.xlu0 %838
  %841 = vset.pattern.permute.xlu0 1
  %842 = vperm.xlu0 %841, %v89
  %v843 = vpop.permute.xlu0 %842
  %845 = vset.pattern.permute.xlu0 1
  %846 = vperm.xlu0 %845, %v90
  %v847 = vpop.permute.xlu0 %846
  %849 = vset.pattern.permute.xlu0 1
  %850 = vperm.xlu0 %849, %v91
  %v851 = vpop.permute.xlu0 %850
  %853 = vset.pattern.permute.xlu0 1
  %854 = vperm.xlu0 %853, %v92
  %v855 = vpop.permute.xlu0 %854
  %857 = vset.pattern.permute.xlu0 1
  %858 = vperm.xlu0 %857, %v93
  %v859 = vpop.permute.xlu0 %858
  %861 = vset.pattern.permute.xlu0 1
  %862 = vperm.xlu0 %861, %v94
  %v863 = vpop.permute.xlu0 %862
  %865 = vset.pattern.permute.xlu0 1
  %866 = vperm.xlu0 %865, %v95
  %v867 = vpop.permute.xlu0 %866
  %v869 = vperm.slane %v787, 1
  %v870 = vmul.f32 %v839, %v869
  %v871 = vmul.f32 %v843, %v869
  %v872 = vmul.f32 %v847, %v869
  %v873 = vmul.f32 %v851, %v869
  %v874 = vmul.f32 %v855, %v869
  %v875 = vmul.f32 %v859, %v869
  %v876 = vmul.f32 %v863, %v869
  %v877 = vmul.f32 %v867, %v869
  %v878 = vadd.f32 %v829, %v870
  %v879 = vadd.f32 %v830, %v871
  %v880 = vadd.f32 %v831, %v872
  %v881 = vadd.f32 %v832, %v873
  %v882 = vadd.f32 %v833, %v874
  %v883 = vadd.f32 %v834, %v875
  %v884 = vadd.f32 %v835, %v876
  %v885 = vadd.f32 %v836, %v877
  %886 = vset.pattern.permute.xlu0 2
  %887 = vperm.xlu0 %886, %v88
  %v888 = vpop.permute.xlu0 %887
  %890 = vset.pattern.permute.xlu0 2
  %891 = vperm.xlu0 %890, %v89
  %v892 = vpop.permute.xlu0 %891
  %894 = vset.pattern.permute.xlu0 2
  %895 = vperm.xlu0 %894, %v90
  %v896 = vpop.permute.xlu0 %895
  %898 = vset.pattern.permute.xlu0 2
  %899 = vperm.xlu0 %898, %v91
  %v900 = vpop.permute.xlu0 %899
  %902 = vset.pattern.permute.xlu0 2
  %903 = vperm.xlu0 %902, %v92
  %v904 = vpop.permute.xlu0 %903
  %906 = vset.pattern.permute.xlu0 2
  %907 = vperm.xlu0 %906, %v93
  %v908 = vpop.permute.xlu0 %907
  %910 = vset.pattern.permute.xlu0 2
  %911 = vperm.xlu0 %910, %v94
  %v912 = vpop.permute.xlu0 %911
  %914 = vset.pattern.permute.xlu0 2
  %915 = vperm.xlu0 %914, %v95
  %v916 = vpop.permute.xlu0 %915
  %v918 = vperm.slane %v787, 2
  %v919 = vmul.f32 %v888, %v918
  %v920 = vmul.f32 %v892, %v918
  %v921 = vmul.f32 %v896, %v918
  %v922 = vmul.f32 %v900, %v918
  %v923 = vmul.f32 %v904, %v918
  %v924 = vmul.f32 %v908, %v918
  %v925 = vmul.f32 %v912, %v918
  %v926 = vmul.f32 %v916, %v918
  %v927 = vadd.f32 %v878, %v919
  %v928 = vadd.f32 %v879, %v920
  %v929 = vadd.f32 %v880, %v921
  %v930 = vadd.f32 %v881, %v922
  %v931 = vadd.f32 %v882, %v923
  %v932 = vadd.f32 %v883, %v924
  %v933 = vadd.f32 %v884, %v925
  %v934 = vadd.f32 %v885, %v926
  %935 = vset.pattern.permute.xlu0 3
  %936 = vperm.xlu0 %935, %v88
  %v937 = vpop.permute.xlu0 %936
  %939 = vset.pattern.permute.xlu0 3
  %940 = vperm.xlu0 %939, %v89
  %v941 = vpop.permute.xlu0 %940
  %943 = vset.pattern.permute.xlu0 3
  %944 = vperm.xlu0 %943, %v90
  %v945 = vpop.permute.xlu0 %944
  %947 = vset.pattern.permute.xlu0 3
  %948 = vperm.xlu0 %947, %v91
  %v949 = vpop.permute.xlu0 %948
  %951 = vset.pattern.permute.xlu0 3
  %952 = vperm.xlu0 %951, %v92
  %v953 = vpop.permute.xlu0 %952
  %955 = vset.pattern.permute.xlu0 3
  %956 = vperm.xlu0 %955, %v93
  %v957 = vpop.permute.xlu0 %956
  %959 = vset.pattern.permute.xlu0 3
  %960 = vperm.xlu0 %959, %v94
  %v961 = vpop.permute.xlu0 %960
  %963 = vset.pattern.permute.xlu0 3
  %964 = vperm.xlu0 %963, %v95
  %v965 = vpop.permute.xlu0 %964
  %v967 = vperm.slane %v787, 3
  %v968 = vmul.f32 %v937, %v967
  %v969 = vmul.f32 %v941, %v967
  %v970 = vmul.f32 %v945, %v967
  %v971 = vmul.f32 %v949, %v967
  %v972 = vmul.f32 %v953, %v967
  %v973 = vmul.f32 %v957, %v967
  %v974 = vmul.f32 %v961, %v967
  %v975 = vmul.f32 %v965, %v967
  %v976 = vadd.f32 %v927, %v968
  %v977 = vadd.f32 %v928, %v969
  %v978 = vadd.f32 %v929, %v970
  %v979 = vadd.f32 %v930, %v971
  %v980 = vadd.f32 %v931, %v972
  %v981 = vadd.f32 %v932, %v973
  %v982 = vadd.f32 %v933, %v974
  %v983 = vadd.f32 %v934, %v975
  %984 = vset.pattern.permute.xlu0 4
  %985 = vperm.xlu0 %984, %v88
  %v986 = vpop.permute.xlu0 %985
  %988 = vset.pattern.permute.xlu0 4
  %989 = vperm.xlu0 %988, %v89
  %v990 = vpop.permute.xlu0 %989
  %992 = vset.pattern.permute.xlu0 4
  %993 = vperm.xlu0 %992, %v90
  %v994 = vpop.permute.xlu0 %993
  %996 = vset.pattern.permute.xlu0 4
  %997 = vperm.xlu0 %996, %v91
  %v998 = vpop.permute.xlu0 %997
  %1000 = vset.pattern.permute.xlu0 4
  %1001 = vperm.xlu0 %1000, %v92
  %v1002 = vpop.permute.xlu0 %1001
  %1004 = vset.pattern.permute.xlu0 4
  %1005 = vperm.xlu0 %1004, %v93
  %v1006 = vpop.permute.xlu0 %1005
  %1008 = vset.pattern.permute.xlu0 4
  %1009 = vperm.xlu0 %1008, %v94
  %v1010 = vpop.permute.xlu0 %1009
  %1012 = vset.pattern.permute.xlu0 4
  %1013 = vperm.xlu0 %1012, %v95
  %v1014 = vpop.permute.xlu0 %1013
  %v1016 = vperm.slane %v787, 4
  %v1017 = vmul.f32 %v986, %v1016
  %v1018 = vmul.f32 %v990, %v1016
  %v1019 = vmul.f32 %v994, %v1016
  %v1020 = vmul.f32 %v998, %v1016
  %v1021 = vmul.f32 %v1002, %v1016
  %v1022 = vmul.f32 %v1006, %v1016
  %v1023 = vmul.f32 %v1010, %v1016
  %v1024 = vmul.f32 %v1014, %v1016
  %v1025 = vadd.f32 %v976, %v1017
  %v1026 = vadd.f32 %v977, %v1018
  %v1027 = vadd.f32 %v978, %v1019
  %v1028 = vadd.f32 %v979, %v1020
  %v1029 = vadd.f32 %v980, %v1021
  %v1030 = vadd.f32 %v981, %v1022
  %v1031 = vadd.f32 %v982, %v1023
  %v1032 = vadd.f32 %v983, %v1024
  %1033 = vset.pattern.permute.xlu0 5
  %1034 = vperm.xlu0 %1033, %v88
  %v1035 = vpop.permute.xlu0 %1034
  %1037 = vset.pattern.permute.xlu0 5
  %1038 = vperm.xlu0 %1037, %v89
  %v1039 = vpop.permute.xlu0 %1038
  %1041 = vset.pattern.permute.xlu0 5
  %1042 = vperm.xlu0 %1041, %v90
  %v1043 = vpop.permute.xlu0 %1042
  %1045 = vset.pattern.permute.xlu0 5
  %1046 = vperm.xlu0 %1045, %v91
  %v1047 = vpop.permute.xlu0 %1046
  %1049 = vset.pattern.permute.xlu0 5
  %1050 = vperm.xlu0 %1049, %v92
  %v1051 = vpop.permute.xlu0 %1050
  %1053 = vset.pattern.permute.xlu0 5
  %1054 = vperm.xlu0 %1053, %v93
  %v1055 = vpop.permute.xlu0 %1054
  %1057 = vset.pattern.permute.xlu0 5
  %1058 = vperm.xlu0 %1057, %v94
  %v1059 = vpop.permute.xlu0 %1058
  %1061 = vset.pattern.permute.xlu0 5
  %1062 = vperm.xlu0 %1061, %v95
  %v1063 = vpop.permute.xlu0 %1062
  %v1065 = vperm.slane %v787, 5
  %v1066 = vmul.f32 %v1035, %v1065
  %v1067 = vmul.f32 %v1039, %v1065
  %v1068 = vmul.f32 %v1043, %v1065
  %v1069 = vmul.f32 %v1047, %v1065
  %v1070 = vmul.f32 %v1051, %v1065
  %v1071 = vmul.f32 %v1055, %v1065
  %v1072 = vmul.f32 %v1059, %v1065
  %v1073 = vmul.f32 %v1063, %v1065
  %v1074 = vadd.f32 %v1025, %v1066
  %v1075 = vadd.f32 %v1026, %v1067
  %v1076 = vadd.f32 %v1027, %v1068
  %v1077 = vadd.f32 %v1028, %v1069
  %v1078 = vadd.f32 %v1029, %v1070
  %v1079 = vadd.f32 %v1030, %v1071
  %v1080 = vadd.f32 %v1031, %v1072
  %v1081 = vadd.f32 %v1032, %v1073
  %1082 = vset.pattern.permute.xlu0 6
  %1083 = vperm.xlu0 %1082, %v88
  %v1084 = vpop.permute.xlu0 %1083
  %1086 = vset.pattern.permute.xlu0 6
  %1087 = vperm.xlu0 %1086, %v89
  %v1088 = vpop.permute.xlu0 %1087
  %1090 = vset.pattern.permute.xlu0 6
  %1091 = vperm.xlu0 %1090, %v90
  %v1092 = vpop.permute.xlu0 %1091
  %1094 = vset.pattern.permute.xlu0 6
  %1095 = vperm.xlu0 %1094, %v91
  %v1096 = vpop.permute.xlu0 %1095
  %1098 = vset.pattern.permute.xlu0 6
  %1099 = vperm.xlu0 %1098, %v92
  %v1100 = vpop.permute.xlu0 %1099
  %1102 = vset.pattern.permute.xlu0 6
  %1103 = vperm.xlu0 %1102, %v93
  %v1104 = vpop.permute.xlu0 %1103
  %1106 = vset.pattern.permute.xlu0 6
  %1107 = vperm.xlu0 %1106, %v94
  %v1108 = vpop.permute.xlu0 %1107
  %1110 = vset.pattern.permute.xlu0 6
  %1111 = vperm.xlu0 %1110, %v95
  %v1112 = vpop.permute.xlu0 %1111
  %v1114 = vperm.slane %v787, 6
  %v1115 = vmul.f32 %v1084, %v1114
  %v1116 = vmul.f32 %v1088, %v1114
  %v1117 = vmul.f32 %v1092, %v1114
  %v1118 = vmul.f32 %v1096, %v1114
  %v1119 = vmul.f32 %v1100, %v1114
  %v1120 = vmul.f32 %v1104, %v1114
  %v1121 = vmul.f32 %v1108, %v1114
  %v1122 = vmul.f32 %v1112, %v1114
  %v1123 = vadd.f32 %v1074, %v1115
  %v1124 = vadd.f32 %v1075, %v1116
  %v1125 = vadd.f32 %v1076, %v1117
  %v1126 = vadd.f32 %v1077, %v1118
  %v1127 = vadd.f32 %v1078, %v1119
  %v1128 = vadd.f32 %v1079, %v1120
  %v1129 = vadd.f32 %v1080, %v1121
  %v1130 = vadd.f32 %v1081, %v1122
  %1131 = vset.pattern.permute.xlu0 7
  %1132 = vperm.xlu0 %1131, %v88
  %v1133 = vpop.permute.xlu0 %1132
  %1135 = vset.pattern.permute.xlu0 7
  %1136 = vperm.xlu0 %1135, %v89
  %v1137 = vpop.permute.xlu0 %1136
  %1139 = vset.pattern.permute.xlu0 7
  %1140 = vperm.xlu0 %1139, %v90
  %v1141 = vpop.permute.xlu0 %1140
  %1143 = vset.pattern.permute.xlu0 7
  %1144 = vperm.xlu0 %1143, %v91
  %v1145 = vpop.permute.xlu0 %1144
  %1147 = vset.pattern.permute.xlu0 7
  %1148 = vperm.xlu0 %1147, %v92
  %v1149 = vpop.permute.xlu0 %1148
  %1151 = vset.pattern.permute.xlu0 7
  %1152 = vperm.xlu0 %1151, %v93
  %v1153 = vpop.permute.xlu0 %1152
  %1155 = vset.pattern.permute.xlu0 7
  %1156 = vperm.xlu0 %1155, %v94
  %v1157 = vpop.permute.xlu0 %1156
  %1159 = vset.pattern.permute.xlu0 7
  %1160 = vperm.xlu0 %1159, %v95
  %v1161 = vpop.permute.xlu0 %1160
  %v1163 = vperm.slane %v787, 7
  %v1164 = vmul.f32 %v1133, %v1163
  %v1165 = vmul.f32 %v1137, %v1163
  %v1166 = vmul.f32 %v1141, %v1163
  %v1167 = vmul.f32 %v1145, %v1163
  %v1168 = vmul.f32 %v1149, %v1163
  %v1169 = vmul.f32 %v1153, %v1163
  %v1170 = vmul.f32 %v1157, %v1163
  %v1171 = vmul.f32 %v1161, %v1163
  %v1172 = vadd.f32 %v1123, %v1164
  %v1173 = vadd.f32 %v1124, %v1165
  %v1174 = vadd.f32 %v1125, %v1166
  %v1175 = vadd.f32 %v1126, %v1167
  %v1176 = vadd.f32 %v1127, %v1168
  %v1177 = vadd.f32 %v1128, %v1169
  %v1178 = vadd.f32 %v1129, %v1170
  %v1179 = vadd.f32 %v1130, %v1171
  %v1180 = vadd.f32 %v768, %v1172
  %v1181 = vadd.f32 %v770, %v1173
  %v1182 = vadd.f32 %v773, %v1174
  %v1183 = vadd.f32 %v775, %v1175
  %v1184 = vadd.f32 %v778, %v1176
  %v1185 = vadd.f32 %v780, %v1177
  %v1186 = vadd.f32 %v783, %v1178
  %v1187 = vadd.f32 %v785, %v1179
  %v1188 = vld [vmem:[%s8] sm:$0x1]
  %v1190 = vperm.slane %v1188, 0
  %v1192 = vmul.f32 %v508, %v1190
  %v1193 = vmul.f32 %v520, %v1190
  %v1194 = vmul.f32 %v532, %v1190
  %v1195 = vmul.f32 %v544, %v1190
  %v1196 = vmul.f32 %v556, %v1190
  %v1197 = vmul.f32 %v568, %v1190
  %v1198 = vmul.f32 %v580, %v1190
  %v1199 = vmul.f32 %v592, %v1190
  %v1200 = vadd.f32 %v1180, %v1192
  %v1201 = vadd.f32 %v1181, %v1193
  %v1202 = vadd.f32 %v1182, %v1194
  %v1203 = vadd.f32 %v1183, %v1195
  %v1204 = vadd.f32 %v1184, %v1196
  %v1205 = vadd.f32 %v1185, %v1197
  %v1206 = vadd.f32 %v1186, %v1198
  %v1207 = vadd.f32 %v1187, %v1199
  %v1208 = vld [vmem:[%s9] sm:$0x1]
  %v1210 = vperm.slane %v1208, 0
  %v1212 = vadd.f32 %v1200, %v1210
  %v1213 = vadd.f32 %v1201, %v1210
  %v1214 = vadd.f32 %v1202, %v1210
  %v1215 = vadd.f32 %v1203, %v1210
  %v1216 = vadd.f32 %v1204, %v1210
  %v1217 = vadd.f32 %v1205, %v1210
  %v1218 = vadd.f32 %v1206, %v1210
  %v1219 = vadd.f32 %v1207, %v1210
  %v1220 = vmax.f32 %v1212, 0.0
  %v1221 = vmax.f32 %v1213, 0.0
  %v1222 = vmax.f32 %v1214, 0.0
  %v1223 = vmax.f32 %v1215, 0.0
  %v1224 = vmax.f32 %v1216, 0.0
  %v1225 = vmax.f32 %v1217, 0.0
  %v1226 = vmax.f32 %v1218, 0.0
  %v1227 = vmax.f32 %v1219, 0.0
  %v1228 = vpack.c.bf16 %v1221, %v1220
  %v1229 = vpack.c.bf16 %v1223, %v1222
  %v1230 = vpack.c.bf16 %v1225, %v1224
  %v1231 = vpack.c.bf16 %v1227, %v1226
  %v1232 = vld [vmem:[%s10] sm:$0xf]
  %v1233 = vld [vmem:[%s10 + $0x4] sm:$0xf]
  %v1234 = vld [vmem:[%s10 + $0x8] sm:$0xf]
  %v1235 = vld [vmem:[%s10 + $0xc] sm:$0xf]
  %v1236 = vld [vmem:[%s10 + $0x10] sm:$0xf]
  %v1237 = vld [vmem:[%s10 + $0x14] sm:$0xf]
  %v1238 = vld [vmem:[%s10 + $0x18] sm:$0xf]
  %v1239 = vld [vmem:[%s10 + $0x1c] sm:$0xf]
  %v1240 = vld [vmem:[%s10 + $0x20] sm:$0xf]
  %v1241 = vld [vmem:[%s10 + $0x24] sm:$0xf]
  %v1242 = vld [vmem:[%s10 + $0x28] sm:$0xf]
  %v1243 = vld [vmem:[%s10 + $0x2c] sm:$0xf]
  %v1244 = vld [vmem:[%s10 + $0x30] sm:$0xf]
  %v1245 = vld [vmem:[%s10 + $0x34] sm:$0xf]
  %v1246 = vld [vmem:[%s10 + $0x38] sm:$0xf]
  %v1247 = vld [vmem:[%s10 + $0x3c] sm:$0xf]
  %v1248 = vld [vmem:[%s11] sm:$0x1]
  %v1250 = vperm.slane %v1248, 0
  %v1268 = vunpack.c.l.b16 %v1232
  %v1269 = vunpack.c.l.b16 %v1233
  %v1270 = vunpack.c.l.b16 %v1234
  %v1271 = vunpack.c.l.b16 %v1235
  %v1272 = vunpack.c.l.b16 %v1236
  %v1273 = vunpack.c.l.b16 %v1237
  %v1274 = vunpack.c.l.b16 %v1238
  %v1275 = vunpack.c.l.b16 %v1239
  %v1276 = vunpack.c.l.b16 %v1240
  %v1277 = vunpack.c.l.b16 %v1241
  %v1278 = vunpack.c.l.b16 %v1242
  %v1279 = vunpack.c.l.b16 %v1243
  %v1280 = vunpack.c.l.b16 %v1244
  %v1281 = vunpack.c.l.b16 %v1245
  %v1282 = vunpack.c.l.b16 %v1246
  %v1283 = vunpack.c.l.b16 %v1247
  %v1284 = vpack.c.b16 %v1269, %v1268
  %v1285 = vpack.c.b16 %v1271, %v1270
  %v1286 = vpack.c.b16 %v1273, %v1272
  %v1287 = vpack.c.b16 %v1275, %v1274
  %v1288 = vpack.c.b16 %v1277, %v1276
  %v1289 = vpack.c.b16 %v1279, %v1278
  %v1290 = vpack.c.b16 %v1281, %v1280
  %v1291 = vpack.c.b16 %v1283, %v1282
  %1300 = vmatpush.bf16.msra.mxu0 %v1291
  %1301 = vmatpush.bf16.msra.mxu0 %v1290
  %1302 = vmatpush.bf16.msra.mxu0 %v1289
  %1303 = vmatpush.bf16.msra.mxu0 %v1288
  %1304 = vmatpush.bf16.msra.mxu0 %v1287
  %1305 = vmatpush.bf16.msra.mxu0 %v1286
  %1306 = vmatpush.bf16.msra.mxu0 %v1285
  %1307 = vmatpush.bf16.msra.mxu0 %v1284
  %1308 = vmatmul.bf16.gmra.mxu0 %v1228
  %v1309 = vpop.f32.mrf.mxu0
  %v1310 = vadd.f32 %v1250, %v1309
  %v1311 = vpop.f32.mrf.mxu0
  %v1312 = vadd.f32 %v1250, %v1311
  %1313 = vmatmul.bf16.gmra.mxu0 %v1229
  %v1314 = vpop.f32.mrf.mxu0
  %v1315 = vadd.f32 %v1250, %v1314
  %v1316 = vpop.f32.mrf.mxu0
  %v1317 = vadd.f32 %v1250, %v1316
  %1318 = vmatmul.bf16.gmra.mxu0 %v1230
  %v1319 = vpop.f32.mrf.mxu0
  %v1320 = vadd.f32 %v1250, %v1319
  %v1321 = vpop.f32.mrf.mxu0
  %v1322 = vadd.f32 %v1250, %v1321
  %1323 = vmatmul.bf16.gmra.mxu0 %v1231
  %v1324 = vpop.f32.mrf.mxu0
  %v1325 = vadd.f32 %v1250, %v1324
  %v1326 = vpop.f32.mrf.mxu0
  %v1327 = vadd.f32 %v1250, %v1326
  %1328 = vdwg.mxu0
  %v1329 = vmax.f32 %v1310, 0.0
  %v1330 = vmax.f32 %v1312, 0.0
  %v1331 = vmax.f32 %v1315, 0.0
  %v1332 = vmax.f32 %v1317, 0.0
  %v1333 = vmax.f32 %v1320, 0.0
  %v1334 = vmax.f32 %v1322, 0.0
  %v1335 = vmax.f32 %v1325, 0.0
  %v1336 = vmax.f32 %v1327, 0.0
  %v1337 = vpack.c.bf16 %v1330, %v1329
  %v1338 = vpack.c.bf16 %v1332, %v1331
  %v1339 = vpack.c.bf16 %v1334, %v1333
  %v1340 = vpack.c.bf16 %v1336, %v1335
  %v1341 = vld [vmem:[%s12] sm:$0xf]
  %v1342 = vld [vmem:[%s12 + $0x4] sm:$0xf]
  %v1343 = vld [vmem:[%s12 + $0x8] sm:$0xf]
  %v1344 = vld [vmem:[%s12 + $0xc] sm:$0xf]
  %v1345 = vld [vmem:[%s12 + $0x10] sm:$0xf]
  %v1346 = vld [vmem:[%s12 + $0x14] sm:$0xf]
  %v1347 = vld [vmem:[%s12 + $0x18] sm:$0xf]
  %v1348 = vld [vmem:[%s12 + $0x1c] sm:$0xf]
  %v1349 = vld [vmem:[%s12 + $0x20] sm:$0xf]
  %v1350 = vld [vmem:[%s12 + $0x24] sm:$0xf]
  %v1351 = vld [vmem:[%s12 + $0x28] sm:$0xf]
  %v1352 = vld [vmem:[%s12 + $0x2c] sm:$0xf]
  %v1353 = vld [vmem:[%s12 + $0x30] sm:$0xf]
  %v1354 = vld [vmem:[%s12 + $0x34] sm:$0xf]
  %v1355 = vld [vmem:[%s12 + $0x38] sm:$0xf]
  %v1356 = vld [vmem:[%s12 + $0x3c] sm:$0xf]
  %v1357 = vld [vmem:[%s13] sm:$0x1]
  %v1359 = vperm.slane %v1357, 0
  %v1377 = vunpack.c.l.b16 %v1341
  %v1378 = vunpack.c.l.b16 %v1342
  %v1379 = vunpack.c.l.b16 %v1343
  %v1380 = vunpack.c.l.b16 %v1344
  %v1381 = vunpack.c.l.b16 %v1345
  %v1382 = vunpack.c.l.b16 %v1346
  %v1383 = vunpack.c.l.b16 %v1347
  %v1384 = vunpack.c.l.b16 %v1348
  %v1385 = vunpack.c.l.b16 %v1349
  %v1386 = vunpack.c.l.b16 %v1350
  %v1387 = vunpack.c.l.b16 %v1351
  %v1388 = vunpack.c.l.b16 %v1352
  %v1389 = vunpack.c.l.b16 %v1353
  %v1390 = vunpack.c.l.b16 %v1354
  %v1391 = vunpack.c.l.b16 %v1355
  %v1392 = vunpack.c.l.b16 %v1356
  %v1393 = vpack.c.b16 %v1378, %v1377
  %v1394 = vpack.c.b16 %v1380, %v1379
  %v1395 = vpack.c.b16 %v1382, %v1381
  %v1396 = vpack.c.b16 %v1384, %v1383
  %v1397 = vpack.c.b16 %v1386, %v1385
  %v1398 = vpack.c.b16 %v1388, %v1387
  %v1399 = vpack.c.b16 %v1390, %v1389
  %v1400 = vpack.c.b16 %v1392, %v1391
  %1409 = vmatpush.bf16.msra.mxu0 %v1400
  %1410 = vmatpush.bf16.msra.mxu0 %v1399
  %1411 = vmatpush.bf16.msra.mxu0 %v1398
  %1412 = vmatpush.bf16.msra.mxu0 %v1397
  %1413 = vmatpush.bf16.msra.mxu0 %v1396
  %1414 = vmatpush.bf16.msra.mxu0 %v1395
  %1415 = vmatpush.bf16.msra.mxu0 %v1394
  %1416 = vmatpush.bf16.msra.mxu0 %v1393
  %1417 = vmatmul.bf16.gmra.mxu0 %v1337
  %v1418 = vpop.f32.mrf.mxu0
  %v1419 = vadd.f32 %v1359, %v1418
  %v1420 = vpop.f32.mrf.mxu0
  %v1421 = vadd.f32 %v1359, %v1420
  %1422 = vmatmul.bf16.gmra.mxu0 %v1338
  %v1423 = vpop.f32.mrf.mxu0
  %v1424 = vadd.f32 %v1359, %v1423
  %v1425 = vpop.f32.mrf.mxu0
  %v1426 = vadd.f32 %v1359, %v1425
  %1427 = vmatmul.bf16.gmra.mxu0 %v1339
  %v1428 = vpop.f32.mrf.mxu0
  %v1429 = vadd.f32 %v1359, %v1428
  %v1430 = vpop.f32.mrf.mxu0
  %v1431 = vadd.f32 %v1359, %v1430
  %1432 = vmatmul.bf16.gmra.mxu0 %v1340
  %v1433 = vpop.f32.mrf.mxu0
  %v1434 = vadd.f32 %v1359, %v1433
  %v1435 = vpop.f32.mrf.mxu0
  %v1436 = vadd.f32 %v1359, %v1435
  %1437 = vdwg.mxu0
  %v1438 = vld [vmem:[%s14] sm:$0x1]
  %v1439 = vld [vmem:[%s15] sm:$0x1]
  %v1440 = vld [vmem:[%s16] sm:$0xff]
  %v1441 = vld [vmem:[%s16 + $0x8] sm:$0xff]
  %v1442 = vld [vmem:[%s16 + $0x10] sm:$0xff]
  %v1443 = vld [vmem:[%s16 + $0x18] sm:$0xff]
  %v1444 = vld [vmem:[%s16 + $0x20] sm:$0xff]
  %v1445 = vld [vmem:[%s16 + $0x28] sm:$0xff]
  %v1446 = vld [vmem:[%s16 + $0x30] sm:$0xff]
  %v1447 = vld [vmem:[%s16 + $0x38] sm:$0xff]
  %v1448 = vld [vmem:[%s16 + $0x40] sm:$0xff]
  %v1449 = vld [vmem:[%s16 + $0x48] sm:$0xff]
  %v1450 = vld [vmem:[%s16 + $0x50] sm:$0xff]
  %v1451 = vld [vmem:[%s16 + $0x58] sm:$0xff]
  %v1452 = vld [vmem:[%s16 + $0x60] sm:$0xff]
  %v1453 = vld [vmem:[%s16 + $0x68] sm:$0xff]
  %v1454 = vld [vmem:[%s16 + $0x70] sm:$0xff]
  %v1455 = vld [vmem:[%s16 + $0x78] sm:$0xff]
  %1456 = vmatpush.msra.mxu0 %v1455
  %1457 = vmatpush.msra.mxu0 %v1454
  %1458 = vmatpush.msra.mxu0 %v1453
  %1459 = vmatpush.msra.mxu0 %v1452
  %1460 = vmatpush.msra.mxu0 %v1451
  %1461 = vmatpush.msra.mxu0 %v1450
  %1462 = vmatpush.msra.mxu0 %v1449
  %1463 = vmatpush.msra.mxu0 %v1448
  %1464 = vmatpush.msra.mxu0 %v1447
  %1465 = vmatpush.msra.mxu0 %v1446
  %1466 = vmatpush.msra.mxu0 %v1445
  %1467 = vmatpush.msra.mxu0 %v1444
  %1468 = vmatpush.msra.mxu0 %v1443
  %1469 = vmatpush.msra.mxu0 %v1442
  %1470 = vmatpush.msra.mxu0 %v1441
  %1471 = vmatpush.msra.mxu0 %v1440
  %1472 = vmatmul.f32.gmra.mxu0 %v1419
  %v1473 = vpop.f32.mrf.mxu0
  %v1474 = vadd.f32 0.0, %v1473
  %1475 = vmatmul.f32.gmra.mxu0 %v1421
  %v1476 = vpop.f32.mrf.mxu0
  %v1477 = vadd.f32 0.0, %v1476
  %1478 = vmatmul.f32.gmra.mxu0 %v1424
  %v1479 = vpop.f32.mrf.mxu0
  %v1480 = vadd.f32 0.0, %v1479
  %1481 = vmatmul.f32.gmra.mxu0 %v1426
  %v1482 = vpop.f32.mrf.mxu0
  %v1483 = vadd.f32 0.0, %v1482
  %1484 = vmatmul.f32.gmra.mxu0 %v1429
  %v1485 = vpop.f32.mrf.mxu0
  %v1486 = vadd.f32 0.0, %v1485
  %1487 = vmatmul.f32.gmra.mxu0 %v1431
  %v1488 = vpop.f32.mrf.mxu0
  %v1489 = vadd.f32 0.0, %v1488
  %1490 = vmatmul.f32.gmra.mxu0 %v1434
  %v1491 = vpop.f32.mrf.mxu0
  %v1492 = vadd.f32 0.0, %v1491
  %1493 = vmatmul.f32.gmra.mxu0 %v1436
  %v1494 = vpop.f32.mrf.mxu0
  %v1495 = vadd.f32 0.0, %v1494
  %1496 = vdwg.mxu0
  %v1497 = vmul.f32 %v1419, %v1419
  %v1498 = vmul.f32 %v1421, %v1421
  %v1499 = vmul.f32 %v1424, %v1424
  %v1500 = vmul.f32 %v1426, %v1426
  %v1501 = vmul.f32 %v1429, %v1429
  %v1502 = vmul.f32 %v1431, %v1431
  %v1503 = vmul.f32 %v1434, %v1434
  %v1504 = vmul.f32 %v1436, %v1436
  %1505 = vmatpush.msra.mxu0 %v1455
  %1506 = vmatpush.msra.mxu0 %v1454
  %1507 = vmatpush.msra.mxu0 %v1453
  %1508 = vmatpush.msra.mxu0 %v1452
  %1509 = vmatpush.msra.mxu0 %v1451
  %1510 = vmatpush.msra.mxu0 %v1450
  %1511 = vmatpush.msra.mxu0 %v1449
  %1512 = vmatpush.msra.mxu0 %v1448
  %1513 = vmatpush.msra.mxu0 %v1447
  %1514 = vmatpush.msra.mxu0 %v1446
  %1515 = vmatpush.msra.mxu0 %v1445
  %1516 = vmatpush.msra.mxu0 %v1444
  %1517 = vmatpush.msra.mxu0 %v1443
  %1518 = vmatpush.msra.mxu0 %v1442
  %1519 = vmatpush.msra.mxu0 %v1441
  %1520 = vmatpush.msra.mxu0 %v1440
  %1521 = vmatmul.f32.gmra.mxu0 %v1497
  %v1522 = vpop.f32.mrf.mxu0
  %v1523 = vadd.f32 0.0, %v1522
  %1524 = vmatmul.f32.gmra.mxu0 %v1498
  %v1525 = vpop.f32.mrf.mxu0
  %v1526 = vadd.f32 0.0, %v1525
  %1527 = vmatmul.f32.gmra.mxu0 %v1499
  %v1528 = vpop.f32.mrf.mxu0
  %v1529 = vadd.f32 0.0, %v1528
  %1530 = vmatmul.f32.gmra.mxu0 %v1500
  %v1531 = vpop.f32.mrf.mxu0
  %v1532 = vadd.f32 0.0, %v1531
  %1533 = vmatmul.f32.gmra.mxu0 %v1501
  %v1534 = vpop.f32.mrf.mxu0
  %v1535 = vadd.f32 0.0, %v1534
  %1536 = vmatmul.f32.gmra.mxu0 %v1502
  %v1537 = vpop.f32.mrf.mxu0
  %v1538 = vadd.f32 0.0, %v1537
  %1539 = vmatmul.f32.gmra.mxu0 %v1503
  %v1540 = vpop.f32.mrf.mxu0
  %v1541 = vadd.f32 0.0, %v1540
  %1542 = vmatmul.f32.gmra.mxu0 %v1504
  %v1543 = vpop.f32.mrf.mxu0
  %v1544 = vadd.f32 0.0, %v1543
  %1545 = vdwg.mxu0
  %v1546 = vmul.f32 %v1474, %v1474
  %v1547 = vmul.f32 %v1477, %v1477
  %v1548 = vmul.f32 %v1480, %v1480
  %v1549 = vmul.f32 %v1483, %v1483
  %v1550 = vmul.f32 %v1486, %v1486
  %v1551 = vmul.f32 %v1489, %v1489
  %v1552 = vmul.f32 %v1492, %v1492
  %v1553 = vmul.f32 %v1495, %v1495
  %v1554 = vsub.f32 %v1523, %v1546
  %v1555 = vsub.f32 %v1526, %v1547
  %v1556 = vsub.f32 %v1529, %v1548
  %v1557 = vsub.f32 %v1532, %v1549
  %v1558 = vsub.f32 %v1535, %v1550
  %v1559 = vsub.f32 %v1538, %v1551
  %v1560 = vsub.f32 %v1541, %v1552
  %v1561 = vsub.f32 %v1544, %v1553
  %v1562 = vmax.f32 %v1554, 0.0
  %v1563 = vmax.f32 %v1555, 0.0
  %v1564 = vmax.f32 %v1556, 0.0
  %v1565 = vmax.f32 %v1557, 0.0
  %v1566 = vmax.f32 %v1558, 0.0
  %v1567 = vmax.f32 %v1559, 0.0
  %v1568 = vmax.f32 %v1560, 0.0
  %v1569 = vmax.f32 %v1561, 0.0
  %v1570 = vsub.f32 %v1419, %v1474
  %v1571 = vsub.f32 %v1421, %v1477
  %v1572 = vsub.f32 %v1424, %v1480
  %v1573 = vsub.f32 %v1426, %v1483
  %v1574 = vsub.f32 %v1429, %v1486
  %v1575 = vsub.f32 %v1431, %v1489
  %v1576 = vsub.f32 %v1434, %v1492
  %v1577 = vsub.f32 %v1436, %v1495
  %v1578 = vadd.f32 %v1562, 1e-05
  %v1579 = vadd.f32 %v1563, 1e-05
  %v1580 = vadd.f32 %v1564, 1e-05
  %v1581 = vadd.f32 %v1565, 1e-05
  %v1582 = vadd.f32 %v1566, 1e-05
  %v1583 = vadd.f32 %v1567, 1e-05
  %v1584 = vadd.f32 %v1568, 1e-05
  %v1585 = vadd.f32 %v1569, 1e-05
  %v1586 = vrsqrt.pop %v1578
  %v1587 = vmul.f32 %v1586, %v1578
  %v1588 = vmul.f32 %v1587, %v1586
  %v1589 = vmul.f32 0.5, %v1588
  %v1590 = vsub.f32 1.5, %v1589
  %v1591 = vmul.f32 %v1586, %v1590
  %vm1592 = vweird.f32 %v1578
  %vm1593 = vweird.f32 %v1586
  %vm1594 = vmor %vm1592, %vm1593
  %v1595 = vsel %vm1594, %v1586, %v1591
  %v1596 = vrsqrt.pop %v1579
  %v1597 = vmul.f32 %v1596, %v1579
  %v1598 = vmul.f32 %v1597, %v1596
  %v1599 = vmul.f32 0.5, %v1598
  %v1600 = vsub.f32 1.5, %v1599
  %v1601 = vmul.f32 %v1596, %v1600
  %vm1602 = vweird.f32 %v1579
  %vm1603 = vweird.f32 %v1596
  %vm1604 = vmor %vm1602, %vm1603
  %v1605 = vsel %vm1604, %v1596, %v1601
  %v1606 = vrsqrt.pop %v1580
  %v1607 = vmul.f32 %v1606, %v1580
  %v1608 = vmul.f32 %v1607, %v1606
  %v1609 = vmul.f32 0.5, %v1608
  %v1610 = vsub.f32 1.5, %v1609
  %v1611 = vmul.f32 %v1606, %v1610
  %vm1612 = vweird.f32 %v1580
  %vm1613 = vweird.f32 %v1606
  %vm1614 = vmor %vm1612, %vm1613
  %v1615 = vsel %vm1614, %v1606, %v1611
  %v1616 = vrsqrt.pop %v1581
  %v1617 = vmul.f32 %v1616, %v1581
  %v1618 = vmul.f32 %v1617, %v1616
  %v1619 = vmul.f32 0.5, %v1618
  %v1620 = vsub.f32 1.5, %v1619
  %v1621 = vmul.f32 %v1616, %v1620
  %vm1622 = vweird.f32 %v1581
  %vm1623 = vweird.f32 %v1616
  %vm1624 = vmor %vm1622, %vm1623
  %v1625 = vsel %vm1624, %v1616, %v1621
  %v1626 = vrsqrt.pop %v1582
  %v1627 = vmul.f32 %v1626, %v1582
  %v1628 = vmul.f32 %v1627, %v1626
  %v1629 = vmul.f32 0.5, %v1628
  %v1630 = vsub.f32 1.5, %v1629
  %v1631 = vmul.f32 %v1626, %v1630
  %vm1632 = vweird.f32 %v1582
  %vm1633 = vweird.f32 %v1626
  %vm1634 = vmor %vm1632, %vm1633
  %v1635 = vsel %vm1634, %v1626, %v1631
  %v1636 = vrsqrt.pop %v1583
  %v1637 = vmul.f32 %v1636, %v1583
  %v1638 = vmul.f32 %v1637, %v1636
  %v1639 = vmul.f32 0.5, %v1638
  %v1640 = vsub.f32 1.5, %v1639
  %v1641 = vmul.f32 %v1636, %v1640
  %vm1642 = vweird.f32 %v1583
  %vm1643 = vweird.f32 %v1636
  %vm1644 = vmor %vm1642, %vm1643
  %v1645 = vsel %vm1644, %v1636, %v1641
  %v1646 = vrsqrt.pop %v1584
  %v1647 = vmul.f32 %v1646, %v1584
  %v1648 = vmul.f32 %v1647, %v1646
  %v1649 = vmul.f32 0.5, %v1648
  %v1650 = vsub.f32 1.5, %v1649
  %v1651 = vmul.f32 %v1646, %v1650
  %vm1652 = vweird.f32 %v1584
  %vm1653 = vweird.f32 %v1646
  %vm1654 = vmor %vm1652, %vm1653
  %v1655 = vsel %vm1654, %v1646, %v1651
  %v1656 = vrsqrt.pop %v1585
  %v1657 = vmul.f32 %v1656, %v1585
  %v1658 = vmul.f32 %v1657, %v1656
  %v1659 = vmul.f32 0.5, %v1658
  %v1660 = vsub.f32 1.5, %v1659
  %v1661 = vmul.f32 %v1656, %v1660
  %vm1662 = vweird.f32 %v1585
  %vm1663 = vweird.f32 %v1656
  %vm1664 = vmor %vm1662, %vm1663
  %v1665 = vsel %vm1664, %v1656, %v1661
  %v1666 = vmul.f32 %v1570, %v1595
  %v1667 = vmul.f32 %v1571, %v1605
  %v1668 = vmul.f32 %v1572, %v1615
  %v1669 = vmul.f32 %v1573, %v1625
  %v1670 = vmul.f32 %v1574, %v1635
  %v1671 = vmul.f32 %v1575, %v1645
  %v1672 = vmul.f32 %v1576, %v1655
  %v1673 = vmul.f32 %v1577, %v1665
  %v1675 = vperm.slane %v1438, 0
  %v1677 = vmul.f32 %v1666, %v1675
  %v1678 = vmul.f32 %v1667, %v1675
  %v1679 = vmul.f32 %v1668, %v1675
  %v1680 = vmul.f32 %v1669, %v1675
  %v1681 = vmul.f32 %v1670, %v1675
  %v1682 = vmul.f32 %v1671, %v1675
  %v1683 = vmul.f32 %v1672, %v1675
  %v1684 = vmul.f32 %v1673, %v1675
  %v1686 = vperm.slane %v1439, 0
  %v1688 = vadd.f32 %v1677, %v1686
  %v1689 = vadd.f32 %v1678, %v1686
  %v1690 = vadd.f32 %v1679, %v1686
  %v1691 = vadd.f32 %v1680, %v1686
  %v1692 = vadd.f32 %v1681, %v1686
  %v1693 = vadd.f32 %v1682, %v1686
  %v1694 = vadd.f32 %v1683, %v1686
  %v1695 = vadd.f32 %v1684, %v1686
  %1696 = vst [vmem:[%s17] sm:$0xff] %v1688
  %1697 = vst [vmem:[%s17 + $0x8] sm:$0xff] %v1689
  %1698 = vst [vmem:[%s17 + $0x10] sm:$0xff] %v1690
  %1699 = vst [vmem:[%s17 + $0x18] sm:$0xff] %v1691
  %1700 = vst [vmem:[%s17 + $0x20] sm:$0xff] %v1692
  %1701 = vst [vmem:[%s17 + $0x28] sm:$0xff] %v1693
  %1702 = vst [vmem:[%s17 + $0x30] sm:$0xff] %v1694
  %1703 = vst [vmem:[%s17 + $0x38] sm:$0xff] %v1695
  // Predicated region
  $region70: #{_forward.13} parent=0 // pred_check
    _
  $region71: #{_forward.13} parent=0 // pred_check_branch
    %1705 = sbr.rel (0) target = $region73
  $region72: #{_forward.13} parent=0 // pred_region
    _
  $region73: #{_forward.13} parent=0 // pred_fallthru
    _
  // Predicated region
  $region74: #{_forward.13} parent=0 // pred_check
    _
  $region75: #{_forward.13} parent=0 // pred_check_branch
    %1707 = sbr.rel (0) target = $region77
  $region76: #{_forward.13} parent=0 // pred_region
    _
  $region77: #{_forward.13} parent=0 // pred_fallthru
    _

// kernel: _forward.14
$region0: #{_forward.14}
  #allocation0 [shape = 'u32[]', space=smem, size = 0x4, offset = 0x4, fixed_abs, tag = 'smem constant byte address 0x4 - core index']
  #allocation1 [shape = 'u32[72,128]{1,0:T(1,128)}', space=vmem, size = 0x9000, scoped, tag = 'internal scratch']
  %s0 = inlined_call_operand.vmem [shape: f32[32,128], index: 0, kind: input, shape index: {}]
  %s1 = inlined_call_operand.vmem [shape: f32[32,128], index: 1, kind: input, shape index: {}]
  %s2 = inlined_call_operand.vmem [shape: bf16[128,128], index: 2, kind: input, shape index: {}]
  %s3 = inlined_call_operand.vmem [shape: bf16[128,128], index: 3, kind: input, shape index: {}]
  %s4 = inlined_call_operand.vmem [shape: f32[1,128], index: 4, kind: input, shape index: {}, may-alias: {4,6,8,10}]
  %s5 = inlined_call_operand.vmem [shape: bf16[128,128], index: 5, kind: input, shape index: {}]
  %s6 = inlined_call_operand.vmem [shape: f32[1,128], index: 6, kind: input, shape index: {}, may-alias: {4,6,8,10}]
  %s7 = inlined_call_operand.vmem [shape: bf16[128,128], index: 7, kind: input, shape index: {}]
  %s8 = inlined_call_operand.vmem [shape: f32[1,128], index: 8, kind: input, shape index: {}, may-alias: {4,6,8,10}]
  %s9 = inlined_call_operand.vmem [shape: f32[1,128], index: 9, kind: input, shape index: {}]
  %s10 = inlined_call_operand.vmem [shape: f32[1,128], index: 10, kind: input, shape index: {}, may-alias: {4,6,8,10}]
  %s11 = inlined_call_operand.vmem [shape: f32[128,128], index: 11, kind: input, shape index: {}]
  %s12 = inlined_call_operand.vmem [shape: f32[32,128], index: 12, kind: output, shape index: {}]
  %s13 = sld [smem:[#allocation0]]
  $region58: #{_forward.14} parent=0
    _
  %s15 = ssub.s32 1, %s13
  %s16 = scalar_select 0, %s15, %s13
  // Predicated region
  $region2: #{_forward.14} parent=0 // pred_check
    _
  $region3: #{_forward.14} parent=0 // pred_check_branch
    %18 = sbr.rel (0) target = $region5
  $region4: #{_forward.14} parent=0 // pred_region
    _
  $region5: #{_forward.14} parent=0 // pred_fallthru
    _
  // Predicated region
  $region6: #{_forward.14} parent=0 // pred_check
    _
  $region7: #{_forward.14} parent=0 // pred_check_branch
    %20 = sbr.rel (0) target = $region9
  $region8: #{_forward.14} parent=0 // pred_region
    _
  $region9: #{_forward.14} parent=0 // pred_fallthru
    _
  // Predicated region
  $region10: #{_forward.14} parent=0 // pred_check
    _
  $region11: #{_forward.14} parent=0 // pred_check_branch
    %22 = sbr.rel (0) target = $region13
  $region12: #{_forward.14} parent=0 // pred_region
    _
  $region13: #{_forward.14} parent=0 // pred_fallthru
    _
  // Predicated region
  $region14: #{_forward.14} parent=0 // pred_check
    _
  $region15: #{_forward.14} parent=0 // pred_check_branch
    %24 = sbr.rel (0) target = $region17
  $region16: #{_forward.14} parent=0 // pred_region
    _
  $region17: #{_forward.14} parent=0 // pred_fallthru
    _
  // Predicated region
  $region18: #{_forward.14} parent=0 // pred_check
    _
  $region19: #{_forward.14} parent=0 // pred_check_branch
    %26 = sbr.rel (0) target = $region21
  $region20: #{_forward.14} parent=0 // pred_region
    _
  $region21: #{_forward.14} parent=0 // pred_fallthru
    _
  // Predicated region
  $region22: #{_forward.14} parent=0 // pred_check
    _
  $region23: #{_forward.14} parent=0 // pred_check_branch
    %28 = sbr.rel (0) target = $region25
  $region24: #{_forward.14} parent=0 // pred_region
    _
  $region25: #{_forward.14} parent=0 // pred_fallthru
    _
  // Predicated region
  $region26: #{_forward.14} parent=0 // pred_check
    _
  $region27: #{_forward.14} parent=0 // pred_check_branch
    %30 = sbr.rel (0) target = $region29
  $region28: #{_forward.14} parent=0 // pred_region
    _
  $region29: #{_forward.14} parent=0 // pred_fallthru
    _
  // Predicated region
  $region30: #{_forward.14} parent=0 // pred_check
    _
  $region31: #{_forward.14} parent=0 // pred_check_branch
    %32 = sbr.rel (0) target = $region33
  $region32: #{_forward.14} parent=0 // pred_region
    _
  $region33: #{_forward.14} parent=0 // pred_fallthru
    _
  // Predicated region
  $region34: #{_forward.14} parent=0 // pred_check
    _
  $region35: #{_forward.14} parent=0 // pred_check_branch
    %34 = sbr.rel (0) target = $region37
  $region36: #{_forward.14} parent=0 // pred_region
    _
  $region37: #{_forward.14} parent=0 // pred_fallthru
    _
  // Predicated region
  $region38: #{_forward.14} parent=0 // pred_check
    _
  $region39: #{_forward.14} parent=0 // pred_check_branch
    %36 = sbr.rel (0) target = $region41
  $region40: #{_forward.14} parent=0 // pred_region
    _
  $region41: #{_forward.14} parent=0 // pred_fallthru
    _
  // Predicated region
  $region42: #{_forward.14} parent=0 // pred_check
    _
  $region43: #{_forward.14} parent=0 // pred_check_branch
    %38 = sbr.rel (0) target = $region45
  $region44: #{_forward.14} parent=0 // pred_region
    _
  $region45: #{_forward.14} parent=0 // pred_fallthru
    _
  // Predicated region
  $region46: #{_forward.14} parent=0 // pred_check
    _
  $region47: #{_forward.14} parent=0 // pred_check_branch
    %40 = sbr.rel (0) target = $region49
  $region48: #{_forward.14} parent=0 // pred_region
    _
  $region49: #{_forward.14} parent=0 // pred_fallthru
    _
  %v41 = vld [vmem:[%s0] sm:$0xff]
  %v42 = vld [vmem:[%s0 + $0x8] sm:$0xff]
  %v43 = vld [vmem:[%s0 + $0x10] sm:$0xff]
  %v44 = vld [vmem:[%s0 + $0x18] sm:$0xff]
  %v45 = vpack.c.bf16 %v42, %v41
  %v46 = vpack.c.bf16 %v44, %v43
  %v47 = vld [vmem:[%s2] sm:$0xf]
  %v48 = vld [vmem:[%s2 + $0x4] sm:$0xf]
  %v49 = vld [vmem:[%s2 + $0x8] sm:$0xf]
  %v50 = vld [vmem:[%s2 + $0xc] sm:$0xf]
  %v51 = vld [vmem:[%s2 + $0x10] sm:$0xf]
  %v52 = vld [vmem:[%s2 + $0x14] sm:$0xf]
  %v53 = vld [vmem:[%s2 + $0x18] sm:$0xf]
  %v54 = vld [vmem:[%s2 + $0x1c] sm:$0xf]
  %v55 = vld [vmem:[%s2 + $0x20] sm:$0xf]
  %v56 = vld [vmem:[%s2 + $0x24] sm:$0xf]
  %v57 = vld [vmem:[%s2 + $0x28] sm:$0xf]
  %v58 = vld [vmem:[%s2 + $0x2c] sm:$0xf]
  %v59 = vld [vmem:[%s2 + $0x30] sm:$0xf]
  %v60 = vld [vmem:[%s2 + $0x34] sm:$0xf]
  %v61 = vld [vmem:[%s2 + $0x38] sm:$0xf]
  %v62 = vld [vmem:[%s2 + $0x3c] sm:$0xf]
  %v63 = vld [vmem:[%s1] sm:$0xff]
  %v64 = vld [vmem:[%s1 + $0x8] sm:$0xff]
  %v65 = vld [vmem:[%s1 + $0x10] sm:$0xff]
  %v66 = vld [vmem:[%s1 + $0x18] sm:$0xff]
  %v67 = vpack.c.bf16 %v64, %v63
  %v68 = vpack.c.bf16 %v66, %v65
  %v69 = vld [vmem:[%s3] sm:$0xf]
  %v70 = vld [vmem:[%s3 + $0x4] sm:$0xf]
  %v71 = vld [vmem:[%s3 + $0x8] sm:$0xf]
  %v72 = vld [vmem:[%s3 + $0xc] sm:$0xf]
  %v73 = vld [vmem:[%s3 + $0x10] sm:$0xf]
  %v74 = vld [vmem:[%s3 + $0x14] sm:$0xf]
  %v75 = vld [vmem:[%s3 + $0x18] sm:$0xf]
  %v76 = vld [vmem:[%s3 + $0x1c] sm:$0xf]
  %v77 = vld [vmem:[%s3 + $0x20] sm:$0xf]
  %v78 = vld [vmem:[%s3 + $0x24] sm:$0xf]
  %v79 = vld [vmem:[%s3 + $0x28] sm:$0xf]
  %v80 = vld [vmem:[%s3 + $0x2c] sm:$0xf]
  %v81 = vld [vmem:[%s3 + $0x30] sm:$0xf]
  %v82 = vld [vmem:[%s3 + $0x34] sm:$0xf]
  %v83 = vld [vmem:[%s3 + $0x38] sm:$0xf]
  %v84 = vld [vmem:[%s3 + $0x3c] sm:$0xf]
  %v101 = vunpack.c.l.b16 %v69
  %v102 = vunpack.c.l.b16 %v70
  %v103 = vunpack.c.l.b16 %v71
  %v104 = vunpack.c.l.b16 %v72
  %v105 = vunpack.c.l.b16 %v73
  %v106 = vunpack.c.l.b16 %v74
  %v107 = vunpack.c.l.b16 %v75
  %v108 = vunpack.c.l.b16 %v76
  %v109 = vunpack.c.l.b16 %v77
  %v110 = vunpack.c.l.b16 %v78
  %v111 = vunpack.c.l.b16 %v79
  %v112 = vunpack.c.l.b16 %v80
  %v113 = vunpack.c.l.b16 %v81
  %v114 = vunpack.c.l.b16 %v82
  %v115 = vunpack.c.l.b16 %v83
  %v116 = vunpack.c.l.b16 %v84
  %v117 = vpack.c.b16 %v102, %v101
  %v118 = vpack.c.b16 %v104, %v103
  %v119 = vpack.c.b16 %v106, %v105
  %v120 = vpack.c.b16 %v108, %v107
  %v121 = vpack.c.b16 %v110, %v109
  %v122 = vpack.c.b16 %v112, %v111
  %v123 = vpack.c.b16 %v114, %v113
  %v124 = vpack.c.b16 %v116, %v115
  %133 = vmatpush.bf16.msra.mxu0 %v124
  %134 = vmatpush.bf16.msra.mxu0 %v123
  %135 = vmatpush.bf16.msra.mxu0 %v122
  %136 = vmatpush.bf16.msra.mxu0 %v121
  %137 = vmatpush.bf16.msra.mxu0 %v120
  %138 = vmatpush.bf16.msra.mxu0 %v119
  %139 = vmatpush.bf16.msra.mxu0 %v118
  %140 = vmatpush.bf16.msra.mxu0 %v117
  %141 = vmatmul.bf16.gmra.mxu0 %v67
  %v142 = vpop.f32.mrf.mxu0
  %v143 = vadd.f32 0.0, %v142
  %v144 = vpop.f32.mrf.mxu0
  %v145 = vadd.f32 0.0, %v144
  %146 = vmatmul.bf16.gmra.mxu0 %v68
  %v147 = vpop.f32.mrf.mxu0
  %v148 = vadd.f32 0.0, %v147
  %v149 = vpop.f32.mrf.mxu0
  %v150 = vadd.f32 0.0, %v149
  %151 = vdwg.mxu0
  %v168 = vunpack.c.l.b16 %v47
  %v169 = vunpack.c.l.b16 %v48
  %v170 = vunpack.c.l.b16 %v49
  %v171 = vunpack.c.l.b16 %v50
  %v172 = vunpack.c.l.b16 %v51
  %v173 = vunpack.c.l.b16 %v52
  %v174 = vunpack.c.l.b16 %v53
  %v175 = vunpack.c.l.b16 %v54
  %v176 = vunpack.c.l.b16 %v55
  %v177 = vunpack.c.l.b16 %v56
  %v178 = vunpack.c.l.b16 %v57
  %v179 = vunpack.c.l.b16 %v58
  %v180 = vunpack.c.l.b16 %v59
  %v181 = vunpack.c.l.b16 %v60
  %v182 = vunpack.c.l.b16 %v61
  %v183 = vunpack.c.l.b16 %v62
  %v184 = vpack.c.b16 %v169, %v168
  %v185 = vpack.c.b16 %v171, %v170
  %v186 = vpack.c.b16 %v173, %v172
  %v187 = vpack.c.b16 %v175, %v174
  %v188 = vpack.c.b16 %v177, %v176
  %v189 = vpack.c.b16 %v179, %v178
  %v190 = vpack.c.b16 %v181, %v180
  %v191 = vpack.c.b16 %v183, %v182
  %200 = vmatpush.bf16.msra.mxu0 %v191
  %201 = vmatpush.bf16.msra.mxu0 %v190
  %202 = vmatpush.bf16.msra.mxu0 %v189
  %203 = vmatpush.bf16.msra.mxu0 %v188
  %204 = vmatpush.bf16.msra.mxu0 %v187
  %205 = vmatpush.bf16.msra.mxu0 %v186
  %206 = vmatpush.bf16.msra.mxu0 %v185
  %207 = vmatpush.bf16.msra.mxu0 %v184
  %208 = vmatmul.bf16.gmra.mxu0 %v45
  %v209 = vpop.f32.mrf.mxu0
  %v210 = vadd.f32 %v143, %v209
  %v211 = vpop.f32.mrf.mxu0
  %v212 = vadd.f32 %v145, %v211
  %213 = vmatmul.bf16.gmra.mxu0 %v46
  %v214 = vpop.f32.mrf.mxu0
  %v215 = vadd.f32 %v148, %v214
  %v216 = vpop.f32.mrf.mxu0
  %v217 = vadd.f32 %v150, %v216
  %218 = vdwg.mxu0
  %v219 = vld [vmem:[%s4] sm:$0x1]
  %v221 = vperm.slane %v219, 0
  %v223 = vadd.f32 %v210, %v221
  %v224 = vadd.f32 %v212, %v221
  %v225 = vadd.f32 %v215, %v221
  %v226 = vadd.f32 %v217, %v221
  %v227 = vmax.f32 %v223, 0.0
  %v228 = vmax.f32 %v224, 0.0
  %v229 = vmax.f32 %v225, 0.0
  %v230 = vmax.f32 %v226, 0.0
  %v231 = vpack.c.bf16 %v228, %v227
  %v232 = vpack.c.bf16 %v230, %v229
  %v233 = vld [vmem:[%s5] sm:$0xf]
  %v234 = vld [vmem:[%s5 + $0x4] sm:$0xf]
  %v235 = vld [vmem:[%s5 + $0x8] sm:$0xf]
  %v236 = vld [vmem:[%s5 + $0xc] sm:$0xf]
  %v237 = vld [vmem:[%s5 + $0x10] sm:$0xf]
  %v238 = vld [vmem:[%s5 + $0x14] sm:$0xf]
  %v239 = vld [vmem:[%s5 + $0x18] sm:$0xf]
  %v240 = vld [vmem:[%s5 + $0x1c] sm:$0xf]
  %v241 = vld [vmem:[%s5 + $0x20] sm:$0xf]
  %v242 = vld [vmem:[%s5 + $0x24] sm:$0xf]
  %v243 = vld [vmem:[%s5 + $0x28] sm:$0xf]
  %v244 = vld [vmem:[%s5 + $0x2c] sm:$0xf]
  %v245 = vld [vmem:[%s5 + $0x30] sm:$0xf]
  %v246 = vld [vmem:[%s5 + $0x34] sm:$0xf]
  %v247 = vld [vmem:[%s5 + $0x38] sm:$0xf]
  %v248 = vld [vmem:[%s5 + $0x3c] sm:$0xf]
  %v249 = vld [vmem:[%s6] sm:$0x1]
  %v251 = vperm.slane %v249, 0
  %v269 = vunpack.c.l.b16 %v233
  %v270 = vunpack.c.l.b16 %v234
  %v271 = vunpack.c.l.b16 %v235
  %v272 = vunpack.c.l.b16 %v236
  %v273 = vunpack.c.l.b16 %v237
  %v274 = vunpack.c.l.b16 %v238
  %v275 = vunpack.c.l.b16 %v239
  %v276 = vunpack.c.l.b16 %v240
  %v277 = vunpack.c.l.b16 %v241
  %v278 = vunpack.c.l.b16 %v242
  %v279 = vunpack.c.l.b16 %v243
  %v280 = vunpack.c.l.b16 %v244
  %v281 = vunpack.c.l.b16 %v245
  %v282 = vunpack.c.l.b16 %v246
  %v283 = vunpack.c.l.b16 %v247
  %v284 = vunpack.c.l.b16 %v248
  %v285 = vpack.c.b16 %v270, %v269
  %v286 = vpack.c.b16 %v272, %v271
  %v287 = vpack.c.b16 %v274, %v273
  %v288 = vpack.c.b16 %v276, %v275
  %v289 = vpack.c.b16 %v278, %v277
  %v290 = vpack.c.b16 %v280, %v279
  %v291 = vpack.c.b16 %v282, %v281
  %v292 = vpack.c.b16 %v284, %v283
  %301 = vmatpush.bf16.msra.mxu0 %v292
  %302 = vmatpush.bf16.msra.mxu0 %v291
  %303 = vmatpush.bf16.msra.mxu0 %v290
  %304 = vmatpush.bf16.msra.mxu0 %v289
  %305 = vmatpush.bf16.msra.mxu0 %v288
  %306 = vmatpush.bf16.msra.mxu0 %v287
  %307 = vmatpush.bf16.msra.mxu0 %v286
  %308 = vmatpush.bf16.msra.mxu0 %v285
  %309 = vmatmul.bf16.gmra.mxu0 %v231
  %v310 = vpop.f32.mrf.mxu0
  %v311 = vadd.f32 %v251, %v310
  %v312 = vpop.f32.mrf.mxu0
  %v313 = vadd.f32 %v251, %v312
  %314 = vmatmul.bf16.gmra.mxu0 %v232
  %v315 = vpop.f32.mrf.mxu0
  %v316 = vadd.f32 %v251, %v315
  %v317 = vpop.f32.mrf.mxu0
  %v318 = vadd.f32 %v251, %v317
  %319 = vdwg.mxu0
  %v320 = vmax.f32 %v311, 0.0
  %v321 = vmax.f32 %v313, 0.0
  %v322 = vmax.f32 %v316, 0.0
  %v323 = vmax.f32 %v318, 0.0
  %v324 = vpack.c.bf16 %v321, %v320
  %v325 = vpack.c.bf16 %v323, %v322
  %v326 = vld [vmem:[%s7] sm:$0xf]
  %v327 = vld [vmem:[%s7 + $0x4] sm:$0xf]
  %v328 = vld [vmem:[%s7 + $0x8] sm:$0xf]
  %v329 = vld [vmem:[%s7 + $0xc] sm:$0xf]
  %v330 = vld [vmem:[%s7 + $0x10] sm:$0xf]
  %v331 = vld [vmem:[%s7 + $0x14] sm:$0xf]
  %v332 = vld [vmem:[%s7 + $0x18] sm:$0xf]
  %v333 = vld [vmem:[%s7 + $0x1c] sm:$0xf]
  %v334 = vld [vmem:[%s7 + $0x20] sm:$0xf]
  %v335 = vld [vmem:[%s7 + $0x24] sm:$0xf]
  %v336 = vld [vmem:[%s7 + $0x28] sm:$0xf]
  %v337 = vld [vmem:[%s7 + $0x2c] sm:$0xf]
  %v338 = vld [vmem:[%s7 + $0x30] sm:$0xf]
  %v339 = vld [vmem:[%s7 + $0x34] sm:$0xf]
  %v340 = vld [vmem:[%s7 + $0x38] sm:$0xf]
  %v341 = vld [vmem:[%s7 + $0x3c] sm:$0xf]
  %v342 = vld [vmem:[%s8] sm:$0x1]
  %v344 = vperm.slane %v342, 0
  %v362 = vunpack.c.l.b16 %v326
  %v363 = vunpack.c.l.b16 %v327
  %v364 = vunpack.c.l.b16 %v328
  %v365 = vunpack.c.l.b16 %v329
  %v366 = vunpack.c.l.b16 %v330
  %v367 = vunpack.c.l.b16 %v331
  %v368 = vunpack.c.l.b16 %v332
  %v369 = vunpack.c.l.b16 %v333
  %v370 = vunpack.c.l.b16 %v334
  %v371 = vunpack.c.l.b16 %v335
  %v372 = vunpack.c.l.b16 %v336
  %v373 = vunpack.c.l.b16 %v337
  %v374 = vunpack.c.l.b16 %v338
  %v375 = vunpack.c.l.b16 %v339
  %v376 = vunpack.c.l.b16 %v340
  %v377 = vunpack.c.l.b16 %v341
  %v378 = vpack.c.b16 %v363, %v362
  %v379 = vpack.c.b16 %v365, %v364
  %v380 = vpack.c.b16 %v367, %v366
  %v381 = vpack.c.b16 %v369, %v368
  %v382 = vpack.c.b16 %v371, %v370
  %v383 = vpack.c.b16 %v373, %v372
  %v384 = vpack.c.b16 %v375, %v374
  %v385 = vpack.c.b16 %v377, %v376
  %394 = vmatpush.bf16.msra.mxu0 %v385
  %395 = vmatpush.bf16.msra.mxu0 %v384
  %396 = vmatpush.bf16.msra.mxu0 %v383
  %397 = vmatpush.bf16.msra.mxu0 %v382
  %398 = vmatpush.bf16.msra.mxu0 %v381
  %399 = vmatpush.bf16.msra.mxu0 %v380
  %400 = vmatpush.bf16.msra.mxu0 %v379
  %401 = vmatpush.bf16.msra.mxu0 %v378
  %402 = vmatmul.bf16.gmra.mxu0 %v324
  %v403 = vpop.f32.mrf.mxu0
  %v404 = vadd.f32 %v344, %v403
  %v405 = vpop.f32.mrf.mxu0
  %v406 = vadd.f32 %v344, %v405
  %407 = vmatmul.bf16.gmra.mxu0 %v325
  %v408 = vpop.f32.mrf.mxu0
  %v409 = vadd.f32 %v344, %v408
  %v410 = vpop.f32.mrf.mxu0
  %v411 = vadd.f32 %v344, %v410
  %412 = vdwg.mxu0
  %v413 = vld [vmem:[%s9] sm:$0x1]
  %v414 = vld [vmem:[%s10] sm:$0x1]
  %v415 = vld [vmem:[%s11] sm:$0xff]
  %v416 = vld [vmem:[%s11 + $0x8] sm:$0xff]
  %v417 = vld [vmem:[%s11 + $0x10] sm:$0xff]
  %v418 = vld [vmem:[%s11 + $0x18] sm:$0xff]
  %v419 = vld [vmem:[%s11 + $0x20] sm:$0xff]
  %v420 = vld [vmem:[%s11 + $0x28] sm:$0xff]
  %v421 = vld [vmem:[%s11 + $0x30] sm:$0xff]
  %v422 = vld [vmem:[%s11 + $0x38] sm:$0xff]
  %v423 = vld [vmem:[%s11 + $0x40] sm:$0xff]
  %v424 = vld [vmem:[%s11 + $0x48] sm:$0xff]
  %v425 = vld [vmem:[%s11 + $0x50] sm:$0xff]
  %v426 = vld [vmem:[%s11 + $0x58] sm:$0xff]
  %v427 = vld [vmem:[%s11 + $0x60] sm:$0xff]
  %v428 = vld [vmem:[%s11 + $0x68] sm:$0xff]
  %v429 = vld [vmem:[%s11 + $0x70] sm:$0xff]
  %v430 = vld [vmem:[%s11 + $0x78] sm:$0xff]
  %431 = vmatpush.msra.mxu0 %v430
  %432 = vmatpush.msra.mxu0 %v429
  %433 = vmatpush.msra.mxu0 %v428
  %434 = vmatpush.msra.mxu0 %v427
  %435 = vmatpush.msra.mxu0 %v426
  %436 = vmatpush.msra.mxu0 %v425
  %437 = vmatpush.msra.mxu0 %v424
  %438 = vmatpush.msra.mxu0 %v423
  %439 = vmatpush.msra.mxu0 %v422
  %440 = vmatpush.msra.mxu0 %v421
  %441 = vmatpush.msra.mxu0 %v420
  %442 = vmatpush.msra.mxu0 %v419
  %443 = vmatpush.msra.mxu0 %v418
  %444 = vmatpush.msra.mxu0 %v417
  %445 = vmatpush.msra.mxu0 %v416
  %446 = vmatpush.msra.mxu0 %v415
  %447 = vmatmul.f32.gmra.mxu0 %v404
  %v448 = vpop.f32.mrf.mxu0
  %v449 = vadd.f32 0.0, %v448
  %450 = vmatmul.f32.gmra.mxu0 %v406
  %v451 = vpop.f32.mrf.mxu0
  %v452 = vadd.f32 0.0, %v451
  %453 = vmatmul.f32.gmra.mxu0 %v409
  %v454 = vpop.f32.mrf.mxu0
  %v455 = vadd.f32 0.0, %v454
  %456 = vmatmul.f32.gmra.mxu0 %v411
  %v457 = vpop.f32.mrf.mxu0
  %v458 = vadd.f32 0.0, %v457
  %459 = vdwg.mxu0
  %v460 = vmul.f32 %v404, %v404
  %v461 = vmul.f32 %v406, %v406
  %v462 = vmul.f32 %v409, %v409
  %v463 = vmul.f32 %v411, %v411
  %464 = vmatpush.msra.mxu0 %v430
  %465 = vmatpush.msra.mxu0 %v429
  %466 = vmatpush.msra.mxu0 %v428
  %467 = vmatpush.msra.mxu0 %v427
  %468 = vmatpush.msra.mxu0 %v426
  %469 = vmatpush.msra.mxu0 %v425
  %470 = vmatpush.msra.mxu0 %v424
  %471 = vmatpush.msra.mxu0 %v423
  %472 = vmatpush.msra.mxu0 %v422
  %473 = vmatpush.msra.mxu0 %v421
  %474 = vmatpush.msra.mxu0 %v420
  %475 = vmatpush.msra.mxu0 %v419
  %476 = vmatpush.msra.mxu0 %v418
  %477 = vmatpush.msra.mxu0 %v417
  %478 = vmatpush.msra.mxu0 %v416
  %479 = vmatpush.msra.mxu0 %v415
  %480 = vmatmul.f32.gmra.mxu0 %v460
  %v481 = vpop.f32.mrf.mxu0
  %v482 = vadd.f32 0.0, %v481
  %483 = vmatmul.f32.gmra.mxu0 %v461
  %v484 = vpop.f32.mrf.mxu0
  %v485 = vadd.f32 0.0, %v484
  %486 = vmatmul.f32.gmra.mxu0 %v462
  %v487 = vpop.f32.mrf.mxu0
  %v488 = vadd.f32 0.0, %v487
  %489 = vmatmul.f32.gmra.mxu0 %v463
  %v490 = vpop.f32.mrf.mxu0
  %v491 = vadd.f32 0.0, %v490
  %492 = vdwg.mxu0
  %v493 = vmul.f32 %v449, %v449
  %v494 = vmul.f32 %v452, %v452
  %v495 = vmul.f32 %v455, %v455
  %v496 = vmul.f32 %v458, %v458
  %v497 = vsub.f32 %v482, %v493
  %v498 = vsub.f32 %v485, %v494
  %v499 = vsub.f32 %v488, %v495
  %v500 = vsub.f32 %v491, %v496
  %v501 = vmax.f32 %v497, 0.0
  %v502 = vmax.f32 %v498, 0.0
  %v503 = vmax.f32 %v499, 0.0
  %v504 = vmax.f32 %v500, 0.0
  %v505 = vsub.f32 %v404, %v449
  %v506 = vsub.f32 %v406, %v452
  %v507 = vsub.f32 %v409, %v455
  %v508 = vsub.f32 %v411, %v458
  %v509 = vadd.f32 %v501, 1e-05
  %v510 = vadd.f32 %v502, 1e-05
  %v511 = vadd.f32 %v503, 1e-05
  %v512 = vadd.f32 %v504, 1e-05
  %v513 = vrsqrt.pop %v509
  %v514 = vmul.f32 %v513, %v509
  %v515 = vmul.f32 %v514, %v513
  %v516 = vmul.f32 0.5, %v515
  %v517 = vsub.f32 1.5, %v516
  %v518 = vmul.f32 %v513, %v517
  %vm519 = vweird.f32 %v509
  %vm520 = vweird.f32 %v513
  %vm521 = vmor %vm519, %vm520
  %v522 = vsel %vm521, %v513, %v518
  %v523 = vrsqrt.pop %v510
  %v524 = vmul.f32 %v523, %v510
  %v525 = vmul.f32 %v524, %v523
  %v526 = vmul.f32 0.5, %v525
  %v527 = vsub.f32 1.5, %v526
  %v528 = vmul.f32 %v523, %v527
  %vm529 = vweird.f32 %v510
  %vm530 = vweird.f32 %v523
  %vm531 = vmor %vm529, %vm530
  %v532 = vsel %vm531, %v523, %v528
  %v533 = vrsqrt.pop %v511
  %v534 = vmul.f32 %v533, %v511
  %v535 = vmul.f32 %v534, %v533
  %v536 = vmul.f32 0.5, %v535
  %v537 = vsub.f32 1.5, %v536
  %v538 = vmul.f32 %v533, %v537
  %vm539 = vweird.f32 %v511
  %vm540 = vweird.f32 %v533
  %vm541 = vmor %vm539, %vm540
  %v542 = vsel %vm541, %v533, %v538
  %v543 = vrsqrt.pop %v512
  %v544 = vmul.f32 %v543, %v512
  %v545 = vmul.f32 %v544, %v543
  %v546 = vmul.f32 0.5, %v545
  %v547 = vsub.f32 1.5, %v546
  %v548 = vmul.f32 %v543, %v547
  %vm549 = vweird.f32 %v512
  %vm550 = vweird.f32 %v543
  %vm551 = vmor %vm549, %vm550
  %v552 = vsel %vm551, %v543, %v548
  %v553 = vmul.f32 %v505, %v522
  %v554 = vmul.f32 %v506, %v532
  %v555 = vmul.f32 %v507, %v542
  %v556 = vmul.f32 %v508, %v552
  %v558 = vperm.slane %v413, 0
  %v560 = vmul.f32 %v553, %v558
  %v561 = vmul.f32 %v554, %v558
  %v562 = vmul.f32 %v555, %v558
  %v563 = vmul.f32 %v556, %v558
  %v565 = vperm.slane %v414, 0
  %v567 = vadd.f32 %v560, %v565
  %v568 = vadd.f32 %v561, %v565
  %v569 = vadd.f32 %v562, %v565
  %v570 = vadd.f32 %v563, %v565
  %v571 = vadd.f32 %v41, %v567
  %v572 = vadd.f32 %v42, %v568
  %v573 = vadd.f32 %v43, %v569
  %v574 = vadd.f32 %v44, %v570
  %575 = vst [vmem:[%s12] sm:$0xff] %v571
  %576 = vst [vmem:[%s12 + $0x8] sm:$0xff] %v572
  %577 = vst [vmem:[%s12 + $0x10] sm:$0xff] %v573
  %578 = vst [vmem:[%s12 + $0x18] sm:$0xff] %v574
  // Predicated region
  $region50: #{_forward.14} parent=0 // pred_check
    _
  $region51: #{_forward.14} parent=0 // pred_check_branch
    %580 = sbr.rel (0) target = $region53
  $region52: #{_forward.14} parent=0 // pred_region
    _
  $region53: #{_forward.14} parent=0 // pred_fallthru
    _
  // Predicated region
  $region54: #{_forward.14} parent=0 // pred_check
    _
  $region55: #{_forward.14} parent=0 // pred_check_branch
    %582 = sbr.rel (0) target = $region57
  $region56: #{_forward.14} parent=0 // pred_region
    _
  $region57: #{_forward.14} parent=0 // pred_fallthru
    _

// kernel: _forward.16
$region0: #{_forward.16}
  #allocation0 [shape = 'u32[]', space=smem, size = 0x4, offset = 0x4, fixed_abs, tag = 'smem constant byte address 0x4 - core index']
  #allocation1 [shape = 'u32[72,128]{1,0:T(1,128)}', space=vmem, size = 0x9000, scoped, tag = 'internal scratch']
  %s0 = inlined_call_operand.vmem [shape: f32[16,128], index: 0, kind: input, shape index: {}]
  %s1 = inlined_call_operand.vmem [shape: f32[16,128], index: 1, kind: input, shape index: {}]
  %s2 = inlined_call_operand.vmem [shape: bf16[128,128], index: 2, kind: input, shape index: {}]
  %s3 = inlined_call_operand.vmem [shape: bf16[128,128], index: 3, kind: input, shape index: {}]
  %s4 = inlined_call_operand.vmem [shape: f32[1,128], index: 4, kind: input, shape index: {}, may-alias: {4,6,8,10}]
  %s5 = inlined_call_operand.vmem [shape: bf16[128,128], index: 5, kind: input, shape index: {}]
  %s6 = inlined_call_operand.vmem [shape: f32[1,128], index: 6, kind: input, shape index: {}, may-alias: {4,6,8,10}]
  %s7 = inlined_call_operand.vmem [shape: bf16[128,128], index: 7, kind: input, shape index: {}]
  %s8 = inlined_call_operand.vmem [shape: f32[1,128], index: 8, kind: input, shape index: {}, may-alias: {4,6,8,10}]
  %s9 = inlined_call_operand.vmem [shape: f32[1,128], index: 9, kind: input, shape index: {}]
  %s10 = inlined_call_operand.vmem [shape: f32[1,128], index: 10, kind: input, shape index: {}, may-alias: {4,6,8,10}]
  %s11 = inlined_call_operand.vmem [shape: f32[128,128], index: 11, kind: input, shape index: {}]
  %s12 = inlined_call_operand.vmem [shape: f32[16,128], index: 12, kind: output, shape index: {}]
  %s13 = sld [smem:[#allocation0]]
  $region58: #{_forward.16} parent=0
    _
  %s15 = ssub.s32 1, %s13
  %s16 = scalar_select 0, %s15, %s13
  // Predicated region
  $region2: #{_forward.16} parent=0 // pred_check
    _
  $region3: #{_forward.16} parent=0 // pred_check_branch
    %18 = sbr.rel (0) target = $region5
  $region4: #{_forward.16} parent=0 // pred_region
    _
  $region5: #{_forward.16} parent=0 // pred_fallthru
    _
  // Predicated region
  $region6: #{_forward.16} parent=0 // pred_check
    _
  $region7: #{_forward.16} parent=0 // pred_check_branch
    %20 = sbr.rel (0) target = $region9
  $region8: #{_forward.16} parent=0 // pred_region
    _
  $region9: #{_forward.16} parent=0 // pred_fallthru
    _
  // Predicated region
  $region10: #{_forward.16} parent=0 // pred_check
    _
  $region11: #{_forward.16} parent=0 // pred_check_branch
    %22 = sbr.rel (0) target = $region13
  $region12: #{_forward.16} parent=0 // pred_region
    _
  $region13: #{_forward.16} parent=0 // pred_fallthru
    _
  // Predicated region
  $region14: #{_forward.16} parent=0 // pred_check
    _
  $region15: #{_forward.16} parent=0 // pred_check_branch
    %24 = sbr.rel (0) target = $region17
  $region16: #{_forward.16} parent=0 // pred_region
    _
  $region17: #{_forward.16} parent=0 // pred_fallthru
    _
  // Predicated region
  $region18: #{_forward.16} parent=0 // pred_check
    _
  $region19: #{_forward.16} parent=0 // pred_check_branch
    %26 = sbr.rel (0) target = $region21
  $region20: #{_forward.16} parent=0 // pred_region
    _
  $region21: #{_forward.16} parent=0 // pred_fallthru
    _
  // Predicated region
  $region22: #{_forward.16} parent=0 // pred_check
    _
  $region23: #{_forward.16} parent=0 // pred_check_branch
    %28 = sbr.rel (0) target = $region25
  $region24: #{_forward.16} parent=0 // pred_region
    _
  $region25: #{_forward.16} parent=0 // pred_fallthru
    _
  // Predicated region
  $region26: #{_forward.16} parent=0 // pred_check
    _
  $region27: #{_forward.16} parent=0 // pred_check_branch
    %30 = sbr.rel (0) target = $region29
  $region28: #{_forward.16} parent=0 // pred_region
    _
  $region29: #{_forward.16} parent=0 // pred_fallthru
    _
  // Predicated region
  $region30: #{_forward.16} parent=0 // pred_check
    _
  $region31: #{_forward.16} parent=0 // pred_check_branch
    %32 = sbr.rel (0) target = $region33
  $region32: #{_forward.16} parent=0 // pred_region
    _
  $region33: #{_forward.16} parent=0 // pred_fallthru
    _
  // Predicated region
  $region34: #{_forward.16} parent=0 // pred_check
    _
  $region35: #{_forward.16} parent=0 // pred_check_branch
    %34 = sbr.rel (0) target = $region37
  $region36: #{_forward.16} parent=0 // pred_region
    _
  $region37: #{_forward.16} parent=0 // pred_fallthru
    _
  // Predicated region
  $region38: #{_forward.16} parent=0 // pred_check
    _
  $region39: #{_forward.16} parent=0 // pred_check_branch
    %36 = sbr.rel (0) target = $region41
  $region40: #{_forward.16} parent=0 // pred_region
    _
  $region41: #{_forward.16} parent=0 // pred_fallthru
    _
  // Predicated region
  $region42: #{_forward.16} parent=0 // pred_check
    _
  $region43: #{_forward.16} parent=0 // pred_check_branch
    %38 = sbr.rel (0) target = $region45
  $region44: #{_forward.16} parent=0 // pred_region
    _
  $region45: #{_forward.16} parent=0 // pred_fallthru
    _
  // Predicated region
  $region46: #{_forward.16} parent=0 // pred_check
    _
  $region47: #{_forward.16} parent=0 // pred_check_branch
    %40 = sbr.rel (0) target = $region49
  $region48: #{_forward.16} parent=0 // pred_region
    _
  $region49: #{_forward.16} parent=0 // pred_fallthru
    _
  %v41 = vld [vmem:[%s0] sm:$0xff]
  %v42 = vld [vmem:[%s0 + $0x8] sm:$0xff]
  %v43 = vpack.c.bf16 %v42, %v41
  %v44 = vld [vmem:[%s2] sm:$0xf]
  %v45 = vld [vmem:[%s2 + $0x4] sm:$0xf]
  %v46 = vld [vmem:[%s2 + $0x8] sm:$0xf]
  %v47 = vld [vmem:[%s2 + $0xc] sm:$0xf]
  %v48 = vld [vmem:[%s2 + $0x10] sm:$0xf]
  %v49 = vld [vmem:[%s2 + $0x14] sm:$0xf]
  %v50 = vld [vmem:[%s2 + $0x18] sm:$0xf]
  %v51 = vld [vmem:[%s2 + $0x1c] sm:$0xf]
  %v52 = vld [vmem:[%s2 + $0x20] sm:$0xf]
  %v53 = vld [vmem:[%s2 + $0x24] sm:$0xf]
  %v54 = vld [vmem:[%s2 + $0x28] sm:$0xf]
  %v55 = vld [vmem:[%s2 + $0x2c] sm:$0xf]
  %v56 = vld [vmem:[%s2 + $0x30] sm:$0xf]
  %v57 = vld [vmem:[%s2 + $0x34] sm:$0xf]
  %v58 = vld [vmem:[%s2 + $0x38] sm:$0xf]
  %v59 = vld [vmem:[%s2 + $0x3c] sm:$0xf]
  %v60 = vld [vmem:[%s1] sm:$0xff]
  %v61 = vld [vmem:[%s1 + $0x8] sm:$0xff]
  %v62 = vpack.c.bf16 %v61, %v60
  %v63 = vld [vmem:[%s3] sm:$0xf]
  %v64 = vld [vmem:[%s3 + $0x4] sm:$0xf]
  %v65 = vld [vmem:[%s3 + $0x8] sm:$0xf]
  %v66 = vld [vmem:[%s3 + $0xc] sm:$0xf]
  %v67 = vld [vmem:[%s3 + $0x10] sm:$0xf]
  %v68 = vld [vmem:[%s3 + $0x14] sm:$0xf]
  %v69 = vld [vmem:[%s3 + $0x18] sm:$0xf]
  %v70 = vld [vmem:[%s3 + $0x1c] sm:$0xf]
  %v71 = vld [vmem:[%s3 + $0x20] sm:$0xf]
  %v72 = vld [vmem:[%s3 + $0x24] sm:$0xf]
  %v73 = vld [vmem:[%s3 + $0x28] sm:$0xf]
  %v74 = vld [vmem:[%s3 + $0x2c] sm:$0xf]
  %v75 = vld [vmem:[%s3 + $0x30] sm:$0xf]
  %v76 = vld [vmem:[%s3 + $0x34] sm:$0xf]
  %v77 = vld [vmem:[%s3 + $0x38] sm:$0xf]
  %v78 = vld [vmem:[%s3 + $0x3c] sm:$0xf]
  %v95 = vunpack.c.l.b16 %v63
  %v96 = vunpack.c.l.b16 %v64
  %v97 = vunpack.c.l.b16 %v65
  %v98 = vunpack.c.l.b16 %v66
  %v99 = vunpack.c.l.b16 %v67
  %v100 = vunpack.c.l.b16 %v68
  %v101 = vunpack.c.l.b16 %v69
  %v102 = vunpack.c.l.b16 %v70
  %v103 = vunpack.c.l.b16 %v71
  %v104 = vunpack.c.l.b16 %v72
  %v105 = vunpack.c.l.b16 %v73
  %v106 = vunpack.c.l.b16 %v74
  %v107 = vunpack.c.l.b16 %v75
  %v108 = vunpack.c.l.b16 %v76
  %v109 = vunpack.c.l.b16 %v77
  %v110 = vunpack.c.l.b16 %v78
  %v111 = vpack.c.b16 %v96, %v95
  %v112 = vpack.c.b16 %v98, %v97
  %v113 = vpack.c.b16 %v100, %v99
  %v114 = vpack.c.b16 %v102, %v101
  %v115 = vpack.c.b16 %v104, %v103
  %v116 = vpack.c.b16 %v106, %v105
  %v117 = vpack.c.b16 %v108, %v107
  %v118 = vpack.c.b16 %v110, %v109
  %127 = vmatpush.bf16.msra.mxu0 %v118
  %128 = vmatpush.bf16.msra.mxu0 %v117
  %129 = vmatpush.bf16.msra.mxu0 %v116
  %130 = vmatpush.bf16.msra.mxu0 %v115
  %131 = vmatpush.bf16.msra.mxu0 %v114
  %132 = vmatpush.bf16.msra.mxu0 %v113
  %133 = vmatpush.bf16.msra.mxu0 %v112
  %134 = vmatpush.bf16.msra.mxu0 %v111
  %135 = vmatmul.bf16.gmra.mxu0 %v62
  %v136 = vpop.f32.mrf.mxu0
  %v137 = vadd.f32 0.0, %v136
  %v138 = vpop.f32.mrf.mxu0
  %v139 = vadd.f32 0.0, %v138
  %140 = vdwg.mxu0
  %v157 = vunpack.c.l.b16 %v44
  %v158 = vunpack.c.l.b16 %v45
  %v159 = vunpack.c.l.b16 %v46
  %v160 = vunpack.c.l.b16 %v47
  %v161 = vunpack.c.l.b16 %v48
  %v162 = vunpack.c.l.b16 %v49
  %v163 = vunpack.c.l.b16 %v50
  %v164 = vunpack.c.l.b16 %v51
  %v165 = vunpack.c.l.b16 %v52
  %v166 = vunpack.c.l.b16 %v53
  %v167 = vunpack.c.l.b16 %v54
  %v168 = vunpack.c.l.b16 %v55
  %v169 = vunpack.c.l.b16 %v56
  %v170 = vunpack.c.l.b16 %v57
  %v171 = vunpack.c.l.b16 %v58
  %v172 = vunpack.c.l.b16 %v59
  %v173 = vpack.c.b16 %v158, %v157
  %v174 = vpack.c.b16 %v160, %v159
  %v175 = vpack.c.b16 %v162, %v161
  %v176 = vpack.c.b16 %v164, %v163
  %v177 = vpack.c.b16 %v166, %v165
  %v178 = vpack.c.b16 %v168, %v167
  %v179 = vpack.c.b16 %v170, %v169
  %v180 = vpack.c.b16 %v172, %v171
  %189 = vmatpush.bf16.msra.mxu0 %v180
  %190 = vmatpush.bf16.msra.mxu0 %v179
  %191 = vmatpush.bf16.msra.mxu0 %v178
  %192 = vmatpush.bf16.msra.mxu0 %v177
  %193 = vmatpush.bf16.msra.mxu0 %v176
  %194 = vmatpush.bf16.msra.mxu0 %v175
  %195 = vmatpush.bf16.msra.mxu0 %v174
  %196 = vmatpush.bf16.msra.mxu0 %v173
  %197 = vmatmul.bf16.gmra.mxu0 %v43
  %v198 = vpop.f32.mrf.mxu0
  %v199 = vadd.f32 %v137, %v198
  %v200 = vpop.f32.mrf.mxu0
  %v201 = vadd.f32 %v139, %v200
  %202 = vdwg.mxu0
  %v203 = vld [vmem:[%s4] sm:$0x1]
  %v205 = vperm.slane %v203, 0
  %v207 = vadd.f32 %v199, %v205
  %v208 = vadd.f32 %v201, %v205
  %v209 = vmax.f32 %v207, 0.0
  %v210 = vmax.f32 %v208, 0.0
  %v211 = vpack.c.bf16 %v210, %v209
  %v212 = vld [vmem:[%s5] sm:$0xf]
  %v213 = vld [vmem:[%s5 + $0x4] sm:$0xf]
  %v214 = vld [vmem:[%s5 + $0x8] sm:$0xf]
  %v215 = vld [vmem:[%s5 + $0xc] sm:$0xf]
  %v216 = vld [vmem:[%s5 + $0x10] sm:$0xf]
  %v217 = vld [vmem:[%s5 + $0x14] sm:$0xf]
  %v218 = vld [vmem:[%s5 + $0x18] sm:$0xf]
  %v219 = vld [vmem:[%s5 + $0x1c] sm:$0xf]
  %v220 = vld [vmem:[%s5 + $0x20] sm:$0xf]
  %v221 = vld [vmem:[%s5 + $0x24] sm:$0xf]
  %v222 = vld [vmem:[%s5 + $0x28] sm:$0xf]
  %v223 = vld [vmem:[%s5 + $0x2c] sm:$0xf]
  %v224 = vld [vmem:[%s5 + $0x30] sm:$0xf]
  %v225 = vld [vmem:[%s5 + $0x34] sm:$0xf]
  %v226 = vld [vmem:[%s5 + $0x38] sm:$0xf]
  %v227 = vld [vmem:[%s5 + $0x3c] sm:$0xf]
  %v228 = vld [vmem:[%s6] sm:$0x1]
  %v230 = vperm.slane %v228, 0
  %v248 = vunpack.c.l.b16 %v212
  %v249 = vunpack.c.l.b16 %v213
  %v250 = vunpack.c.l.b16 %v214
  %v251 = vunpack.c.l.b16 %v215
  %v252 = vunpack.c.l.b16 %v216
  %v253 = vunpack.c.l.b16 %v217
  %v254 = vunpack.c.l.b16 %v218
  %v255 = vunpack.c.l.b16 %v219
  %v256 = vunpack.c.l.b16 %v220
  %v257 = vunpack.c.l.b16 %v221
  %v258 = vunpack.c.l.b16 %v222
  %v259 = vunpack.c.l.b16 %v223
  %v260 = vunpack.c.l.b16 %v224
  %v261 = vunpack.c.l.b16 %v225
  %v262 = vunpack.c.l.b16 %v226
  %v263 = vunpack.c.l.b16 %v227
  %v264 = vpack.c.b16 %v249, %v248
  %v265 = vpack.c.b16 %v251, %v250
  %v266 = vpack.c.b16 %v253, %v252
  %v267 = vpack.c.b16 %v255, %v254
  %v268 = vpack.c.b16 %v257, %v256
  %v269 = vpack.c.b16 %v259, %v258
  %v270 = vpack.c.b16 %v261, %v260
  %v271 = vpack.c.b16 %v263, %v262
  %280 = vmatpush.bf16.msra.mxu0 %v271
  %281 = vmatpush.bf16.msra.mxu0 %v270
  %282 = vmatpush.bf16.msra.mxu0 %v269
  %283 = vmatpush.bf16.msra.mxu0 %v268
  %284 = vmatpush.bf16.msra.mxu0 %v267
  %285 = vmatpush.bf16.msra.mxu0 %v266
  %286 = vmatpush.bf16.msra.mxu0 %v265
  %287 = vmatpush.bf16.msra.mxu0 %v264
  %288 = vmatmul.bf16.gmra.mxu0 %v211
  %v289 = vpop.f32.mrf.mxu0
  %v290 = vadd.f32 %v230, %v289
  %v291 = vpop.f32.mrf.mxu0
  %v292 = vadd.f32 %v230, %v291
  %293 = vdwg.mxu0
  %v294 = vmax.f32 %v290, 0.0
  %v295 = vmax.f32 %v292, 0.0
  %v296 = vpack.c.bf16 %v295, %v294
  %v297 = vld [vmem:[%s7] sm:$0xf]
  %v298 = vld [vmem:[%s7 + $0x4] sm:$0xf]
  %v299 = vld [vmem:[%s7 + $0x8] sm:$0xf]
  %v300 = vld [vmem:[%s7 + $0xc] sm:$0xf]
  %v301 = vld [vmem:[%s7 + $0x10] sm:$0xf]
  %v302 = vld [vmem:[%s7 + $0x14] sm:$0xf]
  %v303 = vld [vmem:[%s7 + $0x18] sm:$0xf]
  %v304 = vld [vmem:[%s7 + $0x1c] sm:$0xf]
  %v305 = vld [vmem:[%s7 + $0x20] sm:$0xf]
  %v306 = vld [vmem:[%s7 + $0x24] sm:$0xf]
  %v307 = vld [vmem:[%s7 + $0x28] sm:$0xf]
  %v308 = vld [vmem:[%s7 + $0x2c] sm:$0xf]
  %v309 = vld [vmem:[%s7 + $0x30] sm:$0xf]
  %v310 = vld [vmem:[%s7 + $0x34] sm:$0xf]
  %v311 = vld [vmem:[%s7 + $0x38] sm:$0xf]
  %v312 = vld [vmem:[%s7 + $0x3c] sm:$0xf]
  %v313 = vld [vmem:[%s8] sm:$0x1]
  %v315 = vperm.slane %v313, 0
  %v333 = vunpack.c.l.b16 %v297
  %v334 = vunpack.c.l.b16 %v298
  %v335 = vunpack.c.l.b16 %v299
  %v336 = vunpack.c.l.b16 %v300
  %v337 = vunpack.c.l.b16 %v301
  %v338 = vunpack.c.l.b16 %v302
  %v339 = vunpack.c.l.b16 %v303
  %v340 = vunpack.c.l.b16 %v304
  %v341 = vunpack.c.l.b16 %v305
  %v342 = vunpack.c.l.b16 %v306
  %v343 = vunpack.c.l.b16 %v307
  %v344 = vunpack.c.l.b16 %v308
  %v345 = vunpack.c.l.b16 %v309
  %v346 = vunpack.c.l.b16 %v310
  %v347 = vunpack.c.l.b16 %v311
  %v348 = vunpack.c.l.b16 %v312
  %v349 = vpack.c.b16 %v334, %v333
  %v350 = vpack.c.b16 %v336, %v335
  %v351 = vpack.c.b16 %v338, %v337
  %v352 = vpack.c.b16 %v340, %v339
  %v353 = vpack.c.b16 %v342, %v341
  %v354 = vpack.c.b16 %v344, %v343
  %v355 = vpack.c.b16 %v346, %v345
  %v356 = vpack.c.b16 %v348, %v347
  %365 = vmatpush.bf16.msra.mxu0 %v356
  %366 = vmatpush.bf16.msra.mxu0 %v355
  %367 = vmatpush.bf16.msra.mxu0 %v354
  %368 = vmatpush.bf16.msra.mxu0 %v353
  %369 = vmatpush.bf16.msra.mxu0 %v352
  %370 = vmatpush.bf16.msra.mxu0 %v351
  %371 = vmatpush.bf16.msra.mxu0 %v350
  %372 = vmatpush.bf16.msra.mxu0 %v349
  %373 = vmatmul.bf16.gmra.mxu0 %v296
  %v374 = vpop.f32.mrf.mxu0
  %v375 = vadd.f32 %v315, %v374
  %v376 = vpop.f32.mrf.mxu0
  %v377 = vadd.f32 %v315, %v376
  %378 = vdwg.mxu0
  %v379 = vld [vmem:[%s9] sm:$0x1]
  %v380 = vld [vmem:[%s10] sm:$0x1]
  %v381 = vld [vmem:[%s11] sm:$0xff]
  %v382 = vld [vmem:[%s11 + $0x8] sm:$0xff]
  %v383 = vld [vmem:[%s11 + $0x10] sm:$0xff]
  %v384 = vld [vmem:[%s11 + $0x18] sm:$0xff]
  %v385 = vld [vmem:[%s11 + $0x20] sm:$0xff]
  %v386 = vld [vmem:[%s11 + $0x28] sm:$0xff]
  %v387 = vld [vmem:[%s11 + $0x30] sm:$0xff]
  %v388 = vld [vmem:[%s11 + $0x38] sm:$0xff]
  %v389 = vld [vmem:[%s11 + $0x40] sm:$0xff]
  %v390 = vld [vmem:[%s11 + $0x48] sm:$0xff]
  %v391 = vld [vmem:[%s11 + $0x50] sm:$0xff]
  %v392 = vld [vmem:[%s11 + $0x58] sm:$0xff]
  %v393 = vld [vmem:[%s11 + $0x60] sm:$0xff]
  %v394 = vld [vmem:[%s11 + $0x68] sm:$0xff]
  %v395 = vld [vmem:[%s11 + $0x70] sm:$0xff]
  %v396 = vld [vmem:[%s11 + $0x78] sm:$0xff]
  %397 = vmatpush.msra.mxu0 %v396
  %398 = vmatpush.msra.mxu0 %v395
  %399 = vmatpush.msra.mxu0 %v394
  %400 = vmatpush.msra.mxu0 %v393
  %401 = vmatpush.msra.mxu0 %v392
  %402 = vmatpush.msra.mxu0 %v391
  %403 = vmatpush.msra.mxu0 %v390
  %404 = vmatpush.msra.mxu0 %v389
  %405 = vmatpush.msra.mxu0 %v388
  %406 = vmatpush.msra.mxu0 %v387
  %407 = vmatpush.msra.mxu0 %v386
  %408 = vmatpush.msra.mxu0 %v385
  %409 = vmatpush.msra.mxu0 %v384
  %410 = vmatpush.msra.mxu0 %v383
  %411 = vmatpush.msra.mxu0 %v382
  %412 = vmatpush.msra.mxu0 %v381
  %413 = vmatmul.f32.gmra.mxu0 %v375
  %v414 = vpop.f32.mrf.mxu0
  %v415 = vadd.f32 0.0, %v414
  %416 = vmatmul.f32.gmra.mxu0 %v377
  %v417 = vpop.f32.mrf.mxu0
  %v418 = vadd.f32 0.0, %v417
  %419 = vdwg.mxu0
  %v420 = vmul.f32 %v375, %v375
  %v421 = vmul.f32 %v377, %v377
  %422 = vmatpush.msra.mxu0 %v396
  %423 = vmatpush.msra.mxu0 %v395
  %424 = vmatpush.msra.mxu0 %v394
  %425 = vmatpush.msra.mxu0 %v393
  %426 = vmatpush.msra.mxu0 %v392
  %427 = vmatpush.msra.mxu0 %v391
  %428 = vmatpush.msra.mxu0 %v390
  %429 = vmatpush.msra.mxu0 %v389
  %430 = vmatpush.msra.mxu0 %v388
  %431 = vmatpush.msra.mxu0 %v387
  %432 = vmatpush.msra.mxu0 %v386
  %433 = vmatpush.msra.mxu0 %v385
  %434 = vmatpush.msra.mxu0 %v384
  %435 = vmatpush.msra.mxu0 %v383
  %436 = vmatpush.msra.mxu0 %v382
  %437 = vmatpush.msra.mxu0 %v381
  %438 = vmatmul.f32.gmra.mxu0 %v420
  %v439 = vpop.f32.mrf.mxu0
  %v440 = vadd.f32 0.0, %v439
  %441 = vmatmul.f32.gmra.mxu0 %v421
  %v442 = vpop.f32.mrf.mxu0
  %v443 = vadd.f32 0.0, %v442
  %444 = vdwg.mxu0
  %v445 = vmul.f32 %v415, %v415
  %v446 = vmul.f32 %v418, %v418
  %v447 = vsub.f32 %v440, %v445
  %v448 = vsub.f32 %v443, %v446
  %v449 = vmax.f32 %v447, 0.0
  %v450 = vmax.f32 %v448, 0.0
  %v451 = vsub.f32 %v375, %v415
  %v452 = vsub.f32 %v377, %v418
  %v453 = vadd.f32 %v449, 1e-05
  %v454 = vadd.f32 %v450, 1e-05
  %v455 = vrsqrt.pop %v453
  %v456 = vmul.f32 %v455, %v453
  %v457 = vmul.f32 %v456, %v455
  %v458 = vmul.f32 0.5, %v457
  %v459 = vsub.f32 1.5, %v458
  %v460 = vmul.f32 %v455, %v459
  %vm461 = vweird.f32 %v453
  %vm462 = vweird.f32 %v455
  %vm463 = vmor %vm461, %vm462
  %v464 = vsel %vm463, %v455, %v460
  %v465 = vrsqrt.pop %v454
  %v466 = vmul.f32 %v465, %v454
  %v467 = vmul.f32 %v466, %v465
  %v468 = vmul.f32 0.5, %v467
  %v469 = vsub.f32 1.5, %v468
  %v470 = vmul.f32 %v465, %v469
  %vm471 = vweird.f32 %v454
  %vm472 = vweird.f32 %v465
  %vm473 = vmor %vm471, %vm472
  %v474 = vsel %vm473, %v465, %v470
  %v475 = vmul.f32 %v451, %v464
  %v476 = vmul.f32 %v452, %v474
  %v478 = vperm.slane %v379, 0
  %v480 = vmul.f32 %v475, %v478
  %v481 = vmul.f32 %v476, %v478
  %v483 = vperm.slane %v380, 0
  %v485 = vadd.f32 %v480, %v483
  %v486 = vadd.f32 %v481, %v483
  %v487 = vadd.f32 %v41, %v485
  %v488 = vadd.f32 %v42, %v486
  %489 = vst [vmem:[%s12] sm:$0xff] %v487
  %490 = vst [vmem:[%s12 + $0x8] sm:$0xff] %v488
  // Predicated region
  $region50: #{_forward.16} parent=0 // pred_check
    _
  $region51: #{_forward.16} parent=0 // pred_check_branch
    %492 = sbr.rel (0) target = $region53
  $region52: #{_forward.16} parent=0 // pred_region
    _
  $region53: #{_forward.16} parent=0 // pred_fallthru
    _
  // Predicated region
  $region54: #{_forward.16} parent=0 // pred_check
    _
  $region55: #{_forward.16} parent=0 // pred_check_branch
    %494 = sbr.rel (0) target = $region57
  $region56: #{_forward.16} parent=0 // pred_region
    _
  $region57: #{_forward.16} parent=0 // pred_fallthru
    _

// kernel: _forward.15
$region0: #{_forward.15}
  #allocation0 [shape = 'u32[]', space=smem, size = 0x4, offset = 0x4, fixed_abs, tag = 'smem constant byte address 0x4 - core index']
  #allocation1 [shape = 'u32[72,128]{1,0:T(1,128)}', space=vmem, size = 0x9000, scoped, tag = 'internal scratch']
  %s0 = inlined_call_operand.vmem [shape: f32[32,128], index: 0, kind: input, shape index: {}]
  %s1 = inlined_call_operand.vmem [shape: f32[32,128], index: 1, kind: input, shape index: {}]
  %s2 = inlined_call_operand.vmem [shape: f32[32,8], index: 2, kind: input, shape index: {}]
  %s3 = inlined_call_operand.vmem [shape: f32[32,8], index: 3, kind: input, shape index: {}]
  %s4 = inlined_call_operand.vmem [shape: bf16[128,128], index: 4, kind: input, shape index: {}]
  %s5 = inlined_call_operand.vmem [shape: bf16[128,128], index: 5, kind: input, shape index: {}]
  %s6 = inlined_call_operand.vmem [shape: f32[8,128], index: 6, kind: input, shape index: {}]
  %s7 = inlined_call_operand.vmem [shape: f32[8,128], index: 7, kind: input, shape index: {}]
  %s8 = inlined_call_operand.vmem [shape: f32[1,128], index: 8, kind: input, shape index: {}]
  %s9 = inlined_call_operand.vmem [shape: f32[1,128], index: 9, kind: input, shape index: {}, may-alias: {9,11,13,15}]
  %s10 = inlined_call_operand.vmem [shape: bf16[128,128], index: 10, kind: input, shape index: {}]
  %s11 = inlined_call_operand.vmem [shape: f32[1,128], index: 11, kind: input, shape index: {}, may-alias: {9,11,13,15}]
  %s12 = inlined_call_operand.vmem [shape: bf16[128,128], index: 12, kind: input, shape index: {}]
  %s13 = inlined_call_operand.vmem [shape: f32[1,128], index: 13, kind: input, shape index: {}, may-alias: {9,11,13,15}]
  %s14 = inlined_call_operand.vmem [shape: f32[1,128], index: 14, kind: input, shape index: {}]
  %s15 = inlined_call_operand.vmem [shape: f32[1,128], index: 15, kind: input, shape index: {}, may-alias: {9,11,13,15}]
  %s16 = inlined_call_operand.vmem [shape: f32[128,128], index: 16, kind: input, shape index: {}]
  %s17 = inlined_call_operand.vmem [shape: f32[32,128], index: 17, kind: output, shape index: {}]
  %s18 = sld [smem:[#allocation0]]
  $region78: #{_forward.15} parent=0
    _
  %s20 = ssub.s32 1, %s18
  %s21 = scalar_select 0, %s20, %s18
  // Predicated region
  $region2: #{_forward.15} parent=0 // pred_check
    _
  $region3: #{_forward.15} parent=0 // pred_check_branch
    %23 = sbr.rel (0) target = $region5
  $region4: #{_forward.15} parent=0 // pred_region
    _
  $region5: #{_forward.15} parent=0 // pred_fallthru
    _
  // Predicated region
  $region6: #{_forward.15} parent=0 // pred_check
    _
  $region7: #{_forward.15} parent=0 // pred_check_branch
    %25 = sbr.rel (0) target = $region9
  $region8: #{_forward.15} parent=0 // pred_region
    _
  $region9: #{_forward.15} parent=0 // pred_fallthru
    _
  // Predicated region
  $region10: #{_forward.15} parent=0 // pred_check
    _
  $region11: #{_forward.15} parent=0 // pred_check_branch
    %27 = sbr.rel (0) target = $region13
  $region12: #{_forward.15} parent=0 // pred_region
    _
  $region13: #{_forward.15} parent=0 // pred_fallthru
    _
  // Predicated region
  $region14: #{_forward.15} parent=0 // pred_check
    _
  $region15: #{_forward.15} parent=0 // pred_check_branch
    %29 = sbr.rel (0) target = $region17
  $region16: #{_forward.15} parent=0 // pred_region
    _
  $region17: #{_forward.15} parent=0 // pred_fallthru
    _
  // Predicated region
  $region18: #{_forward.15} parent=0 // pred_check
    _
  $region19: #{_forward.15} parent=0 // pred_check_branch
    %31 = sbr.rel (0) target = $region21
  $region20: #{_forward.15} parent=0 // pred_region
    _
  $region21: #{_forward.15} parent=0 // pred_fallthru
    _
  // Predicated region
  $region22: #{_forward.15} parent=0 // pred_check
    _
  $region23: #{_forward.15} parent=0 // pred_check_branch
    %33 = sbr.rel (0) target = $region25
  $region24: #{_forward.15} parent=0 // pred_region
    _
  $region25: #{_forward.15} parent=0 // pred_fallthru
    _
  // Predicated region
  $region26: #{_forward.15} parent=0 // pred_check
    _
  $region27: #{_forward.15} parent=0 // pred_check_branch
    %35 = sbr.rel (0) target = $region29
  $region28: #{_forward.15} parent=0 // pred_region
    _
  $region29: #{_forward.15} parent=0 // pred_fallthru
    _
  // Predicated region
  $region30: #{_forward.15} parent=0 // pred_check
    _
  $region31: #{_forward.15} parent=0 // pred_check_branch
    %37 = sbr.rel (0) target = $region33
  $region32: #{_forward.15} parent=0 // pred_region
    _
  $region33: #{_forward.15} parent=0 // pred_fallthru
    _
  // Predicated region
  $region34: #{_forward.15} parent=0 // pred_check
    _
  $region35: #{_forward.15} parent=0 // pred_check_branch
    %39 = sbr.rel (0) target = $region37
  $region36: #{_forward.15} parent=0 // pred_region
    _
  $region37: #{_forward.15} parent=0 // pred_fallthru
    _
  // Predicated region
  $region38: #{_forward.15} parent=0 // pred_check
    _
  $region39: #{_forward.15} parent=0 // pred_check_branch
    %41 = sbr.rel (0) target = $region41
  $region40: #{_forward.15} parent=0 // pred_region
    _
  $region41: #{_forward.15} parent=0 // pred_fallthru
    _
  // Predicated region
  $region42: #{_forward.15} parent=0 // pred_check
    _
  $region43: #{_forward.15} parent=0 // pred_check_branch
    %43 = sbr.rel (0) target = $region45
  $region44: #{_forward.15} parent=0 // pred_region
    _
  $region45: #{_forward.15} parent=0 // pred_fallthru
    _
  // Predicated region
  $region46: #{_forward.15} parent=0 // pred_check
    _
  $region47: #{_forward.15} parent=0 // pred_check_branch
    %45 = sbr.rel (0) target = $region49
  $region48: #{_forward.15} parent=0 // pred_region
    _
  $region49: #{_forward.15} parent=0 // pred_fallthru
    _
  // Predicated region
  $region50: #{_forward.15} parent=0 // pred_check
    _
  $region51: #{_forward.15} parent=0 // pred_check_branch
    %47 = sbr.rel (0) target = $region53
  $region52: #{_forward.15} parent=0 // pred_region
    _
  $region53: #{_forward.15} parent=0 // pred_fallthru
    _
  // Predicated region
  $region54: #{_forward.15} parent=0 // pred_check
    _
  $region55: #{_forward.15} parent=0 // pred_check_branch
    %49 = sbr.rel (0) target = $region57
  $region56: #{_forward.15} parent=0 // pred_region
    _
  $region57: #{_forward.15} parent=0 // pred_fallthru
    _
  // Predicated region
  $region58: #{_forward.15} parent=0 // pred_check
    _
  $region59: #{_forward.15} parent=0 // pred_check_branch
    %51 = sbr.rel (0) target = $region61
  $region60: #{_forward.15} parent=0 // pred_region
    _
  $region61: #{_forward.15} parent=0 // pred_fallthru
    _
  // Predicated region
  $region62: #{_forward.15} parent=0 // pred_check
    _
  $region63: #{_forward.15} parent=0 // pred_check_branch
    %53 = sbr.rel (0) target = $region65
  $region64: #{_forward.15} parent=0 // pred_region
    _
  $region65: #{_forward.15} parent=0 // pred_fallthru
    _
  // Predicated region
  $region66: #{_forward.15} parent=0 // pred_check
    _
  $region67: #{_forward.15} parent=0 // pred_check_branch
    %55 = sbr.rel (0) target = $region69
  $region68: #{_forward.15} parent=0 // pred_region
    _
  $region69: #{_forward.15} parent=0 // pred_fallthru
    _
  %v56 = vld [vmem:[%s0] sm:$0xff]
  %v57 = vld [vmem:[%s0 + $0x8] sm:$0xff]
  %v58 = vld [vmem:[%s0 + $0x10] sm:$0xff]
  %v59 = vld [vmem:[%s0 + $0x18] sm:$0xff]
  %v60 = vld [vmem:[%s1] sm:$0xff]
  %v61 = vld [vmem:[%s1 + $0x8] sm:$0xff]
  %v62 = vld [vmem:[%s1 + $0x10] sm:$0xff]
  %v63 = vld [vmem:[%s1 + $0x18] sm:$0xff]
  %v64 = vld [vmem:[%s2] sm:$0xff]
  %v65 = vld [vmem:[%s2 + $0x8] sm:$0xff]
  %v66 = vld [vmem:[%s2 + $0x10] sm:$0xff]
  %v67 = vld [vmem:[%s2 + $0x18] sm:$0xff]
  %v68 = vld [vmem:[%s3] sm:$0xff]
  %v69 = vld [vmem:[%s3 + $0x8] sm:$0xff]
  %v70 = vld [vmem:[%s3 + $0x10] sm:$0xff]
  %v71 = vld [vmem:[%s3 + $0x18] sm:$0xff]
  %v72 = vsub.f32 %v64, %v68
  %v73 = vsub.f32 %v65, %v69
  %v74 = vsub.f32 %v66, %v70
  %v75 = vsub.f32 %v67, %v71
  %v76 = vmul.f32 %v72, %v72
  %v77 = vmul.f32 %v73, %v73
  %v78 = vmul.f32 %v74, %v74
  %v79 = vmul.f32 %v75, %v75
  %v80 = vld [vmem:[%s7] sm:$0xff]
  %82 = vset.pattern.permute.xlu0 0
  %83 = vperm.xlu0 %82, %v76
  %v84 = vpop.permute.xlu0 %83
  %87 = vset.pattern.permute.xlu0 0
  %88 = vperm.xlu0 %87, %v77
  %v89 = vpop.permute.xlu0 %88
  %92 = vset.pattern.permute.xlu0 0
  %93 = vperm.xlu0 %92, %v78
  %v94 = vpop.permute.xlu0 %93
  %97 = vset.pattern.permute.xlu0 0
  %98 = vperm.xlu0 %97, %v79
  %v99 = vpop.permute.xlu0 %98
  %v101 = vperm.slane %v80, 0
  %v102 = vmul.f32 %v84, %v101
  %v103 = vmul.f32 %v89, %v101
  %v104 = vmul.f32 %v94, %v101
  %v105 = vmul.f32 %v99, %v101
  %106 = vset.pattern.permute.xlu0 1
  %107 = vperm.xlu0 %106, %v76
  %v108 = vpop.permute.xlu0 %107
  %110 = vset.pattern.permute.xlu0 1
  %111 = vperm.xlu0 %110, %v77
  %v112 = vpop.permute.xlu0 %111
  %114 = vset.pattern.permute.xlu0 1
  %115 = vperm.xlu0 %114, %v78
  %v116 = vpop.permute.xlu0 %115
  %118 = vset.pattern.permute.xlu0 1
  %119 = vperm.xlu0 %118, %v79
  %v120 = vpop.permute.xlu0 %119
  %v122 = vperm.slane %v80, 1
  %v123 = vmul.f32 %v108, %v122
  %v124 = vmul.f32 %v112, %v122
  %v125 = vmul.f32 %v116, %v122
  %v126 = vmul.f32 %v120, %v122
  %v127 = vadd.f32 %v102, %v123
  %v128 = vadd.f32 %v103, %v124
  %v129 = vadd.f32 %v104, %v125
  %v130 = vadd.f32 %v105, %v126
  %131 = vset.pattern.permute.xlu0 2
  %132 = vperm.xlu0 %131, %v76
  %v133 = vpop.permute.xlu0 %132
  %135 = vset.pattern.permute.xlu0 2
  %136 = vperm.xlu0 %135, %v77
  %v137 = vpop.permute.xlu0 %136
  %139 = vset.pattern.permute.xlu0 2
  %140 = vperm.xlu0 %139, %v78
  %v141 = vpop.permute.xlu0 %140
  %143 = vset.pattern.permute.xlu0 2
  %144 = vperm.xlu0 %143, %v79
  %v145 = vpop.permute.xlu0 %144
  %v147 = vperm.slane %v80, 2
  %v148 = vmul.f32 %v133, %v147
  %v149 = vmul.f32 %v137, %v147
  %v150 = vmul.f32 %v141, %v147
  %v151 = vmul.f32 %v145, %v147
  %v152 = vadd.f32 %v127, %v148
  %v153 = vadd.f32 %v128, %v149
  %v154 = vadd.f32 %v129, %v150
  %v155 = vadd.f32 %v130, %v151
  %156 = vset.pattern.permute.xlu0 3
  %157 = vperm.xlu0 %156, %v76
  %v158 = vpop.permute.xlu0 %157
  %160 = vset.pattern.permute.xlu0 3
  %161 = vperm.xlu0 %160, %v77
  %v162 = vpop.permute.xlu0 %161
  %164 = vset.pattern.permute.xlu0 3
  %165 = vperm.xlu0 %164, %v78
  %v166 = vpop.permute.xlu0 %165
  %168 = vset.pattern.permute.xlu0 3
  %169 = vperm.xlu0 %168, %v79
  %v170 = vpop.permute.xlu0 %169
  %v172 = vperm.slane %v80, 3
  %v173 = vmul.f32 %v158, %v172
  %v174 = vmul.f32 %v162, %v172
  %v175 = vmul.f32 %v166, %v172
  %v176 = vmul.f32 %v170, %v172
  %v177 = vadd.f32 %v152, %v173
  %v178 = vadd.f32 %v153, %v174
  %v179 = vadd.f32 %v154, %v175
  %v180 = vadd.f32 %v155, %v176
  %181 = vset.pattern.permute.xlu0 4
  %182 = vperm.xlu0 %181, %v76
  %v183 = vpop.permute.xlu0 %182
  %185 = vset.pattern.permute.xlu0 4
  %186 = vperm.xlu0 %185, %v77
  %v187 = vpop.permute.xlu0 %186
  %189 = vset.pattern.permute.xlu0 4
  %190 = vperm.xlu0 %189, %v78
  %v191 = vpop.permute.xlu0 %190
  %193 = vset.pattern.permute.xlu0 4
  %194 = vperm.xlu0 %193, %v79
  %v195 = vpop.permute.xlu0 %194
  %v197 = vperm.slane %v80, 4
  %v198 = vmul.f32 %v183, %v197
  %v199 = vmul.f32 %v187, %v197
  %v200 = vmul.f32 %v191, %v197
  %v201 = vmul.f32 %v195, %v197
  %v202 = vadd.f32 %v177, %v198
  %v203 = vadd.f32 %v178, %v199
  %v204 = vadd.f32 %v179, %v200
  %v205 = vadd.f32 %v180, %v201
  %206 = vset.pattern.permute.xlu0 5
  %207 = vperm.xlu0 %206, %v76
  %v208 = vpop.permute.xlu0 %207
  %210 = vset.pattern.permute.xlu0 5
  %211 = vperm.xlu0 %210, %v77
  %v212 = vpop.permute.xlu0 %211
  %214 = vset.pattern.permute.xlu0 5
  %215 = vperm.xlu0 %214, %v78
  %v216 = vpop.permute.xlu0 %215
  %218 = vset.pattern.permute.xlu0 5
  %219 = vperm.xlu0 %218, %v79
  %v220 = vpop.permute.xlu0 %219
  %v222 = vperm.slane %v80, 5
  %v223 = vmul.f32 %v208, %v222
  %v224 = vmul.f32 %v212, %v222
  %v225 = vmul.f32 %v216, %v222
  %v226 = vmul.f32 %v220, %v222
  %v227 = vadd.f32 %v202, %v223
  %v228 = vadd.f32 %v203, %v224
  %v229 = vadd.f32 %v204, %v225
  %v230 = vadd.f32 %v205, %v226
  %231 = vset.pattern.permute.xlu0 6
  %232 = vperm.xlu0 %231, %v76
  %v233 = vpop.permute.xlu0 %232
  %235 = vset.pattern.permute.xlu0 6
  %236 = vperm.xlu0 %235, %v77
  %v237 = vpop.permute.xlu0 %236
  %239 = vset.pattern.permute.xlu0 6
  %240 = vperm.xlu0 %239, %v78
  %v241 = vpop.permute.xlu0 %240
  %243 = vset.pattern.permute.xlu0 6
  %244 = vperm.xlu0 %243, %v79
  %v245 = vpop.permute.xlu0 %244
  %v247 = vperm.slane %v80, 6
  %v248 = vmul.f32 %v233, %v247
  %v249 = vmul.f32 %v237, %v247
  %v250 = vmul.f32 %v241, %v247
  %v251 = vmul.f32 %v245, %v247
  %v252 = vadd.f32 %v227, %v248
  %v253 = vadd.f32 %v228, %v249
  %v254 = vadd.f32 %v229, %v250
  %v255 = vadd.f32 %v230, %v251
  %256 = vset.pattern.permute.xlu0 7
  %257 = vperm.xlu0 %256, %v76
  %v258 = vpop.permute.xlu0 %257
  %260 = vset.pattern.permute.xlu0 7
  %261 = vperm.xlu0 %260, %v77
  %v262 = vpop.permute.xlu0 %261
  %264 = vset.pattern.permute.xlu0 7
  %265 = vperm.xlu0 %264, %v78
  %v266 = vpop.permute.xlu0 %265
  %268 = vset.pattern.permute.xlu0 7
  %269 = vperm.xlu0 %268, %v79
  %v270 = vpop.permute.xlu0 %269
  %v272 = vperm.slane %v80, 7
  %v273 = vmul.f32 %v258, %v272
  %v274 = vmul.f32 %v262, %v272
  %v275 = vmul.f32 %v266, %v272
  %v276 = vmul.f32 %v270, %v272
  %v277 = vadd.f32 %v252, %v273
  %v278 = vadd.f32 %v253, %v274
  %v279 = vadd.f32 %v254, %v275
  %v280 = vadd.f32 %v255, %v276
  %v281 = vrsqrt.pop %v277
  %v282 = vmul.f32 %v281, %v277
  %v283 = vmul.f32 %v282, %v281
  %v284 = vmul.f32 0.5, %v283
  %v285 = vsub.f32 1.5, %v284
  %v286 = vmul.f32 %v281, %v285
  %v287 = vmul.f32 %v277, %v286
  %vm288 = vcmp.eq.f32.partialorder %v277, inf
  %v289 = vsel %vm288, %v277, %v287
  %vm290 = vcmp.eq.f32.partialorder %v277, 0.0
  %v291 = vand.u32 %v277, 2147483648
  %v292 = vsel %vm290, %v291, %v289
  %v293 = vrsqrt.pop %v278
  %v294 = vmul.f32 %v293, %v278
  %v295 = vmul.f32 %v294, %v293
  %v296 = vmul.f32 0.5, %v295
  %v297 = vsub.f32 1.5, %v296
  %v298 = vmul.f32 %v293, %v297
  %v299 = vmul.f32 %v278, %v298
  %vm300 = vcmp.eq.f32.partialorder %v278, inf
  %v301 = vsel %vm300, %v278, %v299
  %vm302 = vcmp.eq.f32.partialorder %v278, 0.0
  %v303 = vand.u32 %v278, 2147483648
  %v304 = vsel %vm302, %v303, %v301
  %v305 = vrsqrt.pop %v279
  %v306 = vmul.f32 %v305, %v279
  %v307 = vmul.f32 %v306, %v305
  %v308 = vmul.f32 0.5, %v307
  %v309 = vsub.f32 1.5, %v308
  %v310 = vmul.f32 %v305, %v309
  %v311 = vmul.f32 %v279, %v310
  %vm312 = vcmp.eq.f32.partialorder %v279, inf
  %v313 = vsel %vm312, %v279, %v311
  %vm314 = vcmp.eq.f32.partialorder %v279, 0.0
  %v315 = vand.u32 %v279, 2147483648
  %v316 = vsel %vm314, %v315, %v313
  %v317 = vrsqrt.pop %v280
  %v318 = vmul.f32 %v317, %v280
  %v319 = vmul.f32 %v318, %v317
  %v320 = vmul.f32 0.5, %v319
  %v321 = vsub.f32 1.5, %v320
  %v322 = vmul.f32 %v317, %v321
  %v323 = vmul.f32 %v280, %v322
  %vm324 = vcmp.eq.f32.partialorder %v280, inf
  %v325 = vsel %vm324, %v280, %v323
  %vm326 = vcmp.eq.f32.partialorder %v280, 0.0
  %v327 = vand.u32 %v280, 2147483648
  %v328 = vsel %vm326, %v327, %v325
  %v329 = vpack.c.bf16 %v57, %v56
  %v330 = vpack.c.bf16 %v59, %v58
  %v331 = vld [vmem:[%s4] sm:$0xf]
  %v332 = vld [vmem:[%s4 + $0x4] sm:$0xf]
  %v333 = vld [vmem:[%s4 + $0x8] sm:$0xf]
  %v334 = vld [vmem:[%s4 + $0xc] sm:$0xf]
  %v335 = vld [vmem:[%s4 + $0x10] sm:$0xf]
  %v336 = vld [vmem:[%s4 + $0x14] sm:$0xf]
  %v337 = vld [vmem:[%s4 + $0x18] sm:$0xf]
  %v338 = vld [vmem:[%s4 + $0x1c] sm:$0xf]
  %v339 = vld [vmem:[%s4 + $0x20] sm:$0xf]
  %v340 = vld [vmem:[%s4 + $0x24] sm:$0xf]
  %v341 = vld [vmem:[%s4 + $0x28] sm:$0xf]
  %v342 = vld [vmem:[%s4 + $0x2c] sm:$0xf]
  %v343 = vld [vmem:[%s4 + $0x30] sm:$0xf]
  %v344 = vld [vmem:[%s4 + $0x34] sm:$0xf]
  %v345 = vld [vmem:[%s4 + $0x38] sm:$0xf]
  %v346 = vld [vmem:[%s4 + $0x3c] sm:$0xf]
  %v347 = vpack.c.bf16 %v61, %v60
  %v348 = vpack.c.bf16 %v63, %v62
  %v349 = vld [vmem:[%s5] sm:$0xf]
  %v350 = vld [vmem:[%s5 + $0x4] sm:$0xf]
  %v351 = vld [vmem:[%s5 + $0x8] sm:$0xf]
  %v352 = vld [vmem:[%s5 + $0xc] sm:$0xf]
  %v353 = vld [vmem:[%s5 + $0x10] sm:$0xf]
  %v354 = vld [vmem:[%s5 + $0x14] sm:$0xf]
  %v355 = vld [vmem:[%s5 + $0x18] sm:$0xf]
  %v356 = vld [vmem:[%s5 + $0x1c] sm:$0xf]
  %v357 = vld [vmem:[%s5 + $0x20] sm:$0xf]
  %v358 = vld [vmem:[%s5 + $0x24] sm:$0xf]
  %v359 = vld [vmem:[%s5 + $0x28] sm:$0xf]
  %v360 = vld [vmem:[%s5 + $0x2c] sm:$0xf]
  %v361 = vld [vmem:[%s5 + $0x30] sm:$0xf]
  %v362 = vld [vmem:[%s5 + $0x34] sm:$0xf]
  %v363 = vld [vmem:[%s5 + $0x38] sm:$0xf]
  %v364 = vld [vmem:[%s5 + $0x3c] sm:$0xf]
  %v381 = vunpack.c.l.b16 %v349
  %v382 = vunpack.c.l.b16 %v350
  %v383 = vunpack.c.l.b16 %v351
  %v384 = vunpack.c.l.b16 %v352
  %v385 = vunpack.c.l.b16 %v353
  %v386 = vunpack.c.l.b16 %v354
  %v387 = vunpack.c.l.b16 %v355
  %v388 = vunpack.c.l.b16 %v356
  %v389 = vunpack.c.l.b16 %v357
  %v390 = vunpack.c.l.b16 %v358
  %v391 = vunpack.c.l.b16 %v359
  %v392 = vunpack.c.l.b16 %v360
  %v393 = vunpack.c.l.b16 %v361
  %v394 = vunpack.c.l.b16 %v362
  %v395 = vunpack.c.l.b16 %v363
  %v396 = vunpack.c.l.b16 %v364
  %v397 = vpack.c.b16 %v382, %v381
  %v398 = vpack.c.b16 %v384, %v383
  %v399 = vpack.c.b16 %v386, %v385
  %v400 = vpack.c.b16 %v388, %v387
  %v401 = vpack.c.b16 %v390, %v389
  %v402 = vpack.c.b16 %v392, %v391
  %v403 = vpack.c.b16 %v394, %v393
  %v404 = vpack.c.b16 %v396, %v395
  %413 = vmatpush.bf16.msra.mxu0 %v404
  %414 = vmatpush.bf16.msra.mxu0 %v403
  %415 = vmatpush.bf16.msra.mxu0 %v402
  %416 = vmatpush.bf16.msra.mxu0 %v401
  %417 = vmatpush.bf16.msra.mxu0 %v400
  %418 = vmatpush.bf16.msra.mxu0 %v399
  %419 = vmatpush.bf16.msra.mxu0 %v398
  %420 = vmatpush.bf16.msra.mxu0 %v397
  %421 = vmatmul.bf16.gmra.mxu0 %v347
  %v422 = vpop.f32.mrf.mxu0
  %v423 = vadd.f32 0.0, %v422
  %v424 = vpop.f32.mrf.mxu0
  %v425 = vadd.f32 0.0, %v424
  %426 = vmatmul.bf16.gmra.mxu0 %v348
  %v427 = vpop.f32.mrf.mxu0
  %v428 = vadd.f32 0.0, %v427
  %v429 = vpop.f32.mrf.mxu0
  %v430 = vadd.f32 0.0, %v429
  %431 = vdwg.mxu0
  %v448 = vunpack.c.l.b16 %v331
  %v449 = vunpack.c.l.b16 %v332
  %v450 = vunpack.c.l.b16 %v333
  %v451 = vunpack.c.l.b16 %v334
  %v452 = vunpack.c.l.b16 %v335
  %v453 = vunpack.c.l.b16 %v336
  %v454 = vunpack.c.l.b16 %v337
  %v455 = vunpack.c.l.b16 %v338
  %v456 = vunpack.c.l.b16 %v339
  %v457 = vunpack.c.l.b16 %v340
  %v458 = vunpack.c.l.b16 %v341
  %v459 = vunpack.c.l.b16 %v342
  %v460 = vunpack.c.l.b16 %v343
  %v461 = vunpack.c.l.b16 %v344
  %v462 = vunpack.c.l.b16 %v345
  %v463 = vunpack.c.l.b16 %v346
  %v464 = vpack.c.b16 %v449, %v448
  %v465 = vpack.c.b16 %v451, %v450
  %v466 = vpack.c.b16 %v453, %v452
  %v467 = vpack.c.b16 %v455, %v454
  %v468 = vpack.c.b16 %v457, %v456
  %v469 = vpack.c.b16 %v459, %v458
  %v470 = vpack.c.b16 %v461, %v460
  %v471 = vpack.c.b16 %v463, %v462
  %480 = vmatpush.bf16.msra.mxu0 %v471
  %481 = vmatpush.bf16.msra.mxu0 %v470
  %482 = vmatpush.bf16.msra.mxu0 %v469
  %483 = vmatpush.bf16.msra.mxu0 %v468
  %484 = vmatpush.bf16.msra.mxu0 %v467
  %485 = vmatpush.bf16.msra.mxu0 %v466
  %486 = vmatpush.bf16.msra.mxu0 %v465
  %487 = vmatpush.bf16.msra.mxu0 %v464
  %488 = vmatmul.bf16.gmra.mxu0 %v329
  %v489 = vpop.f32.mrf.mxu0
  %v490 = vadd.f32 %v423, %v489
  %v491 = vpop.f32.mrf.mxu0
  %v492 = vadd.f32 %v425, %v491
  %493 = vmatmul.bf16.gmra.mxu0 %v330
  %v494 = vpop.f32.mrf.mxu0
  %v495 = vadd.f32 %v428, %v494
  %v496 = vpop.f32.mrf.mxu0
  %v497 = vadd.f32 %v430, %v496
  %498 = vdwg.mxu0
  %v499 = vld [vmem:[%s6] sm:$0xff]
  %501 = vset.pattern.permute.xlu0 0
  %502 = vperm.xlu0 %501, %v72
  %v503 = vpop.permute.xlu0 %502
  %506 = vset.pattern.permute.xlu0 0
  %507 = vperm.xlu0 %506, %v73
  %v508 = vpop.permute.xlu0 %507
  %511 = vset.pattern.permute.xlu0 0
  %512 = vperm.xlu0 %511, %v74
  %v513 = vpop.permute.xlu0 %512
  %516 = vset.pattern.permute.xlu0 0
  %517 = vperm.xlu0 %516, %v75
  %v518 = vpop.permute.xlu0 %517
  %v520 = vperm.slane %v499, 0
  %v521 = vmul.f32 %v503, %v520
  %v522 = vmul.f32 %v508, %v520
  %v523 = vmul.f32 %v513, %v520
  %v524 = vmul.f32 %v518, %v520
  %525 = vset.pattern.permute.xlu0 1
  %526 = vperm.xlu0 %525, %v72
  %v527 = vpop.permute.xlu0 %526
  %529 = vset.pattern.permute.xlu0 1
  %530 = vperm.xlu0 %529, %v73
  %v531 = vpop.permute.xlu0 %530
  %533 = vset.pattern.permute.xlu0 1
  %534 = vperm.xlu0 %533, %v74
  %v535 = vpop.permute.xlu0 %534
  %537 = vset.pattern.permute.xlu0 1
  %538 = vperm.xlu0 %537, %v75
  %v539 = vpop.permute.xlu0 %538
  %v541 = vperm.slane %v499, 1
  %v542 = vmul.f32 %v527, %v541
  %v543 = vmul.f32 %v531, %v541
  %v544 = vmul.f32 %v535, %v541
  %v545 = vmul.f32 %v539, %v541
  %v546 = vadd.f32 %v521, %v542
  %v547 = vadd.f32 %v522, %v543
  %v548 = vadd.f32 %v523, %v544
  %v549 = vadd.f32 %v524, %v545
  %550 = vset.pattern.permute.xlu0 2
  %551 = vperm.xlu0 %550, %v72
  %v552 = vpop.permute.xlu0 %551
  %554 = vset.pattern.permute.xlu0 2
  %555 = vperm.xlu0 %554, %v73
  %v556 = vpop.permute.xlu0 %555
  %558 = vset.pattern.permute.xlu0 2
  %559 = vperm.xlu0 %558, %v74
  %v560 = vpop.permute.xlu0 %559
  %562 = vset.pattern.permute.xlu0 2
  %563 = vperm.xlu0 %562, %v75
  %v564 = vpop.permute.xlu0 %563
  %v566 = vperm.slane %v499, 2
  %v567 = vmul.f32 %v552, %v566
  %v568 = vmul.f32 %v556, %v566
  %v569 = vmul.f32 %v560, %v566
  %v570 = vmul.f32 %v564, %v566
  %v571 = vadd.f32 %v546, %v567
  %v572 = vadd.f32 %v547, %v568
  %v573 = vadd.f32 %v548, %v569
  %v574 = vadd.f32 %v549, %v570
  %575 = vset.pattern.permute.xlu0 3
  %576 = vperm.xlu0 %575, %v72
  %v577 = vpop.permute.xlu0 %576
  %579 = vset.pattern.permute.xlu0 3
  %580 = vperm.xlu0 %579, %v73
  %v581 = vpop.permute.xlu0 %580
  %583 = vset.pattern.permute.xlu0 3
  %584 = vperm.xlu0 %583, %v74
  %v585 = vpop.permute.xlu0 %584
  %587 = vset.pattern.permute.xlu0 3
  %588 = vperm.xlu0 %587, %v75
  %v589 = vpop.permute.xlu0 %588
  %v591 = vperm.slane %v499, 3
  %v592 = vmul.f32 %v577, %v591
  %v593 = vmul.f32 %v581, %v591
  %v594 = vmul.f32 %v585, %v591
  %v595 = vmul.f32 %v589, %v591
  %v596 = vadd.f32 %v571, %v592
  %v597 = vadd.f32 %v572, %v593
  %v598 = vadd.f32 %v573, %v594
  %v599 = vadd.f32 %v574, %v595
  %600 = vset.pattern.permute.xlu0 4
  %601 = vperm.xlu0 %600, %v72
  %v602 = vpop.permute.xlu0 %601
  %604 = vset.pattern.permute.xlu0 4
  %605 = vperm.xlu0 %604, %v73
  %v606 = vpop.permute.xlu0 %605
  %608 = vset.pattern.permute.xlu0 4
  %609 = vperm.xlu0 %608, %v74
  %v610 = vpop.permute.xlu0 %609
  %612 = vset.pattern.permute.xlu0 4
  %613 = vperm.xlu0 %612, %v75
  %v614 = vpop.permute.xlu0 %613
  %v616 = vperm.slane %v499, 4
  %v617 = vmul.f32 %v602, %v616
  %v618 = vmul.f32 %v606, %v616
  %v619 = vmul.f32 %v610, %v616
  %v620 = vmul.f32 %v614, %v616
  %v621 = vadd.f32 %v596, %v617
  %v622 = vadd.f32 %v597, %v618
  %v623 = vadd.f32 %v598, %v619
  %v624 = vadd.f32 %v599, %v620
  %625 = vset.pattern.permute.xlu0 5
  %626 = vperm.xlu0 %625, %v72
  %v627 = vpop.permute.xlu0 %626
  %629 = vset.pattern.permute.xlu0 5
  %630 = vperm.xlu0 %629, %v73
  %v631 = vpop.permute.xlu0 %630
  %633 = vset.pattern.permute.xlu0 5
  %634 = vperm.xlu0 %633, %v74
  %v635 = vpop.permute.xlu0 %634
  %637 = vset.pattern.permute.xlu0 5
  %638 = vperm.xlu0 %637, %v75
  %v639 = vpop.permute.xlu0 %638
  %v641 = vperm.slane %v499, 5
  %v642 = vmul.f32 %v627, %v641
  %v643 = vmul.f32 %v631, %v641
  %v644 = vmul.f32 %v635, %v641
  %v645 = vmul.f32 %v639, %v641
  %v646 = vadd.f32 %v621, %v642
  %v647 = vadd.f32 %v622, %v643
  %v648 = vadd.f32 %v623, %v644
  %v649 = vadd.f32 %v624, %v645
  %650 = vset.pattern.permute.xlu0 6
  %651 = vperm.xlu0 %650, %v72
  %v652 = vpop.permute.xlu0 %651
  %654 = vset.pattern.permute.xlu0 6
  %655 = vperm.xlu0 %654, %v73
  %v656 = vpop.permute.xlu0 %655
  %658 = vset.pattern.permute.xlu0 6
  %659 = vperm.xlu0 %658, %v74
  %v660 = vpop.permute.xlu0 %659
  %662 = vset.pattern.permute.xlu0 6
  %663 = vperm.xlu0 %662, %v75
  %v664 = vpop.permute.xlu0 %663
  %v666 = vperm.slane %v499, 6
  %v667 = vmul.f32 %v652, %v666
  %v668 = vmul.f32 %v656, %v666
  %v669 = vmul.f32 %v660, %v666
  %v670 = vmul.f32 %v664, %v666
  %v671 = vadd.f32 %v646, %v667
  %v672 = vadd.f32 %v647, %v668
  %v673 = vadd.f32 %v648, %v669
  %v674 = vadd.f32 %v649, %v670
  %675 = vset.pattern.permute.xlu0 7
  %676 = vperm.xlu0 %675, %v72
  %v677 = vpop.permute.xlu0 %676
  %679 = vset.pattern.permute.xlu0 7
  %680 = vperm.xlu0 %679, %v73
  %v681 = vpop.permute.xlu0 %680
  %683 = vset.pattern.permute.xlu0 7
  %684 = vperm.xlu0 %683, %v74
  %v685 = vpop.permute.xlu0 %684
  %687 = vset.pattern.permute.xlu0 7
  %688 = vperm.xlu0 %687, %v75
  %v689 = vpop.permute.xlu0 %688
  %v691 = vperm.slane %v499, 7
  %v692 = vmul.f32 %v677, %v691
  %v693 = vmul.f32 %v681, %v691
  %v694 = vmul.f32 %v685, %v691
  %v695 = vmul.f32 %v689, %v691
  %v696 = vadd.f32 %v671, %v692
  %v697 = vadd.f32 %v672, %v693
  %v698 = vadd.f32 %v673, %v694
  %v699 = vadd.f32 %v674, %v695
  %v700 = vadd.f32 %v490, %v696
  %v701 = vadd.f32 %v492, %v697
  %v702 = vadd.f32 %v495, %v698
  %v703 = vadd.f32 %v497, %v699
  %v704 = vld [vmem:[%s8] sm:$0x1]
  %v706 = vperm.slane %v704, 0
  %v708 = vmul.f32 %v292, %v706
  %v709 = vmul.f32 %v304, %v706
  %v710 = vmul.f32 %v316, %v706
  %v711 = vmul.f32 %v328, %v706
  %v712 = vadd.f32 %v700, %v708
  %v713 = vadd.f32 %v701, %v709
  %v714 = vadd.f32 %v702, %v710
  %v715 = vadd.f32 %v703, %v711
  %v716 = vld [vmem:[%s9] sm:$0x1]
  %v718 = vperm.slane %v716, 0
  %v720 = vadd.f32 %v712, %v718
  %v721 = vadd.f32 %v713, %v718
  %v722 = vadd.f32 %v714, %v718
  %v723 = vadd.f32 %v715, %v718
  %v724 = vmax.f32 %v720, 0.0
  %v725 = vmax.f32 %v721, 0.0
  %v726 = vmax.f32 %v722, 0.0
  %v727 = vmax.f32 %v723, 0.0
  %v728 = vpack.c.bf16 %v725, %v724
  %v729 = vpack.c.bf16 %v727, %v726
  %v730 = vld [vmem:[%s10] sm:$0xf]
  %v731 = vld [vmem:[%s10 + $0x4] sm:$0xf]
  %v732 = vld [vmem:[%s10 + $0x8] sm:$0xf]
  %v733 = vld [vmem:[%s10 + $0xc] sm:$0xf]
  %v734 = vld [vmem:[%s10 + $0x10] sm:$0xf]
  %v735 = vld [vmem:[%s10 + $0x14] sm:$0xf]
  %v736 = vld [vmem:[%s10 + $0x18] sm:$0xf]
  %v737 = vld [vmem:[%s10 + $0x1c] sm:$0xf]
  %v738 = vld [vmem:[%s10 + $0x20] sm:$0xf]
  %v739 = vld [vmem:[%s10 + $0x24] sm:$0xf]
  %v740 = vld [vmem:[%s10 + $0x28] sm:$0xf]
  %v741 = vld [vmem:[%s10 + $0x2c] sm:$0xf]
  %v742 = vld [vmem:[%s10 + $0x30] sm:$0xf]
  %v743 = vld [vmem:[%s10 + $0x34] sm:$0xf]
  %v744 = vld [vmem:[%s10 + $0x38] sm:$0xf]
  %v745 = vld [vmem:[%s10 + $0x3c] sm:$0xf]
  %v746 = vld [vmem:[%s11] sm:$0x1]
  %v748 = vperm.slane %v746, 0
  %v766 = vunpack.c.l.b16 %v730
  %v767 = vunpack.c.l.b16 %v731
  %v768 = vunpack.c.l.b16 %v732
  %v769 = vunpack.c.l.b16 %v733
  %v770 = vunpack.c.l.b16 %v734
  %v771 = vunpack.c.l.b16 %v735
  %v772 = vunpack.c.l.b16 %v736
  %v773 = vunpack.c.l.b16 %v737
  %v774 = vunpack.c.l.b16 %v738
  %v775 = vunpack.c.l.b16 %v739
  %v776 = vunpack.c.l.b16 %v740
  %v777 = vunpack.c.l.b16 %v741
  %v778 = vunpack.c.l.b16 %v742
  %v779 = vunpack.c.l.b16 %v743
  %v780 = vunpack.c.l.b16 %v744
  %v781 = vunpack.c.l.b16 %v745
  %v782 = vpack.c.b16 %v767, %v766
  %v783 = vpack.c.b16 %v769, %v768
  %v784 = vpack.c.b16 %v771, %v770
  %v785 = vpack.c.b16 %v773, %v772
  %v786 = vpack.c.b16 %v775, %v774
  %v787 = vpack.c.b16 %v777, %v776
  %v788 = vpack.c.b16 %v779, %v778
  %v789 = vpack.c.b16 %v781, %v780
  %798 = vmatpush.bf16.msra.mxu0 %v789
  %799 = vmatpush.bf16.msra.mxu0 %v788
  %800 = vmatpush.bf16.msra.mxu0 %v787
  %801 = vmatpush.bf16.msra.mxu0 %v786
  %802 = vmatpush.bf16.msra.mxu0 %v785
  %803 = vmatpush.bf16.msra.mxu0 %v784
  %804 = vmatpush.bf16.msra.mxu0 %v783
  %805 = vmatpush.bf16.msra.mxu0 %v782
  %806 = vmatmul.bf16.gmra.mxu0 %v728
  %v807 = vpop.f32.mrf.mxu0
  %v808 = vadd.f32 %v748, %v807
  %v809 = vpop.f32.mrf.mxu0
  %v810 = vadd.f32 %v748, %v809
  %811 = vmatmul.bf16.gmra.mxu0 %v729
  %v812 = vpop.f32.mrf.mxu0
  %v813 = vadd.f32 %v748, %v812
  %v814 = vpop.f32.mrf.mxu0
  %v815 = vadd.f32 %v748, %v814
  %816 = vdwg.mxu0
  %v817 = vmax.f32 %v808, 0.0
  %v818 = vmax.f32 %v810, 0.0
  %v819 = vmax.f32 %v813, 0.0
  %v820 = vmax.f32 %v815, 0.0
  %v821 = vpack.c.bf16 %v818, %v817
  %v822 = vpack.c.bf16 %v820, %v819
  %v823 = vld [vmem:[%s12] sm:$0xf]
  %v824 = vld [vmem:[%s12 + $0x4] sm:$0xf]
  %v825 = vld [vmem:[%s12 + $0x8] sm:$0xf]
  %v826 = vld [vmem:[%s12 + $0xc] sm:$0xf]
  %v827 = vld [vmem:[%s12 + $0x10] sm:$0xf]
  %v828 = vld [vmem:[%s12 + $0x14] sm:$0xf]
  %v829 = vld [vmem:[%s12 + $0x18] sm:$0xf]
  %v830 = vld [vmem:[%s12 + $0x1c] sm:$0xf]
  %v831 = vld [vmem:[%s12 + $0x20] sm:$0xf]
  %v832 = vld [vmem:[%s12 + $0x24] sm:$0xf]
  %v833 = vld [vmem:[%s12 + $0x28] sm:$0xf]
  %v834 = vld [vmem:[%s12 + $0x2c] sm:$0xf]
  %v835 = vld [vmem:[%s12 + $0x30] sm:$0xf]
  %v836 = vld [vmem:[%s12 + $0x34] sm:$0xf]
  %v837 = vld [vmem:[%s12 + $0x38] sm:$0xf]
  %v838 = vld [vmem:[%s12 + $0x3c] sm:$0xf]
  %v839 = vld [vmem:[%s13] sm:$0x1]
  %v841 = vperm.slane %v839, 0
  %v859 = vunpack.c.l.b16 %v823
  %v860 = vunpack.c.l.b16 %v824
  %v861 = vunpack.c.l.b16 %v825
  %v862 = vunpack.c.l.b16 %v826
  %v863 = vunpack.c.l.b16 %v827
  %v864 = vunpack.c.l.b16 %v828
  %v865 = vunpack.c.l.b16 %v829
  %v866 = vunpack.c.l.b16 %v830
  %v867 = vunpack.c.l.b16 %v831
  %v868 = vunpack.c.l.b16 %v832
  %v869 = vunpack.c.l.b16 %v833
  %v870 = vunpack.c.l.b16 %v834
  %v871 = vunpack.c.l.b16 %v835
  %v872 = vunpack.c.l.b16 %v836
  %v873 = vunpack.c.l.b16 %v837
  %v874 = vunpack.c.l.b16 %v838
  %v875 = vpack.c.b16 %v860, %v859
  %v876 = vpack.c.b16 %v862, %v861
  %v877 = vpack.c.b16 %v864, %v863
  %v878 = vpack.c.b16 %v866, %v865
  %v879 = vpack.c.b16 %v868, %v867
  %v880 = vpack.c.b16 %v870, %v869
  %v881 = vpack.c.b16 %v872, %v871
  %v882 = vpack.c.b16 %v874, %v873
  %891 = vmatpush.bf16.msra.mxu0 %v882
  %892 = vmatpush.bf16.msra.mxu0 %v881
  %893 = vmatpush.bf16.msra.mxu0 %v880
  %894 = vmatpush.bf16.msra.mxu0 %v879
  %895 = vmatpush.bf16.msra.mxu0 %v878
  %896 = vmatpush.bf16.msra.mxu0 %v877
  %897 = vmatpush.bf16.msra.mxu0 %v876
  %898 = vmatpush.bf16.msra.mxu0 %v875
  %899 = vmatmul.bf16.gmra.mxu0 %v821
  %v900 = vpop.f32.mrf.mxu0
  %v901 = vadd.f32 %v841, %v900
  %v902 = vpop.f32.mrf.mxu0
  %v903 = vadd.f32 %v841, %v902
  %904 = vmatmul.bf16.gmra.mxu0 %v822
  %v905 = vpop.f32.mrf.mxu0
  %v906 = vadd.f32 %v841, %v905
  %v907 = vpop.f32.mrf.mxu0
  %v908 = vadd.f32 %v841, %v907
  %909 = vdwg.mxu0
  %v910 = vld [vmem:[%s14] sm:$0x1]
  %v911 = vld [vmem:[%s15] sm:$0x1]
  %v912 = vld [vmem:[%s16] sm:$0xff]
  %v913 = vld [vmem:[%s16 + $0x8] sm:$0xff]
  %v914 = vld [vmem:[%s16 + $0x10] sm:$0xff]
  %v915 = vld [vmem:[%s16 + $0x18] sm:$0xff]
  %v916 = vld [vmem:[%s16 + $0x20] sm:$0xff]
  %v917 = vld [vmem:[%s16 + $0x28] sm:$0xff]
  %v918 = vld [vmem:[%s16 + $0x30] sm:$0xff]
  %v919 = vld [vmem:[%s16 + $0x38] sm:$0xff]
  %v920 = vld [vmem:[%s16 + $0x40] sm:$0xff]
  %v921 = vld [vmem:[%s16 + $0x48] sm:$0xff]
  %v922 = vld [vmem:[%s16 + $0x50] sm:$0xff]
  %v923 = vld [vmem:[%s16 + $0x58] sm:$0xff]
  %v924 = vld [vmem:[%s16 + $0x60] sm:$0xff]
  %v925 = vld [vmem:[%s16 + $0x68] sm:$0xff]
  %v926 = vld [vmem:[%s16 + $0x70] sm:$0xff]
  %v927 = vld [vmem:[%s16 + $0x78] sm:$0xff]
  %928 = vmatpush.msra.mxu0 %v927
  %929 = vmatpush.msra.mxu0 %v926
  %930 = vmatpush.msra.mxu0 %v925
  %931 = vmatpush.msra.mxu0 %v924
  %932 = vmatpush.msra.mxu0 %v923
  %933 = vmatpush.msra.mxu0 %v922
  %934 = vmatpush.msra.mxu0 %v921
  %935 = vmatpush.msra.mxu0 %v920
  %936 = vmatpush.msra.mxu0 %v919
  %937 = vmatpush.msra.mxu0 %v918
  %938 = vmatpush.msra.mxu0 %v917
  %939 = vmatpush.msra.mxu0 %v916
  %940 = vmatpush.msra.mxu0 %v915
  %941 = vmatpush.msra.mxu0 %v914
  %942 = vmatpush.msra.mxu0 %v913
  %943 = vmatpush.msra.mxu0 %v912
  %944 = vmatmul.f32.gmra.mxu0 %v901
  %v945 = vpop.f32.mrf.mxu0
  %v946 = vadd.f32 0.0, %v945
  %947 = vmatmul.f32.gmra.mxu0 %v903
  %v948 = vpop.f32.mrf.mxu0
  %v949 = vadd.f32 0.0, %v948
  %950 = vmatmul.f32.gmra.mxu0 %v906
  %v951 = vpop.f32.mrf.mxu0
  %v952 = vadd.f32 0.0, %v951
  %953 = vmatmul.f32.gmra.mxu0 %v908
  %v954 = vpop.f32.mrf.mxu0
  %v955 = vadd.f32 0.0, %v954
  %956 = vdwg.mxu0
  %v957 = vmul.f32 %v901, %v901
  %v958 = vmul.f32 %v903, %v903
  %v959 = vmul.f32 %v906, %v906
  %v960 = vmul.f32 %v908, %v908
  %961 = vmatpush.msra.mxu0 %v927
  %962 = vmatpush.msra.mxu0 %v926
  %963 = vmatpush.msra.mxu0 %v925
  %964 = vmatpush.msra.mxu0 %v924
  %965 = vmatpush.msra.mxu0 %v923
  %966 = vmatpush.msra.mxu0 %v922
  %967 = vmatpush.msra.mxu0 %v921
  %968 = vmatpush.msra.mxu0 %v920
  %969 = vmatpush.msra.mxu0 %v919
  %970 = vmatpush.msra.mxu0 %v918
  %971 = vmatpush.msra.mxu0 %v917
  %972 = vmatpush.msra.mxu0 %v916
  %973 = vmatpush.msra.mxu0 %v915
  %974 = vmatpush.msra.mxu0 %v914
  %975 = vmatpush.msra.mxu0 %v913
  %976 = vmatpush.msra.mxu0 %v912
  %977 = vmatmul.f32.gmra.mxu0 %v957
  %v978 = vpop.f32.mrf.mxu0
  %v979 = vadd.f32 0.0, %v978
  %980 = vmatmul.f32.gmra.mxu0 %v958
  %v981 = vpop.f32.mrf.mxu0
  %v982 = vadd.f32 0.0, %v981
  %983 = vmatmul.f32.gmra.mxu0 %v959
  %v984 = vpop.f32.mrf.mxu0
  %v985 = vadd.f32 0.0, %v984
  %986 = vmatmul.f32.gmra.mxu0 %v960
  %v987 = vpop.f32.mrf.mxu0
  %v988 = vadd.f32 0.0, %v987
  %989 = vdwg.mxu0
  %v990 = vmul.f32 %v946, %v946
  %v991 = vmul.f32 %v949, %v949
  %v992 = vmul.f32 %v952, %v952
  %v993 = vmul.f32 %v955, %v955
  %v994 = vsub.f32 %v979, %v990
  %v995 = vsub.f32 %v982, %v991
  %v996 = vsub.f32 %v985, %v992
  %v997 = vsub.f32 %v988, %v993
  %v998 = vmax.f32 %v994, 0.0
  %v999 = vmax.f32 %v995, 0.0
  %v1000 = vmax.f32 %v996, 0.0
  %v1001 = vmax.f32 %v997, 0.0
  %v1002 = vsub.f32 %v901, %v946
  %v1003 = vsub.f32 %v903, %v949
  %v1004 = vsub.f32 %v906, %v952
  %v1005 = vsub.f32 %v908, %v955
  %v1006 = vadd.f32 %v998, 1e-05
  %v1007 = vadd.f32 %v999, 1e-05
  %v1008 = vadd.f32 %v1000, 1e-05
  %v1009 = vadd.f32 %v1001, 1e-05
  %v1010 = vrsqrt.pop %v1006
  %v1011 = vmul.f32 %v1010, %v1006
  %v1012 = vmul.f32 %v1011, %v1010
  %v1013 = vmul.f32 0.5, %v1012
  %v1014 = vsub.f32 1.5, %v1013
  %v1015 = vmul.f32 %v1010, %v1014
  %vm1016 = vweird.f32 %v1006
  %vm1017 = vweird.f32 %v1010
  %vm1018 = vmor %vm1016, %vm1017
  %v1019 = vsel %vm1018, %v1010, %v1015
  %v1020 = vrsqrt.pop %v1007
  %v1021 = vmul.f32 %v1020, %v1007
  %v1022 = vmul.f32 %v1021, %v1020
  %v1023 = vmul.f32 0.5, %v1022
  %v1024 = vsub.f32 1.5, %v1023
  %v1025 = vmul.f32 %v1020, %v1024
  %vm1026 = vweird.f32 %v1007
  %vm1027 = vweird.f32 %v1020
  %vm1028 = vmor %vm1026, %vm1027
  %v1029 = vsel %vm1028, %v1020, %v1025
  %v1030 = vrsqrt.pop %v1008
  %v1031 = vmul.f32 %v1030, %v1008
  %v1032 = vmul.f32 %v1031, %v1030
  %v1033 = vmul.f32 0.5, %v1032
  %v1034 = vsub.f32 1.5, %v1033
  %v1035 = vmul.f32 %v1030, %v1034
  %vm1036 = vweird.f32 %v1008
  %vm1037 = vweird.f32 %v1030
  %vm1038 = vmor %vm1036, %vm1037
  %v1039 = vsel %vm1038, %v1030, %v1035
  %v1040 = vrsqrt.pop %v1009
  %v1041 = vmul.f32 %v1040, %v1009
  %v1042 = vmul.f32 %v1041, %v1040
  %v1043 = vmul.f32 0.5, %v1042
  %v1044 = vsub.f32 1.5, %v1043
  %v1045 = vmul.f32 %v1040, %v1044
  %vm1046 = vweird.f32 %v1009
  %vm1047 = vweird.f32 %v1040
  %vm1048 = vmor %vm1046, %vm1047
  %v1049 = vsel %vm1048, %v1040, %v1045
  %v1050 = vmul.f32 %v1002, %v1019
  %v1051 = vmul.f32 %v1003, %v1029
  %v1052 = vmul.f32 %v1004, %v1039
  %v1053 = vmul.f32 %v1005, %v1049
  %v1055 = vperm.slane %v910, 0
  %v1057 = vmul.f32 %v1050, %v1055
  %v1058 = vmul.f32 %v1051, %v1055
  %v1059 = vmul.f32 %v1052, %v1055
  %v1060 = vmul.f32 %v1053, %v1055
  %v1062 = vperm.slane %v911, 0
  %v1064 = vadd.f32 %v1057, %v1062
  %v1065 = vadd.f32 %v1058, %v1062
  %v1066 = vadd.f32 %v1059, %v1062
  %v1067 = vadd.f32 %v1060, %v1062
  %1068 = vst [vmem:[%s17] sm:$0xff] %v1064
  %1069 = vst [vmem:[%s17 + $0x8] sm:$0xff] %v1065
  %1070 = vst [vmem:[%s17 + $0x10] sm:$0xff] %v1066
  %1071 = vst [vmem:[%s17 + $0x18] sm:$0xff] %v1067
  // Predicated region
  $region70: #{_forward.15} parent=0 // pred_check
    _
  $region71: #{_forward.15} parent=0 // pred_check_branch
    %1073 = sbr.rel (0) target = $region73
  $region72: #{_forward.15} parent=0 // pred_region
    _
  $region73: #{_forward.15} parent=0 // pred_fallthru
    _
  // Predicated region
  $region74: #{_forward.15} parent=0 // pred_check
    _
  $region75: #{_forward.15} parent=0 // pred_check_branch
    %1075 = sbr.rel (0) target = $region77
  $region76: #{_forward.15} parent=0 // pred_region
    _
  $region77: #{_forward.15} parent=0 // pred_fallthru
    _

// kernel: _forward.17
$region0: #{_forward.17}
  #allocation0 [shape = 'u32[]', space=smem, size = 0x4, offset = 0x4, fixed_abs, tag = 'smem constant byte address 0x4 - core index']
  #allocation1 [shape = 'u32[72,128]{1,0:T(1,128)}', space=vmem, size = 0x9000, scoped, tag = 'internal scratch']
  %s0 = inlined_call_operand.vmem [shape: f32[16,128], index: 0, kind: input, shape index: {}]
  %s1 = inlined_call_operand.vmem [shape: f32[16,128], index: 1, kind: input, shape index: {}]
  %s2 = inlined_call_operand.vmem [shape: f32[16,8], index: 2, kind: input, shape index: {}]
  %s3 = inlined_call_operand.vmem [shape: f32[16,8], index: 3, kind: input, shape index: {}]
  %s4 = inlined_call_operand.vmem [shape: bf16[128,128], index: 4, kind: input, shape index: {}]
  %s5 = inlined_call_operand.vmem [shape: bf16[128,128], index: 5, kind: input, shape index: {}]
  %s6 = inlined_call_operand.vmem [shape: f32[8,128], index: 6, kind: input, shape index: {}]
  %s7 = inlined_call_operand.vmem [shape: f32[8,128], index: 7, kind: input, shape index: {}]
  %s8 = inlined_call_operand.vmem [shape: f32[1,128], index: 8, kind: input, shape index: {}]
  %s9 = inlined_call_operand.vmem [shape: f32[1,128], index: 9, kind: input, shape index: {}, may-alias: {9,11,13,15}]
  %s10 = inlined_call_operand.vmem [shape: bf16[128,128], index: 10, kind: input, shape index: {}]
  %s11 = inlined_call_operand.vmem [shape: f32[1,128], index: 11, kind: input, shape index: {}, may-alias: {9,11,13,15}]
  %s12 = inlined_call_operand.vmem [shape: bf16[128,128], index: 12, kind: input, shape index: {}]
  %s13 = inlined_call_operand.vmem [shape: f32[1,128], index: 13, kind: input, shape index: {}, may-alias: {9,11,13,15}]
  %s14 = inlined_call_operand.vmem [shape: f32[1,128], index: 14, kind: input, shape index: {}]
  %s15 = inlined_call_operand.vmem [shape: f32[1,128], index: 15, kind: input, shape index: {}, may-alias: {9,11,13,15}]
  %s16 = inlined_call_operand.vmem [shape: f32[128,128], index: 16, kind: input, shape index: {}]
  %s17 = inlined_call_operand.vmem [shape: f32[16,128], index: 17, kind: output, shape index: {}]
  %s18 = sld [smem:[#allocation0]]
  $region78: #{_forward.17} parent=0
    _
  %s20 = ssub.s32 1, %s18
  %s21 = scalar_select 0, %s20, %s18
  // Predicated region
  $region2: #{_forward.17} parent=0 // pred_check
    _
  $region3: #{_forward.17} parent=0 // pred_check_branch
    %23 = sbr.rel (0) target = $region5
  $region4: #{_forward.17} parent=0 // pred_region
    _
  $region5: #{_forward.17} parent=0 // pred_fallthru
    _
  // Predicated region
  $region6: #{_forward.17} parent=0 // pred_check
    _
  $region7: #{_forward.17} parent=0 // pred_check_branch
    %25 = sbr.rel (0) target = $region9
  $region8: #{_forward.17} parent=0 // pred_region
    _
  $region9: #{_forward.17} parent=0 // pred_fallthru
    _
  // Predicated region
  $region10: #{_forward.17} parent=0 // pred_check
    _
  $region11: #{_forward.17} parent=0 // pred_check_branch
    %27 = sbr.rel (0) target = $region13
  $region12: #{_forward.17} parent=0 // pred_region
    _
  $region13: #{_forward.17} parent=0 // pred_fallthru
    _
  // Predicated region
  $region14: #{_forward.17} parent=0 // pred_check
    _
  $region15: #{_forward.17} parent=0 // pred_check_branch
    %29 = sbr.rel (0) target = $region17
  $region16: #{_forward.17} parent=0 // pred_region
    _
  $region17: #{_forward.17} parent=0 // pred_fallthru
    _
  // Predicated region
  $region18: #{_forward.17} parent=0 // pred_check
    _
  $region19: #{_forward.17} parent=0 // pred_check_branch
    %31 = sbr.rel (0) target = $region21
  $region20: #{_forward.17} parent=0 // pred_region
    _
  $region21: #{_forward.17} parent=0 // pred_fallthru
    _
  // Predicated region
  $region22: #{_forward.17} parent=0 // pred_check
    _
  $region23: #{_forward.17} parent=0 // pred_check_branch
    %33 = sbr.rel (0) target = $region25
  $region24: #{_forward.17} parent=0 // pred_region
    _
  $region25: #{_forward.17} parent=0 // pred_fallthru
    _
  // Predicated region
  $region26: #{_forward.17} parent=0 // pred_check
    _
  $region27: #{_forward.17} parent=0 // pred_check_branch
    %35 = sbr.rel (0) target = $region29
  $region28: #{_forward.17} parent=0 // pred_region
    _
  $region29: #{_forward.17} parent=0 // pred_fallthru
    _
  // Predicated region
  $region30: #{_forward.17} parent=0 // pred_check
    _
  $region31: #{_forward.17} parent=0 // pred_check_branch
    %37 = sbr.rel (0) target = $region33
  $region32: #{_forward.17} parent=0 // pred_region
    _
  $region33: #{_forward.17} parent=0 // pred_fallthru
    _
  // Predicated region
  $region34: #{_forward.17} parent=0 // pred_check
    _
  $region35: #{_forward.17} parent=0 // pred_check_branch
    %39 = sbr.rel (0) target = $region37
  $region36: #{_forward.17} parent=0 // pred_region
    _
  $region37: #{_forward.17} parent=0 // pred_fallthru
    _
  // Predicated region
  $region38: #{_forward.17} parent=0 // pred_check
    _
  $region39: #{_forward.17} parent=0 // pred_check_branch
    %41 = sbr.rel (0) target = $region41
  $region40: #{_forward.17} parent=0 // pred_region
    _
  $region41: #{_forward.17} parent=0 // pred_fallthru
    _
  // Predicated region
  $region42: #{_forward.17} parent=0 // pred_check
    _
  $region43: #{_forward.17} parent=0 // pred_check_branch
    %43 = sbr.rel (0) target = $region45
  $region44: #{_forward.17} parent=0 // pred_region
    _
  $region45: #{_forward.17} parent=0 // pred_fallthru
    _
  // Predicated region
  $region46: #{_forward.17} parent=0 // pred_check
    _
  $region47: #{_forward.17} parent=0 // pred_check_branch
    %45 = sbr.rel (0) target = $region49
  $region48: #{_forward.17} parent=0 // pred_region
    _
  $region49: #{_forward.17} parent=0 // pred_fallthru
    _
  // Predicated region
  $region50: #{_forward.17} parent=0 // pred_check
    _
  $region51: #{_forward.17} parent=0 // pred_check_branch
    %47 = sbr.rel (0) target = $region53
  $region52: #{_forward.17} parent=0 // pred_region
    _
  $region53: #{_forward.17} parent=0 // pred_fallthru
    _
  // Predicated region
  $region54: #{_forward.17} parent=0 // pred_check
    _
  $region55: #{_forward.17} parent=0 // pred_check_branch
    %49 = sbr.rel (0) target = $region57
  $region56: #{_forward.17} parent=0 // pred_region
    _
  $region57: #{_forward.17} parent=0 // pred_fallthru
    _
  // Predicated region
  $region58: #{_forward.17} parent=0 // pred_check
    _
  $region59: #{_forward.17} parent=0 // pred_check_branch
    %51 = sbr.rel (0) target = $region61
  $region60: #{_forward.17} parent=0 // pred_region
    _
  $region61: #{_forward.17} parent=0 // pred_fallthru
    _
  // Predicated region
  $region62: #{_forward.17} parent=0 // pred_check
    _
  $region63: #{_forward.17} parent=0 // pred_check_branch
    %53 = sbr.rel (0) target = $region65
  $region64: #{_forward.17} parent=0 // pred_region
    _
  $region65: #{_forward.17} parent=0 // pred_fallthru
    _
  // Predicated region
  $region66: #{_forward.17} parent=0 // pred_check
    _
  $region67: #{_forward.17} parent=0 // pred_check_branch
    %55 = sbr.rel (0) target = $region69
  $region68: #{_forward.17} parent=0 // pred_region
    _
  $region69: #{_forward.17} parent=0 // pred_fallthru
    _
  %v56 = vld [vmem:[%s0] sm:$0xff]
  %v57 = vld [vmem:[%s0 + $0x8] sm:$0xff]
  %v58 = vld [vmem:[%s1] sm:$0xff]
  %v59 = vld [vmem:[%s1 + $0x8] sm:$0xff]
  %v60 = vld [vmem:[%s2] sm:$0xff]
  %v61 = vld [vmem:[%s2 + $0x8] sm:$0xff]
  %v62 = vld [vmem:[%s3] sm:$0xff]
  %v63 = vld [vmem:[%s3 + $0x8] sm:$0xff]
  %v64 = vsub.f32 %v60, %v62
  %v65 = vsub.f32 %v61, %v63
  %v66 = vmul.f32 %v64, %v64
  %v67 = vmul.f32 %v65, %v65
  %v68 = vld [vmem:[%s7] sm:$0xff]
  %70 = vset.pattern.permute.xlu0 0
  %71 = vperm.xlu0 %70, %v66
  %v72 = vpop.permute.xlu0 %71
  %75 = vset.pattern.permute.xlu0 0
  %76 = vperm.xlu0 %75, %v67
  %v77 = vpop.permute.xlu0 %76
  %v79 = vperm.slane %v68, 0
  %v80 = vmul.f32 %v72, %v79
  %v81 = vmul.f32 %v77, %v79
  %82 = vset.pattern.permute.xlu0 1
  %83 = vperm.xlu0 %82, %v66
  %v84 = vpop.permute.xlu0 %83
  %86 = vset.pattern.permute.xlu0 1
  %87 = vperm.xlu0 %86, %v67
  %v88 = vpop.permute.xlu0 %87
  %v90 = vperm.slane %v68, 1
  %v91 = vmul.f32 %v84, %v90
  %v92 = vmul.f32 %v88, %v90
  %v93 = vadd.f32 %v80, %v91
  %v94 = vadd.f32 %v81, %v92
  %95 = vset.pattern.permute.xlu0 2
  %96 = vperm.xlu0 %95, %v66
  %v97 = vpop.permute.xlu0 %96
  %99 = vset.pattern.permute.xlu0 2
  %100 = vperm.xlu0 %99, %v67
  %v101 = vpop.permute.xlu0 %100
  %v103 = vperm.slane %v68, 2
  %v104 = vmul.f32 %v97, %v103
  %v105 = vmul.f32 %v101, %v103
  %v106 = vadd.f32 %v93, %v104
  %v107 = vadd.f32 %v94, %v105
  %108 = vset.pattern.permute.xlu0 3
  %109 = vperm.xlu0 %108, %v66
  %v110 = vpop.permute.xlu0 %109
  %112 = vset.pattern.permute.xlu0 3
  %113 = vperm.xlu0 %112, %v67
  %v114 = vpop.permute.xlu0 %113
  %v116 = vperm.slane %v68, 3
  %v117 = vmul.f32 %v110, %v116
  %v118 = vmul.f32 %v114, %v116
  %v119 = vadd.f32 %v106, %v117
  %v120 = vadd.f32 %v107, %v118
  %121 = vset.pattern.permute.xlu0 4
  %122 = vperm.xlu0 %121, %v66
  %v123 = vpop.permute.xlu0 %122
  %125 = vset.pattern.permute.xlu0 4
  %126 = vperm.xlu0 %125, %v67
  %v127 = vpop.permute.xlu0 %126
  %v129 = vperm.slane %v68, 4
  %v130 = vmul.f32 %v123, %v129
  %v131 = vmul.f32 %v127, %v129
  %v132 = vadd.f32 %v119, %v130
  %v133 = vadd.f32 %v120, %v131
  %134 = vset.pattern.permute.xlu0 5
  %135 = vperm.xlu0 %134, %v66
  %v136 = vpop.permute.xlu0 %135
  %138 = vset.pattern.permute.xlu0 5
  %139 = vperm.xlu0 %138, %v67
  %v140 = vpop.permute.xlu0 %139
  %v142 = vperm.slane %v68, 5
  %v143 = vmul.f32 %v136, %v142
  %v144 = vmul.f32 %v140, %v142
  %v145 = vadd.f32 %v132, %v143
  %v146 = vadd.f32 %v133, %v144
  %147 = vset.pattern.permute.xlu0 6
  %148 = vperm.xlu0 %147, %v66
  %v149 = vpop.permute.xlu0 %148
  %151 = vset.pattern.permute.xlu0 6
  %152 = vperm.xlu0 %151, %v67
  %v153 = vpop.permute.xlu0 %152
  %v155 = vperm.slane %v68, 6
  %v156 = vmul.f32 %v149, %v155
  %v157 = vmul.f32 %v153, %v155
  %v158 = vadd.f32 %v145, %v156
  %v159 = vadd.f32 %v146, %v157
  %160 = vset.pattern.permute.xlu0 7
  %161 = vperm.xlu0 %160, %v66
  %v162 = vpop.permute.xlu0 %161
  %164 = vset.pattern.permute.xlu0 7
  %165 = vperm.xlu0 %164, %v67
  %v166 = vpop.permute.xlu0 %165
  %v168 = vperm.slane %v68, 7
  %v169 = vmul.f32 %v162, %v168
  %v170 = vmul.f32 %v166, %v168
  %v171 = vadd.f32 %v158, %v169
  %v172 = vadd.f32 %v159, %v170
  %v173 = vrsqrt.pop %v171
  %v174 = vmul.f32 %v173, %v171
  %v175 = vmul.f32 %v174, %v173
  %v176 = vmul.f32 0.5, %v175
  %v177 = vsub.f32 1.5, %v176
  %v178 = vmul.f32 %v173, %v177
  %v179 = vmul.f32 %v171, %v178
  %vm180 = vcmp.eq.f32.partialorder %v171, inf
  %v181 = vsel %vm180, %v171, %v179
  %vm182 = vcmp.eq.f32.partialorder %v171, 0.0
  %v183 = vand.u32 %v171, 2147483648
  %v184 = vsel %vm182, %v183, %v181
  %v185 = vrsqrt.pop %v172
  %v186 = vmul.f32 %v185, %v172
  %v187 = vmul.f32 %v186, %v185
  %v188 = vmul.f32 0.5, %v187
  %v189 = vsub.f32 1.5, %v188
  %v190 = vmul.f32 %v185, %v189
  %v191 = vmul.f32 %v172, %v190
  %vm192 = vcmp.eq.f32.partialorder %v172, inf
  %v193 = vsel %vm192, %v172, %v191
  %vm194 = vcmp.eq.f32.partialorder %v172, 0.0
  %v195 = vand.u32 %v172, 2147483648
  %v196 = vsel %vm194, %v195, %v193
  %v197 = vpack.c.bf16 %v57, %v56
  %v198 = vld [vmem:[%s4] sm:$0xf]
  %v199 = vld [vmem:[%s4 + $0x4] sm:$0xf]
  %v200 = vld [vmem:[%s4 + $0x8] sm:$0xf]
  %v201 = vld [vmem:[%s4 + $0xc] sm:$0xf]
  %v202 = vld [vmem:[%s4 + $0x10] sm:$0xf]
  %v203 = vld [vmem:[%s4 + $0x14] sm:$0xf]
  %v204 = vld [vmem:[%s4 + $0x18] sm:$0xf]
  %v205 = vld [vmem:[%s4 + $0x1c] sm:$0xf]
  %v206 = vld [vmem:[%s4 + $0x20] sm:$0xf]
  %v207 = vld [vmem:[%s4 + $0x24] sm:$0xf]
  %v208 = vld [vmem:[%s4 + $0x28] sm:$0xf]
  %v209 = vld [vmem:[%s4 + $0x2c] sm:$0xf]
  %v210 = vld [vmem:[%s4 + $0x30] sm:$0xf]
  %v211 = vld [vmem:[%s4 + $0x34] sm:$0xf]
  %v212 = vld [vmem:[%s4 + $0x38] sm:$0xf]
  %v213 = vld [vmem:[%s4 + $0x3c] sm:$0xf]
  %v214 = vpack.c.bf16 %v59, %v58
  %v215 = vld [vmem:[%s5] sm:$0xf]
  %v216 = vld [vmem:[%s5 + $0x4] sm:$0xf]
  %v217 = vld [vmem:[%s5 + $0x8] sm:$0xf]
  %v218 = vld [vmem:[%s5 + $0xc] sm:$0xf]
  %v219 = vld [vmem:[%s5 + $0x10] sm:$0xf]
  %v220 = vld [vmem:[%s5 + $0x14] sm:$0xf]
  %v221 = vld [vmem:[%s5 + $0x18] sm:$0xf]
  %v222 = vld [vmem:[%s5 + $0x1c] sm:$0xf]
  %v223 = vld [vmem:[%s5 + $0x20] sm:$0xf]
  %v224 = vld [vmem:[%s5 + $0x24] sm:$0xf]
  %v225 = vld [vmem:[%s5 + $0x28] sm:$0xf]
  %v226 = vld [vmem:[%s5 + $0x2c] sm:$0xf]
  %v227 = vld [vmem:[%s5 + $0x30] sm:$0xf]
  %v228 = vld [vmem:[%s5 + $0x34] sm:$0xf]
  %v229 = vld [vmem:[%s5 + $0x38] sm:$0xf]
  %v230 = vld [vmem:[%s5 + $0x3c] sm:$0xf]
  %v247 = vunpack.c.l.b16 %v215
  %v248 = vunpack.c.l.b16 %v216
  %v249 = vunpack.c.l.b16 %v217
  %v250 = vunpack.c.l.b16 %v218
  %v251 = vunpack.c.l.b16 %v219
  %v252 = vunpack.c.l.b16 %v220
  %v253 = vunpack.c.l.b16 %v221
  %v254 = vunpack.c.l.b16 %v222
  %v255 = vunpack.c.l.b16 %v223
  %v256 = vunpack.c.l.b16 %v224
  %v257 = vunpack.c.l.b16 %v225
  %v258 = vunpack.c.l.b16 %v226
  %v259 = vunpack.c.l.b16 %v227
  %v260 = vunpack.c.l.b16 %v228
  %v261 = vunpack.c.l.b16 %v229
  %v262 = vunpack.c.l.b16 %v230
  %v263 = vpack.c.b16 %v248, %v247
  %v264 = vpack.c.b16 %v250, %v249
  %v265 = vpack.c.b16 %v252, %v251
  %v266 = vpack.c.b16 %v254, %v253
  %v267 = vpack.c.b16 %v256, %v255
  %v268 = vpack.c.b16 %v258, %v257
  %v269 = vpack.c.b16 %v260, %v259
  %v270 = vpack.c.b16 %v262, %v261
  %279 = vmatpush.bf16.msra.mxu0 %v270
  %280 = vmatpush.bf16.msra.mxu0 %v269
  %281 = vmatpush.bf16.msra.mxu0 %v268
  %282 = vmatpush.bf16.msra.mxu0 %v267
  %283 = vmatpush.bf16.msra.mxu0 %v266
  %284 = vmatpush.bf16.msra.mxu0 %v265
  %285 = vmatpush.bf16.msra.mxu0 %v264
  %286 = vmatpush.bf16.msra.mxu0 %v263
  %287 = vmatmul.bf16.gmra.mxu0 %v214
  %v288 = vpop.f32.mrf.mxu0
  %v289 = vadd.f32 0.0, %v288
  %v290 = vpop.f32.mrf.mxu0
  %v291 = vadd.f32 0.0, %v290
  %292 = vdwg.mxu0
  %v309 = vunpack.c.l.b16 %v198
  %v310 = vunpack.c.l.b16 %v199
  %v311 = vunpack.c.l.b16 %v200
  %v312 = vunpack.c.l.b16 %v201
  %v313 = vunpack.c.l.b16 %v202
  %v314 = vunpack.c.l.b16 %v203
  %v315 = vunpack.c.l.b16 %v204
  %v316 = vunpack.c.l.b16 %v205
  %v317 = vunpack.c.l.b16 %v206
  %v318 = vunpack.c.l.b16 %v207
  %v319 = vunpack.c.l.b16 %v208
  %v320 = vunpack.c.l.b16 %v209
  %v321 = vunpack.c.l.b16 %v210
  %v322 = vunpack.c.l.b16 %v211
  %v323 = vunpack.c.l.b16 %v212
  %v324 = vunpack.c.l.b16 %v213
  %v325 = vpack.c.b16 %v310, %v309
  %v326 = vpack.c.b16 %v312, %v311
  %v327 = vpack.c.b16 %v314, %v313
  %v328 = vpack.c.b16 %v316, %v315
  %v329 = vpack.c.b16 %v318, %v317
  %v330 = vpack.c.b16 %v320, %v319
  %v331 = vpack.c.b16 %v322, %v321
  %v332 = vpack.c.b16 %v324, %v323
  %341 = vmatpush.bf16.msra.mxu0 %v332
  %342 = vmatpush.bf16.msra.mxu0 %v331
  %343 = vmatpush.bf16.msra.mxu0 %v330
  %344 = vmatpush.bf16.msra.mxu0 %v329
  %345 = vmatpush.bf16.msra.mxu0 %v328
  %346 = vmatpush.bf16.msra.mxu0 %v327
  %347 = vmatpush.bf16.msra.mxu0 %v326
  %348 = vmatpush.bf16.msra.mxu0 %v325
  %349 = vmatmul.bf16.gmra.mxu0 %v197
  %v350 = vpop.f32.mrf.mxu0
  %v351 = vadd.f32 %v289, %v350
  %v352 = vpop.f32.mrf.mxu0
  %v353 = vadd.f32 %v291, %v352
  %354 = vdwg.mxu0
  %v355 = vld [vmem:[%s6] sm:$0xff]
  %357 = vset.pattern.permute.xlu0 0
  %358 = vperm.xlu0 %357, %v64
  %v359 = vpop.permute.xlu0 %358
  %362 = vset.pattern.permute.xlu0 0
  %363 = vperm.xlu0 %362, %v65
  %v364 = vpop.permute.xlu0 %363
  %v366 = vperm.slane %v355, 0
  %v367 = vmul.f32 %v359, %v366
  %v368 = vmul.f32 %v364, %v366
  %369 = vset.pattern.permute.xlu0 1
  %370 = vperm.xlu0 %369, %v64
  %v371 = vpop.permute.xlu0 %370
  %373 = vset.pattern.permute.xlu0 1
  %374 = vperm.xlu0 %373, %v65
  %v375 = vpop.permute.xlu0 %374
  %v377 = vperm.slane %v355, 1
  %v378 = vmul.f32 %v371, %v377
  %v379 = vmul.f32 %v375, %v377
  %v380 = vadd.f32 %v367, %v378
  %v381 = vadd.f32 %v368, %v379
  %382 = vset.pattern.permute.xlu0 2
  %383 = vperm.xlu0 %382, %v64
  %v384 = vpop.permute.xlu0 %383
  %386 = vset.pattern.permute.xlu0 2
  %387 = vperm.xlu0 %386, %v65
  %v388 = vpop.permute.xlu0 %387
  %v390 = vperm.slane %v355, 2
  %v391 = vmul.f32 %v384, %v390
  %v392 = vmul.f32 %v388, %v390
  %v393 = vadd.f32 %v380, %v391
  %v394 = vadd.f32 %v381, %v392
  %395 = vset.pattern.permute.xlu0 3
  %396 = vperm.xlu0 %395, %v64
  %v397 = vpop.permute.xlu0 %396
  %399 = vset.pattern.permute.xlu0 3
  %400 = vperm.xlu0 %399, %v65
  %v401 = vpop.permute.xlu0 %400
  %v403 = vperm.slane %v355, 3
  %v404 = vmul.f32 %v397, %v403
  %v405 = vmul.f32 %v401, %v403
  %v406 = vadd.f32 %v393, %v404
  %v407 = vadd.f32 %v394, %v405
  %408 = vset.pattern.permute.xlu0 4
  %409 = vperm.xlu0 %408, %v64
  %v410 = vpop.permute.xlu0 %409
  %412 = vset.pattern.permute.xlu0 4
  %413 = vperm.xlu0 %412, %v65
  %v414 = vpop.permute.xlu0 %413
  %v416 = vperm.slane %v355, 4
  %v417 = vmul.f32 %v410, %v416
  %v418 = vmul.f32 %v414, %v416
  %v419 = vadd.f32 %v406, %v417
  %v420 = vadd.f32 %v407, %v418
  %421 = vset.pattern.permute.xlu0 5
  %422 = vperm.xlu0 %421, %v64
  %v423 = vpop.permute.xlu0 %422
  %425 = vset.pattern.permute.xlu0 5
  %426 = vperm.xlu0 %425, %v65
  %v427 = vpop.permute.xlu0 %426
  %v429 = vperm.slane %v355, 5
  %v430 = vmul.f32 %v423, %v429
  %v431 = vmul.f32 %v427, %v429
  %v432 = vadd.f32 %v419, %v430
  %v433 = vadd.f32 %v420, %v431
  %434 = vset.pattern.permute.xlu0 6
  %435 = vperm.xlu0 %434, %v64
  %v436 = vpop.permute.xlu0 %435
  %438 = vset.pattern.permute.xlu0 6
  %439 = vperm.xlu0 %438, %v65
  %v440 = vpop.permute.xlu0 %439
  %v442 = vperm.slane %v355, 6
  %v443 = vmul.f32 %v436, %v442
  %v444 = vmul.f32 %v440, %v442
  %v445 = vadd.f32 %v432, %v443
  %v446 = vadd.f32 %v433, %v444
  %447 = vset.pattern.permute.xlu0 7
  %448 = vperm.xlu0 %447, %v64
  %v449 = vpop.permute.xlu0 %448
  %451 = vset.pattern.permute.xlu0 7
  %452 = vperm.xlu0 %451, %v65
  %v453 = vpop.permute.xlu0 %452
  %v455 = vperm.slane %v355, 7
  %v456 = vmul.f32 %v449, %v455
  %v457 = vmul.f32 %v453, %v455
  %v458 = vadd.f32 %v445, %v456
  %v459 = vadd.f32 %v446, %v457
  %v460 = vadd.f32 %v351, %v458
  %v461 = vadd.f32 %v353, %v459
  %v462 = vld [vmem:[%s8] sm:$0x1]
  %v464 = vperm.slane %v462, 0
  %v466 = vmul.f32 %v184, %v464
  %v467 = vmul.f32 %v196, %v464
  %v468 = vadd.f32 %v460, %v466
  %v469 = vadd.f32 %v461, %v467
  %v470 = vld [vmem:[%s9] sm:$0x1]
  %v472 = vperm.slane %v470, 0
  %v474 = vadd.f32 %v468, %v472
  %v475 = vadd.f32 %v469, %v472
  %v476 = vmax.f32 %v474, 0.0
  %v477 = vmax.f32 %v475, 0.0
  %v478 = vpack.c.bf16 %v477, %v476
  %v479 = vld [vmem:[%s10] sm:$0xf]
  %v480 = vld [vmem:[%s10 + $0x4] sm:$0xf]
  %v481 = vld [vmem:[%s10 + $0x8] sm:$0xf]
  %v482 = vld [vmem:[%s10 + $0xc] sm:$0xf]
  %v483 = vld [vmem:[%s10 + $0x10] sm:$0xf]
  %v484 = vld [vmem:[%s10 + $0x14] sm:$0xf]
  %v485 = vld [vmem:[%s10 + $0x18] sm:$0xf]
  %v486 = vld [vmem:[%s10 + $0x1c] sm:$0xf]
  %v487 = vld [vmem:[%s10 + $0x20] sm:$0xf]
  %v488 = vld [vmem:[%s10 + $0x24] sm:$0xf]
  %v489 = vld [vmem:[%s10 + $0x28] sm:$0xf]
  %v490 = vld [vmem:[%s10 + $0x2c] sm:$0xf]
  %v491 = vld [vmem:[%s10 + $0x30] sm:$0xf]
  %v492 = vld [vmem:[%s10 + $0x34] sm:$0xf]
  %v493 = vld [vmem:[%s10 + $0x38] sm:$0xf]
  %v494 = vld [vmem:[%s10 + $0x3c] sm:$0xf]
  %v495 = vld [vmem:[%s11] sm:$0x1]
  %v497 = vperm.slane %v495, 0
  %v515 = vunpack.c.l.b16 %v479
  %v516 = vunpack.c.l.b16 %v480
  %v517 = vunpack.c.l.b16 %v481
  %v518 = vunpack.c.l.b16 %v482
  %v519 = vunpack.c.l.b16 %v483
  %v520 = vunpack.c.l.b16 %v484
  %v521 = vunpack.c.l.b16 %v485
  %v522 = vunpack.c.l.b16 %v486
  %v523 = vunpack.c.l.b16 %v487
  %v524 = vunpack.c.l.b16 %v488
  %v525 = vunpack.c.l.b16 %v489
  %v526 = vunpack.c.l.b16 %v490
  %v527 = vunpack.c.l.b16 %v491
  %v528 = vunpack.c.l.b16 %v492
  %v529 = vunpack.c.l.b16 %v493
  %v530 = vunpack.c.l.b16 %v494
  %v531 = vpack.c.b16 %v516, %v515
  %v532 = vpack.c.b16 %v518, %v517
  %v533 = vpack.c.b16 %v520, %v519
  %v534 = vpack.c.b16 %v522, %v521
  %v535 = vpack.c.b16 %v524, %v523
  %v536 = vpack.c.b16 %v526, %v525
  %v537 = vpack.c.b16 %v528, %v527
  %v538 = vpack.c.b16 %v530, %v529
  %547 = vmatpush.bf16.msra.mxu0 %v538
  %548 = vmatpush.bf16.msra.mxu0 %v537
  %549 = vmatpush.bf16.msra.mxu0 %v536
  %550 = vmatpush.bf16.msra.mxu0 %v535
  %551 = vmatpush.bf16.msra.mxu0 %v534
  %552 = vmatpush.bf16.msra.mxu0 %v533
  %553 = vmatpush.bf16.msra.mxu0 %v532
  %554 = vmatpush.bf16.msra.mxu0 %v531
  %555 = vmatmul.bf16.gmra.mxu0 %v478
  %v556 = vpop.f32.mrf.mxu0
  %v557 = vadd.f32 %v497, %v556
  %v558 = vpop.f32.mrf.mxu0
  %v559 = vadd.f32 %v497, %v558
  %560 = vdwg.mxu0
  %v561 = vmax.f32 %v557, 0.0
  %v562 = vmax.f32 %v559, 0.0
  %v563 = vpack.c.bf16 %v562, %v561
  %v564 = vld [vmem:[%s12] sm:$0xf]
  %v565 = vld [vmem:[%s12 + $0x4] sm:$0xf]
  %v566 = vld [vmem:[%s12 + $0x8] sm:$0xf]
  %v567 = vld [vmem:[%s12 + $0xc] sm:$0xf]
  %v568 = vld [vmem:[%s12 + $0x10] sm:$0xf]
  %v569 = vld [vmem:[%s12 + $0x14] sm:$0xf]
  %v570 = vld [vmem:[%s12 + $0x18] sm:$0xf]
  %v571 = vld [vmem:[%s12 + $0x1c] sm:$0xf]
  %v572 = vld [vmem:[%s12 + $0x20] sm:$0xf]
  %v573 = vld [vmem:[%s12 + $0x24] sm:$0xf]
  %v574 = vld [vmem:[%s12 + $0x28] sm:$0xf]
  %v575 = vld [vmem:[%s12 + $0x2c] sm:$0xf]
  %v576 = vld [vmem:[%s12 + $0x30] sm:$0xf]
  %v577 = vld [vmem:[%s12 + $0x34] sm:$0xf]
  %v578 = vld [vmem:[%s12 + $0x38] sm:$0xf]
  %v579 = vld [vmem:[%s12 + $0x3c] sm:$0xf]
  %v580 = vld [vmem:[%s13] sm:$0x1]
  %v582 = vperm.slane %v580, 0
  %v600 = vunpack.c.l.b16 %v564
  %v601 = vunpack.c.l.b16 %v565
  %v602 = vunpack.c.l.b16 %v566
  %v603 = vunpack.c.l.b16 %v567
  %v604 = vunpack.c.l.b16 %v568
  %v605 = vunpack.c.l.b16 %v569
  %v606 = vunpack.c.l.b16 %v570
  %v607 = vunpack.c.l.b16 %v571
  %v608 = vunpack.c.l.b16 %v572
  %v609 = vunpack.c.l.b16 %v573
  %v610 = vunpack.c.l.b16 %v574
  %v611 = vunpack.c.l.b16 %v575
  %v612 = vunpack.c.l.b16 %v576
  %v613 = vunpack.c.l.b16 %v577
  %v614 = vunpack.c.l.b16 %v578
  %v615 = vunpack.c.l.b16 %v579
  %v616 = vpack.c.b16 %v601, %v600
  %v617 = vpack.c.b16 %v603, %v602
  %v618 = vpack.c.b16 %v605, %v604
  %v619 = vpack.c.b16 %v607, %v606
  %v620 = vpack.c.b16 %v609, %v608
  %v621 = vpack.c.b16 %v611, %v610
  %v622 = vpack.c.b16 %v613, %v612
  %v623 = vpack.c.b16 %v615, %v614
  %632 = vmatpush.bf16.msra.mxu0 %v623
  %633 = vmatpush.bf16.msra.mxu0 %v622
  %634 = vmatpush.bf16.msra.mxu0 %v621
  %635 = vmatpush.bf16.msra.mxu0 %v620
  %636 = vmatpush.bf16.msra.mxu0 %v619
  %637 = vmatpush.bf16.msra.mxu0 %v618
  %638 = vmatpush.bf16.msra.mxu0 %v617
  %639 = vmatpush.bf16.msra.mxu0 %v616
  %640 = vmatmul.bf16.gmra.mxu0 %v563
  %v641 = vpop.f32.mrf.mxu0
  %v642 = vadd.f32 %v582, %v641
  %v643 = vpop.f32.mrf.mxu0
  %v644 = vadd.f32 %v582, %v643
  %645 = vdwg.mxu0
  %v646 = vld [vmem:[%s14] sm:$0x1]
  %v647 = vld [vmem:[%s15] sm:$0x1]
  %v648 = vld [vmem:[%s16] sm:$0xff]
  %v649 = vld [vmem:[%s16 + $0x8] sm:$0xff]
  %v650 = vld [vmem:[%s16 + $0x10] sm:$0xff]
  %v651 = vld [vmem:[%s16 + $0x18] sm:$0xff]
  %v652 = vld [vmem:[%s16 + $0x20] sm:$0xff]
  %v653 = vld [vmem:[%s16 + $0x28] sm:$0xff]
  %v654 = vld [vmem:[%s16 + $0x30] sm:$0xff]
  %v655 = vld [vmem:[%s16 + $0x38] sm:$0xff]
  %v656 = vld [vmem:[%s16 + $0x40] sm:$0xff]
  %v657 = vld [vmem:[%s16 + $0x48] sm:$0xff]
  %v658 = vld [vmem:[%s16 + $0x50] sm:$0xff]
  %v659 = vld [vmem:[%s16 + $0x58] sm:$0xff]
  %v660 = vld [vmem:[%s16 + $0x60] sm:$0xff]
  %v661 = vld [vmem:[%s16 + $0x68] sm:$0xff]
  %v662 = vld [vmem:[%s16 + $0x70] sm:$0xff]
  %v663 = vld [vmem:[%s16 + $0x78] sm:$0xff]
  %664 = vmatpush.msra.mxu0 %v663
  %665 = vmatpush.msra.mxu0 %v662
  %666 = vmatpush.msra.mxu0 %v661
  %667 = vmatpush.msra.mxu0 %v660
  %668 = vmatpush.msra.mxu0 %v659
  %669 = vmatpush.msra.mxu0 %v658
  %670 = vmatpush.msra.mxu0 %v657
  %671 = vmatpush.msra.mxu0 %v656
  %672 = vmatpush.msra.mxu0 %v655
  %673 = vmatpush.msra.mxu0 %v654
  %674 = vmatpush.msra.mxu0 %v653
  %675 = vmatpush.msra.mxu0 %v652
  %676 = vmatpush.msra.mxu0 %v651
  %677 = vmatpush.msra.mxu0 %v650
  %678 = vmatpush.msra.mxu0 %v649
  %679 = vmatpush.msra.mxu0 %v648
  %680 = vmatmul.f32.gmra.mxu0 %v642
  %v681 = vpop.f32.mrf.mxu0
  %v682 = vadd.f32 0.0, %v681
  %683 = vmatmul.f32.gmra.mxu0 %v644
  %v684 = vpop.f32.mrf.mxu0
  %v685 = vadd.f32 0.0, %v684
  %686 = vdwg.mxu0
  %v687 = vmul.f32 %v642, %v642
  %v688 = vmul.f32 %v644, %v644
  %689 = vmatpush.msra.mxu0 %v663
  %690 = vmatpush.msra.mxu0 %v662
  %691 = vmatpush.msra.mxu0 %v661
  %692 = vmatpush.msra.mxu0 %v660
  %693 = vmatpush.msra.mxu0 %v659
  %694 = vmatpush.msra.mxu0 %v658
  %695 = vmatpush.msra.mxu0 %v657
  %696 = vmatpush.msra.mxu0 %v656
  %697 = vmatpush.msra.mxu0 %v655
  %698 = vmatpush.msra.mxu0 %v654
  %699 = vmatpush.msra.mxu0 %v653
  %700 = vmatpush.msra.mxu0 %v652
  %701 = vmatpush.msra.mxu0 %v651
  %702 = vmatpush.msra.mxu0 %v650
  %703 = vmatpush.msra.mxu0 %v649
  %704 = vmatpush.msra.mxu0 %v648
  %705 = vmatmul.f32.gmra.mxu0 %v687
  %v706 = vpop.f32.mrf.mxu0
  %v707 = vadd.f32 0.0, %v706
  %708 = vmatmul.f32.gmra.mxu0 %v688
  %v709 = vpop.f32.mrf.mxu0
  %v710 = vadd.f32 0.0, %v709
  %711 = vdwg.mxu0
  %v712 = vmul.f32 %v682, %v682
  %v713 = vmul.f32 %v685, %v685
  %v714 = vsub.f32 %v707, %v712
  %v715 = vsub.f32 %v710, %v713
  %v716 = vmax.f32 %v714, 0.0
  %v717 = vmax.f32 %v715, 0.0
  %v718 = vsub.f32 %v642, %v682
  %v719 = vsub.f32 %v644, %v685
  %v720 = vadd.f32 %v716, 1e-05
  %v721 = vadd.f32 %v717, 1e-05
  %v722 = vrsqrt.pop %v720
  %v723 = vmul.f32 %v722, %v720
  %v724 = vmul.f32 %v723, %v722
  %v725 = vmul.f32 0.5, %v724
  %v726 = vsub.f32 1.5, %v725
  %v727 = vmul.f32 %v722, %v726
  %vm728 = vweird.f32 %v720
  %vm729 = vweird.f32 %v722
  %vm730 = vmor %vm728, %vm729
  %v731 = vsel %vm730, %v722, %v727
  %v732 = vrsqrt.pop %v721
  %v733 = vmul.f32 %v732, %v721
  %v734 = vmul.f32 %v733, %v732
  %v735 = vmul.f32 0.5, %v734
  %v736 = vsub.f32 1.5, %v735
  %v737 = vmul.f32 %v732, %v736
  %vm738 = vweird.f32 %v721
  %vm739 = vweird.f32 %v732
  %vm740 = vmor %vm738, %vm739
  %v741 = vsel %vm740, %v732, %v737
  %v742 = vmul.f32 %v718, %v731
  %v743 = vmul.f32 %v719, %v741
  %v745 = vperm.slane %v646, 0
  %v747 = vmul.f32 %v742, %v745
  %v748 = vmul.f32 %v743, %v745
  %v750 = vperm.slane %v647, 0
  %v752 = vadd.f32 %v747, %v750
  %v753 = vadd.f32 %v748, %v750
  %754 = vst [vmem:[%s17] sm:$0xff] %v752
  %755 = vst [vmem:[%s17 + $0x8] sm:$0xff] %v753
  // Predicated region
  $region70: #{_forward.17} parent=0 // pred_check
    _
  $region71: #{_forward.17} parent=0 // pred_check_branch
    %757 = sbr.rel (0) target = $region73
  $region72: #{_forward.17} parent=0 // pred_region
    _
  $region73: #{_forward.17} parent=0 // pred_fallthru
    _
  // Predicated region
  $region74: #{_forward.17} parent=0 // pred_check
    _
  $region75: #{_forward.17} parent=0 // pred_check_branch
    %759 = sbr.rel (0) target = $region77
  $region76: #{_forward.17} parent=0 // pred_region
    _
  $region77: #{_forward.17} parent=0 // pred_fallthru
    _

// kernel: _forward.18
$region0: #{_forward.18}
  #allocation0 [shape = 'u32[]', space=smem, size = 0x4, offset = 0x4, fixed_abs, tag = 'smem constant byte address 0x4 - core index']
  #allocation1 [shape = 'u32[72,128]{1,0:T(1,128)}', space=vmem, size = 0x9000, scoped, tag = 'internal scratch']
  %s0 = inlined_call_operand.vmem [shape: f32[8,128], index: 0, kind: input, shape index: {}]
  %s1 = inlined_call_operand.vmem [shape: f32[8,128], index: 1, kind: input, shape index: {}]
  %s2 = inlined_call_operand.vmem [shape: bf16[128,128], index: 2, kind: input, shape index: {}]
  %s3 = inlined_call_operand.vmem [shape: bf16[128,128], index: 3, kind: input, shape index: {}]
  %s4 = inlined_call_operand.vmem [shape: f32[1,128], index: 4, kind: input, shape index: {}, may-alias: {4,6,8,10}]
  %s5 = inlined_call_operand.vmem [shape: bf16[128,128], index: 5, kind: input, shape index: {}]
  %s6 = inlined_call_operand.vmem [shape: f32[1,128], index: 6, kind: input, shape index: {}, may-alias: {4,6,8,10}]
  %s7 = inlined_call_operand.vmem [shape: bf16[128,128], index: 7, kind: input, shape index: {}]
  %s8 = inlined_call_operand.vmem [shape: f32[1,128], index: 8, kind: input, shape index: {}, may-alias: {4,6,8,10}]
  %s9 = inlined_call_operand.vmem [shape: f32[1,128], index: 9, kind: input, shape index: {}]
  %s10 = inlined_call_operand.vmem [shape: f32[1,128], index: 10, kind: input, shape index: {}, may-alias: {4,6,8,10}]
  %s11 = inlined_call_operand.vmem [shape: f32[128,128], index: 11, kind: input, shape index: {}]
  %s12 = inlined_call_operand.vmem [shape: f32[8,128], index: 12, kind: output, shape index: {}]
  %s13 = sld [smem:[#allocation0]]
  $region58: #{_forward.18} parent=0
    _
  %s15 = ssub.s32 1, %s13
  %s16 = scalar_select 0, %s15, %s13
  // Predicated region
  $region2: #{_forward.18} parent=0 // pred_check
    _
  $region3: #{_forward.18} parent=0 // pred_check_branch
    %18 = sbr.rel (0) target = $region5
  $region4: #{_forward.18} parent=0 // pred_region
    _
  $region5: #{_forward.18} parent=0 // pred_fallthru
    _
  // Predicated region
  $region6: #{_forward.18} parent=0 // pred_check
    _
  $region7: #{_forward.18} parent=0 // pred_check_branch
    %20 = sbr.rel (0) target = $region9
  $region8: #{_forward.18} parent=0 // pred_region
    _
  $region9: #{_forward.18} parent=0 // pred_fallthru
    _
  // Predicated region
  $region10: #{_forward.18} parent=0 // pred_check
    _
  $region11: #{_forward.18} parent=0 // pred_check_branch
    %22 = sbr.rel (0) target = $region13
  $region12: #{_forward.18} parent=0 // pred_region
    _
  $region13: #{_forward.18} parent=0 // pred_fallthru
    _
  // Predicated region
  $region14: #{_forward.18} parent=0 // pred_check
    _
  $region15: #{_forward.18} parent=0 // pred_check_branch
    %24 = sbr.rel (0) target = $region17
  $region16: #{_forward.18} parent=0 // pred_region
    _
  $region17: #{_forward.18} parent=0 // pred_fallthru
    _
  // Predicated region
  $region18: #{_forward.18} parent=0 // pred_check
    _
  $region19: #{_forward.18} parent=0 // pred_check_branch
    %26 = sbr.rel (0) target = $region21
  $region20: #{_forward.18} parent=0 // pred_region
    _
  $region21: #{_forward.18} parent=0 // pred_fallthru
    _
  // Predicated region
  $region22: #{_forward.18} parent=0 // pred_check
    _
  $region23: #{_forward.18} parent=0 // pred_check_branch
    %28 = sbr.rel (0) target = $region25
  $region24: #{_forward.18} parent=0 // pred_region
    _
  $region25: #{_forward.18} parent=0 // pred_fallthru
    _
  // Predicated region
  $region26: #{_forward.18} parent=0 // pred_check
    _
  $region27: #{_forward.18} parent=0 // pred_check_branch
    %30 = sbr.rel (0) target = $region29
  $region28: #{_forward.18} parent=0 // pred_region
    _
  $region29: #{_forward.18} parent=0 // pred_fallthru
    _
  // Predicated region
  $region30: #{_forward.18} parent=0 // pred_check
    _
  $region31: #{_forward.18} parent=0 // pred_check_branch
    %32 = sbr.rel (0) target = $region33
  $region32: #{_forward.18} parent=0 // pred_region
    _
  $region33: #{_forward.18} parent=0 // pred_fallthru
    _
  // Predicated region
  $region34: #{_forward.18} parent=0 // pred_check
    _
  $region35: #{_forward.18} parent=0 // pred_check_branch
    %34 = sbr.rel (0) target = $region37
  $region36: #{_forward.18} parent=0 // pred_region
    _
  $region37: #{_forward.18} parent=0 // pred_fallthru
    _
  // Predicated region
  $region38: #{_forward.18} parent=0 // pred_check
    _
  $region39: #{_forward.18} parent=0 // pred_check_branch
    %36 = sbr.rel (0) target = $region41
  $region40: #{_forward.18} parent=0 // pred_region
    _
  $region41: #{_forward.18} parent=0 // pred_fallthru
    _
  // Predicated region
  $region42: #{_forward.18} parent=0 // pred_check
    _
  $region43: #{_forward.18} parent=0 // pred_check_branch
    %38 = sbr.rel (0) target = $region45
  $region44: #{_forward.18} parent=0 // pred_region
    _
  $region45: #{_forward.18} parent=0 // pred_fallthru
    _
  // Predicated region
  $region46: #{_forward.18} parent=0 // pred_check
    _
  $region47: #{_forward.18} parent=0 // pred_check_branch
    %40 = sbr.rel (0) target = $region49
  $region48: #{_forward.18} parent=0 // pred_region
    _
  $region49: #{_forward.18} parent=0 // pred_fallthru
    _
  %v41 = vld [vmem:[%s0] sm:$0xff]
  %v42 = vpack.c.bf16 %v41, %v41
  %v43 = vld [vmem:[%s2] sm:$0xf]
  %v44 = vld [vmem:[%s2 + $0x4] sm:$0xf]
  %v45 = vld [vmem:[%s2 + $0x8] sm:$0xf]
  %v46 = vld [vmem:[%s2 + $0xc] sm:$0xf]
  %v47 = vld [vmem:[%s2 + $0x10] sm:$0xf]
  %v48 = vld [vmem:[%s2 + $0x14] sm:$0xf]
  %v49 = vld [vmem:[%s2 + $0x18] sm:$0xf]
  %v50 = vld [vmem:[%s2 + $0x1c] sm:$0xf]
  %v51 = vld [vmem:[%s2 + $0x20] sm:$0xf]
  %v52 = vld [vmem:[%s2 + $0x24] sm:$0xf]
  %v53 = vld [vmem:[%s2 + $0x28] sm:$0xf]
  %v54 = vld [vmem:[%s2 + $0x2c] sm:$0xf]
  %v55 = vld [vmem:[%s2 + $0x30] sm:$0xf]
  %v56 = vld [vmem:[%s2 + $0x34] sm:$0xf]
  %v57 = vld [vmem:[%s2 + $0x38] sm:$0xf]
  %v58 = vld [vmem:[%s2 + $0x3c] sm:$0xf]
  %v59 = vld [vmem:[%s1] sm:$0xff]
  %v60 = vpack.c.bf16 %v59, %v59
  %v61 = vld [vmem:[%s3] sm:$0xf]
  %v62 = vld [vmem:[%s3 + $0x4] sm:$0xf]
  %v63 = vld [vmem:[%s3 + $0x8] sm:$0xf]
  %v64 = vld [vmem:[%s3 + $0xc] sm:$0xf]
  %v65 = vld [vmem:[%s3 + $0x10] sm:$0xf]
  %v66 = vld [vmem:[%s3 + $0x14] sm:$0xf]
  %v67 = vld [vmem:[%s3 + $0x18] sm:$0xf]
  %v68 = vld [vmem:[%s3 + $0x1c] sm:$0xf]
  %v69 = vld [vmem:[%s3 + $0x20] sm:$0xf]
  %v70 = vld [vmem:[%s3 + $0x24] sm:$0xf]
  %v71 = vld [vmem:[%s3 + $0x28] sm:$0xf]
  %v72 = vld [vmem:[%s3 + $0x2c] sm:$0xf]
  %v73 = vld [vmem:[%s3 + $0x30] sm:$0xf]
  %v74 = vld [vmem:[%s3 + $0x34] sm:$0xf]
  %v75 = vld [vmem:[%s3 + $0x38] sm:$0xf]
  %v76 = vld [vmem:[%s3 + $0x3c] sm:$0xf]
  %v93 = vunpack.c.l.b16 %v61
  %v94 = vunpack.c.l.b16 %v62
  %v95 = vunpack.c.l.b16 %v63
  %v96 = vunpack.c.l.b16 %v64
  %v97 = vunpack.c.l.b16 %v65
  %v98 = vunpack.c.l.b16 %v66
  %v99 = vunpack.c.l.b16 %v67
  %v100 = vunpack.c.l.b16 %v68
  %v101 = vunpack.c.l.b16 %v69
  %v102 = vunpack.c.l.b16 %v70
  %v103 = vunpack.c.l.b16 %v71
  %v104 = vunpack.c.l.b16 %v72
  %v105 = vunpack.c.l.b16 %v73
  %v106 = vunpack.c.l.b16 %v74
  %v107 = vunpack.c.l.b16 %v75
  %v108 = vunpack.c.l.b16 %v76
  %v109 = vpack.c.b16 %v94, %v93
  %v110 = vpack.c.b16 %v96, %v95
  %v111 = vpack.c.b16 %v98, %v97
  %v112 = vpack.c.b16 %v100, %v99
  %v113 = vpack.c.b16 %v102, %v101
  %v114 = vpack.c.b16 %v104, %v103
  %v115 = vpack.c.b16 %v106, %v105
  %v116 = vpack.c.b16 %v108, %v107
  %125 = vmatpush.bf16.msra.mxu0 %v116
  %126 = vmatpush.bf16.msra.mxu0 %v115
  %127 = vmatpush.bf16.msra.mxu0 %v114
  %128 = vmatpush.bf16.msra.mxu0 %v113
  %129 = vmatpush.bf16.msra.mxu0 %v112
  %130 = vmatpush.bf16.msra.mxu0 %v111
  %131 = vmatpush.bf16.msra.mxu0 %v110
  %132 = vmatpush.bf16.msra.mxu0 %v109
  %133 = vmatmul.bf16.gmra.mxu0 %v60
  %v134 = vpop.f32.mrf.mxu0
  %v135 = vadd.f32 0.0, %v134
  %v136 = vpop.f32.mrf.mxu0
  %137 = vdwg.mxu0
  %v154 = vunpack.c.l.b16 %v43
  %v155 = vunpack.c.l.b16 %v44
  %v156 = vunpack.c.l.b16 %v45
  %v157 = vunpack.c.l.b16 %v46
  %v158 = vunpack.c.l.b16 %v47
  %v159 = vunpack.c.l.b16 %v48
  %v160 = vunpack.c.l.b16 %v49
  %v161 = vunpack.c.l.b16 %v50
  %v162 = vunpack.c.l.b16 %v51
  %v163 = vunpack.c.l.b16 %v52
  %v164 = vunpack.c.l.b16 %v53
  %v165 = vunpack.c.l.b16 %v54
  %v166 = vunpack.c.l.b16 %v55
  %v167 = vunpack.c.l.b16 %v56
  %v168 = vunpack.c.l.b16 %v57
  %v169 = vunpack.c.l.b16 %v58
  %v170 = vpack.c.b16 %v155, %v154
  %v171 = vpack.c.b16 %v157, %v156
  %v172 = vpack.c.b16 %v159, %v158
  %v173 = vpack.c.b16 %v161, %v160
  %v174 = vpack.c.b16 %v163, %v162
  %v175 = vpack.c.b16 %v165, %v164
  %v176 = vpack.c.b16 %v167, %v166
  %v177 = vpack.c.b16 %v169, %v168
  %186 = vmatpush.bf16.msra.mxu0 %v177
  %187 = vmatpush.bf16.msra.mxu0 %v176
  %188 = vmatpush.bf16.msra.mxu0 %v175
  %189 = vmatpush.bf16.msra.mxu0 %v174
  %190 = vmatpush.bf16.msra.mxu0 %v173
  %191 = vmatpush.bf16.msra.mxu0 %v172
  %192 = vmatpush.bf16.msra.mxu0 %v171
  %193 = vmatpush.bf16.msra.mxu0 %v170
  %194 = vmatmul.bf16.gmra.mxu0 %v42
  %v195 = vpop.f32.mrf.mxu0
  %v196 = vadd.f32 %v135, %v195
  %v197 = vpop.f32.mrf.mxu0
  %198 = vdwg.mxu0
  %v199 = vld [vmem:[%s4] sm:$0x1]
  %v201 = vperm.slane %v199, 0
  %v203 = vadd.f32 %v196, %v201
  %v204 = vmax.f32 %v203, 0.0
  %v205 = vpack.c.bf16 %v204, %v204
  %v206 = vld [vmem:[%s5] sm:$0xf]
  %v207 = vld [vmem:[%s5 + $0x4] sm:$0xf]
  %v208 = vld [vmem:[%s5 + $0x8] sm:$0xf]
  %v209 = vld [vmem:[%s5 + $0xc] sm:$0xf]
  %v210 = vld [vmem:[%s5 + $0x10] sm:$0xf]
  %v211 = vld [vmem:[%s5 + $0x14] sm:$0xf]
  %v212 = vld [vmem:[%s5 + $0x18] sm:$0xf]
  %v213 = vld [vmem:[%s5 + $0x1c] sm:$0xf]
  %v214 = vld [vmem:[%s5 + $0x20] sm:$0xf]
  %v215 = vld [vmem:[%s5 + $0x24] sm:$0xf]
  %v216 = vld [vmem:[%s5 + $0x28] sm:$0xf]
  %v217 = vld [vmem:[%s5 + $0x2c] sm:$0xf]
  %v218 = vld [vmem:[%s5 + $0x30] sm:$0xf]
  %v219 = vld [vmem:[%s5 + $0x34] sm:$0xf]
  %v220 = vld [vmem:[%s5 + $0x38] sm:$0xf]
  %v221 = vld [vmem:[%s5 + $0x3c] sm:$0xf]
  %v222 = vld [vmem:[%s6] sm:$0x1]
  %v224 = vperm.slane %v222, 0
  %v242 = vunpack.c.l.b16 %v206
  %v243 = vunpack.c.l.b16 %v207
  %v244 = vunpack.c.l.b16 %v208
  %v245 = vunpack.c.l.b16 %v209
  %v246 = vunpack.c.l.b16 %v210
  %v247 = vunpack.c.l.b16 %v211
  %v248 = vunpack.c.l.b16 %v212
  %v249 = vunpack.c.l.b16 %v213
  %v250 = vunpack.c.l.b16 %v214
  %v251 = vunpack.c.l.b16 %v215
  %v252 = vunpack.c.l.b16 %v216
  %v253 = vunpack.c.l.b16 %v217
  %v254 = vunpack.c.l.b16 %v218
  %v255 = vunpack.c.l.b16 %v219
  %v256 = vunpack.c.l.b16 %v220
  %v257 = vunpack.c.l.b16 %v221
  %v258 = vpack.c.b16 %v243, %v242
  %v259 = vpack.c.b16 %v245, %v244
  %v260 = vpack.c.b16 %v247, %v246
  %v261 = vpack.c.b16 %v249, %v248
  %v262 = vpack.c.b16 %v251, %v250
  %v263 = vpack.c.b16 %v253, %v252
  %v264 = vpack.c.b16 %v255, %v254
  %v265 = vpack.c.b16 %v257, %v256
  %274 = vmatpush.bf16.msra.mxu0 %v265
  %275 = vmatpush.bf16.msra.mxu0 %v264
  %276 = vmatpush.bf16.msra.mxu0 %v263
  %277 = vmatpush.bf16.msra.mxu0 %v262
  %278 = vmatpush.bf16.msra.mxu0 %v261
  %279 = vmatpush.bf16.msra.mxu0 %v260
  %280 = vmatpush.bf16.msra.mxu0 %v259
  %281 = vmatpush.bf16.msra.mxu0 %v258
  %282 = vmatmul.bf16.gmra.mxu0 %v205
  %v283 = vpop.f32.mrf.mxu0
  %v284 = vadd.f32 %v224, %v283
  %v285 = vpop.f32.mrf.mxu0
  %286 = vdwg.mxu0
  %v287 = vmax.f32 %v284, 0.0
  %v288 = vpack.c.bf16 %v287, %v287
  %v289 = vld [vmem:[%s7] sm:$0xf]
  %v290 = vld [vmem:[%s7 + $0x4] sm:$0xf]
  %v291 = vld [vmem:[%s7 + $0x8] sm:$0xf]
  %v292 = vld [vmem:[%s7 + $0xc] sm:$0xf]
  %v293 = vld [vmem:[%s7 + $0x10] sm:$0xf]
  %v294 = vld [vmem:[%s7 + $0x14] sm:$0xf]
  %v295 = vld [vmem:[%s7 + $0x18] sm:$0xf]
  %v296 = vld [vmem:[%s7 + $0x1c] sm:$0xf]
  %v297 = vld [vmem:[%s7 + $0x20] sm:$0xf]
  %v298 = vld [vmem:[%s7 + $0x24] sm:$0xf]
  %v299 = vld [vmem:[%s7 + $0x28] sm:$0xf]
  %v300 = vld [vmem:[%s7 + $0x2c] sm:$0xf]
  %v301 = vld [vmem:[%s7 + $0x30] sm:$0xf]
  %v302 = vld [vmem:[%s7 + $0x34] sm:$0xf]
  %v303 = vld [vmem:[%s7 + $0x38] sm:$0xf]
  %v304 = vld [vmem:[%s7 + $0x3c] sm:$0xf]
  %v305 = vld [vmem:[%s8] sm:$0x1]
  %v307 = vperm.slane %v305, 0
  %v325 = vunpack.c.l.b16 %v289
  %v326 = vunpack.c.l.b16 %v290
  %v327 = vunpack.c.l.b16 %v291
  %v328 = vunpack.c.l.b16 %v292
  %v329 = vunpack.c.l.b16 %v293
  %v330 = vunpack.c.l.b16 %v294
  %v331 = vunpack.c.l.b16 %v295
  %v332 = vunpack.c.l.b16 %v296
  %v333 = vunpack.c.l.b16 %v297
  %v334 = vunpack.c.l.b16 %v298
  %v335 = vunpack.c.l.b16 %v299
  %v336 = vunpack.c.l.b16 %v300
  %v337 = vunpack.c.l.b16 %v301
  %v338 = vunpack.c.l.b16 %v302
  %v339 = vunpack.c.l.b16 %v303
  %v340 = vunpack.c.l.b16 %v304
  %v341 = vpack.c.b16 %v326, %v325
  %v342 = vpack.c.b16 %v328, %v327
  %v343 = vpack.c.b16 %v330, %v329
  %v344 = vpack.c.b16 %v332, %v331
  %v345 = vpack.c.b16 %v334, %v333
  %v346 = vpack.c.b16 %v336, %v335
  %v347 = vpack.c.b16 %v338, %v337
  %v348 = vpack.c.b16 %v340, %v339
  %357 = vmatpush.bf16.msra.mxu0 %v348
  %358 = vmatpush.bf16.msra.mxu0 %v347
  %359 = vmatpush.bf16.msra.mxu0 %v346
  %360 = vmatpush.bf16.msra.mxu0 %v345
  %361 = vmatpush.bf16.msra.mxu0 %v344
  %362 = vmatpush.bf16.msra.mxu0 %v343
  %363 = vmatpush.bf16.msra.mxu0 %v342
  %364 = vmatpush.bf16.msra.mxu0 %v341
  %365 = vmatmul.bf16.gmra.mxu0 %v288
  %v366 = vpop.f32.mrf.mxu0
  %v367 = vadd.f32 %v307, %v366
  %v368 = vpop.f32.mrf.mxu0
  %369 = vdwg.mxu0
  %v370 = vld [vmem:[%s9] sm:$0x1]
  %v371 = vld [vmem:[%s10] sm:$0x1]
  %v372 = vld [vmem:[%s11] sm:$0xff]
  %v373 = vld [vmem:[%s11 + $0x8] sm:$0xff]
  %v374 = vld [vmem:[%s11 + $0x10] sm:$0xff]
  %v375 = vld [vmem:[%s11 + $0x18] sm:$0xff]
  %v376 = vld [vmem:[%s11 + $0x20] sm:$0xff]
  %v377 = vld [vmem:[%s11 + $0x28] sm:$0xff]
  %v378 = vld [vmem:[%s11 + $0x30] sm:$0xff]
  %v379 = vld [vmem:[%s11 + $0x38] sm:$0xff]
  %v380 = vld [vmem:[%s11 + $0x40] sm:$0xff]
  %v381 = vld [vmem:[%s11 + $0x48] sm:$0xff]
  %v382 = vld [vmem:[%s11 + $0x50] sm:$0xff]
  %v383 = vld [vmem:[%s11 + $0x58] sm:$0xff]
  %v384 = vld [vmem:[%s11 + $0x60] sm:$0xff]
  %v385 = vld [vmem:[%s11 + $0x68] sm:$0xff]
  %v386 = vld [vmem:[%s11 + $0x70] sm:$0xff]
  %v387 = vld [vmem:[%s11 + $0x78] sm:$0xff]
  %388 = vmatpush.msra.mxu0 %v387
  %389 = vmatpush.msra.mxu0 %v386
  %390 = vmatpush.msra.mxu0 %v385
  %391 = vmatpush.msra.mxu0 %v384
  %392 = vmatpush.msra.mxu0 %v383
  %393 = vmatpush.msra.mxu0 %v382
  %394 = vmatpush.msra.mxu0 %v381
  %395 = vmatpush.msra.mxu0 %v380
  %396 = vmatpush.msra.mxu0 %v379
  %397 = vmatpush.msra.mxu0 %v378
  %398 = vmatpush.msra.mxu0 %v377
  %399 = vmatpush.msra.mxu0 %v376
  %400 = vmatpush.msra.mxu0 %v375
  %401 = vmatpush.msra.mxu0 %v374
  %402 = vmatpush.msra.mxu0 %v373
  %403 = vmatpush.msra.mxu0 %v372
  %404 = vmatmul.f32.gmra.mxu0 %v367
  %v405 = vpop.f32.mrf.mxu0
  %v406 = vadd.f32 0.0, %v405
  %407 = vdwg.mxu0
  %v408 = vmul.f32 %v367, %v367
  %409 = vmatpush.msra.mxu0 %v387
  %410 = vmatpush.msra.mxu0 %v386
  %411 = vmatpush.msra.mxu0 %v385
  %412 = vmatpush.msra.mxu0 %v384
  %413 = vmatpush.msra.mxu0 %v383
  %414 = vmatpush.msra.mxu0 %v382
  %415 = vmatpush.msra.mxu0 %v381
  %416 = vmatpush.msra.mxu0 %v380
  %417 = vmatpush.msra.mxu0 %v379
  %418 = vmatpush.msra.mxu0 %v378
  %419 = vmatpush.msra.mxu0 %v377
  %420 = vmatpush.msra.mxu0 %v376
  %421 = vmatpush.msra.mxu0 %v375
  %422 = vmatpush.msra.mxu0 %v374
  %423 = vmatpush.msra.mxu0 %v373
  %424 = vmatpush.msra.mxu0 %v372
  %425 = vmatmul.f32.gmra.mxu0 %v408
  %v426 = vpop.f32.mrf.mxu0
  %v427 = vadd.f32 0.0, %v426
  %428 = vdwg.mxu0
  %v429 = vmul.f32 %v406, %v406
  %v430 = vsub.f32 %v427, %v429
  %v431 = vmax.f32 %v430, 0.0
  %v432 = vsub.f32 %v367, %v406
  %v433 = vadd.f32 %v431, 1e-05
  %v434 = vrsqrt.pop %v433
  %v435 = vmul.f32 %v434, %v433
  %v436 = vmul.f32 %v435, %v434
  %v437 = vmul.f32 0.5, %v436
  %v438 = vsub.f32 1.5, %v437
  %v439 = vmul.f32 %v434, %v438
  %vm440 = vweird.f32 %v433
  %vm441 = vweird.f32 %v434
  %vm442 = vmor %vm440, %vm441
  %v443 = vsel %vm442, %v434, %v439
  %v444 = vmul.f32 %v432, %v443
  %v446 = vperm.slane %v370, 0
  %v448 = vmul.f32 %v444, %v446
  %v450 = vperm.slane %v371, 0
  %v452 = vadd.f32 %v448, %v450
  %v453 = vadd.f32 %v41, %v452
  %454 = vst [vmem:[%s12] sm:$0xff] %v453
  // Predicated region
  $region50: #{_forward.18} parent=0 // pred_check
    _
  $region51: #{_forward.18} parent=0 // pred_check_branch
    %456 = sbr.rel (0) target = $region53
  $region52: #{_forward.18} parent=0 // pred_region
    _
  $region53: #{_forward.18} parent=0 // pred_fallthru
    _
  // Predicated region
  $region54: #{_forward.18} parent=0 // pred_check
    _
  $region55: #{_forward.18} parent=0 // pred_check_branch
    %458 = sbr.rel (0) target = $region57
  $region56: #{_forward.18} parent=0 // pred_region
    _
  $region57: #{_forward.18} parent=0 // pred_fallthru
    _

// kernel: _forward.23
$region0: #{_forward.23}
  #allocation0 [shape = 'u32[]', space=smem, size = 0x4, offset = 0x4, fixed_abs, tag = 'smem constant byte address 0x4 - core index']
  #allocation1 [shape = 'u32[72,128]{1,0:T(1,128)}', space=vmem, size = 0x9000, scoped, tag = 'internal scratch']
  %s0 = inlined_call_operand.vmem [shape: f32[32,128], index: 0, kind: input, shape index: {}]
  %s1 = inlined_call_operand.vmem [shape: f32[32,16], index: 1, kind: input, shape index: {}]
  %s2 = inlined_call_operand.vmem [shape: f32[1,12], index: 2, kind: input, shape index: {}]
  %s3 = inlined_call_operand.vmem [shape: f32[1,12], index: 3, kind: input, shape index: {}]
  %s4 = inlined_call_operand.vmem [shape: f32[16,12], index: 4, kind: input, shape index: {}]
  %s5 = inlined_call_operand.vmem [shape: f32[16,12], index: 5, kind: input, shape index: {}]
  %s6 = inlined_call_operand.vmem [shape: bf16[128,128], index: 6, kind: input, shape index: {}]
  %s7 = inlined_call_operand.vmem [shape: f32[1,128], index: 7, kind: input, shape index: {}, may-alias: {7,9}]
  %s8 = inlined_call_operand.vmem [shape: bf16[128,128], index: 8, kind: input, shape index: {}]
  %s9 = inlined_call_operand.vmem [shape: f32[1,128], index: 9, kind: input, shape index: {}, may-alias: {7,9}]
  %s10 = inlined_call_operand.vmem [shape: bf16[128,12], index: 10, kind: input, shape index: {}]
  %s11 = inlined_call_operand.vmem [shape: f32[1,12], index: 11, kind: input, shape index: {}]
  %s12 = inlined_call_operand.vmem [shape: f32[32,12], index: 12, kind: output, shape index: {}]
  %s13 = sld [smem:[#allocation0]]
  $region58: #{_forward.23} parent=0
    _
  %s15 = ssub.s32 1, %s13
  %s16 = scalar_select 0, %s15, %s13
  // Predicated region
  $region2: #{_forward.23} parent=0 // pred_check
    _
  $region3: #{_forward.23} parent=0 // pred_check_branch
    %18 = sbr.rel (0) target = $region5
  $region4: #{_forward.23} parent=0 // pred_region
    _
  $region5: #{_forward.23} parent=0 // pred_fallthru
    _
  // Predicated region
  $region6: #{_forward.23} parent=0 // pred_check
    _
  $region7: #{_forward.23} parent=0 // pred_check_branch
    %20 = sbr.rel (0) target = $region9
  $region8: #{_forward.23} parent=0 // pred_region
    _
  $region9: #{_forward.23} parent=0 // pred_fallthru
    _
  // Predicated region
  $region10: #{_forward.23} parent=0 // pred_check
    _
  $region11: #{_forward.23} parent=0 // pred_check_branch
    %22 = sbr.rel (0) target = $region13
  $region12: #{_forward.23} parent=0 // pred_region
    _
  $region13: #{_forward.23} parent=0 // pred_fallthru
    _
  // Predicated region
  $region14: #{_forward.23} parent=0 // pred_check
    _
  $region15: #{_forward.23} parent=0 // pred_check_branch
    %24 = sbr.rel (0) target = $region17
  $region16: #{_forward.23} parent=0 // pred_region
    _
  $region17: #{_forward.23} parent=0 // pred_fallthru
    _
  // Predicated region
  $region18: #{_forward.23} parent=0 // pred_check
    _
  $region19: #{_forward.23} parent=0 // pred_check_branch
    %26 = sbr.rel (0) target = $region21
  $region20: #{_forward.23} parent=0 // pred_region
    _
  $region21: #{_forward.23} parent=0 // pred_fallthru
    _
  // Predicated region
  $region22: #{_forward.23} parent=0 // pred_check
    _
  $region23: #{_forward.23} parent=0 // pred_check_branch
    %28 = sbr.rel (0) target = $region25
  $region24: #{_forward.23} parent=0 // pred_region
    _
  $region25: #{_forward.23} parent=0 // pred_fallthru
    _
  // Predicated region
  $region26: #{_forward.23} parent=0 // pred_check
    _
  $region27: #{_forward.23} parent=0 // pred_check_branch
    %30 = sbr.rel (0) target = $region29
  $region28: #{_forward.23} parent=0 // pred_region
    _
  $region29: #{_forward.23} parent=0 // pred_fallthru
    _
  // Predicated region
  $region30: #{_forward.23} parent=0 // pred_check
    _
  $region31: #{_forward.23} parent=0 // pred_check_branch
    %32 = sbr.rel (0) target = $region33
  $region32: #{_forward.23} parent=0 // pred_region
    _
  $region33: #{_forward.23} parent=0 // pred_fallthru
    _
  // Predicated region
  $region34: #{_forward.23} parent=0 // pred_check
    _
  $region35: #{_forward.23} parent=0 // pred_check_branch
    %34 = sbr.rel (0) target = $region37
  $region36: #{_forward.23} parent=0 // pred_region
    _
  $region37: #{_forward.23} parent=0 // pred_fallthru
    _
  // Predicated region
  $region38: #{_forward.23} parent=0 // pred_check
    _
  $region39: #{_forward.23} parent=0 // pred_check_branch
    %36 = sbr.rel (0) target = $region41
  $region40: #{_forward.23} parent=0 // pred_region
    _
  $region41: #{_forward.23} parent=0 // pred_fallthru
    _
  // Predicated region
  $region42: #{_forward.23} parent=0 // pred_check
    _
  $region43: #{_forward.23} parent=0 // pred_check_branch
    %38 = sbr.rel (0) target = $region45
  $region44: #{_forward.23} parent=0 // pred_region
    _
  $region45: #{_forward.23} parent=0 // pred_fallthru
    _
  // Predicated region
  $region46: #{_forward.23} parent=0 // pred_check
    _
  $region47: #{_forward.23} parent=0 // pred_check_branch
    %40 = sbr.rel (0) target = $region49
  $region48: #{_forward.23} parent=0 // pred_region
    _
  $region49: #{_forward.23} parent=0 // pred_fallthru
    _
  %v41 = vld [vmem:[%s1] sm:$0xff]
  %v42 = vld [vmem:[%s1 + $0x8] sm:$0xff]
  %v43 = vld [vmem:[%s1 + $0x10] sm:$0xff]
  %v44 = vld [vmem:[%s1 + $0x18] sm:$0xff]
  %v45 = vld [vmem:[%s0] sm:$0xff]
  %v46 = vld [vmem:[%s0 + $0x8] sm:$0xff]
  %v47 = vld [vmem:[%s0 + $0x10] sm:$0xff]
  %v48 = vld [vmem:[%s0 + $0x18] sm:$0xff]
  %v49 = vpack.c.bf16 %v46, %v45
  %v50 = vpack.c.bf16 %v48, %v47
  %v51 = vld [vmem:[%s6] sm:$0xf]
  %v52 = vld [vmem:[%s6 + $0x4] sm:$0xf]
  %v53 = vld [vmem:[%s6 + $0x8] sm:$0xf]
  %v54 = vld [vmem:[%s6 + $0xc] sm:$0xf]
  %v55 = vld [vmem:[%s6 + $0x10] sm:$0xf]
  %v56 = vld [vmem:[%s6 + $0x14] sm:$0xf]
  %v57 = vld [vmem:[%s6 + $0x18] sm:$0xf]
  %v58 = vld [vmem:[%s6 + $0x1c] sm:$0xf]
  %v59 = vld [vmem:[%s6 + $0x20] sm:$0xf]
  %v60 = vld [vmem:[%s6 + $0x24] sm:$0xf]
  %v61 = vld [vmem:[%s6 + $0x28] sm:$0xf]
  %v62 = vld [vmem:[%s6 + $0x2c] sm:$0xf]
  %v63 = vld [vmem:[%s6 + $0x30] sm:$0xf]
  %v64 = vld [vmem:[%s6 + $0x34] sm:$0xf]
  %v65 = vld [vmem:[%s6 + $0x38] sm:$0xf]
  %v66 = vld [vmem:[%s6 + $0x3c] sm:$0xf]
  %v67 = vld [vmem:[%s7] sm:$0x1]
  %v69 = vperm.slane %v67, 0
  %v87 = vunpack.c.l.b16 %v51
  %v88 = vunpack.c.l.b16 %v52
  %v89 = vunpack.c.l.b16 %v53
  %v90 = vunpack.c.l.b16 %v54
  %v91 = vunpack.c.l.b16 %v55
  %v92 = vunpack.c.l.b16 %v56
  %v93 = vunpack.c.l.b16 %v57
  %v94 = vunpack.c.l.b16 %v58
  %v95 = vunpack.c.l.b16 %v59
  %v96 = vunpack.c.l.b16 %v60
  %v97 = vunpack.c.l.b16 %v61
  %v98 = vunpack.c.l.b16 %v62
  %v99 = vunpack.c.l.b16 %v63
  %v100 = vunpack.c.l.b16 %v64
  %v101 = vunpack.c.l.b16 %v65
  %v102 = vunpack.c.l.b16 %v66
  %v103 = vpack.c.b16 %v88, %v87
  %v104 = vpack.c.b16 %v90, %v89
  %v105 = vpack.c.b16 %v92, %v91
  %v106 = vpack.c.b16 %v94, %v93
  %v107 = vpack.c.b16 %v96, %v95
  %v108 = vpack.c.b16 %v98, %v97
  %v109 = vpack.c.b16 %v100, %v99
  %v110 = vpack.c.b16 %v102, %v101
  %119 = vmatpush.bf16.msra.mxu0 %v110
  %120 = vmatpush.bf16.msra.mxu0 %v109
  %121 = vmatpush.bf16.msra.mxu0 %v108
  %122 = vmatpush.bf16.msra.mxu0 %v107
  %123 = vmatpush.bf16.msra.mxu0 %v106
  %124 = vmatpush.bf16.msra.mxu0 %v105
  %125 = vmatpush.bf16.msra.mxu0 %v104
  %126 = vmatpush.bf16.msra.mxu0 %v103
  %127 = vmatmul.bf16.gmra.mxu0 %v49
  %v128 = vpop.f32.mrf.mxu0
  %v129 = vadd.f32 %v69, %v128
  %v130 = vpop.f32.mrf.mxu0
  %v131 = vadd.f32 %v69, %v130
  %132 = vmatmul.bf16.gmra.mxu0 %v50
  %v133 = vpop.f32.mrf.mxu0
  %v134 = vadd.f32 %v69, %v133
  %v135 = vpop.f32.mrf.mxu0
  %v136 = vadd.f32 %v69, %v135
  %137 = vdwg.mxu0
  %v138 = vmax.f32 %v129, 0.0
  %v139 = vmax.f32 %v131, 0.0
  %v140 = vmax.f32 %v134, 0.0
  %v141 = vmax.f32 %v136, 0.0
  %v142 = vpack.c.bf16 %v139, %v138
  %v143 = vpack.c.bf16 %v141, %v140
  %v144 = vld [vmem:[%s8] sm:$0xf]
  %v145 = vld [vmem:[%s8 + $0x4] sm:$0xf]
  %v146 = vld [vmem:[%s8 + $0x8] sm:$0xf]
  %v147 = vld [vmem:[%s8 + $0xc] sm:$0xf]
  %v148 = vld [vmem:[%s8 + $0x10] sm:$0xf]
  %v149 = vld [vmem:[%s8 + $0x14] sm:$0xf]
  %v150 = vld [vmem:[%s8 + $0x18] sm:$0xf]
  %v151 = vld [vmem:[%s8 + $0x1c] sm:$0xf]
  %v152 = vld [vmem:[%s8 + $0x20] sm:$0xf]
  %v153 = vld [vmem:[%s8 + $0x24] sm:$0xf]
  %v154 = vld [vmem:[%s8 + $0x28] sm:$0xf]
  %v155 = vld [vmem:[%s8 + $0x2c] sm:$0xf]
  %v156 = vld [vmem:[%s8 + $0x30] sm:$0xf]
  %v157 = vld [vmem:[%s8 + $0x34] sm:$0xf]
  %v158 = vld [vmem:[%s8 + $0x38] sm:$0xf]
  %v159 = vld [vmem:[%s8 + $0x3c] sm:$0xf]
  %v160 = vld [vmem:[%s9] sm:$0x1]
  %v162 = vperm.slane %v160, 0
  %v180 = vunpack.c.l.b16 %v144
  %v181 = vunpack.c.l.b16 %v145
  %v182 = vunpack.c.l.b16 %v146
  %v183 = vunpack.c.l.b16 %v147
  %v184 = vunpack.c.l.b16 %v148
  %v185 = vunpack.c.l.b16 %v149
  %v186 = vunpack.c.l.b16 %v150
  %v187 = vunpack.c.l.b16 %v151
  %v188 = vunpack.c.l.b16 %v152
  %v189 = vunpack.c.l.b16 %v153
  %v190 = vunpack.c.l.b16 %v154
  %v191 = vunpack.c.l.b16 %v155
  %v192 = vunpack.c.l.b16 %v156
  %v193 = vunpack.c.l.b16 %v157
  %v194 = vunpack.c.l.b16 %v158
  %v195 = vunpack.c.l.b16 %v159
  %v196 = vpack.c.b16 %v181, %v180
  %v197 = vpack.c.b16 %v183, %v182
  %v198 = vpack.c.b16 %v185, %v184
  %v199 = vpack.c.b16 %v187, %v186
  %v200 = vpack.c.b16 %v189, %v188
  %v201 = vpack.c.b16 %v191, %v190
  %v202 = vpack.c.b16 %v193, %v192
  %v203 = vpack.c.b16 %v195, %v194
  %212 = vmatpush.bf16.msra.mxu0 %v203
  %213 = vmatpush.bf16.msra.mxu0 %v202
  %214 = vmatpush.bf16.msra.mxu0 %v201
  %215 = vmatpush.bf16.msra.mxu0 %v200
  %216 = vmatpush.bf16.msra.mxu0 %v199
  %217 = vmatpush.bf16.msra.mxu0 %v198
  %218 = vmatpush.bf16.msra.mxu0 %v197
  %219 = vmatpush.bf16.msra.mxu0 %v196
  %220 = vmatmul.bf16.gmra.mxu0 %v142
  %v221 = vpop.f32.mrf.mxu0
  %v222 = vadd.f32 %v162, %v221
  %v223 = vpop.f32.mrf.mxu0
  %v224 = vadd.f32 %v162, %v223
  %225 = vmatmul.bf16.gmra.mxu0 %v143
  %v226 = vpop.f32.mrf.mxu0
  %v227 = vadd.f32 %v162, %v226
  %v228 = vpop.f32.mrf.mxu0
  %v229 = vadd.f32 %v162, %v228
  %230 = vdwg.mxu0
  %v231 = vmax.f32 %v222, 0.0
  %v232 = vmax.f32 %v224, 0.0
  %v233 = vmax.f32 %v227, 0.0
  %v234 = vmax.f32 %v229, 0.0
  %v235 = vpack.c.bf16 %v232, %v231
  %v236 = vpack.c.bf16 %v234, %v233
  %v237 = vld [vmem:[%s10] sm:$0xf]
  %v238 = vld [vmem:[%s10 + $0x4] sm:$0xf]
  %v239 = vld [vmem:[%s10 + $0x8] sm:$0xf]
  %v240 = vld [vmem:[%s10 + $0xc] sm:$0xf]
  %v241 = vld [vmem:[%s10 + $0x10] sm:$0xf]
  %v242 = vld [vmem:[%s10 + $0x14] sm:$0xf]
  %v243 = vld [vmem:[%s10 + $0x18] sm:$0xf]
  %v244 = vld [vmem:[%s10 + $0x1c] sm:$0xf]
  %v245 = vld [vmem:[%s10 + $0x20] sm:$0xf]
  %v246 = vld [vmem:[%s10 + $0x24] sm:$0xf]
  %v247 = vld [vmem:[%s10 + $0x28] sm:$0xf]
  %v248 = vld [vmem:[%s10 + $0x2c] sm:$0xf]
  %v249 = vld [vmem:[%s10 + $0x30] sm:$0xf]
  %v250 = vld [vmem:[%s10 + $0x34] sm:$0xf]
  %v251 = vld [vmem:[%s10 + $0x38] sm:$0xf]
  %v252 = vld [vmem:[%s10 + $0x3c] sm:$0xf]
  %v253 = vld [vmem:[%s11] sm:$0x1]
  %v255 = vperm.slane %v253, 0
  %v273 = vunpack.c.l.b16 %v237
  %v274 = vunpack.c.l.b16 %v238
  %v275 = vunpack.c.l.b16 %v239
  %v276 = vunpack.c.l.b16 %v240
  %v277 = vunpack.c.l.b16 %v241
  %v278 = vunpack.c.l.b16 %v242
  %v279 = vunpack.c.l.b16 %v243
  %v280 = vunpack.c.l.b16 %v244
  %v281 = vunpack.c.l.b16 %v245
  %v282 = vunpack.c.l.b16 %v246
  %v283 = vunpack.c.l.b16 %v247
  %v284 = vunpack.c.l.b16 %v248
  %v285 = vunpack.c.l.b16 %v249
  %v286 = vunpack.c.l.b16 %v250
  %v287 = vunpack.c.l.b16 %v251
  %v288 = vunpack.c.l.b16 %v252
  %v289 = vpack.c.b16 %v274, %v273
  %v290 = vpack.c.b16 %v276, %v275
  %v291 = vpack.c.b16 %v278, %v277
  %v292 = vpack.c.b16 %v280, %v279
  %v293 = vpack.c.b16 %v282, %v281
  %v294 = vpack.c.b16 %v284, %v283
  %v295 = vpack.c.b16 %v286, %v285
  %v296 = vpack.c.b16 %v288, %v287
  %305 = vmatpush.bf16.msra.mxu0 %v296
  %306 = vmatpush.bf16.msra.mxu0 %v295
  %307 = vmatpush.bf16.msra.mxu0 %v294
  %308 = vmatpush.bf16.msra.mxu0 %v293
  %309 = vmatpush.bf16.msra.mxu0 %v292
  %310 = vmatpush.bf16.msra.mxu0 %v291
  %311 = vmatpush.bf16.msra.mxu0 %v290
  %312 = vmatpush.bf16.msra.mxu0 %v289
  %313 = vmatmul.bf16.gmra.mxu0 %v235
  %v314 = vpop.f32.mrf.mxu0
  %v315 = vadd.f32 %v255, %v314
  %v316 = vpop.f32.mrf.mxu0
  %v317 = vadd.f32 %v255, %v316
  %318 = vmatmul.bf16.gmra.mxu0 %v236
  %v319 = vpop.f32.mrf.mxu0
  %v320 = vadd.f32 %v255, %v319
  %v321 = vpop.f32.mrf.mxu0
  %v322 = vadd.f32 %v255, %v321
  %323 = vdwg.mxu0
  %v324 = vld [vmem:[%s2] sm:$0x1]
  %v326 = vperm.slane %v324, 0
  %v328 = vmul.f32 %v315, %v326
  %v329 = vmul.f32 %v317, %v326
  %v330 = vmul.f32 %v320, %v326
  %v331 = vmul.f32 %v322, %v326
  %v332 = vld [vmem:[%s3] sm:$0x1]
  %v334 = vperm.slane %v332, 0
  %v336 = vadd.f32 %v328, %v334
  %v337 = vadd.f32 %v329, %v334
  %v338 = vadd.f32 %v330, %v334
  %v339 = vadd.f32 %v331, %v334
  %v340 = vld [vmem:[%s4] sm:$0xff]
  %v341 = vld [vmem:[%s4 + $0x8] sm:$0xff]
  %343 = vset.pattern.permute.xlu0 0
  %344 = vperm.xlu0 %343, %v41
  %v345 = vpop.permute.xlu0 %344
  %348 = vset.pattern.permute.xlu0 0
  %349 = vperm.xlu0 %348, %v42
  %v350 = vpop.permute.xlu0 %349
  %353 = vset.pattern.permute.xlu0 0
  %354 = vperm.xlu0 %353, %v43
  %v355 = vpop.permute.xlu0 %354
  %358 = vset.pattern.permute.xlu0 0
  %359 = vperm.xlu0 %358, %v44
  %v360 = vpop.permute.xlu0 %359
  %v362 = vperm.slane %v340, 0
  %v363 = vmul.f32 %v345, %v362
  %v364 = vmul.f32 %v350, %v362
  %v365 = vmul.f32 %v355, %v362
  %v366 = vmul.f32 %v360, %v362
  %367 = vset.pattern.permute.xlu0 1
  %368 = vperm.xlu0 %367, %v41
  %v369 = vpop.permute.xlu0 %368
  %371 = vset.pattern.permute.xlu0 1
  %372 = vperm.xlu0 %371, %v42
  %v373 = vpop.permute.xlu0 %372
  %375 = vset.pattern.permute.xlu0 1
  %376 = vperm.xlu0 %375, %v43
  %v377 = vpop.permute.xlu0 %376
  %379 = vset.pattern.permute.xlu0 1
  %380 = vperm.xlu0 %379, %v44
  %v381 = vpop.permute.xlu0 %380
  %v383 = vperm.slane %v340, 1
  %v384 = vmul.f32 %v369, %v383
  %v385 = vmul.f32 %v373, %v383
  %v386 = vmul.f32 %v377, %v383
  %v387 = vmul.f32 %v381, %v383
  %v388 = vadd.f32 %v363, %v384
  %v389 = vadd.f32 %v364, %v385
  %v390 = vadd.f32 %v365, %v386
  %v391 = vadd.f32 %v366, %v387
  %392 = vset.pattern.permute.xlu0 2
  %393 = vperm.xlu0 %392, %v41
  %v394 = vpop.permute.xlu0 %393
  %396 = vset.pattern.permute.xlu0 2
  %397 = vperm.xlu0 %396, %v42
  %v398 = vpop.permute.xlu0 %397
  %400 = vset.pattern.permute.xlu0 2
  %401 = vperm.xlu0 %400, %v43
  %v402 = vpop.permute.xlu0 %401
  %404 = vset.pattern.permute.xlu0 2
  %405 = vperm.xlu0 %404, %v44
  %v406 = vpop.permute.xlu0 %405
  %v408 = vperm.slane %v340, 2
  %v409 = vmul.f32 %v394, %v408
  %v410 = vmul.f32 %v398, %v408
  %v411 = vmul.f32 %v402, %v408
  %v412 = vmul.f32 %v406, %v408
  %v413 = vadd.f32 %v388, %v409
  %v414 = vadd.f32 %v389, %v410
  %v415 = vadd.f32 %v390, %v411
  %v416 = vadd.f32 %v391, %v412
  %417 = vset.pattern.permute.xlu0 3
  %418 = vperm.xlu0 %417, %v41
  %v419 = vpop.permute.xlu0 %418
  %421 = vset.pattern.permute.xlu0 3
  %422 = vperm.xlu0 %421, %v42
  %v423 = vpop.permute.xlu0 %422
  %425 = vset.pattern.permute.xlu0 3
  %426 = vperm.xlu0 %425, %v43
  %v427 = vpop.permute.xlu0 %426
  %429 = vset.pattern.permute.xlu0 3
  %430 = vperm.xlu0 %429, %v44
  %v431 = vpop.permute.xlu0 %430
  %v433 = vperm.slane %v340, 3
  %v434 = vmul.f32 %v419, %v433
  %v435 = vmul.f32 %v423, %v433
  %v436 = vmul.f32 %v427, %v433
  %v437 = vmul.f32 %v431, %v433
  %v438 = vadd.f32 %v413, %v434
  %v439 = vadd.f32 %v414, %v435
  %v440 = vadd.f32 %v415, %v436
  %v441 = vadd.f32 %v416, %v437
  %442 = vset.pattern.permute.xlu0 4
  %443 = vperm.xlu0 %442, %v41
  %v444 = vpop.permute.xlu0 %443
  %446 = vset.pattern.permute.xlu0 4
  %447 = vperm.xlu0 %446, %v42
  %v448 = vpop.permute.xlu0 %447
  %450 = vset.pattern.permute.xlu0 4
  %451 = vperm.xlu0 %450, %v43
  %v452 = vpop.permute.xlu0 %451
  %454 = vset.pattern.permute.xlu0 4
  %455 = vperm.xlu0 %454, %v44
  %v456 = vpop.permute.xlu0 %455
  %v458 = vperm.slane %v340, 4
  %v459 = vmul.f32 %v444, %v458
  %v460 = vmul.f32 %v448, %v458
  %v461 = vmul.f32 %v452, %v458
  %v462 = vmul.f32 %v456, %v458
  %v463 = vadd.f32 %v438, %v459
  %v464 = vadd.f32 %v439, %v460
  %v465 = vadd.f32 %v440, %v461
  %v466 = vadd.f32 %v441, %v462
  %467 = vset.pattern.permute.xlu0 5
  %468 = vperm.xlu0 %467, %v41
  %v469 = vpop.permute.xlu0 %468
  %471 = vset.pattern.permute.xlu0 5
  %472 = vperm.xlu0 %471, %v42
  %v473 = vpop.permute.xlu0 %472
  %475 = vset.pattern.permute.xlu0 5
  %476 = vperm.xlu0 %475, %v43
  %v477 = vpop.permute.xlu0 %476
  %479 = vset.pattern.permute.xlu0 5
  %480 = vperm.xlu0 %479, %v44
  %v481 = vpop.permute.xlu0 %480
  %v483 = vperm.slane %v340, 5
  %v484 = vmul.f32 %v469, %v483
  %v485 = vmul.f32 %v473, %v483
  %v486 = vmul.f32 %v477, %v483
  %v487 = vmul.f32 %v481, %v483
  %v488 = vadd.f32 %v463, %v484
  %v489 = vadd.f32 %v464, %v485
  %v490 = vadd.f32 %v465, %v486
  %v491 = vadd.f32 %v466, %v487
  %492 = vset.pattern.permute.xlu0 6
  %493 = vperm.xlu0 %492, %v41
  %v494 = vpop.permute.xlu0 %493
  %496 = vset.pattern.permute.xlu0 6
  %497 = vperm.xlu0 %496, %v42
  %v498 = vpop.permute.xlu0 %497
  %500 = vset.pattern.permute.xlu0 6
  %501 = vperm.xlu0 %500, %v43
  %v502 = vpop.permute.xlu0 %501
  %504 = vset.pattern.permute.xlu0 6
  %505 = vperm.xlu0 %504, %v44
  %v506 = vpop.permute.xlu0 %505
  %v508 = vperm.slane %v340, 6
  %v509 = vmul.f32 %v494, %v508
  %v510 = vmul.f32 %v498, %v508
  %v511 = vmul.f32 %v502, %v508
  %v512 = vmul.f32 %v506, %v508
  %v513 = vadd.f32 %v488, %v509
  %v514 = vadd.f32 %v489, %v510
  %v515 = vadd.f32 %v490, %v511
  %v516 = vadd.f32 %v491, %v512
  %517 = vset.pattern.permute.xlu0 7
  %518 = vperm.xlu0 %517, %v41
  %v519 = vpop.permute.xlu0 %518
  %521 = vset.pattern.permute.xlu0 7
  %522 = vperm.xlu0 %521, %v42
  %v523 = vpop.permute.xlu0 %522
  %525 = vset.pattern.permute.xlu0 7
  %526 = vperm.xlu0 %525, %v43
  %v527 = vpop.permute.xlu0 %526
  %529 = vset.pattern.permute.xlu0 7
  %530 = vperm.xlu0 %529, %v44
  %v531 = vpop.permute.xlu0 %530
  %v533 = vperm.slane %v340, 7
  %v534 = vmul.f32 %v519, %v533
  %v535 = vmul.f32 %v523, %v533
  %v536 = vmul.f32 %v527, %v533
  %v537 = vmul.f32 %v531, %v533
  %v538 = vadd.f32 %v513, %v534
  %v539 = vadd.f32 %v514, %v535
  %v540 = vadd.f32 %v515, %v536
  %v541 = vadd.f32 %v516, %v537
  %542 = vset.pattern.permute.xlu0 8
  %543 = vperm.xlu0 %542, %v41
  %v544 = vpop.permute.xlu0 %543
  %546 = vset.pattern.permute.xlu0 8
  %547 = vperm.xlu0 %546, %v42
  %v548 = vpop.permute.xlu0 %547
  %550 = vset.pattern.permute.xlu0 8
  %551 = vperm.xlu0 %550, %v43
  %v552 = vpop.permute.xlu0 %551
  %554 = vset.pattern.permute.xlu0 8
  %555 = vperm.xlu0 %554, %v44
  %v556 = vpop.permute.xlu0 %555
  %v558 = vperm.slane %v341, 0
  %v559 = vmul.f32 %v544, %v558
  %v560 = vmul.f32 %v548, %v558
  %v561 = vmul.f32 %v552, %v558
  %v562 = vmul.f32 %v556, %v558
  %v563 = vadd.f32 %v538, %v559
  %v564 = vadd.f32 %v539, %v560
  %v565 = vadd.f32 %v540, %v561
  %v566 = vadd.f32 %v541, %v562
  %567 = vset.pattern.permute.xlu0 9
  %568 = vperm.xlu0 %567, %v41
  %v569 = vpop.permute.xlu0 %568
  %571 = vset.pattern.permute.xlu0 9
  %572 = vperm.xlu0 %571, %v42
  %v573 = vpop.permute.xlu0 %572
  %575 = vset.pattern.permute.xlu0 9
  %576 = vperm.xlu0 %575, %v43
  %v577 = vpop.permute.xlu0 %576
  %579 = vset.pattern.permute.xlu0 9
  %580 = vperm.xlu0 %579, %v44
  %v581 = vpop.permute.xlu0 %580
  %v583 = vperm.slane %v341, 1
  %v584 = vmul.f32 %v569, %v583
  %v585 = vmul.f32 %v573, %v583
  %v586 = vmul.f32 %v577, %v583
  %v587 = vmul.f32 %v581, %v583
  %v588 = vadd.f32 %v563, %v584
  %v589 = vadd.f32 %v564, %v585
  %v590 = vadd.f32 %v565, %v586
  %v591 = vadd.f32 %v566, %v587
  %592 = vset.pattern.permute.xlu0 10
  %593 = vperm.xlu0 %592, %v41
  %v594 = vpop.permute.xlu0 %593
  %596 = vset.pattern.permute.xlu0 10
  %597 = vperm.xlu0 %596, %v42
  %v598 = vpop.permute.xlu0 %597
  %600 = vset.pattern.permute.xlu0 10
  %601 = vperm.xlu0 %600, %v43
  %v602 = vpop.permute.xlu0 %601
  %604 = vset.pattern.permute.xlu0 10
  %605 = vperm.xlu0 %604, %v44
  %v606 = vpop.permute.xlu0 %605
  %v608 = vperm.slane %v341, 2
  %v609 = vmul.f32 %v594, %v608
  %v610 = vmul.f32 %v598, %v608
  %v611 = vmul.f32 %v602, %v608
  %v612 = vmul.f32 %v606, %v608
  %v613 = vadd.f32 %v588, %v609
  %v614 = vadd.f32 %v589, %v610
  %v615 = vadd.f32 %v590, %v611
  %v616 = vadd.f32 %v591, %v612
  %617 = vset.pattern.permute.xlu0 11
  %618 = vperm.xlu0 %617, %v41
  %v619 = vpop.permute.xlu0 %618
  %621 = vset.pattern.permute.xlu0 11
  %622 = vperm.xlu0 %621, %v42
  %v623 = vpop.permute.xlu0 %622
  %625 = vset.pattern.permute.xlu0 11
  %626 = vperm.xlu0 %625, %v43
  %v627 = vpop.permute.xlu0 %626
  %629 = vset.pattern.permute.xlu0 11
  %630 = vperm.xlu0 %629, %v44
  %v631 = vpop.permute.xlu0 %630
  %v633 = vperm.slane %v341, 3
  %v634 = vmul.f32 %v619, %v633
  %v635 = vmul.f32 %v623, %v633
  %v636 = vmul.f32 %v627, %v633
  %v637 = vmul.f32 %v631, %v633
  %v638 = vadd.f32 %v613, %v634
  %v639 = vadd.f32 %v614, %v635
  %v640 = vadd.f32 %v615, %v636
  %v641 = vadd.f32 %v616, %v637
  %642 = vset.pattern.permute.xlu0 12
  %643 = vperm.xlu0 %642, %v41
  %v644 = vpop.permute.xlu0 %643
  %646 = vset.pattern.permute.xlu0 12
  %647 = vperm.xlu0 %646, %v42
  %v648 = vpop.permute.xlu0 %647
  %650 = vset.pattern.permute.xlu0 12
  %651 = vperm.xlu0 %650, %v43
  %v652 = vpop.permute.xlu0 %651
  %654 = vset.pattern.permute.xlu0 12
  %655 = vperm.xlu0 %654, %v44
  %v656 = vpop.permute.xlu0 %655
  %v658 = vperm.slane %v341, 4
  %v659 = vmul.f32 %v644, %v658
  %v660 = vmul.f32 %v648, %v658
  %v661 = vmul.f32 %v652, %v658
  %v662 = vmul.f32 %v656, %v658
  %v663 = vadd.f32 %v638, %v659
  %v664 = vadd.f32 %v639, %v660
  %v665 = vadd.f32 %v640, %v661
  %v666 = vadd.f32 %v641, %v662
  %667 = vset.pattern.permute.xlu0 13
  %668 = vperm.xlu0 %667, %v41
  %v669 = vpop.permute.xlu0 %668
  %671 = vset.pattern.permute.xlu0 13
  %672 = vperm.xlu0 %671, %v42
  %v673 = vpop.permute.xlu0 %672
  %675 = vset.pattern.permute.xlu0 13
  %676 = vperm.xlu0 %675, %v43
  %v677 = vpop.permute.xlu0 %676
  %679 = vset.pattern.permute.xlu0 13
  %680 = vperm.xlu0 %679, %v44
  %v681 = vpop.permute.xlu0 %680
  %v683 = vperm.slane %v341, 5
  %v684 = vmul.f32 %v669, %v683
  %v685 = vmul.f32 %v673, %v683
  %v686 = vmul.f32 %v677, %v683
  %v687 = vmul.f32 %v681, %v683
  %v688 = vadd.f32 %v663, %v684
  %v689 = vadd.f32 %v664, %v685
  %v690 = vadd.f32 %v665, %v686
  %v691 = vadd.f32 %v666, %v687
  %692 = vset.pattern.permute.xlu0 14
  %693 = vperm.xlu0 %692, %v41
  %v694 = vpop.permute.xlu0 %693
  %696 = vset.pattern.permute.xlu0 14
  %697 = vperm.xlu0 %696, %v42
  %v698 = vpop.permute.xlu0 %697
  %700 = vset.pattern.permute.xlu0 14
  %701 = vperm.xlu0 %700, %v43
  %v702 = vpop.permute.xlu0 %701
  %704 = vset.pattern.permute.xlu0 14
  %705 = vperm.xlu0 %704, %v44
  %v706 = vpop.permute.xlu0 %705
  %v708 = vperm.slane %v341, 6
  %v709 = vmul.f32 %v694, %v708
  %v710 = vmul.f32 %v698, %v708
  %v711 = vmul.f32 %v702, %v708
  %v712 = vmul.f32 %v706, %v708
  %v713 = vadd.f32 %v688, %v709
  %v714 = vadd.f32 %v689, %v710
  %v715 = vadd.f32 %v690, %v711
  %v716 = vadd.f32 %v691, %v712
  %717 = vset.pattern.permute.xlu0 15
  %718 = vperm.xlu0 %717, %v41
  %v719 = vpop.permute.xlu0 %718
  %721 = vset.pattern.permute.xlu0 15
  %722 = vperm.xlu0 %721, %v42
  %v723 = vpop.permute.xlu0 %722
  %725 = vset.pattern.permute.xlu0 15
  %726 = vperm.xlu0 %725, %v43
  %v727 = vpop.permute.xlu0 %726
  %729 = vset.pattern.permute.xlu0 15
  %730 = vperm.xlu0 %729, %v44
  %v731 = vpop.permute.xlu0 %730
  %v733 = vperm.slane %v341, 7
  %v734 = vmul.f32 %v719, %v733
  %v735 = vmul.f32 %v723, %v733
  %v736 = vmul.f32 %v727, %v733
  %v737 = vmul.f32 %v731, %v733
  %v738 = vadd.f32 %v713, %v734
  %v739 = vadd.f32 %v714, %v735
  %v740 = vadd.f32 %v715, %v736
  %v741 = vadd.f32 %v716, %v737
  %v742 = vld [vmem:[%s5] sm:$0xff]
  %v743 = vld [vmem:[%s5 + $0x8] sm:$0xff]
  %v744 = vperm.slane %v742, 0
  %v745 = vmul.f32 %v345, %v744
  %v746 = vmul.f32 %v350, %v744
  %v747 = vmul.f32 %v355, %v744
  %v748 = vmul.f32 %v360, %v744
  %v749 = vperm.slane %v742, 1
  %v750 = vmul.f32 %v369, %v749
  %v751 = vmul.f32 %v373, %v749
  %v752 = vmul.f32 %v377, %v749
  %v753 = vmul.f32 %v381, %v749
  %v754 = vadd.f32 %v745, %v750
  %v755 = vadd.f32 %v746, %v751
  %v756 = vadd.f32 %v747, %v752
  %v757 = vadd.f32 %v748, %v753
  %v758 = vperm.slane %v742, 2
  %v759 = vmul.f32 %v394, %v758
  %v760 = vmul.f32 %v398, %v758
  %v761 = vmul.f32 %v402, %v758
  %v762 = vmul.f32 %v406, %v758
  %v763 = vadd.f32 %v754, %v759
  %v764 = vadd.f32 %v755, %v760
  %v765 = vadd.f32 %v756, %v761
  %v766 = vadd.f32 %v757, %v762
  %v767 = vperm.slane %v742, 3
  %v768 = vmul.f32 %v419, %v767
  %v769 = vmul.f32 %v423, %v767
  %v770 = vmul.f32 %v427, %v767
  %v771 = vmul.f32 %v431, %v767
  %v772 = vadd.f32 %v763, %v768
  %v773 = vadd.f32 %v764, %v769
  %v774 = vadd.f32 %v765, %v770
  %v775 = vadd.f32 %v766, %v771
  %v776 = vperm.slane %v742, 4
  %v777 = vmul.f32 %v444, %v776
  %v778 = vmul.f32 %v448, %v776
  %v779 = vmul.f32 %v452, %v776
  %v780 = vmul.f32 %v456, %v776
  %v781 = vadd.f32 %v772, %v777
  %v782 = vadd.f32 %v773, %v778
  %v783 = vadd.f32 %v774, %v779
  %v784 = vadd.f32 %v775, %v780
  %v785 = vperm.slane %v742, 5
  %v786 = vmul.f32 %v469, %v785
  %v787 = vmul.f32 %v473, %v785
  %v788 = vmul.f32 %v477, %v785
  %v789 = vmul.f32 %v481, %v785
  %v790 = vadd.f32 %v781, %v786
  %v791 = vadd.f32 %v782, %v787
  %v792 = vadd.f32 %v783, %v788
  %v793 = vadd.f32 %v784, %v789
  %v794 = vperm.slane %v742, 6
  %v795 = vmul.f32 %v494, %v794
  %v796 = vmul.f32 %v498, %v794
  %v797 = vmul.f32 %v502, %v794
  %v798 = vmul.f32 %v506, %v794
  %v799 = vadd.f32 %v790, %v795
  %v800 = vadd.f32 %v791, %v796
  %v801 = vadd.f32 %v792, %v797
  %v802 = vadd.f32 %v793, %v798
  %v803 = vperm.slane %v742, 7
  %v804 = vmul.f32 %v519, %v803
  %v805 = vmul.f32 %v523, %v803
  %v806 = vmul.f32 %v527, %v803
  %v807 = vmul.f32 %v531, %v803
  %v808 = vadd.f32 %v799, %v804
  %v809 = vadd.f32 %v800, %v805
  %v810 = vadd.f32 %v801, %v806
  %v811 = vadd.f32 %v802, %v807
  %v812 = vperm.slane %v743, 0
  %v813 = vmul.f32 %v544, %v812
  %v814 = vmul.f32 %v548, %v812
  %v815 = vmul.f32 %v552, %v812
  %v816 = vmul.f32 %v556, %v812
  %v817 = vadd.f32 %v808, %v813
  %v818 = vadd.f32 %v809, %v814
  %v819 = vadd.f32 %v810, %v815
  %v820 = vadd.f32 %v811, %v816
  %v821 = vperm.slane %v743, 1
  %v822 = vmul.f32 %v569, %v821
  %v823 = vmul.f32 %v573, %v821
  %v824 = vmul.f32 %v577, %v821
  %v825 = vmul.f32 %v581, %v821
  %v826 = vadd.f32 %v817, %v822
  %v827 = vadd.f32 %v818, %v823
  %v828 = vadd.f32 %v819, %v824
  %v829 = vadd.f32 %v820, %v825
  %v830 = vperm.slane %v743, 2
  %v831 = vmul.f32 %v594, %v830
  %v832 = vmul.f32 %v598, %v830
  %v833 = vmul.f32 %v602, %v830
  %v834 = vmul.f32 %v606, %v830
  %v835 = vadd.f32 %v826, %v831
  %v836 = vadd.f32 %v827, %v832
  %v837 = vadd.f32 %v828, %v833
  %v838 = vadd.f32 %v829, %v834
  %v839 = vperm.slane %v743, 3
  %v840 = vmul.f32 %v619, %v839
  %v841 = vmul.f32 %v623, %v839
  %v842 = vmul.f32 %v627, %v839
  %v843 = vmul.f32 %v631, %v839
  %v844 = vadd.f32 %v835, %v840
  %v845 = vadd.f32 %v836, %v841
  %v846 = vadd.f32 %v837, %v842
  %v847 = vadd.f32 %v838, %v843
  %v848 = vperm.slane %v743, 4
  %v849 = vmul.f32 %v644, %v848
  %v850 = vmul.f32 %v648, %v848
  %v851 = vmul.f32 %v652, %v848
  %v852 = vmul.f32 %v656, %v848
  %v853 = vadd.f32 %v844, %v849
  %v854 = vadd.f32 %v845, %v850
  %v855 = vadd.f32 %v846, %v851
  %v856 = vadd.f32 %v847, %v852
  %v857 = vperm.slane %v743, 5
  %v858 = vmul.f32 %v669, %v857
  %v859 = vmul.f32 %v673, %v857
  %v860 = vmul.f32 %v677, %v857
  %v861 = vmul.f32 %v681, %v857
  %v862 = vadd.f32 %v853, %v858
  %v863 = vadd.f32 %v854, %v859
  %v864 = vadd.f32 %v855, %v860
  %v865 = vadd.f32 %v856, %v861
  %v866 = vperm.slane %v743, 6
  %v867 = vmul.f32 %v694, %v866
  %v868 = vmul.f32 %v698, %v866
  %v869 = vmul.f32 %v702, %v866
  %v870 = vmul.f32 %v706, %v866
  %v871 = vadd.f32 %v862, %v867
  %v872 = vadd.f32 %v863, %v868
  %v873 = vadd.f32 %v864, %v869
  %v874 = vadd.f32 %v865, %v870
  %v875 = vperm.slane %v743, 7
  %v876 = vmul.f32 %v719, %v875
  %v877 = vmul.f32 %v723, %v875
  %v878 = vmul.f32 %v727, %v875
  %v879 = vmul.f32 %v731, %v875
  %v880 = vadd.f32 %v871, %v876
  %v881 = vadd.f32 %v872, %v877
  %v882 = vadd.f32 %v873, %v878
  %v883 = vadd.f32 %v874, %v879
  %v884 = vmul.f32 %v336, %v880
  %v885 = vmul.f32 %v337, %v881
  %v886 = vmul.f32 %v338, %v882
  %v887 = vmul.f32 %v339, %v883
  %v888 = vadd.f32 %v738, %v884
  %v889 = vadd.f32 %v739, %v885
  %v890 = vadd.f32 %v740, %v886
  %v891 = vadd.f32 %v741, %v887
  %vm892 = vcmask 97280
  %893 = vst.msk [vmem:[%s12] sm:$0xff] %vm892, %v888
  %894 = vst.msk [vmem:[%s12 + $0x8] sm:$0xff] %vm892, %v889
  %895 = vst.msk [vmem:[%s12 + $0x10] sm:$0xff] %vm892, %v890
  %896 = vst.msk [vmem:[%s12 + $0x18] sm:$0xff] %vm892, %v891
  // Predicated region
  $region50: #{_forward.23} parent=0 // pred_check
    _
  $region51: #{_forward.23} parent=0 // pred_check_branch
    %898 = sbr.rel (0) target = $region53
  $region52: #{_forward.23} parent=0 // pred_region
    _
  $region53: #{_forward.23} parent=0 // pred_fallthru
    _
  // Predicated region
  $region54: #{_forward.23} parent=0 // pred_check
    _
  $region55: #{_forward.23} parent=0 // pred_check_branch
    %900 = sbr.rel (0) target = $region57
  $region56: #{_forward.23} parent=0 // pred_region
    _
  $region57: #{_forward.23} parent=0 // pred_fallthru
    _

</llo_original>
